<compile_context>
chip_gen: v7x
topology: tpu7x:2x2x1
jax: 0.10.0
libtpu: 0.0.40
codegen_flags: <defaults>
</compile_context>

<pallas_src>
import functools

import jax
import jax.numpy as jnp
from jax.experimental import pallas as pl
from jax.experimental.pallas import tpu as pltpu


def _iou_fit_fc3_kernel(x_ref, w1_ref, wdn_ref, wup_ref, aux_ref, o_ref):
    """One row-tile of the fused MLP.

    x_ref   [tile, in]        f32  (concat(pred, gt))
    w1_ref  [in, 512]         bf16
    wdn_ref [3, 512, 128]     bf16  (bottle{2,3,4}.fc1)
    wup_ref [3, 128, 512]     bf16  (bottle{2,3,4}.fc2)
    aux_ref [9, 512]          f32   rows: b1, b2a|0, b2b, b3a|0, b3b,
                                          b4a|0, b4b, w5-row, b5|0
    o_ref   [1, 1, tile]      f32   (lane-dense: output row index in lanes)
    """
    bf16 = jnp.bfloat16
    bn = wdn_ref.shape[-1]          # bottleneck width (128)

    # fc1: Linear(in, 512) + ReLU as one small-K bf16 MXU matmul with f32
    # accumulation (matches the MXU's native operand precision).
    h = jnp.dot(x_ref[...].astype(bf16), w1_ref[...],
                preferred_element_type=jnp.float32)
    h = jnp.maximum(h + aux_ref[0:1, :], 0.0)

    # Three bottlenecks: Linear(512,128)+ReLU then Linear(128,512)+ReLU.
    # bf16 MXU operands, f32 accumulation, f32 bias/ReLU epilogue.
    for l in range(3):              # unrolled at trace time
        t = jnp.dot(h.astype(bf16), wdn_ref[l],
                    preferred_element_type=jnp.float32)
        t = jnp.maximum(t + aux_ref[2 * l + 1:2 * l + 2, 0:bn], 0.0)
        u = jnp.dot(t.astype(bf16), wup_ref[l],
                    preferred_element_type=jnp.float32)
        h = jnp.maximum(u + aux_ref[2 * l + 2:2 * l + 3, :], 0.0)

    # fc5: Linear(512, 1), no activation.  A [tile,512]x[512,1] matmul would
    # spend a full MXU push sequence on one output column, so keep it on the
    # VPU (broadcast multiply + lane reduction), then relayout the [tile,1]
    # column into the lane-dense (1,1,tile) output row: full-width unmasked
    # stores and a single contiguous writeback DMA per grid step.
    col = jnp.sum(h * aux_ref[7:8, :], axis=-1, keepdims=True)   # [tile, 1]
    col = col + aux_ref[8:9, 0:1]                                # + b5
    o_ref[...] = col.reshape(o_ref.shape).astype(o_ref.dtype)


# ---------------------------------------------------------------------------
# Wrapper / parameter preparation
# ---------------------------------------------------------------------------

def _cdiv(a, b):
    return -(-a // b)


def _round_up(a, m):
    return _cdiv(a, m) * m


def _choose_tiling(n, max_tile):
    """Rows per grid step (multiple of 8) and padded batch size.

    Largest tile <= max_tile, >= 2 grid steps (so dimension_semantics=
    ('parallel',) can shard rows across v7x's two TensorCores), and at most
    ~8 padded rows per step.
    """
    steps = max(2, _cdiv(n, max_tile)) if n > 8 else 1
    tile = _round_up(_cdiv(n, steps), 8)
    return tile, steps * tile


def prepare_params(params):
    """One-time weight packing/casting for the kernel (call OUTSIDE jit, once
    at model-load time): removes the per-launch HBM->HBM cast/slice ops."""
    f32, bf16 = jnp.float32, jnp.bfloat16
    hidden = params["w1"].shape[1]          # 512

    def pad_row(b):                         # [1, k] -> [1, hidden], zero pad
        return jnp.pad(b.astype(f32), ((0, 0), (0, hidden - b.shape[1])))

    aux = jnp.concatenate([
        params["b1"].astype(f32),
        pad_row(params["b2a"]), params["b2b"].astype(f32),
        pad_row(params["b3a"]), params["b3b"].astype(f32),
        pad_row(params["b4a"]), params["b4b"].astype(f32),
        params["w5"].reshape(1, hidden).astype(f32),   # fc5 weight as a row
        pad_row(params["b5"]),                         # fc5 bias at [8, 0]
    ], axis=0)                                         # [9, hidden] f32

    return {
        "w1": params["w1"].astype(bf16),                                   # [in,512]
        "w_dn": jnp.stack([params["w2a"], params["w3a"], params["w4a"]]).astype(bf16),
        "w_up": jnp.stack([params["w2b"], params["w3b"], params["w4b"]]).astype(bf16),
        "aux": aux,
    }


@functools.partial(jax.jit, static_argnames=("max_tile",))
def iou_fit_fc3(pred, gt, prep, *, max_tile=1024):
    """IOUfitFC3 forward with a fused Pallas TPU kernel.

    pred: [N, Dp] f32, gt: [N, Dg] f32; prep = prepare_params(raw_params).
    Returns [N, 1] float32.
    """
    n = pred.shape[0]
    x = jnp.concatenate([pred, gt], axis=-1).astype(jnp.float32)   # [N, in]
    d_in = x.shape[1]

    tile, n_pad = _choose_tiling(n, max_tile)
    steps = n_pad // tile
    if n_pad != n:
        x = jnp.pad(x, ((0, n_pad - n), (0, 0)))   # padded rows sliced off below

    def const_spec(a):
        # Whole array, same block every grid step (VMEM-resident weights).
        nd = a.ndim
        return pl.BlockSpec(a.shape, lambda i: (0,) * nd)

    w1, w_dn, w_up, aux = prep["w1"], prep["w_dn"], prep["w_up"], prep["aux"]

    out = pl.pallas_call(
        _iou_fit_fc3_kernel,
        out_shape=jax.ShapeDtypeStruct((steps, 1, tile), jnp.float32),
        grid_spec=pltpu.PrefetchScalarGridSpec(
            num_scalar_prefetch=0,
            grid=(steps,),
            in_specs=[
                pl.BlockSpec((tile, d_in), lambda i: (i, 0)),
                const_spec(w1), const_spec(w_dn), const_spec(w_up),
                const_spec(aux),
            ],
            out_specs=pl.BlockSpec((1, 1, tile), lambda i: (i, 0, 0)),
        ),
        compiler_params=pltpu.CompilerParams(
            dimension_semantics=("parallel",),      # rows shard across TCs (v7x)
            vmem_limit_bytes=32 * 1024 * 1024,      # above v5e's 16 MiB default
        ),
    )(x, w1, w_dn, w_up, aux)

    # (steps, 1, tile) is row-major == original row order; drop pad, -> [N,1].
    return out.reshape(n_pad, 1)[:n]


# ---------------------------------------------------------------------------
# Synthetic init + pure-JAX reference
# ---------------------------------------------------------------------------

def init_params(key, in_features, hidden=512, bneck=None):
    """Deterministic synthetic parameter init (shapes match IOUfitFC3.__init__)."""
    if bneck is None:
        bneck = hidden // 4  # 128

    def linear(key, fan_in, fan_out):
        kw, kb = jax.random.split(key)
        bound = 1.0 / jnp.sqrt(fan_in)
        w = jax.random.uniform(kw, (fan_in, fan_out), jnp.float32, -bound, bound)
        b = jax.random.uniform(kb, (1, fan_out), jnp.float32, -bound, bound)
        return w, b

    keys = jax.random.split(key, 8)
    p = {}
    p["w1"], p["b1"] = linear(keys[0], in_features, hidden)        # fc1: in -> 512
    p["w2a"], p["b2a"] = linear(keys[1], hidden, bneck)            # bottle2.fc1
    p["w2b"], p["b2b"] = linear(keys[2], bneck, hidden)            # bottle2.fc2
    p["w3a"], p["b3a"] = linear(keys[3], hidden, bneck)            # bottle3.fc1
    p["w3b"], p["b3b"] = linear(keys[4], bneck, hidden)            # bottle3.fc2
    p["w4a"], p["b4a"] = linear(keys[5], hidden, bneck)            # bottle4.fc1
    p["w4b"], p["b4b"] = linear(keys[6], bneck, hidden)            # bottle4.fc2
    p["w5"], p["b5"] = linear(keys[7], hidden, 1)                  # fc5: 512 -> 1
    return p


def iou_fit_fc3_ref(pred, gt, p, *, matmul_dtype=jnp.float32):
    """Pure-JAX reference matching the PyTorch forward.

    matmul_dtype=bfloat16 mirrors the kernel's MXU operand precision
    (f32 accumulation, f32 biases/epilogues).
    """
    def lin(x, w, b):
        return jnp.dot(x.astype(matmul_dtype), w.astype(matmul_dtype),
                       preferred_element_type=jnp.float32) + b

    h = jax.nn.relu(lin(jnp.concatenate([pred, gt], axis=-1), p["w1"], p["b1"]))
    for a, b in (("2a", "2b"), ("3a", "3b"), ("4a", "4b")):
        t = jax.nn.relu(lin(h, p["w" + a], p["b" + a]))
        h = jax.nn.relu(lin(t, p["w" + b], p["b" + b]))
    return jnp.dot(h, p["w5"], preferred_element_type=jnp.float32) + p["b5"]


if __name__ == "__main__":
    key = jax.random.PRNGKey(0)
    k_pred, k_gt, k_params = jax.random.split(key, 3)

    # 600 (pred, gt) box pairs, 4-d each.  600 is deliberately not a multiple
    # of 8: the adaptive tiling pads it to 608 (2 steps x 304 rows).
    N, d_pred, d_gt = 600, 4, 4
    pred = jax.random.normal(k_pred, (N, d_pred), jnp.float32)
    gt = jax.random.normal(k_gt, (N, d_gt), jnp.float32)

    params = init_params(k_params, in_features=d_pred + d_gt)
    prep = prepare_params(params)               # one-time, outside jit

    out = iou_fit_fc3(pred, gt, prep)
    out = jax.block_until_ready(out)
    assert out.shape == (N, 1)
    assert bool(jnp.all(jnp.isfinite(out)))

    # Tight check vs. a reference using the same bf16-operand/f32-accumulate
    # matmuls as the kernel...
    ref_mixed = iou_fit_fc3_ref(pred, gt, params, matmul_dtype=jnp.bfloat16)
    assert jnp.allclose(out, ref_mixed, atol=2e-3, rtol=2e-3), "mismatch vs bf16 reference"
    # ...and a loose check vs. the pure-f32 reference (bf16 MXU operands drift).
    ref_f32 = iou_fit_fc3_ref(pred, gt, params, matmul_dtype=jnp.float32)
    assert jnp.allclose(out, ref_f32, atol=1e-1, rtol=1e-1), "mismatch vs f32 reference"

    print("KERNEL_OK")
</pallas_src>

<mosaic_0001>
module attributes {stable_mosaic.version = 11 : i64} {
  func.func @_iou_fit_fc3_kernel(%arg0: i32, %arg1: memref<304x8xf32, #tpu.memory_space<vmem>>, %arg2: memref<8x512xbf16, #tpu.memory_space<vmem>>, %arg3: memref<3x512x128xbf16, #tpu.memory_space<vmem>>, %arg4: memref<3x128x512xbf16, #tpu.memory_space<vmem>>, %arg5: memref<9x512xf32, #tpu.memory_space<vmem>>, %arg6: memref<1x1x304xf32, #tpu.memory_space<vmem>>) attributes {dimension_semantics = [#tpu.dimension_semantics<parallel>], iteration_bounds = array<i64: 2>, scalar_prefetch = 0 : i64, scratch_operands = 0 : i64, tpu.core_type = #tpu.core_type<tc>, window_params = [{transform_indices = @transform_0, window_bounds = array<i64: 304, 8>}, {pipeline_mode = #tpu.pipeline_mode<synchronous>, transform_indices = @transform_1, window_bounds = array<i64: 8, 512>}, {pipeline_mode = #tpu.pipeline_mode<synchronous>, transform_indices = @transform_2, window_bounds = array<i64: 3, 512, 128>}, {pipeline_mode = #tpu.pipeline_mode<synchronous>, transform_indices = @transform_3, window_bounds = array<i64: 3, 128, 512>}, {pipeline_mode = #tpu.pipeline_mode<synchronous>, transform_indices = @transform_4, window_bounds = array<i64: 9, 512>}, {transform_indices = @transform_5, window_bounds = array<i64: 1, 1, 304>}]} {
    %c0 = arith.constant 0 : index
    %c0_0 = arith.constant 0 : index
    %0 = vector.load %arg1[%c0, %c0_0] : memref<304x8xf32, #tpu.memory_space<vmem>>, vector<304x8xf32>
    %1 = arith.truncf %0 : vector<304x8xf32> to vector<304x8xbf16>
    %c0_1 = arith.constant 0 : index
    %c0_2 = arith.constant 0 : index
    %2 = vector.load %arg2[%c0_1, %c0_2] : memref<8x512xbf16, #tpu.memory_space<vmem>>, vector<8x512xbf16>
    %cst = arith.constant dense<0.000000e+00> : vector<304x512xf32>
    %3 = tpu.matmul %1, %2, %cst {dimension_numbers = #tpu.dot_dimension_numbers<[1], [0], [0], [1], [0, 0, 1, 1], [], []>} : vector<304x8xbf16>, vector<8x512xbf16>, vector<304x512xf32> -> vector<304x512xf32>
    %c0_3 = arith.constant 0 : index
    %c0_4 = arith.constant 0 : index
    %4 = vector.load %arg5[%c0_3, %c0_4] : memref<9x512xf32, #tpu.memory_space<vmem>>, vector<1x512xf32>
    %5 = vector.broadcast %4 : vector<1x512xf32> to vector<304x512xf32>
    %6 = arith.addf %3, %5 : vector<304x512xf32>
    %cst_5 = arith.constant 0.000000e+00 : f32
    %7 = vector.broadcast %cst_5 : f32 to vector<304x512xf32>
    %8 = arith.maximumf %6, %7 : vector<304x512xf32>
    %9 = arith.truncf %8 : vector<304x512xf32> to vector<304x512xbf16>
    %c0_6 = arith.constant 0 : index
    %c0_7 = arith.constant 0 : index
    %c0_8 = arith.constant 0 : index
    %10 = vector.load %arg3[%c0_6, %c0_7, %c0_8] : memref<3x512x128xbf16, #tpu.memory_space<vmem>>, vector<1x512x128xbf16>
    %11 = vector.shape_cast %10 : vector<1x512x128xbf16> to vector<512x128xbf16>
    %cst_9 = arith.constant dense<0.000000e+00> : vector<304x128xf32>
    %12 = tpu.matmul %9, %11, %cst_9 {dimension_numbers = #tpu.dot_dimension_numbers<[1], [0], [0], [1], [0, 0, 1, 1], [], []>} : vector<304x512xbf16>, vector<512x128xbf16>, vector<304x128xf32> -> vector<304x128xf32>
    %c1 = arith.constant 1 : index
    %c0_10 = arith.constant 0 : index
    %13 = vector.load %arg5[%c1, %c0_10] : memref<9x512xf32, #tpu.memory_space<vmem>>, vector<1x128xf32>
    %14 = vector.broadcast %13 : vector<1x128xf32> to vector<304x128xf32>
    %15 = arith.addf %12, %14 : vector<304x128xf32>
    %cst_11 = arith.constant 0.000000e+00 : f32
    %16 = vector.broadcast %cst_11 : f32 to vector<304x128xf32>
    %17 = arith.maximumf %15, %16 : vector<304x128xf32>
    %18 = arith.truncf %17 : vector<304x128xf32> to vector<304x128xbf16>
    %c0_12 = arith.constant 0 : index
    %c0_13 = arith.constant 0 : index
    %c0_14 = arith.constant 0 : index
    %19 = vector.load %arg4[%c0_12, %c0_13, %c0_14] : memref<3x128x512xbf16, #tpu.memory_space<vmem>>, vector<1x128x512xbf16>
    %20 = vector.shape_cast %19 : vector<1x128x512xbf16> to vector<128x512xbf16>
    %cst_15 = arith.constant dense<0.000000e+00> : vector<304x512xf32>
    %21 = tpu.matmul %18, %20, %cst_15 {dimension_numbers = #tpu.dot_dimension_numbers<[1], [0], [0], [1], [0, 0, 1, 1], [], []>} : vector<304x128xbf16>, vector<128x512xbf16>, vector<304x512xf32> -> vector<304x512xf32>
    %c2 = arith.constant 2 : index
    %c0_16 = arith.constant 0 : index
    %22 = vector.load %arg5[%c2, %c0_16] : memref<9x512xf32, #tpu.memory_space<vmem>>, vector<1x512xf32>
    %23 = vector.broadcast %22 : vector<1x512xf32> to vector<304x512xf32>
    %24 = arith.addf %21, %23 : vector<304x512xf32>
    %cst_17 = arith.constant 0.000000e+00 : f32
    %25 = vector.broadcast %cst_17 : f32 to vector<304x512xf32>
    %26 = arith.maximumf %24, %25 : vector<304x512xf32>
    %27 = arith.truncf %26 : vector<304x512xf32> to vector<304x512xbf16>
    %c1_18 = arith.constant 1 : index
    %c0_19 = arith.constant 0 : index
    %c0_20 = arith.constant 0 : index
    %28 = vector.load %arg3[%c1_18, %c0_19, %c0_20] : memref<3x512x128xbf16, #tpu.memory_space<vmem>>, vector<1x512x128xbf16>
    %29 = vector.shape_cast %28 : vector<1x512x128xbf16> to vector<512x128xbf16>
    %cst_21 = arith.constant dense<0.000000e+00> : vector<304x128xf32>
    %30 = tpu.matmul %27, %29, %cst_21 {dimension_numbers = #tpu.dot_dimension_numbers<[1], [0], [0], [1], [0, 0, 1, 1], [], []>} : vector<304x512xbf16>, vector<512x128xbf16>, vector<304x128xf32> -> vector<304x128xf32>
    %c3 = arith.constant 3 : index
    %c0_22 = arith.constant 0 : index
    %31 = vector.load %arg5[%c3, %c0_22] : memref<9x512xf32, #tpu.memory_space<vmem>>, vector<1x128xf32>
    %32 = vector.broadcast %31 : vector<1x128xf32> to vector<304x128xf32>
    %33 = arith.addf %30, %32 : vector<304x128xf32>
    %cst_23 = arith.constant 0.000000e+00 : f32
    %34 = vector.broadcast %cst_23 : f32 to vector<304x128xf32>
    %35 = arith.maximumf %33, %34 : vector<304x128xf32>
    %36 = arith.truncf %35 : vector<304x128xf32> to vector<304x128xbf16>
    %c1_24 = arith.constant 1 : index
    %c0_25 = arith.constant 0 : index
    %c0_26 = arith.constant 0 : index
    %37 = vector.load %arg4[%c1_24, %c0_25, %c0_26] : memref<3x128x512xbf16, #tpu.memory_space<vmem>>, vector<1x128x512xbf16>
    %38 = vector.shape_cast %37 : vector<1x128x512xbf16> to vector<128x512xbf16>
    %cst_27 = arith.constant dense<0.000000e+00> : vector<304x512xf32>
    %39 = tpu.matmul %36, %38, %cst_27 {dimension_numbers = #tpu.dot_dimension_numbers<[1], [0], [0], [1], [0, 0, 1, 1], [], []>} : vector<304x128xbf16>, vector<128x512xbf16>, vector<304x512xf32> -> vector<304x512xf32>
    %c4 = arith.constant 4 : index
    %c0_28 = arith.constant 0 : index
    %40 = vector.load %arg5[%c4, %c0_28] : memref<9x512xf32, #tpu.memory_space<vmem>>, vector<1x512xf32>
    %41 = vector.broadcast %40 : vector<1x512xf32> to vector<304x512xf32>
    %42 = arith.addf %39, %41 : vector<304x512xf32>
    %cst_29 = arith.constant 0.000000e+00 : f32
    %43 = vector.broadcast %cst_29 : f32 to vector<304x512xf32>
    %44 = arith.maximumf %42, %43 : vector<304x512xf32>
    %45 = arith.truncf %44 : vector<304x512xf32> to vector<304x512xbf16>
    %c2_30 = arith.constant 2 : index
    %c0_31 = arith.constant 0 : index
    %c0_32 = arith.constant 0 : index
    %46 = vector.load %arg3[%c2_30, %c0_31, %c0_32] : memref<3x512x128xbf16, #tpu.memory_space<vmem>>, vector<1x512x128xbf16>
    %47 = vector.shape_cast %46 : vector<1x512x128xbf16> to vector<512x128xbf16>
    %cst_33 = arith.constant dense<0.000000e+00> : vector<304x128xf32>
    %48 = tpu.matmul %45, %47, %cst_33 {dimension_numbers = #tpu.dot_dimension_numbers<[1], [0], [0], [1], [0, 0, 1, 1], [], []>} : vector<304x512xbf16>, vector<512x128xbf16>, vector<304x128xf32> -> vector<304x128xf32>
    %c5 = arith.constant 5 : index
    %c0_34 = arith.constant 0 : index
    %49 = vector.load %arg5[%c5, %c0_34] : memref<9x512xf32, #tpu.memory_space<vmem>>, vector<1x128xf32>
    %50 = vector.broadcast %49 : vector<1x128xf32> to vector<304x128xf32>
    %51 = arith.addf %48, %50 : vector<304x128xf32>
    %cst_35 = arith.constant 0.000000e+00 : f32
    %52 = vector.broadcast %cst_35 : f32 to vector<304x128xf32>
    %53 = arith.maximumf %51, %52 : vector<304x128xf32>
    %54 = arith.truncf %53 : vector<304x128xf32> to vector<304x128xbf16>
    %c2_36 = arith.constant 2 : index
    %c0_37 = arith.constant 0 : index
    %c0_38 = arith.constant 0 : index
    %55 = vector.load %arg4[%c2_36, %c0_37, %c0_38] : memref<3x128x512xbf16, #tpu.memory_space<vmem>>, vector<1x128x512xbf16>
    %56 = vector.shape_cast %55 : vector<1x128x512xbf16> to vector<128x512xbf16>
    %cst_39 = arith.constant dense<0.000000e+00> : vector<304x512xf32>
    %57 = tpu.matmul %54, %56, %cst_39 {dimension_numbers = #tpu.dot_dimension_numbers<[1], [0], [0], [1], [0, 0, 1, 1], [], []>} : vector<304x128xbf16>, vector<128x512xbf16>, vector<304x512xf32> -> vector<304x512xf32>
    %c6 = arith.constant 6 : index
    %c0_40 = arith.constant 0 : index
    %58 = vector.load %arg5[%c6, %c0_40] : memref<9x512xf32, #tpu.memory_space<vmem>>, vector<1x512xf32>
    %59 = vector.broadcast %58 : vector<1x512xf32> to vector<304x512xf32>
    %60 = arith.addf %57, %59 : vector<304x512xf32>
    %cst_41 = arith.constant 0.000000e+00 : f32
    %61 = vector.broadcast %cst_41 : f32 to vector<304x512xf32>
    %62 = arith.maximumf %60, %61 : vector<304x512xf32>
    %c7 = arith.constant 7 : index
    %c0_42 = arith.constant 0 : index
    %63 = vector.load %arg5[%c7, %c0_42] : memref<9x512xf32, #tpu.memory_space<vmem>>, vector<1x512xf32>
    %64 = vector.broadcast %63 : vector<1x512xf32> to vector<304x512xf32>
    %65 = arith.mulf %62, %64 : vector<304x512xf32>
    %cst_43 = arith.constant dense<0.000000e+00> : vector<304xf32>
    %66 = vector.multi_reduction <add>, %65, %cst_43 [1] : vector<304x512xf32> to vector<304xf32>
    %67 = vector.shape_cast %66 : vector<304xf32> to vector<304x1xf32>
    %c8 = arith.constant 8 : index
    %c0_44 = arith.constant 0 : index
    %68 = vector.load %arg5[%c8, %c0_44] : memref<9x512xf32, #tpu.memory_space<vmem>>, vector<1x1xf32>
    %69 = vector.broadcast %68 : vector<1x1xf32> to vector<304x1xf32>
    %70 = arith.addf %67, %69 : vector<304x1xf32>
    %71 = vector.shape_cast %70 : vector<304x1xf32> to vector<1x1x304xf32>
    %c0_45 = arith.constant 0 : index
    %c0_46 = arith.constant 0 : index
    %c0_47 = arith.constant 0 : index
    %72 = vector.load %arg6[%c0_45, %c0_46, %c0_47] : memref<1x1x304xf32, #tpu.memory_space<vmem>>, vector<1x1x304xf32>
    tpu.vector_store %arg6[%c0_45, %c0_46, %c0_47], %71 {strides = array<i32>} : memref<1x1x304xf32, #tpu.memory_space<vmem>>, vector<1x1x304xf32>,
    return
  }
  func.func @transform_0(%arg0: i32) -> (i32, i32) {
    %c0_i32 = arith.constant 0 : i32
    %c0_i32_0 = arith.constant 0 : i32
    return %arg0, %c0_i32 : i32, i32
  }
  func.func @transform_1(%arg0: i32) -> (i32, i32) {
    %c0_i32 = arith.constant 0 : i32
    %c0_i32_0 = arith.constant 0 : i32
    %c0_i32_1 = arith.constant 0 : i32
    return %c0_i32, %c0_i32_0 : i32, i32
  }
  func.func @transform_2(%arg0: i32) -> (i32, i32, i32) {
    %c0_i32 = arith.constant 0 : i32
    %c0_i32_0 = arith.constant 0 : i32
    %c0_i32_1 = arith.constant 0 : i32
    %c0_i32_2 = arith.constant 0 : i32
    return %c0_i32, %c0_i32_0, %c0_i32_1 : i32, i32, i32
  }
  func.func @transform_3(%arg0: i32) -> (i32, i32, i32) {
    %c0_i32 = arith.constant 0 : i32
    %c0_i32_0 = arith.constant 0 : i32
    %c0_i32_1 = arith.constant 0 : i32
    %c0_i32_2 = arith.constant 0 : i32
    return %c0_i32, %c0_i32_0, %c0_i32_1 : i32, i32, i32
  }
  func.func @transform_4(%arg0: i32) -> (i32, i32) {
    %c0_i32 = arith.constant 0 : i32
    %c0_i32_0 = arith.constant 0 : i32
    %c0_i32_1 = arith.constant 0 : i32
    return %c0_i32, %c0_i32_0 : i32, i32
  }
  func.func @transform_5(%arg0: i32) -> (i32, i32, i32) {
    %c0_i32 = arith.constant 0 : i32
    %c0_i32_0 = arith.constant 0 : i32
    %c0_i32_1 = arith.constant 0 : i32
    return %arg0, %c0_i32, %c0_i32_0 : i32, i32, i32
  }
}

</mosaic_0001>

<llo_original>
// kernel: iou_fit_fc3.1
$region0: #{iou_fit_fc3.1}
  #allocation0 [shape = 'u32[]', space=smem, size = 0x4, offset = 0x4, fixed_abs, tag = 'smem constant byte address 0x4 - core index']
  #allocation1 [shape = 'u32[144,128]{1,0:T(1,128)}', space=vmem, size = 0x12000, scoped, tag = 'internal scratch']
  %s0 = inlined_call_operand.vmem [shape: f32[608,8], index: 0, kind: input, shape index: {}]
  %s1 = inlined_call_operand.vmem [shape: bf16[8,512], index: 1, kind: input, shape index: {}]
  %s2 = inlined_call_operand.vmem [shape: bf16[3,512,128], index: 2, kind: input, shape index: {}]
  %s3 = inlined_call_operand.vmem [shape: bf16[3,128,512], index: 3, kind: input, shape index: {}]
  %s4 = inlined_call_operand.vmem [shape: f32[9,512], index: 4, kind: input, shape index: {}]
  %s5 = inlined_call_operand.vmem [shape: f32[2,1,304], index: 5, kind: output, shape index: {}]
  %s6 = sld [smem:[#allocation0]]
  $region53: #{iou_fit_fc3.1} parent=0
    _
  %s8 = ssub.s32 1, %s6
  %s9 = scalar_select 0, %s8, %s6
  loop: start=0, step=1, limit=4
  $region2: #{iou_fit_fc3.1} parent=0 // loop_pre_header
    _
  $region3: #{iou_fit_fc3.1} parent=0 // loop_header
    %s11 = sphi 0, %s15
    %p12 = scmp.ge.s32.totalorder %s11, 4
    %s21 = sphi 0, %s23
    %s24 = sphi 0, %s21
    %s25 = sphi 0, %s24
    %s41 = sphi 0, %s25
    %s45 = sphi 0, %s45
    %s47 = sphi 0, %s45
    %s48 = sphi 0, %s47
    %s62 = sphi 0, %s48
    %s66 = sphi 0, %s66
    %s68 = sphi 0, %s66
    %s69 = sphi 0, %s68
    %s83 = sphi 0, %s69
    %s87 = sphi 0, %s87
    %s89 = sphi 0, %s87
    %s90 = sphi 0, %s89
    %s104 = sphi 0, %s90
    %s108 = sphi 0, %s108
    %s110 = sphi 0, %s108
    %s111 = sphi 0, %s110
    %s125 = sphi 0, %s111
    %s131 = sphi 0, %s133
    %s134 = sphi 0, %s131
    %s135 = sphi 0, %s134
    %s151 = sphi 0, %s135
  $region4: #{iou_fit_fc3.1} parent=0 // loop_header_branch
    %14 = sbr.rel (%p12) target = $region8
  $region5: #{iou_fit_fc3.1} parent=0 // loop_body
    %s16 = ssub.s32 %s11, 1
    %s17 = ssub.s32 %s11, 2
    %s18 = sadd.s32 %s11, 1
    %s19 = ssub.s32 %s11, %s18
    %p20 = scmp.eq.s32.totalorder %s19, 0
    %s22 = sadd.s32 %s21, 1
    %s23 = scalar_select %p20, %s21, %s22
    %p26 = pneg %p20
    %p27 = scmp.eq.s32.totalorder %s11, 1
    %p28 = por %p26, %p27
    %p29 = scmp.ne.s32.totalorder %s21, %s24
    %p30 = scmp.eq.s32.totalorder %s11, 0
    %p31 = por %p29, %p30
    %p32 = scmp.ne.s32.totalorder %s21, %s24
    %p33 = scmp.eq.s32.totalorder %s16, 1
    %p34 = por %p32, %p33
    %p35 = scmp.ne.s32.totalorder %s24, %s25
    %p36 = scmp.eq.s32.totalorder %s16, 0
    %p37 = por %p35, %p36
    %p38 = scmp.ne.s32.totalorder %s24, %s25
    %p39 = scmp.eq.s32.totalorder %s17, 1
    %p40 = por %p38, %p39
    %p42 = scmp.ne.s32.totalorder %s25, %s41
    %p43 = scmp.eq.s32.totalorder %s17, 0
    %p44 = por %p42, %p43
    %s46 = sadd.s32 %s45, 1
    %p49 = scmp.eq.s32.totalorder %s11, 1
    %p50 = scmp.ne.s32.totalorder %s45, %s47
    %p51 = scmp.eq.s32.totalorder %s11, 0
    %p52 = por %p50, %p51
    %p53 = scmp.ne.s32.totalorder %s45, %s47
    %p54 = scmp.eq.s32.totalorder %s16, 1
    %p55 = por %p53, %p54
    %p56 = scmp.ne.s32.totalorder %s47, %s48
    %p57 = scmp.eq.s32.totalorder %s16, 0
    %p58 = por %p56, %p57
    %p59 = scmp.ne.s32.totalorder %s47, %s48
    %p60 = scmp.eq.s32.totalorder %s17, 1
    %p61 = por %p59, %p60
    %p63 = scmp.ne.s32.totalorder %s48, %s62
    %p64 = scmp.eq.s32.totalorder %s17, 0
    %p65 = por %p63, %p64
    %s67 = sadd.s32 %s66, 1
    %p70 = scmp.eq.s32.totalorder %s11, 1
    %p71 = scmp.ne.s32.totalorder %s66, %s68
    %p72 = scmp.eq.s32.totalorder %s11, 0
    %p73 = por %p71, %p72
    %p74 = scmp.ne.s32.totalorder %s66, %s68
    %p75 = scmp.eq.s32.totalorder %s16, 1
    %p76 = por %p74, %p75
    %p77 = scmp.ne.s32.totalorder %s68, %s69
    %p78 = scmp.eq.s32.totalorder %s16, 0
    %p79 = por %p77, %p78
    %p80 = scmp.ne.s32.totalorder %s68, %s69
    %p81 = scmp.eq.s32.totalorder %s17, 1
    %p82 = por %p80, %p81
    %p84 = scmp.ne.s32.totalorder %s69, %s83
    %p85 = scmp.eq.s32.totalorder %s17, 0
    %p86 = por %p84, %p85
    %s88 = sadd.s32 %s87, 1
    %p91 = scmp.eq.s32.totalorder %s11, 1
    %p92 = scmp.ne.s32.totalorder %s87, %s89
    %p93 = scmp.eq.s32.totalorder %s11, 0
    %p94 = por %p92, %p93
    %p95 = scmp.ne.s32.totalorder %s87, %s89
    %p96 = scmp.eq.s32.totalorder %s16, 1
    %p97 = por %p95, %p96
    %p98 = scmp.ne.s32.totalorder %s89, %s90
    %p99 = scmp.eq.s32.totalorder %s16, 0
    %p100 = por %p98, %p99
    %p101 = scmp.ne.s32.totalorder %s89, %s90
    %p102 = scmp.eq.s32.totalorder %s17, 1
    %p103 = por %p101, %p102
    %p105 = scmp.ne.s32.totalorder %s90, %s104
    %p106 = scmp.eq.s32.totalorder %s17, 0
    %p107 = por %p105, %p106
    %s109 = sadd.s32 %s108, 1
    %p112 = scmp.eq.s32.totalorder %s11, 1
    %p113 = scmp.ne.s32.totalorder %s108, %s110
    %p114 = scmp.eq.s32.totalorder %s11, 0
    %p115 = por %p113, %p114
    %p116 = scmp.ne.s32.totalorder %s108, %s110
    %p117 = scmp.eq.s32.totalorder %s16, 1
    %p118 = por %p116, %p117
    %p119 = scmp.ne.s32.totalorder %s110, %s111
    %p120 = scmp.eq.s32.totalorder %s16, 0
    %p121 = por %p119, %p120
    %p122 = scmp.ne.s32.totalorder %s110, %s111
    %p123 = scmp.eq.s32.totalorder %s17, 1
    %p124 = por %p122, %p123
    %p126 = scmp.ne.s32.totalorder %s111, %s125
    %p127 = scmp.eq.s32.totalorder %s17, 0
    %p128 = por %p126, %p127
    %s129 = ssub.s32 %s11, %s18
    %p130 = scmp.eq.s32.totalorder %s129, 0
    %s132 = sadd.s32 %s131, 1
    %s133 = scalar_select %p130, %s131, %s132
    %p136 = pneg %p130
    %p137 = scmp.eq.s32.totalorder %s11, 1
    %p138 = por %p136, %p137
    %p139 = scmp.ne.s32.totalorder %s131, %s134
    %p140 = scmp.eq.s32.totalorder %s11, 0
    %p141 = por %p139, %p140
    %p142 = scmp.ne.s32.totalorder %s131, %s134
    %p143 = scmp.eq.s32.totalorder %s16, 1
    %p144 = por %p142, %p143
    %p145 = scmp.ne.s32.totalorder %s134, %s135
    %p146 = scmp.eq.s32.totalorder %s16, 0
    %p147 = por %p145, %p146
    %p148 = scmp.ne.s32.totalorder %s134, %s135
    %p149 = scmp.eq.s32.totalorder %s17, 1
    %p150 = por %p148, %p149
    %p152 = scmp.ne.s32.totalorder %s135, %s151
    %p153 = scmp.eq.s32.totalorder %s17, 0
    %p154 = por %p152, %p153
    %p155 = scmp.le.s32.totalorder 1, %s11
    %p156 = scmp.lt.s32.totalorder %s11, 3
    %p157 = pnand %p155, %p156
    %p158 = pneg %p157
    // Predicated region
    $region9: #{iou_fit_fc3.1} parent=5 // pred_check
      _
    $region10: #{iou_fit_fc3.1} parent=5 // pred_check_branch
      %160 = sbr.rel (%p157) target = $region12
    $region11: #{iou_fit_fc3.1} parent=5 // pred_region
      %s161 = ssub.s32 %s11, 1
      // Predicated region
      $region13: #{iou_fit_fc3.1} parent=11 // pred_check
        %p162 = pneg %p58
      $region14: #{iou_fit_fc3.1} parent=11 // pred_check_branch
        %164 = sbr.rel (%p162) target = $region16
      $region15: #{iou_fit_fc3.1} parent=11 // pred_region
        _
      $region16: #{iou_fit_fc3.1} parent=11 // pred_fallthru
        _
      // Predicated region
      $region17: #{iou_fit_fc3.1} parent=11 // pred_check
        %p165 = pneg %p79
      $region18: #{iou_fit_fc3.1} parent=11 // pred_check_branch
        %167 = sbr.rel (%p165) target = $region20
      $region19: #{iou_fit_fc3.1} parent=11 // pred_region
        _
      $region20: #{iou_fit_fc3.1} parent=11 // pred_fallthru
        _
      // Predicated region
      $region21: #{iou_fit_fc3.1} parent=11 // pred_check
        %p168 = pneg %p100
      $region22: #{iou_fit_fc3.1} parent=11 // pred_check_branch
        %170 = sbr.rel (%p168) target = $region24
      $region23: #{iou_fit_fc3.1} parent=11 // pred_region
        _
      $region24: #{iou_fit_fc3.1} parent=11 // pred_fallthru
        _
      // Predicated region
      $region25: #{iou_fit_fc3.1} parent=11 // pred_check
        %p171 = pneg %p121
      $region26: #{iou_fit_fc3.1} parent=11 // pred_check_branch
        %173 = sbr.rel (%p171) target = $region28
      $region27: #{iou_fit_fc3.1} parent=11 // pred_region
        _
      $region28: #{iou_fit_fc3.1} parent=11 // pred_fallthru
        _
    $region12: #{iou_fit_fc3.1} parent=5 // pred_fallthru
      _
    %p174 = scmp.lt.s32.totalorder %s11, 2
    // Predicated region
    $region29: #{iou_fit_fc3.1} parent=5 // pred_check
      %p175 = pneg %p174
    $region30: #{iou_fit_fc3.1} parent=5 // pred_check_branch
      %177 = sbr.rel (%p175) target = $region32
    $region31: #{iou_fit_fc3.1} parent=5 // pred_region
      // Predicated region
      $region33: #{iou_fit_fc3.1} parent=31 // pred_check
        %p178 = pneg %p31
      $region34: #{iou_fit_fc3.1} parent=31 // pred_check_branch
        %180 = sbr.rel (%p178) target = $region36
      $region35: #{iou_fit_fc3.1} parent=31 // pred_region
        %s181 = smul.u32 38, %s11
        %p182 = scmp.lt.s32.totalorder %s181, 75
        %s183 = scalar_select %p182, %s181, 75
        %s184 = smul.addr %s183, 8
        %s185 = scalar_lea.vmem %s0, %s184
        %s186 = smul.u32 38, %s11
      $region36: #{iou_fit_fc3.1} parent=31 // pred_fallthru
        _
    $region32: #{iou_fit_fc3.1} parent=5 // pred_fallthru
      _
    %p187 = scmp.le.s32.totalorder 1, %s11
    %p188 = scmp.lt.s32.totalorder %s11, 3
    %p189 = pnand %p187, %p188
    %p190 = pneg %p189
    // Predicated region
    $region37: #{iou_fit_fc3.1} parent=5 // pred_check
      _
    $region38: #{iou_fit_fc3.1} parent=5 // pred_check_branch
      %192 = sbr.rel (%p189) target = $region40
    $region39: #{iou_fit_fc3.1} parent=5 // pred_region
      %s193 = ssub.s32 %s11, 1
      %s194 = smul.u32 38, %s16
      %p195 = scmp.lt.s32.totalorder %s194, 75
      %s196 = scalar_select %p195, %s194, 75
      %s197 = smul.addr %s196, 8
      %s198 = scalar_lea.vmem %s0, %s197
      %p199 = pneg %p37
      %p200 = pneg %p34
      %p201 = pneg %p58
      %p202 = pneg %p55
      %p203 = pneg %p79
      %p204 = pneg %p76
      %p205 = pneg %p100
      %p206 = pneg %p97
      %p207 = pneg %p121
      %p208 = pneg %p118
      %p209 = pneg %p147
      %p210 = pneg %p144
      %p211 = scmp.lt.s32.totalorder %s16, 1
      %s212 = scalar_select %p211, %s16, 1
      %s213 = smul.addr %s212, 3
      %s214 = scalar_lea.vmem %s5, %s213
      %s215 = smul.u32 38, %s16
      %p216 = scmp.lt.s32.totalorder %s215, 75
      %s217 = scalar_select %p216, %s215, 75
      %s218 = smul.addr %s217, 8
      %s219 = scalar_lea.vmem %s0, %s218
      %s220 = smul.u32 38, %s16
      %p221 = scmp.lt.s32.totalorder %s16, 1
      %s222 = scalar_select %p221, %s16, 1
      %s223 = smul.addr %s222, 3
      %s224 = scalar_lea.vmem %s5, %s223
      %v226 = vld [vmem:[%s219] sm:$0xff]
      %v227 = vld [vmem:[%s219 + $0x8] sm:$0xff]
      %v228 = vld [vmem:[%s219 + $0x10] sm:$0xff]
      %v229 = vld [vmem:[%s219 + $0x18] sm:$0xff]
      %v230 = vld [vmem:[%s219 + $0x20] sm:$0xff]
      %v231 = vld [vmem:[%s219 + $0x28] sm:$0xff]
      %v232 = vld [vmem:[%s219 + $0x30] sm:$0xff]
      %v233 = vld [vmem:[%s219 + $0x38] sm:$0xff]
      %v234 = vld [vmem:[%s219 + $0x40] sm:$0xff]
      %v235 = vld [vmem:[%s219 + $0x48] sm:$0xff]
      %v236 = vld [vmem:[%s219 + $0x50] sm:$0xff]
      %v237 = vld [vmem:[%s219 + $0x58] sm:$0xff]
      %v238 = vld [vmem:[%s219 + $0x60] sm:$0xff]
      %v239 = vld [vmem:[%s219 + $0x68] sm:$0xff]
      %v240 = vld [vmem:[%s219 + $0x70] sm:$0xff]
      %v241 = vld [vmem:[%s219 + $0x78] sm:$0xff]
      %v242 = vld [vmem:[%s219 + $0x80] sm:$0xff]
      %v243 = vld [vmem:[%s219 + $0x88] sm:$0xff]
      %v244 = vld [vmem:[%s219 + $0x90] sm:$0xff]
      %v245 = vld [vmem:[%s219 + $0x98] sm:$0xff]
      %v246 = vld [vmem:[%s219 + $0xa0] sm:$0xff]
      %v247 = vld [vmem:[%s219 + $0xa8] sm:$0xff]
      %v248 = vld [vmem:[%s219 + $0xb0] sm:$0xff]
      %v249 = vld [vmem:[%s219 + $0xb8] sm:$0xff]
      %v250 = vld [vmem:[%s219 + $0xc0] sm:$0xff]
      %v251 = vld [vmem:[%s219 + $0xc8] sm:$0xff]
      %v252 = vld [vmem:[%s219 + $0xd0] sm:$0xff]
      %v253 = vld [vmem:[%s219 + $0xd8] sm:$0xff]
      %v254 = vld [vmem:[%s219 + $0xe0] sm:$0xff]
      %v255 = vld [vmem:[%s219 + $0xe8] sm:$0xff]
      %v256 = vld [vmem:[%s219 + $0xf0] sm:$0xff]
      %v257 = vld [vmem:[%s219 + $0xf8] sm:$0xff]
      %v258 = vld [vmem:[%s219 + $0x100] sm:$0xff]
      %v259 = vld [vmem:[%s219 + $0x108] sm:$0xff]
      %v260 = vld [vmem:[%s219 + $0x110] sm:$0xff]
      %v261 = vld [vmem:[%s219 + $0x118] sm:$0xff]
      %v262 = vld [vmem:[%s219 + $0x120] sm:$0xff]
      %v263 = vld [vmem:[%s219 + $0x128] sm:$0xff]
      %v264 = vpack.c.bf16 %v227, %v226
      %v265 = vpack.c.bf16 %v229, %v228
      %v266 = vpack.c.bf16 %v231, %v230
      %v267 = vpack.c.bf16 %v233, %v232
      %v268 = vpack.c.bf16 %v235, %v234
      %v269 = vpack.c.bf16 %v237, %v236
      %v270 = vpack.c.bf16 %v239, %v238
      %v271 = vpack.c.bf16 %v241, %v240
      %v272 = vpack.c.bf16 %v243, %v242
      %v273 = vpack.c.bf16 %v245, %v244
      %v274 = vpack.c.bf16 %v247, %v246
      %v275 = vpack.c.bf16 %v249, %v248
      %v276 = vpack.c.bf16 %v251, %v250
      %v277 = vpack.c.bf16 %v253, %v252
      %v278 = vpack.c.bf16 %v255, %v254
      %v279 = vpack.c.bf16 %v257, %v256
      %v280 = vpack.c.bf16 %v259, %v258
      %v281 = vpack.c.bf16 %v261, %v260
      %v282 = vpack.c.bf16 %v263, %v262
      %v283 = vld [vmem:[%s1] sm:$0xff]
      %v284 = vld [vmem:[%s1 + $0x8] sm:$0xff]
      %v285 = vld [vmem:[%s4] ss:$8 sm:$0xf]
      %v287 = vlaneseq
      %v288 = vshrl.u32 %v287, 7
      %v289 = vsub.s32 0, %v288
      %v290 = vrot.slane %v285, %v289
      %v291 = vlaneseq
      %v292 = vshrl.u32 %v291, 7
      %v293 = vsub.s32 1, %v292
      %v294 = vrot.slane %v285, %v293
      %v295 = vlaneseq
      %v296 = vshrl.u32 %v295, 7
      %v297 = vsub.s32 2, %v296
      %v298 = vrot.slane %v285, %v297
      %v299 = vlaneseq
      %v300 = vshrl.u32 %v299, 7
      %v301 = vsub.s32 3, %v300
      %v302 = vrot.slane %v285, %v301
      %v309 = vunpack.c.l.b16 %v283
      %v310 = vunpack.c.h.b16 %v283
      %v311 = vunpack.c.l.b16 %v284
      %v312 = vunpack.c.h.b16 %v284
      %v313 = vpack.c.b16 %v309, %v309
      %v314 = vpack.c.b16 %v310, %v310
      %v315 = vpack.c.b16 %v311, %v311
      %v316 = vpack.c.b16 %v312, %v312
      %vm317 = vcmask 64512
      %v319 = vsel %vm317, %v264, 0
      %v322 = vsel %vm317, %v265, 0
      %v325 = vsel %vm317, %v266, 0
      %v328 = vsel %vm317, %v267, 0
      %v331 = vsel %vm317, %v268, 0
      %v334 = vsel %vm317, %v269, 0
      %v337 = vsel %vm317, %v270, 0
      %v340 = vsel %vm317, %v271, 0
      %v343 = vsel %vm317, %v272, 0
      %v346 = vsel %vm317, %v273, 0
      %v349 = vsel %vm317, %v274, 0
      %v352 = vsel %vm317, %v275, 0
      %v355 = vsel %vm317, %v276, 0
      %v358 = vsel %vm317, %v277, 0
      %v361 = vsel %vm317, %v278, 0
      %v364 = vsel %vm317, %v279, 0
      %v367 = vsel %vm317, %v280, 0
      %v370 = vsel %vm317, %v281, 0
      %v373 = vsel %vm317, %v282, 0
      %vm375 = vcmask 1043456
      %v377 = vsel %vm375, %v313, 0
      %v380 = vsel %vm375, %v314, 0
      %v383 = vsel %vm375, %v315, 0
      %v386 = vsel %vm375, %v316, 0
      %388 = vmatprep.subr.bf16.mxu0 %v380
      %389 = vmatpush1.bf16.msra.mxu0 %v377
      %390 = vmatprep.subr.bf16.mxu0 0
      %391 = vmatpush1.bf16.msra.mxu0 0
      %392 = vmatprep.subr.bf16.mxu0 0
      %393 = vmatpush1.bf16.msra.mxu0 0
      %394 = vmatprep.subr.bf16.mxu0 0
      %395 = vmatpush1.bf16.msra.mxu0 0
      %396 = vmatprep.subr.bf16.mxu0 0
      %397 = vmatpush1.bf16.msra.mxu0 0
      %398 = vmatprep.subr.bf16.mxu0 0
      %399 = vmatpush1.bf16.msra.mxu0 0
      %400 = vmatprep.subr.bf16.mxu0 0
      %401 = vmatpush1.bf16.msra.mxu0 0
      %402 = vmatprep.subr.bf16.mxu0 0
      %403 = vmatpush1.bf16.msra.mxu0 0
      %404 = vmatprep.subr.bf16.mxu0 0
      %405 = vmatpush1.bf16.msra.mxu0 0
      %406 = vmatprep.subr.bf16.mxu0 0
      %407 = vmatpush1.bf16.msra.mxu0 0
      %408 = vmatprep.subr.bf16.mxu0 0
      %409 = vmatpush1.bf16.msra.mxu0 0
      %410 = vmatprep.subr.bf16.mxu0 0
      %411 = vmatpush1.bf16.msra.mxu0 0
      %412 = vmatprep.subr.bf16.mxu0 0
      %413 = vmatpush1.bf16.msra.mxu0 0
      %414 = vmatprep.subr.bf16.mxu0 0
      %415 = vmatpush1.bf16.msra.mxu0 0
      %416 = vmatprep.subr.bf16.mxu0 0
      %417 = vmatpush1.bf16.msra.mxu0 0
      %418 = vmatprep.subr.bf16.mxu0 0
      %419 = vmatpush1.bf16.msra.mxu0 0
      %420 = vmatprep.mubr.bf16.mxu0 0
      %421 = vmatmul.mubr.bf16.gmra.mrb[0].mxu0 %v319
      %v422 = vpop.f32.mrb[0].mxu0
      %v423 = vadd.f32 %v290, %v422
      %v424 = vpop.f32.mrb[0].mxu0
      %v425 = vadd.f32 %v294, %v424
      %v426 = vpop.f32.mrb[0].mxu0
      %v427 = vadd.f32 %v290, %v426
      %v428 = vpop.f32.mrb[0].mxu0
      %v429 = vadd.f32 %v294, %v428
      %430 = vmatprep.mubr.bf16.mxu0 0
      %431 = vmatmul.mubr.bf16.gmra.mrb[0].mxu0 %v322
      %v432 = vpop.f32.mrb[0].mxu0
      %v433 = vadd.f32 %v290, %v432
      %v434 = vpop.f32.mrb[0].mxu0
      %v435 = vadd.f32 %v294, %v434
      %v436 = vpop.f32.mrb[0].mxu0
      %v437 = vadd.f32 %v290, %v436
      %v438 = vpop.f32.mrb[0].mxu0
      %v439 = vadd.f32 %v294, %v438
      %440 = vmatprep.mubr.bf16.mxu0 0
      %441 = vmatmul.mubr.bf16.gmra.mrb[0].mxu0 %v325
      %v442 = vpop.f32.mrb[0].mxu0
      %v443 = vadd.f32 %v290, %v442
      %v444 = vpop.f32.mrb[0].mxu0
      %v445 = vadd.f32 %v294, %v444
      %v446 = vpop.f32.mrb[0].mxu0
      %v447 = vadd.f32 %v290, %v446
      %v448 = vpop.f32.mrb[0].mxu0
      %v449 = vadd.f32 %v294, %v448
      %450 = vmatprep.mubr.bf16.mxu0 0
      %451 = vmatmul.mubr.bf16.gmra.mrb[0].mxu0 %v328
      %v452 = vpop.f32.mrb[0].mxu0
      %v453 = vadd.f32 %v290, %v452
      %v454 = vpop.f32.mrb[0].mxu0
      %v455 = vadd.f32 %v294, %v454
      %v456 = vpop.f32.mrb[0].mxu0
      %v457 = vadd.f32 %v290, %v456
      %v458 = vpop.f32.mrb[0].mxu0
      %v459 = vadd.f32 %v294, %v458
      %460 = vmatprep.mubr.bf16.mxu0 0
      %461 = vmatmul.mubr.bf16.gmra.mrb[0].mxu0 %v331
      %v462 = vpop.f32.mrb[0].mxu0
      %v463 = vadd.f32 %v290, %v462
      %v464 = vpop.f32.mrb[0].mxu0
      %v465 = vadd.f32 %v294, %v464
      %v466 = vpop.f32.mrb[0].mxu0
      %v467 = vadd.f32 %v290, %v466
      %v468 = vpop.f32.mrb[0].mxu0
      %v469 = vadd.f32 %v294, %v468
      %470 = vmatprep.mubr.bf16.mxu0 0
      %471 = vmatmul.mubr.bf16.gmra.mrb[0].mxu0 %v334
      %v472 = vpop.f32.mrb[0].mxu0
      %v473 = vadd.f32 %v290, %v472
      %v474 = vpop.f32.mrb[0].mxu0
      %v475 = vadd.f32 %v294, %v474
      %v476 = vpop.f32.mrb[0].mxu0
      %v477 = vadd.f32 %v290, %v476
      %v478 = vpop.f32.mrb[0].mxu0
      %v479 = vadd.f32 %v294, %v478
      %480 = vmatprep.mubr.bf16.mxu0 0
      %481 = vmatmul.mubr.bf16.gmra.mrb[0].mxu0 %v337
      %v482 = vpop.f32.mrb[0].mxu0
      %v483 = vadd.f32 %v290, %v482
      %v484 = vpop.f32.mrb[0].mxu0
      %v485 = vadd.f32 %v294, %v484
      %v486 = vpop.f32.mrb[0].mxu0
      %v487 = vadd.f32 %v290, %v486
      %v488 = vpop.f32.mrb[0].mxu0
      %v489 = vadd.f32 %v294, %v488
      %490 = vmatprep.mubr.bf16.mxu0 0
      %491 = vmatmul.mubr.bf16.gmra.mrb[0].mxu0 %v340
      %v492 = vpop.f32.mrb[0].mxu0
      %v493 = vadd.f32 %v290, %v492
      %v494 = vpop.f32.mrb[0].mxu0
      %v495 = vadd.f32 %v294, %v494
      %v496 = vpop.f32.mrb[0].mxu0
      %v497 = vadd.f32 %v290, %v496
      %v498 = vpop.f32.mrb[0].mxu0
      %v499 = vadd.f32 %v294, %v498
      %500 = vmatprep.mubr.bf16.mxu0 0
      %501 = vmatmul.mubr.bf16.gmra.mrb[0].mxu0 %v343
      %v502 = vpop.f32.mrb[0].mxu0
      %v503 = vadd.f32 %v290, %v502
      %v504 = vpop.f32.mrb[0].mxu0
      %v505 = vadd.f32 %v294, %v504
      %v506 = vpop.f32.mrb[0].mxu0
      %v507 = vadd.f32 %v290, %v506
      %v508 = vpop.f32.mrb[0].mxu0
      %v509 = vadd.f32 %v294, %v508
      %510 = vmatprep.mubr.bf16.mxu0 0
      %511 = vmatmul.mubr.bf16.gmra.mrb[0].mxu0 %v346
      %v512 = vpop.f32.mrb[0].mxu0
      %v513 = vadd.f32 %v290, %v512
      %v514 = vpop.f32.mrb[0].mxu0
      %v515 = vadd.f32 %v294, %v514
      %v516 = vpop.f32.mrb[0].mxu0
      %v517 = vadd.f32 %v290, %v516
      %v518 = vpop.f32.mrb[0].mxu0
      %v519 = vadd.f32 %v294, %v518
      %520 = vmatprep.mubr.bf16.mxu0 0
      %521 = vmatmul.mubr.bf16.gmra.mrb[0].mxu0 %v349
      %v522 = vpop.f32.mrb[0].mxu0
      %v523 = vadd.f32 %v290, %v522
      %v524 = vpop.f32.mrb[0].mxu0
      %v525 = vadd.f32 %v294, %v524
      %v526 = vpop.f32.mrb[0].mxu0
      %v527 = vadd.f32 %v290, %v526
      %v528 = vpop.f32.mrb[0].mxu0
      %v529 = vadd.f32 %v294, %v528
      %530 = vmatprep.mubr.bf16.mxu0 0
      %531 = vmatmul.mubr.bf16.gmra.mrb[0].mxu0 %v352
      %v532 = vpop.f32.mrb[0].mxu0
      %v533 = vadd.f32 %v290, %v532
      %v534 = vpop.f32.mrb[0].mxu0
      %v535 = vadd.f32 %v294, %v534
      %v536 = vpop.f32.mrb[0].mxu0
      %v537 = vadd.f32 %v290, %v536
      %v538 = vpop.f32.mrb[0].mxu0
      %v539 = vadd.f32 %v294, %v538
      %540 = vmatprep.mubr.bf16.mxu0 0
      %541 = vmatmul.mubr.bf16.gmra.mrb[0].mxu0 %v355
      %v542 = vpop.f32.mrb[0].mxu0
      %v543 = vadd.f32 %v290, %v542
      %v544 = vpop.f32.mrb[0].mxu0
      %v545 = vadd.f32 %v294, %v544
      %v546 = vpop.f32.mrb[0].mxu0
      %v547 = vadd.f32 %v290, %v546
      %v548 = vpop.f32.mrb[0].mxu0
      %v549 = vadd.f32 %v294, %v548
      %550 = vmatprep.mubr.bf16.mxu0 0
      %551 = vmatmul.mubr.bf16.gmra.mrb[0].mxu0 %v358
      %v552 = vpop.f32.mrb[0].mxu0
      %v553 = vadd.f32 %v290, %v552
      %v554 = vpop.f32.mrb[0].mxu0
      %v555 = vadd.f32 %v294, %v554
      %v556 = vpop.f32.mrb[0].mxu0
      %v557 = vadd.f32 %v290, %v556
      %v558 = vpop.f32.mrb[0].mxu0
      %v559 = vadd.f32 %v294, %v558
      %560 = vmatprep.mubr.bf16.mxu0 0
      %561 = vmatmul.mubr.bf16.gmra.mrb[0].mxu0 %v361
      %v562 = vpop.f32.mrb[0].mxu0
      %v563 = vadd.f32 %v290, %v562
      %v564 = vpop.f32.mrb[0].mxu0
      %v565 = vadd.f32 %v294, %v564
      %v566 = vpop.f32.mrb[0].mxu0
      %v567 = vadd.f32 %v290, %v566
      %v568 = vpop.f32.mrb[0].mxu0
      %v569 = vadd.f32 %v294, %v568
      %570 = vmatprep.mubr.bf16.mxu0 0
      %571 = vmatmul.mubr.bf16.gmra.mrb[0].mxu0 %v364
      %v572 = vpop.f32.mrb[0].mxu0
      %v573 = vadd.f32 %v290, %v572
      %v574 = vpop.f32.mrb[0].mxu0
      %v575 = vadd.f32 %v294, %v574
      %v576 = vpop.f32.mrb[0].mxu0
      %v577 = vadd.f32 %v290, %v576
      %v578 = vpop.f32.mrb[0].mxu0
      %v579 = vadd.f32 %v294, %v578
      %580 = vmatprep.mubr.bf16.mxu0 0
      %581 = vmatmul.mubr.bf16.gmra.mrb[0].mxu0 %v367
      %v582 = vpop.f32.mrb[0].mxu0
      %v583 = vadd.f32 %v290, %v582
      %v584 = vpop.f32.mrb[0].mxu0
      %v585 = vadd.f32 %v294, %v584
      %v586 = vpop.f32.mrb[0].mxu0
      %v587 = vadd.f32 %v290, %v586
      %v588 = vpop.f32.mrb[0].mxu0
      %v589 = vadd.f32 %v294, %v588
      %590 = vmatprep.mubr.bf16.mxu0 0
      %591 = vmatmul.mubr.bf16.gmra.mrb[0].mxu0 %v370
      %v592 = vpop.f32.mrb[0].mxu0
      %v593 = vadd.f32 %v290, %v592
      %v594 = vpop.f32.mrb[0].mxu0
      %v595 = vadd.f32 %v294, %v594
      %v596 = vpop.f32.mrb[0].mxu0
      %v597 = vadd.f32 %v290, %v596
      %v598 = vpop.f32.mrb[0].mxu0
      %v599 = vadd.f32 %v294, %v598
      %600 = vmatprep.mubr.bf16.mxu0 0
      %601 = vmatmul.mubr.bf16.gmra.mrb[0].mxu0 %v373
      %v602 = vpop.f32.mrb[0].mxu0
      %v603 = vadd.f32 %v290, %v602
      %v604 = vpop.f32.mrb[0].mxu0
      %v605 = vadd.f32 %v294, %v604
      %v606 = vpop.f32.mrb[0].mxu0
      %v607 = vadd.f32 %v290, %v606
      %v608 = vpop.f32.mrb[0].mxu0
      %v609 = vadd.f32 %v294, %v608
      %610 = vdwg.mxu0
      %611 = vmatprep.subr.bf16.mxu0 %v386
      %612 = vmatpush1.bf16.msra.mxu0 %v383
      %613 = vmatprep.subr.bf16.mxu0 0
      %614 = vmatpush1.bf16.msra.mxu0 0
      %615 = vmatprep.subr.bf16.mxu0 0
      %616 = vmatpush1.bf16.msra.mxu0 0
      %617 = vmatprep.subr.bf16.mxu0 0
      %618 = vmatpush1.bf16.msra.mxu0 0
      %619 = vmatprep.subr.bf16.mxu0 0
      %620 = vmatpush1.bf16.msra.mxu0 0
      %621 = vmatprep.subr.bf16.mxu0 0
      %622 = vmatpush1.bf16.msra.mxu0 0
      %623 = vmatprep.subr.bf16.mxu0 0
      %624 = vmatpush1.bf16.msra.mxu0 0
      %625 = vmatprep.subr.bf16.mxu0 0
      %626 = vmatpush1.bf16.msra.mxu0 0
      %627 = vmatprep.subr.bf16.mxu0 0
      %628 = vmatpush1.bf16.msra.mxu0 0
      %629 = vmatprep.subr.bf16.mxu0 0
      %630 = vmatpush1.bf16.msra.mxu0 0
      %631 = vmatprep.subr.bf16.mxu0 0
      %632 = vmatpush1.bf16.msra.mxu0 0
      %633 = vmatprep.subr.bf16.mxu0 0
      %634 = vmatpush1.bf16.msra.mxu0 0
      %635 = vmatprep.subr.bf16.mxu0 0
      %636 = vmatpush1.bf16.msra.mxu0 0
      %637 = vmatprep.subr.bf16.mxu0 0
      %638 = vmatpush1.bf16.msra.mxu0 0
      %639 = vmatprep.subr.bf16.mxu0 0
      %640 = vmatpush1.bf16.msra.mxu0 0
      %641 = vmatprep.subr.bf16.mxu0 0
      %642 = vmatpush1.bf16.msra.mxu0 0
      %643 = vmatprep.mubr.bf16.mxu0 0
      %644 = vmatmul.mubr.bf16.gmra.mrb[0].mxu0 %v319
      %v645 = vpop.f32.mrb[0].mxu0
      %v646 = vadd.f32 %v298, %v645
      %v647 = vpop.f32.mrb[0].mxu0
      %v648 = vadd.f32 %v302, %v647
      %v649 = vpop.f32.mrb[0].mxu0
      %v650 = vadd.f32 %v298, %v649
      %v651 = vpop.f32.mrb[0].mxu0
      %v652 = vadd.f32 %v302, %v651
      %653 = vmatprep.mubr.bf16.mxu0 0
      %654 = vmatmul.mubr.bf16.gmra.mrb[0].mxu0 %v322
      %v655 = vpop.f32.mrb[0].mxu0
      %v656 = vadd.f32 %v298, %v655
      %v657 = vpop.f32.mrb[0].mxu0
      %v658 = vadd.f32 %v302, %v657
      %v659 = vpop.f32.mrb[0].mxu0
      %v660 = vadd.f32 %v298, %v659
      %v661 = vpop.f32.mrb[0].mxu0
      %v662 = vadd.f32 %v302, %v661
      %663 = vmatprep.mubr.bf16.mxu0 0
      %664 = vmatmul.mubr.bf16.gmra.mrb[0].mxu0 %v325
      %v665 = vpop.f32.mrb[0].mxu0
      %v666 = vadd.f32 %v298, %v665
      %v667 = vpop.f32.mrb[0].mxu0
      %v668 = vadd.f32 %v302, %v667
      %v669 = vpop.f32.mrb[0].mxu0
      %v670 = vadd.f32 %v298, %v669
      %v671 = vpop.f32.mrb[0].mxu0
      %v672 = vadd.f32 %v302, %v671
      %673 = vmatprep.mubr.bf16.mxu0 0
      %674 = vmatmul.mubr.bf16.gmra.mrb[0].mxu0 %v328
      %v675 = vpop.f32.mrb[0].mxu0
      %v676 = vadd.f32 %v298, %v675
      %v677 = vpop.f32.mrb[0].mxu0
      %v678 = vadd.f32 %v302, %v677
      %v679 = vpop.f32.mrb[0].mxu0
      %v680 = vadd.f32 %v298, %v679
      %v681 = vpop.f32.mrb[0].mxu0
      %v682 = vadd.f32 %v302, %v681
      %683 = vmatprep.mubr.bf16.mxu0 0
      %684 = vmatmul.mubr.bf16.gmra.mrb[0].mxu0 %v331
      %v685 = vpop.f32.mrb[0].mxu0
      %v686 = vadd.f32 %v298, %v685
      %v687 = vpop.f32.mrb[0].mxu0
      %v688 = vadd.f32 %v302, %v687
      %v689 = vpop.f32.mrb[0].mxu0
      %v690 = vadd.f32 %v298, %v689
      %v691 = vpop.f32.mrb[0].mxu0
      %v692 = vadd.f32 %v302, %v691
      %693 = vmatprep.mubr.bf16.mxu0 0
      %694 = vmatmul.mubr.bf16.gmra.mrb[0].mxu0 %v334
      %v695 = vpop.f32.mrb[0].mxu0
      %v696 = vadd.f32 %v298, %v695
      %v697 = vpop.f32.mrb[0].mxu0
      %v698 = vadd.f32 %v302, %v697
      %v699 = vpop.f32.mrb[0].mxu0
      %v700 = vadd.f32 %v298, %v699
      %v701 = vpop.f32.mrb[0].mxu0
      %v702 = vadd.f32 %v302, %v701
      %703 = vmatprep.mubr.bf16.mxu0 0
      %704 = vmatmul.mubr.bf16.gmra.mrb[0].mxu0 %v337
      %v705 = vpop.f32.mrb[0].mxu0
      %v706 = vadd.f32 %v298, %v705
      %v707 = vpop.f32.mrb[0].mxu0
      %v708 = vadd.f32 %v302, %v707
      %v709 = vpop.f32.mrb[0].mxu0
      %v710 = vadd.f32 %v298, %v709
      %v711 = vpop.f32.mrb[0].mxu0
      %v712 = vadd.f32 %v302, %v711
      %713 = vmatprep.mubr.bf16.mxu0 0
      %714 = vmatmul.mubr.bf16.gmra.mrb[0].mxu0 %v340
      %v715 = vpop.f32.mrb[0].mxu0
      %v716 = vadd.f32 %v298, %v715
      %v717 = vpop.f32.mrb[0].mxu0
      %v718 = vadd.f32 %v302, %v717
      %v719 = vpop.f32.mrb[0].mxu0
      %v720 = vadd.f32 %v298, %v719
      %v721 = vpop.f32.mrb[0].mxu0
      %v722 = vadd.f32 %v302, %v721
      %723 = vmatprep.mubr.bf16.mxu0 0
      %724 = vmatmul.mubr.bf16.gmra.mrb[0].mxu0 %v343
      %v725 = vpop.f32.mrb[0].mxu0
      %v726 = vadd.f32 %v298, %v725
      %v727 = vpop.f32.mrb[0].mxu0
      %v728 = vadd.f32 %v302, %v727
      %v729 = vpop.f32.mrb[0].mxu0
      %v730 = vadd.f32 %v298, %v729
      %v731 = vpop.f32.mrb[0].mxu0
      %v732 = vadd.f32 %v302, %v731
      %733 = vmatprep.mubr.bf16.mxu0 0
      %734 = vmatmul.mubr.bf16.gmra.mrb[0].mxu0 %v346
      %v735 = vpop.f32.mrb[0].mxu0
      %v736 = vadd.f32 %v298, %v735
      %v737 = vpop.f32.mrb[0].mxu0
      %v738 = vadd.f32 %v302, %v737
      %v739 = vpop.f32.mrb[0].mxu0
      %v740 = vadd.f32 %v298, %v739
      %v741 = vpop.f32.mrb[0].mxu0
      %v742 = vadd.f32 %v302, %v741
      %743 = vmatprep.mubr.bf16.mxu0 0
      %744 = vmatmul.mubr.bf16.gmra.mrb[0].mxu0 %v349
      %v745 = vpop.f32.mrb[0].mxu0
      %v746 = vadd.f32 %v298, %v745
      %v747 = vpop.f32.mrb[0].mxu0
      %v748 = vadd.f32 %v302, %v747
      %v749 = vpop.f32.mrb[0].mxu0
      %v750 = vadd.f32 %v298, %v749
      %v751 = vpop.f32.mrb[0].mxu0
      %v752 = vadd.f32 %v302, %v751
      %753 = vmatprep.mubr.bf16.mxu0 0
      %754 = vmatmul.mubr.bf16.gmra.mrb[0].mxu0 %v352
      %v755 = vpop.f32.mrb[0].mxu0
      %v756 = vadd.f32 %v298, %v755
      %v757 = vpop.f32.mrb[0].mxu0
      %v758 = vadd.f32 %v302, %v757
      %v759 = vpop.f32.mrb[0].mxu0
      %v760 = vadd.f32 %v298, %v759
      %v761 = vpop.f32.mrb[0].mxu0
      %v762 = vadd.f32 %v302, %v761
      %763 = vmatprep.mubr.bf16.mxu0 0
      %764 = vmatmul.mubr.bf16.gmra.mrb[0].mxu0 %v355
      %v765 = vpop.f32.mrb[0].mxu0
      %v766 = vadd.f32 %v298, %v765
      %v767 = vpop.f32.mrb[0].mxu0
      %v768 = vadd.f32 %v302, %v767
      %v769 = vpop.f32.mrb[0].mxu0
      %v770 = vadd.f32 %v298, %v769
      %v771 = vpop.f32.mrb[0].mxu0
      %v772 = vadd.f32 %v302, %v771
      %773 = vmatprep.mubr.bf16.mxu0 0
      %774 = vmatmul.mubr.bf16.gmra.mrb[0].mxu0 %v358
      %v775 = vpop.f32.mrb[0].mxu0
      %v776 = vadd.f32 %v298, %v775
      %v777 = vpop.f32.mrb[0].mxu0
      %v778 = vadd.f32 %v302, %v777
      %v779 = vpop.f32.mrb[0].mxu0
      %v780 = vadd.f32 %v298, %v779
      %v781 = vpop.f32.mrb[0].mxu0
      %v782 = vadd.f32 %v302, %v781
      %783 = vmatprep.mubr.bf16.mxu0 0
      %784 = vmatmul.mubr.bf16.gmra.mrb[0].mxu0 %v361
      %v785 = vpop.f32.mrb[0].mxu0
      %v786 = vadd.f32 %v298, %v785
      %v787 = vpop.f32.mrb[0].mxu0
      %v788 = vadd.f32 %v302, %v787
      %v789 = vpop.f32.mrb[0].mxu0
      %v790 = vadd.f32 %v298, %v789
      %v791 = vpop.f32.mrb[0].mxu0
      %v792 = vadd.f32 %v302, %v791
      %793 = vmatprep.mubr.bf16.mxu0 0
      %794 = vmatmul.mubr.bf16.gmra.mrb[0].mxu0 %v364
      %v795 = vpop.f32.mrb[0].mxu0
      %v796 = vadd.f32 %v298, %v795
      %v797 = vpop.f32.mrb[0].mxu0
      %v798 = vadd.f32 %v302, %v797
      %v799 = vpop.f32.mrb[0].mxu0
      %v800 = vadd.f32 %v298, %v799
      %v801 = vpop.f32.mrb[0].mxu0
      %v802 = vadd.f32 %v302, %v801
      %803 = vmatprep.mubr.bf16.mxu0 0
      %804 = vmatmul.mubr.bf16.gmra.mrb[0].mxu0 %v367
      %v805 = vpop.f32.mrb[0].mxu0
      %v806 = vadd.f32 %v298, %v805
      %v807 = vpop.f32.mrb[0].mxu0
      %v808 = vadd.f32 %v302, %v807
      %v809 = vpop.f32.mrb[0].mxu0
      %v810 = vadd.f32 %v298, %v809
      %v811 = vpop.f32.mrb[0].mxu0
      %v812 = vadd.f32 %v302, %v811
      %813 = vmatprep.mubr.bf16.mxu0 0
      %814 = vmatmul.mubr.bf16.gmra.mrb[0].mxu0 %v370
      %v815 = vpop.f32.mrb[0].mxu0
      %v816 = vadd.f32 %v298, %v815
      %v817 = vpop.f32.mrb[0].mxu0
      %v818 = vadd.f32 %v302, %v817
      %v819 = vpop.f32.mrb[0].mxu0
      %v820 = vadd.f32 %v298, %v819
      %v821 = vpop.f32.mrb[0].mxu0
      %v822 = vadd.f32 %v302, %v821
      %823 = vmatprep.mubr.bf16.mxu0 0
      %824 = vmatmul.mubr.bf16.gmra.mrb[0].mxu0 %v373
      %v825 = vpop.f32.mrb[0].mxu0
      %v826 = vadd.f32 %v298, %v825
      %v827 = vpop.f32.mrb[0].mxu0
      %v828 = vadd.f32 %v302, %v827
      %v829 = vpop.f32.mrb[0].mxu0
      %v830 = vadd.f32 %v298, %v829
      %v831 = vpop.f32.mrb[0].mxu0
      %v832 = vadd.f32 %v302, %v831
      %833 = vdwg.mxu0
      %v834 = vmax.f32 %v423, 0.0
      %v835 = vmax.f32 %v425, 0.0
      %v836 = vmax.f32 %v646, 0.0
      %v837 = vmax.f32 %v648, 0.0
      %v838 = vmax.f32 %v427, 0.0
      %v839 = vmax.f32 %v429, 0.0
      %v840 = vmax.f32 %v650, 0.0
      %v841 = vmax.f32 %v652, 0.0
      %v842 = vmax.f32 %v433, 0.0
      %v843 = vmax.f32 %v435, 0.0
      %v844 = vmax.f32 %v656, 0.0
      %v845 = vmax.f32 %v658, 0.0
      %v846 = vmax.f32 %v437, 0.0
      %v847 = vmax.f32 %v439, 0.0
      %v848 = vmax.f32 %v660, 0.0
      %v849 = vmax.f32 %v662, 0.0
      %v850 = vmax.f32 %v443, 0.0
      %v851 = vmax.f32 %v445, 0.0
      %v852 = vmax.f32 %v666, 0.0
      %v853 = vmax.f32 %v668, 0.0
      %v854 = vmax.f32 %v447, 0.0
      %v855 = vmax.f32 %v449, 0.0
      %v856 = vmax.f32 %v670, 0.0
      %v857 = vmax.f32 %v672, 0.0
      %v858 = vmax.f32 %v453, 0.0
      %v859 = vmax.f32 %v455, 0.0
      %v860 = vmax.f32 %v676, 0.0
      %v861 = vmax.f32 %v678, 0.0
      %v862 = vmax.f32 %v457, 0.0
      %v863 = vmax.f32 %v459, 0.0
      %v864 = vmax.f32 %v680, 0.0
      %v865 = vmax.f32 %v682, 0.0
      %v866 = vmax.f32 %v463, 0.0
      %v867 = vmax.f32 %v465, 0.0
      %v868 = vmax.f32 %v686, 0.0
      %v869 = vmax.f32 %v688, 0.0
      %v870 = vmax.f32 %v467, 0.0
      %v871 = vmax.f32 %v469, 0.0
      %v872 = vmax.f32 %v690, 0.0
      %v873 = vmax.f32 %v692, 0.0
      %v874 = vmax.f32 %v473, 0.0
      %v875 = vmax.f32 %v475, 0.0
      %v876 = vmax.f32 %v696, 0.0
      %v877 = vmax.f32 %v698, 0.0
      %v878 = vmax.f32 %v477, 0.0
      %v879 = vmax.f32 %v479, 0.0
      %v880 = vmax.f32 %v700, 0.0
      %v881 = vmax.f32 %v702, 0.0
      %v882 = vmax.f32 %v483, 0.0
      %v883 = vmax.f32 %v485, 0.0
      %v884 = vmax.f32 %v706, 0.0
      %v885 = vmax.f32 %v708, 0.0
      %v886 = vmax.f32 %v487, 0.0
      %v887 = vmax.f32 %v489, 0.0
      %v888 = vmax.f32 %v710, 0.0
      %v889 = vmax.f32 %v712, 0.0
      %v890 = vmax.f32 %v493, 0.0
      %v891 = vmax.f32 %v495, 0.0
      %v892 = vmax.f32 %v716, 0.0
      %v893 = vmax.f32 %v718, 0.0
      %v894 = vmax.f32 %v497, 0.0
      %v895 = vmax.f32 %v499, 0.0
      %v896 = vmax.f32 %v720, 0.0
      %v897 = vmax.f32 %v722, 0.0
      %v898 = vmax.f32 %v503, 0.0
      %v899 = vmax.f32 %v505, 0.0
      %v900 = vmax.f32 %v726, 0.0
      %v901 = vmax.f32 %v728, 0.0
      %v902 = vmax.f32 %v507, 0.0
      %v903 = vmax.f32 %v509, 0.0
      %v904 = vmax.f32 %v730, 0.0
      %v905 = vmax.f32 %v732, 0.0
      %v906 = vmax.f32 %v513, 0.0
      %v907 = vmax.f32 %v515, 0.0
      %v908 = vmax.f32 %v736, 0.0
      %v909 = vmax.f32 %v738, 0.0
      %v910 = vmax.f32 %v517, 0.0
      %v911 = vmax.f32 %v519, 0.0
      %v912 = vmax.f32 %v740, 0.0
      %v913 = vmax.f32 %v742, 0.0
      %v914 = vmax.f32 %v523, 0.0
      %v915 = vmax.f32 %v525, 0.0
      %v916 = vmax.f32 %v746, 0.0
      %v917 = vmax.f32 %v748, 0.0
      %v918 = vmax.f32 %v527, 0.0
      %v919 = vmax.f32 %v529, 0.0
      %v920 = vmax.f32 %v750, 0.0
      %v921 = vmax.f32 %v752, 0.0
      %v922 = vmax.f32 %v533, 0.0
      %v923 = vmax.f32 %v535, 0.0
      %v924 = vmax.f32 %v756, 0.0
      %v925 = vmax.f32 %v758, 0.0
      %v926 = vmax.f32 %v537, 0.0
      %v927 = vmax.f32 %v539, 0.0
      %v928 = vmax.f32 %v760, 0.0
      %v929 = vmax.f32 %v762, 0.0
      %v930 = vmax.f32 %v543, 0.0
      %v931 = vmax.f32 %v545, 0.0
      %v932 = vmax.f32 %v766, 0.0
      %v933 = vmax.f32 %v768, 0.0
      %v934 = vmax.f32 %v547, 0.0
      %v935 = vmax.f32 %v549, 0.0
      %v936 = vmax.f32 %v770, 0.0
      %v937 = vmax.f32 %v772, 0.0
      %v938 = vmax.f32 %v553, 0.0
      %v939 = vmax.f32 %v555, 0.0
      %v940 = vmax.f32 %v776, 0.0
      %v941 = vmax.f32 %v778, 0.0
      %v942 = vmax.f32 %v557, 0.0
      %v943 = vmax.f32 %v559, 0.0
      %v944 = vmax.f32 %v780, 0.0
      %v945 = vmax.f32 %v782, 0.0
      %v946 = vmax.f32 %v563, 0.0
      %v947 = vmax.f32 %v565, 0.0
      %v948 = vmax.f32 %v786, 0.0
      %v949 = vmax.f32 %v788, 0.0
      %v950 = vmax.f32 %v567, 0.0
      %v951 = vmax.f32 %v569, 0.0
      %v952 = vmax.f32 %v790, 0.0
      %v953 = vmax.f32 %v792, 0.0
      %v954 = vmax.f32 %v573, 0.0
      %v955 = vmax.f32 %v575, 0.0
      %v956 = vmax.f32 %v796, 0.0
      %v957 = vmax.f32 %v798, 0.0
      %v958 = vmax.f32 %v577, 0.0
      %v959 = vmax.f32 %v579, 0.0
      %v960 = vmax.f32 %v800, 0.0
      %v961 = vmax.f32 %v802, 0.0
      %v962 = vmax.f32 %v583, 0.0
      %v963 = vmax.f32 %v585, 0.0
      %v964 = vmax.f32 %v806, 0.0
      %v965 = vmax.f32 %v808, 0.0
      %v966 = vmax.f32 %v587, 0.0
      %v967 = vmax.f32 %v589, 0.0
      %v968 = vmax.f32 %v810, 0.0
      %v969 = vmax.f32 %v812, 0.0
      %v970 = vmax.f32 %v593, 0.0
      %v971 = vmax.f32 %v595, 0.0
      %v972 = vmax.f32 %v816, 0.0
      %v973 = vmax.f32 %v818, 0.0
      %v974 = vmax.f32 %v597, 0.0
      %v975 = vmax.f32 %v599, 0.0
      %v976 = vmax.f32 %v820, 0.0
      %v977 = vmax.f32 %v822, 0.0
      %v978 = vmax.f32 %v603, 0.0
      %v979 = vmax.f32 %v605, 0.0
      %v980 = vmax.f32 %v826, 0.0
      %v981 = vmax.f32 %v828, 0.0
      %v982 = vmax.f32 %v607, 0.0
      %v983 = vmax.f32 %v609, 0.0
      %v984 = vmax.f32 %v830, 0.0
      %v985 = vmax.f32 %v832, 0.0
      %v986 = vpack.c.bf16 %v838, %v834
      %v987 = vpack.c.bf16 %v839, %v835
      %v988 = vpack.c.bf16 %v840, %v836
      %v989 = vpack.c.bf16 %v841, %v837
      %v990 = vpack.c.bf16 %v846, %v842
      %v991 = vpack.c.bf16 %v847, %v843
      %v992 = vpack.c.bf16 %v848, %v844
      %v993 = vpack.c.bf16 %v849, %v845
      %v994 = vpack.c.bf16 %v854, %v850
      %v995 = vpack.c.bf16 %v855, %v851
      %v996 = vpack.c.bf16 %v856, %v852
      %v997 = vpack.c.bf16 %v857, %v853
      %v998 = vpack.c.bf16 %v862, %v858
      %v999 = vpack.c.bf16 %v863, %v859
      %v1000 = vpack.c.bf16 %v864, %v860
      %v1001 = vpack.c.bf16 %v865, %v861
      %v1002 = vpack.c.bf16 %v870, %v866
      %v1003 = vpack.c.bf16 %v871, %v867
      %v1004 = vpack.c.bf16 %v872, %v868
      %v1005 = vpack.c.bf16 %v873, %v869
      %v1006 = vpack.c.bf16 %v878, %v874
      %v1007 = vpack.c.bf16 %v879, %v875
      %v1008 = vpack.c.bf16 %v880, %v876
      %v1009 = vpack.c.bf16 %v881, %v877
      %v1010 = vpack.c.bf16 %v886, %v882
      %v1011 = vpack.c.bf16 %v887, %v883
      %v1012 = vpack.c.bf16 %v888, %v884
      %v1013 = vpack.c.bf16 %v889, %v885
      %v1014 = vpack.c.bf16 %v894, %v890
      %v1015 = vpack.c.bf16 %v895, %v891
      %v1016 = vpack.c.bf16 %v896, %v892
      %v1017 = vpack.c.bf16 %v897, %v893
      %v1018 = vpack.c.bf16 %v902, %v898
      %v1019 = vpack.c.bf16 %v903, %v899
      %v1020 = vpack.c.bf16 %v904, %v900
      %v1021 = vpack.c.bf16 %v905, %v901
      %v1022 = vpack.c.bf16 %v910, %v906
      %v1023 = vpack.c.bf16 %v911, %v907
      %v1024 = vpack.c.bf16 %v912, %v908
      %v1025 = vpack.c.bf16 %v913, %v909
      %v1026 = vpack.c.bf16 %v918, %v914
      %v1027 = vpack.c.bf16 %v919, %v915
      %v1028 = vpack.c.bf16 %v920, %v916
      %v1029 = vpack.c.bf16 %v921, %v917
      %v1030 = vpack.c.bf16 %v926, %v922
      %v1031 = vpack.c.bf16 %v927, %v923
      %v1032 = vpack.c.bf16 %v928, %v924
      %v1033 = vpack.c.bf16 %v929, %v925
      %v1034 = vpack.c.bf16 %v934, %v930
      %v1035 = vpack.c.bf16 %v935, %v931
      %v1036 = vpack.c.bf16 %v936, %v932
      %v1037 = vpack.c.bf16 %v937, %v933
      %v1038 = vpack.c.bf16 %v942, %v938
      %v1039 = vpack.c.bf16 %v943, %v939
      %v1040 = vpack.c.bf16 %v944, %v940
      %v1041 = vpack.c.bf16 %v945, %v941
      %v1042 = vpack.c.bf16 %v950, %v946
      %v1043 = vpack.c.bf16 %v951, %v947
      %v1044 = vpack.c.bf16 %v952, %v948
      %v1045 = vpack.c.bf16 %v953, %v949
      %v1046 = vpack.c.bf16 %v958, %v954
      %v1047 = vpack.c.bf16 %v959, %v955
      %v1048 = vpack.c.bf16 %v960, %v956
      %v1049 = vpack.c.bf16 %v961, %v957
      %v1050 = vpack.c.bf16 %v966, %v962
      %v1051 = vpack.c.bf16 %v967, %v963
      %v1052 = vpack.c.bf16 %v968, %v964
      %v1053 = vpack.c.bf16 %v969, %v965
      %v1054 = vpack.c.bf16 %v974, %v970
      %v1055 = vpack.c.bf16 %v975, %v971
      %v1056 = vpack.c.bf16 %v976, %v972
      %v1057 = vpack.c.bf16 %v977, %v973
      %v1058 = vpack.c.bf16 %v982, %v978
      %v1059 = vpack.c.bf16 %v983, %v979
      %v1060 = vpack.c.bf16 %v984, %v980
      %v1061 = vpack.c.bf16 %v985, %v981
      %v1062 = vld [vmem:[%s2] sm:$0xf]
      %v1063 = vld [vmem:[%s2 + $0x4] sm:$0xf]
      %v1064 = vld [vmem:[%s2 + $0x8] sm:$0xf]
      %v1065 = vld [vmem:[%s2 + $0xc] sm:$0xf]
      %v1066 = vld [vmem:[%s2 + $0x10] sm:$0xf]
      %v1067 = vld [vmem:[%s2 + $0x14] sm:$0xf]
      %v1068 = vld [vmem:[%s2 + $0x18] sm:$0xf]
      %v1069 = vld [vmem:[%s2 + $0x1c] sm:$0xf]
      %v1070 = vld [vmem:[%s2 + $0x20] sm:$0xf]
      %v1071 = vld [vmem:[%s2 + $0x24] sm:$0xf]
      %v1072 = vld [vmem:[%s2 + $0x28] sm:$0xf]
      %v1073 = vld [vmem:[%s2 + $0x2c] sm:$0xf]
      %v1074 = vld [vmem:[%s2 + $0x30] sm:$0xf]
      %v1075 = vld [vmem:[%s2 + $0x34] sm:$0xf]
      %v1076 = vld [vmem:[%s2 + $0x38] sm:$0xf]
      %v1077 = vld [vmem:[%s2 + $0x3c] sm:$0xf]
      %v1078 = vld [vmem:[%s2 + $0x40] sm:$0xf]
      %v1079 = vld [vmem:[%s2 + $0x44] sm:$0xf]
      %v1080 = vld [vmem:[%s2 + $0x48] sm:$0xf]
      %v1081 = vld [vmem:[%s2 + $0x4c] sm:$0xf]
      %v1082 = vld [vmem:[%s2 + $0x50] sm:$0xf]
      %v1083 = vld [vmem:[%s2 + $0x54] sm:$0xf]
      %v1084 = vld [vmem:[%s2 + $0x58] sm:$0xf]
      %v1085 = vld [vmem:[%s2 + $0x5c] sm:$0xf]
      %v1086 = vld [vmem:[%s2 + $0x60] sm:$0xf]
      %v1087 = vld [vmem:[%s2 + $0x64] sm:$0xf]
      %v1088 = vld [vmem:[%s2 + $0x68] sm:$0xf]
      %v1089 = vld [vmem:[%s2 + $0x6c] sm:$0xf]
      %v1090 = vld [vmem:[%s2 + $0x70] sm:$0xf]
      %v1091 = vld [vmem:[%s2 + $0x74] sm:$0xf]
      %v1092 = vld [vmem:[%s2 + $0x78] sm:$0xf]
      %v1093 = vld [vmem:[%s2 + $0x7c] sm:$0xf]
      %v1094 = vld [vmem:[%s2 + $0x80] sm:$0xf]
      %v1095 = vld [vmem:[%s2 + $0x84] sm:$0xf]
      %v1096 = vld [vmem:[%s2 + $0x88] sm:$0xf]
      %v1097 = vld [vmem:[%s2 + $0x8c] sm:$0xf]
      %v1098 = vld [vmem:[%s2 + $0x90] sm:$0xf]
      %v1099 = vld [vmem:[%s2 + $0x94] sm:$0xf]
      %v1100 = vld [vmem:[%s2 + $0x98] sm:$0xf]
      %v1101 = vld [vmem:[%s2 + $0x9c] sm:$0xf]
      %v1102 = vld [vmem:[%s2 + $0xa0] sm:$0xf]
      %v1103 = vld [vmem:[%s2 + $0xa4] sm:$0xf]
      %v1104 = vld [vmem:[%s2 + $0xa8] sm:$0xf]
      %v1105 = vld [vmem:[%s2 + $0xac] sm:$0xf]
      %v1106 = vld [vmem:[%s2 + $0xb0] sm:$0xf]
      %v1107 = vld [vmem:[%s2 + $0xb4] sm:$0xf]
      %v1108 = vld [vmem:[%s2 + $0xb8] sm:$0xf]
      %v1109 = vld [vmem:[%s2 + $0xbc] sm:$0xf]
      %v1110 = vld [vmem:[%s2 + $0xc0] sm:$0xf]
      %v1111 = vld [vmem:[%s2 + $0xc4] sm:$0xf]
      %v1112 = vld [vmem:[%s2 + $0xc8] sm:$0xf]
      %v1113 = vld [vmem:[%s2 + $0xcc] sm:$0xf]
      %v1114 = vld [vmem:[%s2 + $0xd0] sm:$0xf]
      %v1115 = vld [vmem:[%s2 + $0xd4] sm:$0xf]
      %v1116 = vld [vmem:[%s2 + $0xd8] sm:$0xf]
      %v1117 = vld [vmem:[%s2 + $0xdc] sm:$0xf]
      %v1118 = vld [vmem:[%s2 + $0xe0] sm:$0xf]
      %v1119 = vld [vmem:[%s2 + $0xe4] sm:$0xf]
      %v1120 = vld [vmem:[%s2 + $0xe8] sm:$0xf]
      %v1121 = vld [vmem:[%s2 + $0xec] sm:$0xf]
      %v1122 = vld [vmem:[%s2 + $0xf0] sm:$0xf]
      %v1123 = vld [vmem:[%s2 + $0xf4] sm:$0xf]
      %v1124 = vld [vmem:[%s2 + $0xf8] sm:$0xf]
      %v1125 = vld [vmem:[%s2 + $0xfc] sm:$0xf]
      %v1126 = vld [vmem:[%s4 + $0x1] ss:$0 sm:$0xff]
      %v1191 = vunpack.c.l.b16 %v1062
      %v1192 = vunpack.c.l.b16 %v1063
      %v1193 = vunpack.c.l.b16 %v1064
      %v1194 = vunpack.c.l.b16 %v1065
      %v1195 = vunpack.c.l.b16 %v1066
      %v1196 = vunpack.c.l.b16 %v1067
      %v1197 = vunpack.c.l.b16 %v1068
      %v1198 = vunpack.c.l.b16 %v1069
      %v1199 = vunpack.c.l.b16 %v1070
      %v1200 = vunpack.c.l.b16 %v1071
      %v1201 = vunpack.c.l.b16 %v1072
      %v1202 = vunpack.c.l.b16 %v1073
      %v1203 = vunpack.c.l.b16 %v1074
      %v1204 = vunpack.c.l.b16 %v1075
      %v1205 = vunpack.c.l.b16 %v1076
      %v1206 = vunpack.c.l.b16 %v1077
      %v1207 = vunpack.c.l.b16 %v1078
      %v1208 = vunpack.c.l.b16 %v1079
      %v1209 = vunpack.c.l.b16 %v1080
      %v1210 = vunpack.c.l.b16 %v1081
      %v1211 = vunpack.c.l.b16 %v1082
      %v1212 = vunpack.c.l.b16 %v1083
      %v1213 = vunpack.c.l.b16 %v1084
      %v1214 = vunpack.c.l.b16 %v1085
      %v1215 = vunpack.c.l.b16 %v1086
      %v1216 = vunpack.c.l.b16 %v1087
      %v1217 = vunpack.c.l.b16 %v1088
      %v1218 = vunpack.c.l.b16 %v1089
      %v1219 = vunpack.c.l.b16 %v1090
      %v1220 = vunpack.c.l.b16 %v1091
      %v1221 = vunpack.c.l.b16 %v1092
      %v1222 = vunpack.c.l.b16 %v1093
      %v1223 = vunpack.c.l.b16 %v1094
      %v1224 = vunpack.c.l.b16 %v1095
      %v1225 = vunpack.c.l.b16 %v1096
      %v1226 = vunpack.c.l.b16 %v1097
      %v1227 = vunpack.c.l.b16 %v1098
      %v1228 = vunpack.c.l.b16 %v1099
      %v1229 = vunpack.c.l.b16 %v1100
      %v1230 = vunpack.c.l.b16 %v1101
      %v1231 = vunpack.c.l.b16 %v1102
      %v1232 = vunpack.c.l.b16 %v1103
      %v1233 = vunpack.c.l.b16 %v1104
      %v1234 = vunpack.c.l.b16 %v1105
      %v1235 = vunpack.c.l.b16 %v1106
      %v1236 = vunpack.c.l.b16 %v1107
      %v1237 = vunpack.c.l.b16 %v1108
      %v1238 = vunpack.c.l.b16 %v1109
      %v1239 = vunpack.c.l.b16 %v1110
      %v1240 = vunpack.c.l.b16 %v1111
      %v1241 = vunpack.c.l.b16 %v1112
      %v1242 = vunpack.c.l.b16 %v1113
      %v1243 = vunpack.c.l.b16 %v1114
      %v1244 = vunpack.c.l.b16 %v1115
      %v1245 = vunpack.c.l.b16 %v1116
      %v1246 = vunpack.c.l.b16 %v1117
      %v1247 = vunpack.c.l.b16 %v1118
      %v1248 = vunpack.c.l.b16 %v1119
      %v1249 = vunpack.c.l.b16 %v1120
      %v1250 = vunpack.c.l.b16 %v1121
      %v1251 = vunpack.c.l.b16 %v1122
      %v1252 = vunpack.c.l.b16 %v1123
      %v1253 = vunpack.c.l.b16 %v1124
      %v1254 = vunpack.c.l.b16 %v1125
      %v1255 = vpack.c.b16 %v1192, %v1191
      %v1256 = vpack.c.b16 %v1194, %v1193
      %v1257 = vpack.c.b16 %v1196, %v1195
      %v1258 = vpack.c.b16 %v1198, %v1197
      %v1259 = vpack.c.b16 %v1200, %v1199
      %v1260 = vpack.c.b16 %v1202, %v1201
      %v1261 = vpack.c.b16 %v1204, %v1203
      %v1262 = vpack.c.b16 %v1206, %v1205
      %v1263 = vpack.c.b16 %v1208, %v1207
      %v1264 = vpack.c.b16 %v1210, %v1209
      %v1265 = vpack.c.b16 %v1212, %v1211
      %v1266 = vpack.c.b16 %v1214, %v1213
      %v1267 = vpack.c.b16 %v1216, %v1215
      %v1268 = vpack.c.b16 %v1218, %v1217
      %v1269 = vpack.c.b16 %v1220, %v1219
      %v1270 = vpack.c.b16 %v1222, %v1221
      %v1271 = vpack.c.b16 %v1224, %v1223
      %v1272 = vpack.c.b16 %v1226, %v1225
      %v1273 = vpack.c.b16 %v1228, %v1227
      %v1274 = vpack.c.b16 %v1230, %v1229
      %v1275 = vpack.c.b16 %v1232, %v1231
      %v1276 = vpack.c.b16 %v1234, %v1233
      %v1277 = vpack.c.b16 %v1236, %v1235
      %v1278 = vpack.c.b16 %v1238, %v1237
      %v1279 = vpack.c.b16 %v1240, %v1239
      %v1280 = vpack.c.b16 %v1242, %v1241
      %v1281 = vpack.c.b16 %v1244, %v1243
      %v1282 = vpack.c.b16 %v1246, %v1245
      %v1283 = vpack.c.b16 %v1248, %v1247
      %v1284 = vpack.c.b16 %v1250, %v1249
      %v1285 = vpack.c.b16 %v1252, %v1251
      %v1286 = vpack.c.b16 %v1254, %v1253
      %1319 = vmatprep.subr.bf16.mxu0 0
      %1320 = vmatpush1.bf16.msra.mxu0 %v1255
      %1321 = vmatprep.subr.bf16.mxu0 0
      %1322 = vmatpush1.bf16.msra.mxu0 %v1256
      %1323 = vmatprep.subr.bf16.mxu0 0
      %1324 = vmatpush1.bf16.msra.mxu0 %v1257
      %1325 = vmatprep.subr.bf16.mxu0 0
      %1326 = vmatpush1.bf16.msra.mxu0 %v1258
      %1327 = vmatprep.subr.bf16.mxu0 0
      %1328 = vmatpush1.bf16.msra.mxu0 %v1259
      %1329 = vmatprep.subr.bf16.mxu0 0
      %1330 = vmatpush1.bf16.msra.mxu0 %v1260
      %1331 = vmatprep.subr.bf16.mxu0 0
      %1332 = vmatpush1.bf16.msra.mxu0 %v1261
      %1333 = vmatprep.subr.bf16.mxu0 0
      %1334 = vmatpush1.bf16.msra.mxu0 %v1262
      %1335 = vmatprep.subr.bf16.mxu0 0
      %1336 = vmatpush1.bf16.msra.mxu0 %v1263
      %1337 = vmatprep.subr.bf16.mxu0 0
      %1338 = vmatpush1.bf16.msra.mxu0 %v1264
      %1339 = vmatprep.subr.bf16.mxu0 0
      %1340 = vmatpush1.bf16.msra.mxu0 %v1265
      %1341 = vmatprep.subr.bf16.mxu0 0
      %1342 = vmatpush1.bf16.msra.mxu0 %v1266
      %1343 = vmatprep.subr.bf16.mxu0 0
      %1344 = vmatpush1.bf16.msra.mxu0 %v1267
      %1345 = vmatprep.subr.bf16.mxu0 0
      %1346 = vmatpush1.bf16.msra.mxu0 %v1268
      %1347 = vmatprep.subr.bf16.mxu0 0
      %1348 = vmatpush1.bf16.msra.mxu0 %v1269
      %1349 = vmatprep.subr.bf16.mxu0 0
      %1350 = vmatpush1.bf16.msra.mxu0 %v1270
      %1351 = vmatprep.mubr.bf16.mxu0 %v987
      %1352 = vmatmul.mubr.bf16.gmra.mrb[0].mxu0 %v986
      %v1353 = vpop.f32.mrb[0].mxu0
      %v1354 = vadd.f32 %v1126, %v1353
      %v1355 = vpop.f32.mrb[0].mxu0
      %v1356 = vpop.f32.mrb[0].mxu0
      %v1357 = vadd.f32 %v1126, %v1356
      %v1358 = vpop.f32.mrb[0].mxu0
      %1359 = vmatprep.mubr.bf16.mxu0 %v991
      %1360 = vmatmul.mubr.bf16.gmra.mrb[0].mxu0 %v990
      %v1361 = vpop.f32.mrb[0].mxu0
      %v1362 = vadd.f32 %v1126, %v1361
      %v1363 = vpop.f32.mrb[0].mxu0
      %v1364 = vpop.f32.mrb[0].mxu0
      %v1365 = vadd.f32 %v1126, %v1364
      %v1366 = vpop.f32.mrb[0].mxu0
      %1367 = vmatprep.mubr.bf16.mxu0 %v995
      %1368 = vmatmul.mubr.bf16.gmra.mrb[0].mxu0 %v994
      %v1369 = vpop.f32.mrb[0].mxu0
      %v1370 = vadd.f32 %v1126, %v1369
      %v1371 = vpop.f32.mrb[0].mxu0
      %v1372 = vpop.f32.mrb[0].mxu0
      %v1373 = vadd.f32 %v1126, %v1372
      %v1374 = vpop.f32.mrb[0].mxu0
      %1375 = vmatprep.mubr.bf16.mxu0 %v999
      %1376 = vmatmul.mubr.bf16.gmra.mrb[0].mxu0 %v998
      %v1377 = vpop.f32.mrb[0].mxu0
      %v1378 = vadd.f32 %v1126, %v1377
      %v1379 = vpop.f32.mrb[0].mxu0
      %v1380 = vpop.f32.mrb[0].mxu0
      %v1381 = vadd.f32 %v1126, %v1380
      %v1382 = vpop.f32.mrb[0].mxu0
      %1383 = vmatprep.mubr.bf16.mxu0 %v1003
      %1384 = vmatmul.mubr.bf16.gmra.mrb[0].mxu0 %v1002
      %v1385 = vpop.f32.mrb[0].mxu0
      %v1386 = vadd.f32 %v1126, %v1385
      %v1387 = vpop.f32.mrb[0].mxu0
      %v1388 = vpop.f32.mrb[0].mxu0
      %v1389 = vadd.f32 %v1126, %v1388
      %v1390 = vpop.f32.mrb[0].mxu0
      %1391 = vmatprep.mubr.bf16.mxu0 %v1007
      %1392 = vmatmul.mubr.bf16.gmra.mrb[0].mxu0 %v1006
      %v1393 = vpop.f32.mrb[0].mxu0
      %v1394 = vadd.f32 %v1126, %v1393
      %v1395 = vpop.f32.mrb[0].mxu0
      %v1396 = vpop.f32.mrb[0].mxu0
      %v1397 = vadd.f32 %v1126, %v1396
      %v1398 = vpop.f32.mrb[0].mxu0
      %1399 = vmatprep.mubr.bf16.mxu0 %v1011
      %1400 = vmatmul.mubr.bf16.gmra.mrb[0].mxu0 %v1010
      %v1401 = vpop.f32.mrb[0].mxu0
      %v1402 = vadd.f32 %v1126, %v1401
      %v1403 = vpop.f32.mrb[0].mxu0
      %v1404 = vpop.f32.mrb[0].mxu0
      %v1405 = vadd.f32 %v1126, %v1404
      %v1406 = vpop.f32.mrb[0].mxu0
      %1407 = vmatprep.mubr.bf16.mxu0 %v1015
      %1408 = vmatmul.mubr.bf16.gmra.mrb[0].mxu0 %v1014
      %v1409 = vpop.f32.mrb[0].mxu0
      %v1410 = vadd.f32 %v1126, %v1409
      %v1411 = vpop.f32.mrb[0].mxu0
      %v1412 = vpop.f32.mrb[0].mxu0
      %v1413 = vadd.f32 %v1126, %v1412
      %v1414 = vpop.f32.mrb[0].mxu0
      %1415 = vmatprep.mubr.bf16.mxu0 %v1019
      %1416 = vmatmul.mubr.bf16.gmra.mrb[0].mxu0 %v1018
      %v1417 = vpop.f32.mrb[0].mxu0
      %v1418 = vadd.f32 %v1126, %v1417
      %v1419 = vpop.f32.mrb[0].mxu0
      %v1420 = vpop.f32.mrb[0].mxu0
      %v1421 = vadd.f32 %v1126, %v1420
      %v1422 = vpop.f32.mrb[0].mxu0
      %1423 = vmatprep.mubr.bf16.mxu0 %v1023
      %1424 = vmatmul.mubr.bf16.gmra.mrb[0].mxu0 %v1022
      %v1425 = vpop.f32.mrb[0].mxu0
      %v1426 = vadd.f32 %v1126, %v1425
      %v1427 = vpop.f32.mrb[0].mxu0
      %v1428 = vpop.f32.mrb[0].mxu0
      %v1429 = vadd.f32 %v1126, %v1428
      %v1430 = vpop.f32.mrb[0].mxu0
      %1431 = vmatprep.mubr.bf16.mxu0 %v1027
      %1432 = vmatmul.mubr.bf16.gmra.mrb[0].mxu0 %v1026
      %v1433 = vpop.f32.mrb[0].mxu0
      %v1434 = vadd.f32 %v1126, %v1433
      %v1435 = vpop.f32.mrb[0].mxu0
      %v1436 = vpop.f32.mrb[0].mxu0
      %v1437 = vadd.f32 %v1126, %v1436
      %v1438 = vpop.f32.mrb[0].mxu0
      %1439 = vmatprep.mubr.bf16.mxu0 %v1031
      %1440 = vmatmul.mubr.bf16.gmra.mrb[0].mxu0 %v1030
      %v1441 = vpop.f32.mrb[0].mxu0
      %v1442 = vadd.f32 %v1126, %v1441
      %v1443 = vpop.f32.mrb[0].mxu0
      %v1444 = vpop.f32.mrb[0].mxu0
      %v1445 = vadd.f32 %v1126, %v1444
      %v1446 = vpop.f32.mrb[0].mxu0
      %1447 = vmatprep.mubr.bf16.mxu0 %v1035
      %1448 = vmatmul.mubr.bf16.gmra.mrb[0].mxu0 %v1034
      %v1449 = vpop.f32.mrb[0].mxu0
      %v1450 = vadd.f32 %v1126, %v1449
      %v1451 = vpop.f32.mrb[0].mxu0
      %v1452 = vpop.f32.mrb[0].mxu0
      %v1453 = vadd.f32 %v1126, %v1452
      %v1454 = vpop.f32.mrb[0].mxu0
      %1455 = vmatprep.mubr.bf16.mxu0 %v1039
      %1456 = vmatmul.mubr.bf16.gmra.mrb[0].mxu0 %v1038
      %v1457 = vpop.f32.mrb[0].mxu0
      %v1458 = vadd.f32 %v1126, %v1457
      %v1459 = vpop.f32.mrb[0].mxu0
      %v1460 = vpop.f32.mrb[0].mxu0
      %v1461 = vadd.f32 %v1126, %v1460
      %v1462 = vpop.f32.mrb[0].mxu0
      %1463 = vmatprep.mubr.bf16.mxu0 %v1043
      %1464 = vmatmul.mubr.bf16.gmra.mrb[0].mxu0 %v1042
      %v1465 = vpop.f32.mrb[0].mxu0
      %v1466 = vadd.f32 %v1126, %v1465
      %v1467 = vpop.f32.mrb[0].mxu0
      %v1468 = vpop.f32.mrb[0].mxu0
      %v1469 = vadd.f32 %v1126, %v1468
      %v1470 = vpop.f32.mrb[0].mxu0
      %1471 = vmatprep.mubr.bf16.mxu0 %v1047
      %1472 = vmatmul.mubr.bf16.gmra.mrb[0].mxu0 %v1046
      %v1473 = vpop.f32.mrb[0].mxu0
      %v1474 = vadd.f32 %v1126, %v1473
      %v1475 = vpop.f32.mrb[0].mxu0
      %v1476 = vpop.f32.mrb[0].mxu0
      %v1477 = vadd.f32 %v1126, %v1476
      %v1478 = vpop.f32.mrb[0].mxu0
      %1479 = vmatprep.mubr.bf16.mxu0 %v1051
      %1480 = vmatmul.mubr.bf16.gmra.mrb[0].mxu0 %v1050
      %v1481 = vpop.f32.mrb[0].mxu0
      %v1482 = vadd.f32 %v1126, %v1481
      %v1483 = vpop.f32.mrb[0].mxu0
      %v1484 = vpop.f32.mrb[0].mxu0
      %v1485 = vadd.f32 %v1126, %v1484
      %v1486 = vpop.f32.mrb[0].mxu0
      %1487 = vmatprep.mubr.bf16.mxu0 %v1055
      %1488 = vmatmul.mubr.bf16.gmra.mrb[0].mxu0 %v1054
      %v1489 = vpop.f32.mrb[0].mxu0
      %v1490 = vadd.f32 %v1126, %v1489
      %v1491 = vpop.f32.mrb[0].mxu0
      %v1492 = vpop.f32.mrb[0].mxu0
      %v1493 = vadd.f32 %v1126, %v1492
      %v1494 = vpop.f32.mrb[0].mxu0
      %1495 = vmatprep.mubr.bf16.mxu0 %v1059
      %1496 = vmatmul.mubr.bf16.gmra.mrb[0].mxu0 %v1058
      %v1497 = vpop.f32.mrb[0].mxu0
      %v1498 = vadd.f32 %v1126, %v1497
      %v1499 = vpop.f32.mrb[0].mxu0
      %v1500 = vpop.f32.mrb[0].mxu0
      %v1501 = vadd.f32 %v1126, %v1500
      %v1502 = vpop.f32.mrb[0].mxu0
      %1503 = vdwg.mxu0
      %1504 = vmatprep.subr.bf16.mxu0 0
      %1505 = vmatpush1.bf16.msra.mxu0 %v1271
      %1506 = vmatprep.subr.bf16.mxu0 0
      %1507 = vmatpush1.bf16.msra.mxu0 %v1272
      %1508 = vmatprep.subr.bf16.mxu0 0
      %1509 = vmatpush1.bf16.msra.mxu0 %v1273
      %1510 = vmatprep.subr.bf16.mxu0 0
      %1511 = vmatpush1.bf16.msra.mxu0 %v1274
      %1512 = vmatprep.subr.bf16.mxu0 0
      %1513 = vmatpush1.bf16.msra.mxu0 %v1275
      %1514 = vmatprep.subr.bf16.mxu0 0
      %1515 = vmatpush1.bf16.msra.mxu0 %v1276
      %1516 = vmatprep.subr.bf16.mxu0 0
      %1517 = vmatpush1.bf16.msra.mxu0 %v1277
      %1518 = vmatprep.subr.bf16.mxu0 0
      %1519 = vmatpush1.bf16.msra.mxu0 %v1278
      %1520 = vmatprep.subr.bf16.mxu0 0
      %1521 = vmatpush1.bf16.msra.mxu0 %v1279
      %1522 = vmatprep.subr.bf16.mxu0 0
      %1523 = vmatpush1.bf16.msra.mxu0 %v1280
      %1524 = vmatprep.subr.bf16.mxu0 0
      %1525 = vmatpush1.bf16.msra.mxu0 %v1281
      %1526 = vmatprep.subr.bf16.mxu0 0
      %1527 = vmatpush1.bf16.msra.mxu0 %v1282
      %1528 = vmatprep.subr.bf16.mxu0 0
      %1529 = vmatpush1.bf16.msra.mxu0 %v1283
      %1530 = vmatprep.subr.bf16.mxu0 0
      %1531 = vmatpush1.bf16.msra.mxu0 %v1284
      %1532 = vmatprep.subr.bf16.mxu0 0
      %1533 = vmatpush1.bf16.msra.mxu0 %v1285
      %1534 = vmatprep.subr.bf16.mxu0 0
      %1535 = vmatpush1.bf16.msra.mxu0 %v1286
      %1536 = vmatprep.mubr.bf16.mxu0 %v989
      %1537 = vmatmul.mubr.bf16.gmra.mrb[0].mxu0 %v988
      %v1538 = vpop.f32.mrb[0].mxu0
      %v1539 = vadd.f32 %v1354, %v1538
      %v1540 = vpop.f32.mrb[0].mxu0
      %v1541 = vpop.f32.mrb[0].mxu0
      %v1542 = vadd.f32 %v1357, %v1541
      %v1543 = vpop.f32.mrb[0].mxu0
      %1544 = vmatprep.mubr.bf16.mxu0 %v993
      %1545 = vmatmul.mubr.bf16.gmra.mrb[0].mxu0 %v992
      %v1546 = vpop.f32.mrb[0].mxu0
      %v1547 = vadd.f32 %v1362, %v1546
      %v1548 = vpop.f32.mrb[0].mxu0
      %v1549 = vpop.f32.mrb[0].mxu0
      %v1550 = vadd.f32 %v1365, %v1549
      %v1551 = vpop.f32.mrb[0].mxu0
      %1552 = vmatprep.mubr.bf16.mxu0 %v997
      %1553 = vmatmul.mubr.bf16.gmra.mrb[0].mxu0 %v996
      %v1554 = vpop.f32.mrb[0].mxu0
      %v1555 = vadd.f32 %v1370, %v1554
      %v1556 = vpop.f32.mrb[0].mxu0
      %v1557 = vpop.f32.mrb[0].mxu0
      %v1558 = vadd.f32 %v1373, %v1557
      %v1559 = vpop.f32.mrb[0].mxu0
      %1560 = vmatprep.mubr.bf16.mxu0 %v1001
      %1561 = vmatmul.mubr.bf16.gmra.mrb[0].mxu0 %v1000
      %v1562 = vpop.f32.mrb[0].mxu0
      %v1563 = vadd.f32 %v1378, %v1562
      %v1564 = vpop.f32.mrb[0].mxu0
      %v1565 = vpop.f32.mrb[0].mxu0
      %v1566 = vadd.f32 %v1381, %v1565
      %v1567 = vpop.f32.mrb[0].mxu0
      %1568 = vmatprep.mubr.bf16.mxu0 %v1005
      %1569 = vmatmul.mubr.bf16.gmra.mrb[0].mxu0 %v1004
      %v1570 = vpop.f32.mrb[0].mxu0
      %v1571 = vadd.f32 %v1386, %v1570
      %v1572 = vpop.f32.mrb[0].mxu0
      %v1573 = vpop.f32.mrb[0].mxu0
      %v1574 = vadd.f32 %v1389, %v1573
      %v1575 = vpop.f32.mrb[0].mxu0
      %1576 = vmatprep.mubr.bf16.mxu0 %v1009
      %1577 = vmatmul.mubr.bf16.gmra.mrb[0].mxu0 %v1008
      %v1578 = vpop.f32.mrb[0].mxu0
      %v1579 = vadd.f32 %v1394, %v1578
      %v1580 = vpop.f32.mrb[0].mxu0
      %v1581 = vpop.f32.mrb[0].mxu0
      %v1582 = vadd.f32 %v1397, %v1581
      %v1583 = vpop.f32.mrb[0].mxu0
      %1584 = vmatprep.mubr.bf16.mxu0 %v1013
      %1585 = vmatmul.mubr.bf16.gmra.mrb[0].mxu0 %v1012
      %v1586 = vpop.f32.mrb[0].mxu0
      %v1587 = vadd.f32 %v1402, %v1586
      %v1588 = vpop.f32.mrb[0].mxu0
      %v1589 = vpop.f32.mrb[0].mxu0
      %v1590 = vadd.f32 %v1405, %v1589
      %v1591 = vpop.f32.mrb[0].mxu0
      %1592 = vmatprep.mubr.bf16.mxu0 %v1017
      %1593 = vmatmul.mubr.bf16.gmra.mrb[0].mxu0 %v1016
      %v1594 = vpop.f32.mrb[0].mxu0
      %v1595 = vadd.f32 %v1410, %v1594
      %v1596 = vpop.f32.mrb[0].mxu0
      %v1597 = vpop.f32.mrb[0].mxu0
      %v1598 = vadd.f32 %v1413, %v1597
      %v1599 = vpop.f32.mrb[0].mxu0
      %1600 = vmatprep.mubr.bf16.mxu0 %v1021
      %1601 = vmatmul.mubr.bf16.gmra.mrb[0].mxu0 %v1020
      %v1602 = vpop.f32.mrb[0].mxu0
      %v1603 = vadd.f32 %v1418, %v1602
      %v1604 = vpop.f32.mrb[0].mxu0
      %v1605 = vpop.f32.mrb[0].mxu0
      %v1606 = vadd.f32 %v1421, %v1605
      %v1607 = vpop.f32.mrb[0].mxu0
      %1608 = vmatprep.mubr.bf16.mxu0 %v1025
      %1609 = vmatmul.mubr.bf16.gmra.mrb[0].mxu0 %v1024
      %v1610 = vpop.f32.mrb[0].mxu0
      %v1611 = vadd.f32 %v1426, %v1610
      %v1612 = vpop.f32.mrb[0].mxu0
      %v1613 = vpop.f32.mrb[0].mxu0
      %v1614 = vadd.f32 %v1429, %v1613
      %v1615 = vpop.f32.mrb[0].mxu0
      %1616 = vmatprep.mubr.bf16.mxu0 %v1029
      %1617 = vmatmul.mubr.bf16.gmra.mrb[0].mxu0 %v1028
      %v1618 = vpop.f32.mrb[0].mxu0
      %v1619 = vadd.f32 %v1434, %v1618
      %v1620 = vpop.f32.mrb[0].mxu0
      %v1621 = vpop.f32.mrb[0].mxu0
      %v1622 = vadd.f32 %v1437, %v1621
      %v1623 = vpop.f32.mrb[0].mxu0
      %1624 = vmatprep.mubr.bf16.mxu0 %v1033
      %1625 = vmatmul.mubr.bf16.gmra.mrb[0].mxu0 %v1032
      %v1626 = vpop.f32.mrb[0].mxu0
      %v1627 = vadd.f32 %v1442, %v1626
      %v1628 = vpop.f32.mrb[0].mxu0
      %v1629 = vpop.f32.mrb[0].mxu0
      %v1630 = vadd.f32 %v1445, %v1629
      %v1631 = vpop.f32.mrb[0].mxu0
      %1632 = vmatprep.mubr.bf16.mxu0 %v1037
      %1633 = vmatmul.mubr.bf16.gmra.mrb[0].mxu0 %v1036
      %v1634 = vpop.f32.mrb[0].mxu0
      %v1635 = vadd.f32 %v1450, %v1634
      %v1636 = vpop.f32.mrb[0].mxu0
      %v1637 = vpop.f32.mrb[0].mxu0
      %v1638 = vadd.f32 %v1453, %v1637
      %v1639 = vpop.f32.mrb[0].mxu0
      %1640 = vmatprep.mubr.bf16.mxu0 %v1041
      %1641 = vmatmul.mubr.bf16.gmra.mrb[0].mxu0 %v1040
      %v1642 = vpop.f32.mrb[0].mxu0
      %v1643 = vadd.f32 %v1458, %v1642
      %v1644 = vpop.f32.mrb[0].mxu0
      %v1645 = vpop.f32.mrb[0].mxu0
      %v1646 = vadd.f32 %v1461, %v1645
      %v1647 = vpop.f32.mrb[0].mxu0
      %1648 = vmatprep.mubr.bf16.mxu0 %v1045
      %1649 = vmatmul.mubr.bf16.gmra.mrb[0].mxu0 %v1044
      %v1650 = vpop.f32.mrb[0].mxu0
      %v1651 = vadd.f32 %v1466, %v1650
      %v1652 = vpop.f32.mrb[0].mxu0
      %v1653 = vpop.f32.mrb[0].mxu0
      %v1654 = vadd.f32 %v1469, %v1653
      %v1655 = vpop.f32.mrb[0].mxu0
      %1656 = vmatprep.mubr.bf16.mxu0 %v1049
      %1657 = vmatmul.mubr.bf16.gmra.mrb[0].mxu0 %v1048
      %v1658 = vpop.f32.mrb[0].mxu0
      %v1659 = vadd.f32 %v1474, %v1658
      %v1660 = vpop.f32.mrb[0].mxu0
      %v1661 = vpop.f32.mrb[0].mxu0
      %v1662 = vadd.f32 %v1477, %v1661
      %v1663 = vpop.f32.mrb[0].mxu0
      %1664 = vmatprep.mubr.bf16.mxu0 %v1053
      %1665 = vmatmul.mubr.bf16.gmra.mrb[0].mxu0 %v1052
      %v1666 = vpop.f32.mrb[0].mxu0
      %v1667 = vadd.f32 %v1482, %v1666
      %v1668 = vpop.f32.mrb[0].mxu0
      %v1669 = vpop.f32.mrb[0].mxu0
      %v1670 = vadd.f32 %v1485, %v1669
      %v1671 = vpop.f32.mrb[0].mxu0
      %1672 = vmatprep.mubr.bf16.mxu0 %v1057
      %1673 = vmatmul.mubr.bf16.gmra.mrb[0].mxu0 %v1056
      %v1674 = vpop.f32.mrb[0].mxu0
      %v1675 = vadd.f32 %v1490, %v1674
      %v1676 = vpop.f32.mrb[0].mxu0
      %v1677 = vpop.f32.mrb[0].mxu0
      %v1678 = vadd.f32 %v1493, %v1677
      %v1679 = vpop.f32.mrb[0].mxu0
      %1680 = vmatprep.mubr.bf16.mxu0 %v1061
      %1681 = vmatmul.mubr.bf16.gmra.mrb[0].mxu0 %v1060
      %v1682 = vpop.f32.mrb[0].mxu0
      %v1683 = vadd.f32 %v1498, %v1682
      %v1684 = vpop.f32.mrb[0].mxu0
      %v1685 = vpop.f32.mrb[0].mxu0
      %v1686 = vadd.f32 %v1501, %v1685
      %v1687 = vpop.f32.mrb[0].mxu0
      %1688 = vdwg.mxu0
      %v1689 = vmax.f32 %v1539, 0.0
      %v1690 = vmax.f32 %v1542, 0.0
      %v1691 = vmax.f32 %v1547, 0.0
      %v1692 = vmax.f32 %v1550, 0.0
      %v1693 = vmax.f32 %v1555, 0.0
      %v1694 = vmax.f32 %v1558, 0.0
      %v1695 = vmax.f32 %v1563, 0.0
      %v1696 = vmax.f32 %v1566, 0.0
      %v1697 = vmax.f32 %v1571, 0.0
      %v1698 = vmax.f32 %v1574, 0.0
      %v1699 = vmax.f32 %v1579, 0.0
      %v1700 = vmax.f32 %v1582, 0.0
      %v1701 = vmax.f32 %v1587, 0.0
      %v1702 = vmax.f32 %v1590, 0.0
      %v1703 = vmax.f32 %v1595, 0.0
      %v1704 = vmax.f32 %v1598, 0.0
      %v1705 = vmax.f32 %v1603, 0.0
      %v1706 = vmax.f32 %v1606, 0.0
      %v1707 = vmax.f32 %v1611, 0.0
      %v1708 = vmax.f32 %v1614, 0.0
      %v1709 = vmax.f32 %v1619, 0.0
      %v1710 = vmax.f32 %v1622, 0.0
      %v1711 = vmax.f32 %v1627, 0.0
      %v1712 = vmax.f32 %v1630, 0.0
      %v1713 = vmax.f32 %v1635, 0.0
      %v1714 = vmax.f32 %v1638, 0.0
      %v1715 = vmax.f32 %v1643, 0.0
      %v1716 = vmax.f32 %v1646, 0.0
      %v1717 = vmax.f32 %v1651, 0.0
      %v1718 = vmax.f32 %v1654, 0.0
      %v1719 = vmax.f32 %v1659, 0.0
      %v1720 = vmax.f32 %v1662, 0.0
      %v1721 = vmax.f32 %v1667, 0.0
      %v1722 = vmax.f32 %v1670, 0.0
      %v1723 = vmax.f32 %v1675, 0.0
      %v1724 = vmax.f32 %v1678, 0.0
      %v1725 = vmax.f32 %v1683, 0.0
      %v1726 = vmax.f32 %v1686, 0.0
      %v1727 = vpack.c.bf16 %v1690, %v1689
      %v1728 = vpack.c.bf16 %v1692, %v1691
      %v1729 = vpack.c.bf16 %v1694, %v1693
      %v1730 = vpack.c.bf16 %v1696, %v1695
      %v1731 = vpack.c.bf16 %v1698, %v1697
      %v1732 = vpack.c.bf16 %v1700, %v1699
      %v1733 = vpack.c.bf16 %v1702, %v1701
      %v1734 = vpack.c.bf16 %v1704, %v1703
      %v1735 = vpack.c.bf16 %v1706, %v1705
      %v1736 = vpack.c.bf16 %v1708, %v1707
      %v1737 = vpack.c.bf16 %v1710, %v1709
      %v1738 = vpack.c.bf16 %v1712, %v1711
      %v1739 = vpack.c.bf16 %v1714, %v1713
      %v1740 = vpack.c.bf16 %v1716, %v1715
      %v1741 = vpack.c.bf16 %v1718, %v1717
      %v1742 = vpack.c.bf16 %v1720, %v1719
      %v1743 = vpack.c.bf16 %v1722, %v1721
      %v1744 = vpack.c.bf16 %v1724, %v1723
      %v1745 = vpack.c.bf16 %v1726, %v1725
      %v1746 = vld [vmem:[%s3] sm:$0xff]
      %v1747 = vld [vmem:[%s3 + $0x8] sm:$0xff]
      %v1748 = vld [vmem:[%s3 + $0x10] sm:$0xff]
      %v1749 = vld [vmem:[%s3 + $0x18] sm:$0xff]
      %v1750 = vld [vmem:[%s3 + $0x20] sm:$0xff]
      %v1751 = vld [vmem:[%s3 + $0x28] sm:$0xff]
      %v1752 = vld [vmem:[%s3 + $0x30] sm:$0xff]
      %v1753 = vld [vmem:[%s3 + $0x38] sm:$0xff]
      %v1754 = vld [vmem:[%s3 + $0x40] sm:$0xff]
      %v1755 = vld [vmem:[%s3 + $0x48] sm:$0xff]
      %v1756 = vld [vmem:[%s3 + $0x50] sm:$0xff]
      %v1757 = vld [vmem:[%s3 + $0x58] sm:$0xff]
      %v1758 = vld [vmem:[%s3 + $0x60] sm:$0xff]
      %v1759 = vld [vmem:[%s3 + $0x68] sm:$0xff]
      %v1760 = vld [vmem:[%s3 + $0x70] sm:$0xff]
      %v1761 = vld [vmem:[%s3 + $0x78] sm:$0xff]
      %v1762 = vld [vmem:[%s3 + $0x80] sm:$0xff]
      %v1763 = vld [vmem:[%s3 + $0x88] sm:$0xff]
      %v1764 = vld [vmem:[%s3 + $0x90] sm:$0xff]
      %v1765 = vld [vmem:[%s3 + $0x98] sm:$0xff]
      %v1766 = vld [vmem:[%s3 + $0xa0] sm:$0xff]
      %v1767 = vld [vmem:[%s3 + $0xa8] sm:$0xff]
      %v1768 = vld [vmem:[%s3 + $0xb0] sm:$0xff]
      %v1769 = vld [vmem:[%s3 + $0xb8] sm:$0xff]
      %v1770 = vld [vmem:[%s3 + $0xc0] sm:$0xff]
      %v1771 = vld [vmem:[%s3 + $0xc8] sm:$0xff]
      %v1772 = vld [vmem:[%s3 + $0xd0] sm:$0xff]
      %v1773 = vld [vmem:[%s3 + $0xd8] sm:$0xff]
      %v1774 = vld [vmem:[%s3 + $0xe0] sm:$0xff]
      %v1775 = vld [vmem:[%s3 + $0xe8] sm:$0xff]
      %v1776 = vld [vmem:[%s3 + $0xf0] sm:$0xff]
      %v1777 = vld [vmem:[%s3 + $0xf8] sm:$0xff]
      %s1778 = scalar_lea.vmem %s4, 2
      %v1779 = vld [vmem:[%s1778] ss:$8 sm:$0xf]
      %v1781 = vlaneseq
      %v1782 = vshrl.u32 %v1781, 7
      %v1783 = vsub.s32 0, %v1782
      %v1784 = vrot.slane %v1779, %v1783
      %v1785 = vlaneseq
      %v1786 = vshrl.u32 %v1785, 7
      %v1787 = vsub.s32 1, %v1786
      %v1788 = vrot.slane %v1779, %v1787
      %v1789 = vlaneseq
      %v1790 = vshrl.u32 %v1789, 7
      %v1791 = vsub.s32 2, %v1790
      %v1792 = vrot.slane %v1779, %v1791
      %v1793 = vlaneseq
      %v1794 = vshrl.u32 %v1793, 7
      %v1795 = vsub.s32 3, %v1794
      %v1796 = vrot.slane %v1779, %v1795
      %v1833 = vunpack.c.l.b16 %v1746
      %v1834 = vunpack.c.h.b16 %v1746
      %v1835 = vunpack.c.l.b16 %v1747
      %v1836 = vunpack.c.h.b16 %v1747
      %v1837 = vunpack.c.l.b16 %v1748
      %v1838 = vunpack.c.h.b16 %v1748
      %v1839 = vunpack.c.l.b16 %v1749
      %v1840 = vunpack.c.h.b16 %v1749
      %v1841 = vunpack.c.l.b16 %v1750
      %v1842 = vunpack.c.h.b16 %v1750
      %v1843 = vunpack.c.l.b16 %v1751
      %v1844 = vunpack.c.h.b16 %v1751
      %v1845 = vunpack.c.l.b16 %v1752
      %v1846 = vunpack.c.h.b16 %v1752
      %v1847 = vunpack.c.l.b16 %v1753
      %v1848 = vunpack.c.h.b16 %v1753
      %v1849 = vunpack.c.l.b16 %v1754
      %v1850 = vunpack.c.h.b16 %v1754
      %v1851 = vunpack.c.l.b16 %v1755
      %v1852 = vunpack.c.h.b16 %v1755
      %v1853 = vunpack.c.l.b16 %v1756
      %v1854 = vunpack.c.h.b16 %v1756
      %v1855 = vunpack.c.l.b16 %v1757
      %v1856 = vunpack.c.h.b16 %v1757
      %v1857 = vunpack.c.l.b16 %v1758
      %v1858 = vunpack.c.h.b16 %v1758
      %v1859 = vunpack.c.l.b16 %v1759
      %v1860 = vunpack.c.h.b16 %v1759
      %v1861 = vunpack.c.l.b16 %v1760
      %v1862 = vunpack.c.h.b16 %v1760
      %v1863 = vunpack.c.l.b16 %v1761
      %v1864 = vunpack.c.h.b16 %v1761
      %v1865 = vunpack.c.l.b16 %v1762
      %v1866 = vunpack.c.h.b16 %v1762
      %v1867 = vunpack.c.l.b16 %v1763
      %v1868 = vunpack.c.h.b16 %v1763
      %v1869 = vunpack.c.l.b16 %v1764
      %v1870 = vunpack.c.h.b16 %v1764
      %v1871 = vunpack.c.l.b16 %v1765
      %v1872 = vunpack.c.h.b16 %v1765
      %v1873 = vunpack.c.l.b16 %v1766
      %v1874 = vunpack.c.h.b16 %v1766
      %v1875 = vunpack.c.l.b16 %v1767
      %v1876 = vunpack.c.h.b16 %v1767
      %v1877 = vunpack.c.l.b16 %v1768
      %v1878 = vunpack.c.h.b16 %v1768
      %v1879 = vunpack.c.l.b16 %v1769
      %v1880 = vunpack.c.h.b16 %v1769
      %v1881 = vunpack.c.l.b16 %v1770
      %v1882 = vunpack.c.h.b16 %v1770
      %v1883 = vunpack.c.l.b16 %v1771
      %v1884 = vunpack.c.h.b16 %v1771
      %v1885 = vunpack.c.l.b16 %v1772
      %v1886 = vunpack.c.h.b16 %v1772
      %v1887 = vunpack.c.l.b16 %v1773
      %v1888 = vunpack.c.h.b16 %v1773
      %v1889 = vunpack.c.l.b16 %v1774
      %v1890 = vunpack.c.h.b16 %v1774
      %v1891 = vunpack.c.l.b16 %v1775
      %v1892 = vunpack.c.h.b16 %v1775
      %v1893 = vunpack.c.l.b16 %v1776
      %v1894 = vunpack.c.h.b16 %v1776
      %v1895 = vunpack.c.l.b16 %v1777
      %v1896 = vunpack.c.h.b16 %v1777
      %v1897 = vpack.c.b16 %v1837, %v1833
      %v1898 = vpack.c.b16 %v1838, %v1834
      %v1899 = vpack.c.b16 %v1839, %v1835
      %v1900 = vpack.c.b16 %v1840, %v1836
      %v1901 = vpack.c.b16 %v1845, %v1841
      %v1902 = vpack.c.b16 %v1846, %v1842
      %v1903 = vpack.c.b16 %v1847, %v1843
      %v1904 = vpack.c.b16 %v1848, %v1844
      %v1905 = vpack.c.b16 %v1853, %v1849
      %v1906 = vpack.c.b16 %v1854, %v1850
      %v1907 = vpack.c.b16 %v1855, %v1851
      %v1908 = vpack.c.b16 %v1856, %v1852
      %v1909 = vpack.c.b16 %v1861, %v1857
      %v1910 = vpack.c.b16 %v1862, %v1858
      %v1911 = vpack.c.b16 %v1863, %v1859
      %v1912 = vpack.c.b16 %v1864, %v1860
      %v1913 = vpack.c.b16 %v1869, %v1865
      %v1914 = vpack.c.b16 %v1870, %v1866
      %v1915 = vpack.c.b16 %v1871, %v1867
      %v1916 = vpack.c.b16 %v1872, %v1868
      %v1917 = vpack.c.b16 %v1877, %v1873
      %v1918 = vpack.c.b16 %v1878, %v1874
      %v1919 = vpack.c.b16 %v1879, %v1875
      %v1920 = vpack.c.b16 %v1880, %v1876
      %v1921 = vpack.c.b16 %v1885, %v1881
      %v1922 = vpack.c.b16 %v1886, %v1882
      %v1923 = vpack.c.b16 %v1887, %v1883
      %v1924 = vpack.c.b16 %v1888, %v1884
      %v1925 = vpack.c.b16 %v1893, %v1889
      %v1926 = vpack.c.b16 %v1894, %v1890
      %v1927 = vpack.c.b16 %v1895, %v1891
      %v1928 = vpack.c.b16 %v1896, %v1892
      %1961 = vmatprep.subr.bf16.mxu0 %v1898
      %1962 = vmatpush1.bf16.msra.mxu0 %v1897
      %1963 = vmatprep.subr.bf16.mxu0 %v1902
      %1964 = vmatpush1.bf16.msra.mxu0 %v1901
      %1965 = vmatprep.subr.bf16.mxu0 %v1906
      %1966 = vmatpush1.bf16.msra.mxu0 %v1905
      %1967 = vmatprep.subr.bf16.mxu0 %v1910
      %1968 = vmatpush1.bf16.msra.mxu0 %v1909
      %1969 = vmatprep.subr.bf16.mxu0 %v1914
      %1970 = vmatpush1.bf16.msra.mxu0 %v1913
      %1971 = vmatprep.subr.bf16.mxu0 %v1918
      %1972 = vmatpush1.bf16.msra.mxu0 %v1917
      %1973 = vmatprep.subr.bf16.mxu0 %v1922
      %1974 = vmatpush1.bf16.msra.mxu0 %v1921
      %1975 = vmatprep.subr.bf16.mxu0 %v1926
      %1976 = vmatpush1.bf16.msra.mxu0 %v1925
      %1977 = vmatprep.subr.bf16.mxu0 0
      %1978 = vmatpush1.bf16.msra.mxu0 0
      %1979 = vmatprep.subr.bf16.mxu0 0
      %1980 = vmatpush1.bf16.msra.mxu0 0
      %1981 = vmatprep.subr.bf16.mxu0 0
      %1982 = vmatpush1.bf16.msra.mxu0 0
      %1983 = vmatprep.subr.bf16.mxu0 0
      %1984 = vmatpush1.bf16.msra.mxu0 0
      %1985 = vmatprep.subr.bf16.mxu0 0
      %1986 = vmatpush1.bf16.msra.mxu0 0
      %1987 = vmatprep.subr.bf16.mxu0 0
      %1988 = vmatpush1.bf16.msra.mxu0 0
      %1989 = vmatprep.subr.bf16.mxu0 0
      %1990 = vmatpush1.bf16.msra.mxu0 0
      %1991 = vmatprep.subr.bf16.mxu0 0
      %1992 = vmatpush1.bf16.msra.mxu0 0
      %1993 = vmatprep.mubr.bf16.mxu0 0
      %1994 = vmatmul.mubr.bf16.gmra.mrb[0].mxu0 %v1727
      %v1995 = vpop.f32.mrb[0].mxu0
      %v1996 = vadd.f32 %v1784, %v1995
      %v1997 = vpop.f32.mrb[0].mxu0
      %v1998 = vadd.f32 %v1788, %v1997
      %v1999 = vpop.f32.mrb[0].mxu0
      %v2000 = vadd.f32 %v1784, %v1999
      %v2001 = vpop.f32.mrb[0].mxu0
      %v2002 = vadd.f32 %v1788, %v2001
      %2003 = vmatprep.mubr.bf16.mxu0 0
      %2004 = vmatmul.mubr.bf16.gmra.mrb[0].mxu0 %v1728
      %v2005 = vpop.f32.mrb[0].mxu0
      %v2006 = vadd.f32 %v1784, %v2005
      %v2007 = vpop.f32.mrb[0].mxu0
      %v2008 = vadd.f32 %v1788, %v2007
      %v2009 = vpop.f32.mrb[0].mxu0
      %v2010 = vadd.f32 %v1784, %v2009
      %v2011 = vpop.f32.mrb[0].mxu0
      %v2012 = vadd.f32 %v1788, %v2011
      %2013 = vmatprep.mubr.bf16.mxu0 0
      %2014 = vmatmul.mubr.bf16.gmra.mrb[0].mxu0 %v1729
      %v2015 = vpop.f32.mrb[0].mxu0
      %v2016 = vadd.f32 %v1784, %v2015
      %v2017 = vpop.f32.mrb[0].mxu0
      %v2018 = vadd.f32 %v1788, %v2017
      %v2019 = vpop.f32.mrb[0].mxu0
      %v2020 = vadd.f32 %v1784, %v2019
      %v2021 = vpop.f32.mrb[0].mxu0
      %v2022 = vadd.f32 %v1788, %v2021
      %2023 = vmatprep.mubr.bf16.mxu0 0
      %2024 = vmatmul.mubr.bf16.gmra.mrb[0].mxu0 %v1730
      %v2025 = vpop.f32.mrb[0].mxu0
      %v2026 = vadd.f32 %v1784, %v2025
      %v2027 = vpop.f32.mrb[0].mxu0
      %v2028 = vadd.f32 %v1788, %v2027
      %v2029 = vpop.f32.mrb[0].mxu0
      %v2030 = vadd.f32 %v1784, %v2029
      %v2031 = vpop.f32.mrb[0].mxu0
      %v2032 = vadd.f32 %v1788, %v2031
      %2033 = vmatprep.mubr.bf16.mxu0 0
      %2034 = vmatmul.mubr.bf16.gmra.mrb[0].mxu0 %v1731
      %v2035 = vpop.f32.mrb[0].mxu0
      %v2036 = vadd.f32 %v1784, %v2035
      %v2037 = vpop.f32.mrb[0].mxu0
      %v2038 = vadd.f32 %v1788, %v2037
      %v2039 = vpop.f32.mrb[0].mxu0
      %v2040 = vadd.f32 %v1784, %v2039
      %v2041 = vpop.f32.mrb[0].mxu0
      %v2042 = vadd.f32 %v1788, %v2041
      %2043 = vmatprep.mubr.bf16.mxu0 0
      %2044 = vmatmul.mubr.bf16.gmra.mrb[0].mxu0 %v1732
      %v2045 = vpop.f32.mrb[0].mxu0
      %v2046 = vadd.f32 %v1784, %v2045
      %v2047 = vpop.f32.mrb[0].mxu0
      %v2048 = vadd.f32 %v1788, %v2047
      %v2049 = vpop.f32.mrb[0].mxu0
      %v2050 = vadd.f32 %v1784, %v2049
      %v2051 = vpop.f32.mrb[0].mxu0
      %v2052 = vadd.f32 %v1788, %v2051
      %2053 = vmatprep.mubr.bf16.mxu0 0
      %2054 = vmatmul.mubr.bf16.gmra.mrb[0].mxu0 %v1733
      %v2055 = vpop.f32.mrb[0].mxu0
      %v2056 = vadd.f32 %v1784, %v2055
      %v2057 = vpop.f32.mrb[0].mxu0
      %v2058 = vadd.f32 %v1788, %v2057
      %v2059 = vpop.f32.mrb[0].mxu0
      %v2060 = vadd.f32 %v1784, %v2059
      %v2061 = vpop.f32.mrb[0].mxu0
      %v2062 = vadd.f32 %v1788, %v2061
      %2063 = vmatprep.mubr.bf16.mxu0 0
      %2064 = vmatmul.mubr.bf16.gmra.mrb[0].mxu0 %v1734
      %v2065 = vpop.f32.mrb[0].mxu0
      %v2066 = vadd.f32 %v1784, %v2065
      %v2067 = vpop.f32.mrb[0].mxu0
      %v2068 = vadd.f32 %v1788, %v2067
      %v2069 = vpop.f32.mrb[0].mxu0
      %v2070 = vadd.f32 %v1784, %v2069
      %v2071 = vpop.f32.mrb[0].mxu0
      %v2072 = vadd.f32 %v1788, %v2071
      %2073 = vmatprep.mubr.bf16.mxu0 0
      %2074 = vmatmul.mubr.bf16.gmra.mrb[0].mxu0 %v1735
      %v2075 = vpop.f32.mrb[0].mxu0
      %v2076 = vadd.f32 %v1784, %v2075
      %v2077 = vpop.f32.mrb[0].mxu0
      %v2078 = vadd.f32 %v1788, %v2077
      %v2079 = vpop.f32.mrb[0].mxu0
      %v2080 = vadd.f32 %v1784, %v2079
      %v2081 = vpop.f32.mrb[0].mxu0
      %v2082 = vadd.f32 %v1788, %v2081
      %2083 = vmatprep.mubr.bf16.mxu0 0
      %2084 = vmatmul.mubr.bf16.gmra.mrb[0].mxu0 %v1736
      %v2085 = vpop.f32.mrb[0].mxu0
      %v2086 = vadd.f32 %v1784, %v2085
      %v2087 = vpop.f32.mrb[0].mxu0
      %v2088 = vadd.f32 %v1788, %v2087
      %v2089 = vpop.f32.mrb[0].mxu0
      %v2090 = vadd.f32 %v1784, %v2089
      %v2091 = vpop.f32.mrb[0].mxu0
      %v2092 = vadd.f32 %v1788, %v2091
      %2093 = vmatprep.mubr.bf16.mxu0 0
      %2094 = vmatmul.mubr.bf16.gmra.mrb[0].mxu0 %v1737
      %v2095 = vpop.f32.mrb[0].mxu0
      %v2096 = vadd.f32 %v1784, %v2095
      %v2097 = vpop.f32.mrb[0].mxu0
      %v2098 = vadd.f32 %v1788, %v2097
      %v2099 = vpop.f32.mrb[0].mxu0
      %v2100 = vadd.f32 %v1784, %v2099
      %v2101 = vpop.f32.mrb[0].mxu0
      %v2102 = vadd.f32 %v1788, %v2101
      %2103 = vmatprep.mubr.bf16.mxu0 0
      %2104 = vmatmul.mubr.bf16.gmra.mrb[0].mxu0 %v1738
      %v2105 = vpop.f32.mrb[0].mxu0
      %v2106 = vadd.f32 %v1784, %v2105
      %v2107 = vpop.f32.mrb[0].mxu0
      %v2108 = vadd.f32 %v1788, %v2107
      %v2109 = vpop.f32.mrb[0].mxu0
      %v2110 = vadd.f32 %v1784, %v2109
      %v2111 = vpop.f32.mrb[0].mxu0
      %v2112 = vadd.f32 %v1788, %v2111
      %2113 = vmatprep.mubr.bf16.mxu0 0
      %2114 = vmatmul.mubr.bf16.gmra.mrb[0].mxu0 %v1739
      %v2115 = vpop.f32.mrb[0].mxu0
      %v2116 = vadd.f32 %v1784, %v2115
      %v2117 = vpop.f32.mrb[0].mxu0
      %v2118 = vadd.f32 %v1788, %v2117
      %v2119 = vpop.f32.mrb[0].mxu0
      %v2120 = vadd.f32 %v1784, %v2119
      %v2121 = vpop.f32.mrb[0].mxu0
      %v2122 = vadd.f32 %v1788, %v2121
      %2123 = vmatprep.mubr.bf16.mxu0 0
      %2124 = vmatmul.mubr.bf16.gmra.mrb[0].mxu0 %v1740
      %v2125 = vpop.f32.mrb[0].mxu0
      %v2126 = vadd.f32 %v1784, %v2125
      %v2127 = vpop.f32.mrb[0].mxu0
      %v2128 = vadd.f32 %v1788, %v2127
      %v2129 = vpop.f32.mrb[0].mxu0
      %v2130 = vadd.f32 %v1784, %v2129
      %v2131 = vpop.f32.mrb[0].mxu0
      %v2132 = vadd.f32 %v1788, %v2131
      %2133 = vmatprep.mubr.bf16.mxu0 0
      %2134 = vmatmul.mubr.bf16.gmra.mrb[0].mxu0 %v1741
      %v2135 = vpop.f32.mrb[0].mxu0
      %v2136 = vadd.f32 %v1784, %v2135
      %v2137 = vpop.f32.mrb[0].mxu0
      %v2138 = vadd.f32 %v1788, %v2137
      %v2139 = vpop.f32.mrb[0].mxu0
      %v2140 = vadd.f32 %v1784, %v2139
      %v2141 = vpop.f32.mrb[0].mxu0
      %v2142 = vadd.f32 %v1788, %v2141
      %2143 = vmatprep.mubr.bf16.mxu0 0
      %2144 = vmatmul.mubr.bf16.gmra.mrb[0].mxu0 %v1742
      %v2145 = vpop.f32.mrb[0].mxu0
      %v2146 = vadd.f32 %v1784, %v2145
      %v2147 = vpop.f32.mrb[0].mxu0
      %v2148 = vadd.f32 %v1788, %v2147
      %v2149 = vpop.f32.mrb[0].mxu0
      %v2150 = vadd.f32 %v1784, %v2149
      %v2151 = vpop.f32.mrb[0].mxu0
      %v2152 = vadd.f32 %v1788, %v2151
      %2153 = vmatprep.mubr.bf16.mxu0 0
      %2154 = vmatmul.mubr.bf16.gmra.mrb[0].mxu0 %v1743
      %v2155 = vpop.f32.mrb[0].mxu0
      %v2156 = vadd.f32 %v1784, %v2155
      %v2157 = vpop.f32.mrb[0].mxu0
      %v2158 = vadd.f32 %v1788, %v2157
      %v2159 = vpop.f32.mrb[0].mxu0
      %v2160 = vadd.f32 %v1784, %v2159
      %v2161 = vpop.f32.mrb[0].mxu0
      %v2162 = vadd.f32 %v1788, %v2161
      %2163 = vmatprep.mubr.bf16.mxu0 0
      %2164 = vmatmul.mubr.bf16.gmra.mrb[0].mxu0 %v1744
      %v2165 = vpop.f32.mrb[0].mxu0
      %v2166 = vadd.f32 %v1784, %v2165
      %v2167 = vpop.f32.mrb[0].mxu0
      %v2168 = vadd.f32 %v1788, %v2167
      %v2169 = vpop.f32.mrb[0].mxu0
      %v2170 = vadd.f32 %v1784, %v2169
      %v2171 = vpop.f32.mrb[0].mxu0
      %v2172 = vadd.f32 %v1788, %v2171
      %2173 = vmatprep.mubr.bf16.mxu0 0
      %2174 = vmatmul.mubr.bf16.gmra.mrb[0].mxu0 %v1745
      %v2175 = vpop.f32.mrb[0].mxu0
      %v2176 = vadd.f32 %v1784, %v2175
      %v2177 = vpop.f32.mrb[0].mxu0
      %v2178 = vadd.f32 %v1788, %v2177
      %v2179 = vpop.f32.mrb[0].mxu0
      %v2180 = vadd.f32 %v1784, %v2179
      %v2181 = vpop.f32.mrb[0].mxu0
      %v2182 = vadd.f32 %v1788, %v2181
      %2183 = vdwg.mxu0
      %2184 = vmatprep.subr.bf16.mxu0 %v1900
      %2185 = vmatpush1.bf16.msra.mxu0 %v1899
      %2186 = vmatprep.subr.bf16.mxu0 %v1904
      %2187 = vmatpush1.bf16.msra.mxu0 %v1903
      %2188 = vmatprep.subr.bf16.mxu0 %v1908
      %2189 = vmatpush1.bf16.msra.mxu0 %v1907
      %2190 = vmatprep.subr.bf16.mxu0 %v1912
      %2191 = vmatpush1.bf16.msra.mxu0 %v1911
      %2192 = vmatprep.subr.bf16.mxu0 %v1916
      %2193 = vmatpush1.bf16.msra.mxu0 %v1915
      %2194 = vmatprep.subr.bf16.mxu0 %v1920
      %2195 = vmatpush1.bf16.msra.mxu0 %v1919
      %2196 = vmatprep.subr.bf16.mxu0 %v1924
      %2197 = vmatpush1.bf16.msra.mxu0 %v1923
      %2198 = vmatprep.subr.bf16.mxu0 %v1928
      %2199 = vmatpush1.bf16.msra.mxu0 %v1927
      %2200 = vmatprep.subr.bf16.mxu0 0
      %2201 = vmatpush1.bf16.msra.mxu0 0
      %2202 = vmatprep.subr.bf16.mxu0 0
      %2203 = vmatpush1.bf16.msra.mxu0 0
      %2204 = vmatprep.subr.bf16.mxu0 0
      %2205 = vmatpush1.bf16.msra.mxu0 0
      %2206 = vmatprep.subr.bf16.mxu0 0
      %2207 = vmatpush1.bf16.msra.mxu0 0
      %2208 = vmatprep.subr.bf16.mxu0 0
      %2209 = vmatpush1.bf16.msra.mxu0 0
      %2210 = vmatprep.subr.bf16.mxu0 0
      %2211 = vmatpush1.bf16.msra.mxu0 0
      %2212 = vmatprep.subr.bf16.mxu0 0
      %2213 = vmatpush1.bf16.msra.mxu0 0
      %2214 = vmatprep.subr.bf16.mxu0 0
      %2215 = vmatpush1.bf16.msra.mxu0 0
      %2216 = vmatprep.mubr.bf16.mxu0 0
      %2217 = vmatmul.mubr.bf16.gmra.mrb[0].mxu0 %v1727
      %v2218 = vpop.f32.mrb[0].mxu0
      %v2219 = vadd.f32 %v1792, %v2218
      %v2220 = vpop.f32.mrb[0].mxu0
      %v2221 = vadd.f32 %v1796, %v2220
      %v2222 = vpop.f32.mrb[0].mxu0
      %v2223 = vadd.f32 %v1792, %v2222
      %v2224 = vpop.f32.mrb[0].mxu0
      %v2225 = vadd.f32 %v1796, %v2224
      %2226 = vmatprep.mubr.bf16.mxu0 0
      %2227 = vmatmul.mubr.bf16.gmra.mrb[0].mxu0 %v1728
      %v2228 = vpop.f32.mrb[0].mxu0
      %v2229 = vadd.f32 %v1792, %v2228
      %v2230 = vpop.f32.mrb[0].mxu0
      %v2231 = vadd.f32 %v1796, %v2230
      %v2232 = vpop.f32.mrb[0].mxu0
      %v2233 = vadd.f32 %v1792, %v2232
      %v2234 = vpop.f32.mrb[0].mxu0
      %v2235 = vadd.f32 %v1796, %v2234
      %2236 = vmatprep.mubr.bf16.mxu0 0
      %2237 = vmatmul.mubr.bf16.gmra.mrb[0].mxu0 %v1729
      %v2238 = vpop.f32.mrb[0].mxu0
      %v2239 = vadd.f32 %v1792, %v2238
      %v2240 = vpop.f32.mrb[0].mxu0
      %v2241 = vadd.f32 %v1796, %v2240
      %v2242 = vpop.f32.mrb[0].mxu0
      %v2243 = vadd.f32 %v1792, %v2242
      %v2244 = vpop.f32.mrb[0].mxu0
      %v2245 = vadd.f32 %v1796, %v2244
      %2246 = vmatprep.mubr.bf16.mxu0 0
      %2247 = vmatmul.mubr.bf16.gmra.mrb[0].mxu0 %v1730
      %v2248 = vpop.f32.mrb[0].mxu0
      %v2249 = vadd.f32 %v1792, %v2248
      %v2250 = vpop.f32.mrb[0].mxu0
      %v2251 = vadd.f32 %v1796, %v2250
      %v2252 = vpop.f32.mrb[0].mxu0
      %v2253 = vadd.f32 %v1792, %v2252
      %v2254 = vpop.f32.mrb[0].mxu0
      %v2255 = vadd.f32 %v1796, %v2254
      %2256 = vmatprep.mubr.bf16.mxu0 0
      %2257 = vmatmul.mubr.bf16.gmra.mrb[0].mxu0 %v1731
      %v2258 = vpop.f32.mrb[0].mxu0
      %v2259 = vadd.f32 %v1792, %v2258
      %v2260 = vpop.f32.mrb[0].mxu0
      %v2261 = vadd.f32 %v1796, %v2260
      %v2262 = vpop.f32.mrb[0].mxu0
      %v2263 = vadd.f32 %v1792, %v2262
      %v2264 = vpop.f32.mrb[0].mxu0
      %v2265 = vadd.f32 %v1796, %v2264
      %2266 = vmatprep.mubr.bf16.mxu0 0
      %2267 = vmatmul.mubr.bf16.gmra.mrb[0].mxu0 %v1732
      %v2268 = vpop.f32.mrb[0].mxu0
      %v2269 = vadd.f32 %v1792, %v2268
      %v2270 = vpop.f32.mrb[0].mxu0
      %v2271 = vadd.f32 %v1796, %v2270
      %v2272 = vpop.f32.mrb[0].mxu0
      %v2273 = vadd.f32 %v1792, %v2272
      %v2274 = vpop.f32.mrb[0].mxu0
      %v2275 = vadd.f32 %v1796, %v2274
      %2276 = vmatprep.mubr.bf16.mxu0 0
      %2277 = vmatmul.mubr.bf16.gmra.mrb[0].mxu0 %v1733
      %v2278 = vpop.f32.mrb[0].mxu0
      %v2279 = vadd.f32 %v1792, %v2278
      %v2280 = vpop.f32.mrb[0].mxu0
      %v2281 = vadd.f32 %v1796, %v2280
      %v2282 = vpop.f32.mrb[0].mxu0
      %v2283 = vadd.f32 %v1792, %v2282
      %v2284 = vpop.f32.mrb[0].mxu0
      %v2285 = vadd.f32 %v1796, %v2284
      %2286 = vmatprep.mubr.bf16.mxu0 0
      %2287 = vmatmul.mubr.bf16.gmra.mrb[0].mxu0 %v1734
      %v2288 = vpop.f32.mrb[0].mxu0
      %v2289 = vadd.f32 %v1792, %v2288
      %v2290 = vpop.f32.mrb[0].mxu0
      %v2291 = vadd.f32 %v1796, %v2290
      %v2292 = vpop.f32.mrb[0].mxu0
      %v2293 = vadd.f32 %v1792, %v2292
      %v2294 = vpop.f32.mrb[0].mxu0
      %v2295 = vadd.f32 %v1796, %v2294
      %2296 = vmatprep.mubr.bf16.mxu0 0
      %2297 = vmatmul.mubr.bf16.gmra.mrb[0].mxu0 %v1735
      %v2298 = vpop.f32.mrb[0].mxu0
      %v2299 = vadd.f32 %v1792, %v2298
      %v2300 = vpop.f32.mrb[0].mxu0
      %v2301 = vadd.f32 %v1796, %v2300
      %v2302 = vpop.f32.mrb[0].mxu0
      %v2303 = vadd.f32 %v1792, %v2302
      %v2304 = vpop.f32.mrb[0].mxu0
      %v2305 = vadd.f32 %v1796, %v2304
      %2306 = vmatprep.mubr.bf16.mxu0 0
      %2307 = vmatmul.mubr.bf16.gmra.mrb[0].mxu0 %v1736
      %v2308 = vpop.f32.mrb[0].mxu0
      %v2309 = vadd.f32 %v1792, %v2308
      %v2310 = vpop.f32.mrb[0].mxu0
      %v2311 = vadd.f32 %v1796, %v2310
      %v2312 = vpop.f32.mrb[0].mxu0
      %v2313 = vadd.f32 %v1792, %v2312
      %v2314 = vpop.f32.mrb[0].mxu0
      %v2315 = vadd.f32 %v1796, %v2314
      %2316 = vmatprep.mubr.bf16.mxu0 0
      %2317 = vmatmul.mubr.bf16.gmra.mrb[0].mxu0 %v1737
      %v2318 = vpop.f32.mrb[0].mxu0
      %v2319 = vadd.f32 %v1792, %v2318
      %v2320 = vpop.f32.mrb[0].mxu0
      %v2321 = vadd.f32 %v1796, %v2320
      %v2322 = vpop.f32.mrb[0].mxu0
      %v2323 = vadd.f32 %v1792, %v2322
      %v2324 = vpop.f32.mrb[0].mxu0
      %v2325 = vadd.f32 %v1796, %v2324
      %2326 = vmatprep.mubr.bf16.mxu0 0
      %2327 = vmatmul.mubr.bf16.gmra.mrb[0].mxu0 %v1738
      %v2328 = vpop.f32.mrb[0].mxu0
      %v2329 = vadd.f32 %v1792, %v2328
      %v2330 = vpop.f32.mrb[0].mxu0
      %v2331 = vadd.f32 %v1796, %v2330
      %v2332 = vpop.f32.mrb[0].mxu0
      %v2333 = vadd.f32 %v1792, %v2332
      %v2334 = vpop.f32.mrb[0].mxu0
      %v2335 = vadd.f32 %v1796, %v2334
      %2336 = vmatprep.mubr.bf16.mxu0 0
      %2337 = vmatmul.mubr.bf16.gmra.mrb[0].mxu0 %v1739
      %v2338 = vpop.f32.mrb[0].mxu0
      %v2339 = vadd.f32 %v1792, %v2338
      %v2340 = vpop.f32.mrb[0].mxu0
      %v2341 = vadd.f32 %v1796, %v2340
      %v2342 = vpop.f32.mrb[0].mxu0
      %v2343 = vadd.f32 %v1792, %v2342
      %v2344 = vpop.f32.mrb[0].mxu0
      %v2345 = vadd.f32 %v1796, %v2344
      %2346 = vmatprep.mubr.bf16.mxu0 0
      %2347 = vmatmul.mubr.bf16.gmra.mrb[0].mxu0 %v1740
      %v2348 = vpop.f32.mrb[0].mxu0
      %v2349 = vadd.f32 %v1792, %v2348
      %v2350 = vpop.f32.mrb[0].mxu0
      %v2351 = vadd.f32 %v1796, %v2350
      %v2352 = vpop.f32.mrb[0].mxu0
      %v2353 = vadd.f32 %v1792, %v2352
      %v2354 = vpop.f32.mrb[0].mxu0
      %v2355 = vadd.f32 %v1796, %v2354
      %2356 = vmatprep.mubr.bf16.mxu0 0
      %2357 = vmatmul.mubr.bf16.gmra.mrb[0].mxu0 %v1741
      %v2358 = vpop.f32.mrb[0].mxu0
      %v2359 = vadd.f32 %v1792, %v2358
      %v2360 = vpop.f32.mrb[0].mxu0
      %v2361 = vadd.f32 %v1796, %v2360
      %v2362 = vpop.f32.mrb[0].mxu0
      %v2363 = vadd.f32 %v1792, %v2362
      %v2364 = vpop.f32.mrb[0].mxu0
      %v2365 = vadd.f32 %v1796, %v2364
      %2366 = vmatprep.mubr.bf16.mxu0 0
      %2367 = vmatmul.mubr.bf16.gmra.mrb[0].mxu0 %v1742
      %v2368 = vpop.f32.mrb[0].mxu0
      %v2369 = vadd.f32 %v1792, %v2368
      %v2370 = vpop.f32.mrb[0].mxu0
      %v2371 = vadd.f32 %v1796, %v2370
      %v2372 = vpop.f32.mrb[0].mxu0
      %v2373 = vadd.f32 %v1792, %v2372
      %v2374 = vpop.f32.mrb[0].mxu0
      %v2375 = vadd.f32 %v1796, %v2374
      %2376 = vmatprep.mubr.bf16.mxu0 0
      %2377 = vmatmul.mubr.bf16.gmra.mrb[0].mxu0 %v1743
      %v2378 = vpop.f32.mrb[0].mxu0
      %v2379 = vadd.f32 %v1792, %v2378
      %v2380 = vpop.f32.mrb[0].mxu0
      %v2381 = vadd.f32 %v1796, %v2380
      %v2382 = vpop.f32.mrb[0].mxu0
      %v2383 = vadd.f32 %v1792, %v2382
      %v2384 = vpop.f32.mrb[0].mxu0
      %v2385 = vadd.f32 %v1796, %v2384
      %2386 = vmatprep.mubr.bf16.mxu0 0
      %2387 = vmatmul.mubr.bf16.gmra.mrb[0].mxu0 %v1744
      %v2388 = vpop.f32.mrb[0].mxu0
      %v2389 = vadd.f32 %v1792, %v2388
      %v2390 = vpop.f32.mrb[0].mxu0
      %v2391 = vadd.f32 %v1796, %v2390
      %v2392 = vpop.f32.mrb[0].mxu0
      %v2393 = vadd.f32 %v1792, %v2392
      %v2394 = vpop.f32.mrb[0].mxu0
      %v2395 = vadd.f32 %v1796, %v2394
      %2396 = vmatprep.mubr.bf16.mxu0 0
      %2397 = vmatmul.mubr.bf16.gmra.mrb[0].mxu0 %v1745
      %v2398 = vpop.f32.mrb[0].mxu0
      %v2399 = vadd.f32 %v1792, %v2398
      %v2400 = vpop.f32.mrb[0].mxu0
      %v2401 = vadd.f32 %v1796, %v2400
      %v2402 = vpop.f32.mrb[0].mxu0
      %v2403 = vadd.f32 %v1792, %v2402
      %v2404 = vpop.f32.mrb[0].mxu0
      %v2405 = vadd.f32 %v1796, %v2404
      %2406 = vdwg.mxu0
      %v2407 = vmax.f32 %v1996, 0.0
      %v2408 = vmax.f32 %v1998, 0.0
      %v2409 = vmax.f32 %v2219, 0.0
      %v2410 = vmax.f32 %v2221, 0.0
      %v2411 = vmax.f32 %v2000, 0.0
      %v2412 = vmax.f32 %v2002, 0.0
      %v2413 = vmax.f32 %v2223, 0.0
      %v2414 = vmax.f32 %v2225, 0.0
      %v2415 = vmax.f32 %v2006, 0.0
      %v2416 = vmax.f32 %v2008, 0.0
      %v2417 = vmax.f32 %v2229, 0.0
      %v2418 = vmax.f32 %v2231, 0.0
      %v2419 = vmax.f32 %v2010, 0.0
      %v2420 = vmax.f32 %v2012, 0.0
      %v2421 = vmax.f32 %v2233, 0.0
      %v2422 = vmax.f32 %v2235, 0.0
      %v2423 = vmax.f32 %v2016, 0.0
      %v2424 = vmax.f32 %v2018, 0.0
      %v2425 = vmax.f32 %v2239, 0.0
      %v2426 = vmax.f32 %v2241, 0.0
      %v2427 = vmax.f32 %v2020, 0.0
      %v2428 = vmax.f32 %v2022, 0.0
      %v2429 = vmax.f32 %v2243, 0.0
      %v2430 = vmax.f32 %v2245, 0.0
      %v2431 = vmax.f32 %v2026, 0.0
      %v2432 = vmax.f32 %v2028, 0.0
      %v2433 = vmax.f32 %v2249, 0.0
      %v2434 = vmax.f32 %v2251, 0.0
      %v2435 = vmax.f32 %v2030, 0.0
      %v2436 = vmax.f32 %v2032, 0.0
      %v2437 = vmax.f32 %v2253, 0.0
      %v2438 = vmax.f32 %v2255, 0.0
      %v2439 = vmax.f32 %v2036, 0.0
      %v2440 = vmax.f32 %v2038, 0.0
      %v2441 = vmax.f32 %v2259, 0.0
      %v2442 = vmax.f32 %v2261, 0.0
      %v2443 = vmax.f32 %v2040, 0.0
      %v2444 = vmax.f32 %v2042, 0.0
      %v2445 = vmax.f32 %v2263, 0.0
      %v2446 = vmax.f32 %v2265, 0.0
      %v2447 = vmax.f32 %v2046, 0.0
      %v2448 = vmax.f32 %v2048, 0.0
      %v2449 = vmax.f32 %v2269, 0.0
      %v2450 = vmax.f32 %v2271, 0.0
      %v2451 = vmax.f32 %v2050, 0.0
      %v2452 = vmax.f32 %v2052, 0.0
      %v2453 = vmax.f32 %v2273, 0.0
      %v2454 = vmax.f32 %v2275, 0.0
      %v2455 = vmax.f32 %v2056, 0.0
      %v2456 = vmax.f32 %v2058, 0.0
      %v2457 = vmax.f32 %v2279, 0.0
      %v2458 = vmax.f32 %v2281, 0.0
      %v2459 = vmax.f32 %v2060, 0.0
      %v2460 = vmax.f32 %v2062, 0.0
      %v2461 = vmax.f32 %v2283, 0.0
      %v2462 = vmax.f32 %v2285, 0.0
      %v2463 = vmax.f32 %v2066, 0.0
      %v2464 = vmax.f32 %v2068, 0.0
      %v2465 = vmax.f32 %v2289, 0.0
      %v2466 = vmax.f32 %v2291, 0.0
      %v2467 = vmax.f32 %v2070, 0.0
      %v2468 = vmax.f32 %v2072, 0.0
      %v2469 = vmax.f32 %v2293, 0.0
      %v2470 = vmax.f32 %v2295, 0.0
      %v2471 = vmax.f32 %v2076, 0.0
      %v2472 = vmax.f32 %v2078, 0.0
      %v2473 = vmax.f32 %v2299, 0.0
      %v2474 = vmax.f32 %v2301, 0.0
      %v2475 = vmax.f32 %v2080, 0.0
      %v2476 = vmax.f32 %v2082, 0.0
      %v2477 = vmax.f32 %v2303, 0.0
      %v2478 = vmax.f32 %v2305, 0.0
      %v2479 = vmax.f32 %v2086, 0.0
      %v2480 = vmax.f32 %v2088, 0.0
      %v2481 = vmax.f32 %v2309, 0.0
      %v2482 = vmax.f32 %v2311, 0.0
      %v2483 = vmax.f32 %v2090, 0.0
      %v2484 = vmax.f32 %v2092, 0.0
      %v2485 = vmax.f32 %v2313, 0.0
      %v2486 = vmax.f32 %v2315, 0.0
      %v2487 = vmax.f32 %v2096, 0.0
      %v2488 = vmax.f32 %v2098, 0.0
      %v2489 = vmax.f32 %v2319, 0.0
      %v2490 = vmax.f32 %v2321, 0.0
      %v2491 = vmax.f32 %v2100, 0.0
      %v2492 = vmax.f32 %v2102, 0.0
      %v2493 = vmax.f32 %v2323, 0.0
      %v2494 = vmax.f32 %v2325, 0.0
      %v2495 = vmax.f32 %v2106, 0.0
      %v2496 = vmax.f32 %v2108, 0.0
      %v2497 = vmax.f32 %v2329, 0.0
      %v2498 = vmax.f32 %v2331, 0.0
      %v2499 = vmax.f32 %v2110, 0.0
      %v2500 = vmax.f32 %v2112, 0.0
      %v2501 = vmax.f32 %v2333, 0.0
      %v2502 = vmax.f32 %v2335, 0.0
      %v2503 = vmax.f32 %v2116, 0.0
      %v2504 = vmax.f32 %v2118, 0.0
      %v2505 = vmax.f32 %v2339, 0.0
      %v2506 = vmax.f32 %v2341, 0.0
      %v2507 = vmax.f32 %v2120, 0.0
      %v2508 = vmax.f32 %v2122, 0.0
      %v2509 = vmax.f32 %v2343, 0.0
      %v2510 = vmax.f32 %v2345, 0.0
      %v2511 = vmax.f32 %v2126, 0.0
      %v2512 = vmax.f32 %v2128, 0.0
      %v2513 = vmax.f32 %v2349, 0.0
      %v2514 = vmax.f32 %v2351, 0.0
      %v2515 = vmax.f32 %v2130, 0.0
      %v2516 = vmax.f32 %v2132, 0.0
      %v2517 = vmax.f32 %v2353, 0.0
      %v2518 = vmax.f32 %v2355, 0.0
      %v2519 = vmax.f32 %v2136, 0.0
      %v2520 = vmax.f32 %v2138, 0.0
      %v2521 = vmax.f32 %v2359, 0.0
      %v2522 = vmax.f32 %v2361, 0.0
      %v2523 = vmax.f32 %v2140, 0.0
      %v2524 = vmax.f32 %v2142, 0.0
      %v2525 = vmax.f32 %v2363, 0.0
      %v2526 = vmax.f32 %v2365, 0.0
      %v2527 = vmax.f32 %v2146, 0.0
      %v2528 = vmax.f32 %v2148, 0.0
      %v2529 = vmax.f32 %v2369, 0.0
      %v2530 = vmax.f32 %v2371, 0.0
      %v2531 = vmax.f32 %v2150, 0.0
      %v2532 = vmax.f32 %v2152, 0.0
      %v2533 = vmax.f32 %v2373, 0.0
      %v2534 = vmax.f32 %v2375, 0.0
      %v2535 = vmax.f32 %v2156, 0.0
      %v2536 = vmax.f32 %v2158, 0.0
      %v2537 = vmax.f32 %v2379, 0.0
      %v2538 = vmax.f32 %v2381, 0.0
      %v2539 = vmax.f32 %v2160, 0.0
      %v2540 = vmax.f32 %v2162, 0.0
      %v2541 = vmax.f32 %v2383, 0.0
      %v2542 = vmax.f32 %v2385, 0.0
      %v2543 = vmax.f32 %v2166, 0.0
      %v2544 = vmax.f32 %v2168, 0.0
      %v2545 = vmax.f32 %v2389, 0.0
      %v2546 = vmax.f32 %v2391, 0.0
      %v2547 = vmax.f32 %v2170, 0.0
      %v2548 = vmax.f32 %v2172, 0.0
      %v2549 = vmax.f32 %v2393, 0.0
      %v2550 = vmax.f32 %v2395, 0.0
      %v2551 = vmax.f32 %v2176, 0.0
      %v2552 = vmax.f32 %v2178, 0.0
      %v2553 = vmax.f32 %v2399, 0.0
      %v2554 = vmax.f32 %v2401, 0.0
      %v2555 = vmax.f32 %v2180, 0.0
      %v2556 = vmax.f32 %v2182, 0.0
      %v2557 = vmax.f32 %v2403, 0.0
      %v2558 = vmax.f32 %v2405, 0.0
      %v2559 = vpack.c.bf16 %v2411, %v2407
      %v2560 = vpack.c.bf16 %v2412, %v2408
      %v2561 = vpack.c.bf16 %v2413, %v2409
      %v2562 = vpack.c.bf16 %v2414, %v2410
      %v2563 = vpack.c.bf16 %v2419, %v2415
      %v2564 = vpack.c.bf16 %v2420, %v2416
      %v2565 = vpack.c.bf16 %v2421, %v2417
      %v2566 = vpack.c.bf16 %v2422, %v2418
      %v2567 = vpack.c.bf16 %v2427, %v2423
      %v2568 = vpack.c.bf16 %v2428, %v2424
      %v2569 = vpack.c.bf16 %v2429, %v2425
      %v2570 = vpack.c.bf16 %v2430, %v2426
      %v2571 = vpack.c.bf16 %v2435, %v2431
      %v2572 = vpack.c.bf16 %v2436, %v2432
      %v2573 = vpack.c.bf16 %v2437, %v2433
      %v2574 = vpack.c.bf16 %v2438, %v2434
      %v2575 = vpack.c.bf16 %v2443, %v2439
      %v2576 = vpack.c.bf16 %v2444, %v2440
      %v2577 = vpack.c.bf16 %v2445, %v2441
      %v2578 = vpack.c.bf16 %v2446, %v2442
      %v2579 = vpack.c.bf16 %v2451, %v2447
      %v2580 = vpack.c.bf16 %v2452, %v2448
      %v2581 = vpack.c.bf16 %v2453, %v2449
      %v2582 = vpack.c.bf16 %v2454, %v2450
      %v2583 = vpack.c.bf16 %v2459, %v2455
      %v2584 = vpack.c.bf16 %v2460, %v2456
      %v2585 = vpack.c.bf16 %v2461, %v2457
      %v2586 = vpack.c.bf16 %v2462, %v2458
      %v2587 = vpack.c.bf16 %v2467, %v2463
      %v2588 = vpack.c.bf16 %v2468, %v2464
      %v2589 = vpack.c.bf16 %v2469, %v2465
      %v2590 = vpack.c.bf16 %v2470, %v2466
      %v2591 = vpack.c.bf16 %v2475, %v2471
      %v2592 = vpack.c.bf16 %v2476, %v2472
      %v2593 = vpack.c.bf16 %v2477, %v2473
      %v2594 = vpack.c.bf16 %v2478, %v2474
      %v2595 = vpack.c.bf16 %v2483, %v2479
      %v2596 = vpack.c.bf16 %v2484, %v2480
      %v2597 = vpack.c.bf16 %v2485, %v2481
      %v2598 = vpack.c.bf16 %v2486, %v2482
      %v2599 = vpack.c.bf16 %v2491, %v2487
      %v2600 = vpack.c.bf16 %v2492, %v2488
      %v2601 = vpack.c.bf16 %v2493, %v2489
      %v2602 = vpack.c.bf16 %v2494, %v2490
      %v2603 = vpack.c.bf16 %v2499, %v2495
      %v2604 = vpack.c.bf16 %v2500, %v2496
      %v2605 = vpack.c.bf16 %v2501, %v2497
      %v2606 = vpack.c.bf16 %v2502, %v2498
      %v2607 = vpack.c.bf16 %v2507, %v2503
      %v2608 = vpack.c.bf16 %v2508, %v2504
      %v2609 = vpack.c.bf16 %v2509, %v2505
      %v2610 = vpack.c.bf16 %v2510, %v2506
      %v2611 = vpack.c.bf16 %v2515, %v2511
      %v2612 = vpack.c.bf16 %v2516, %v2512
      %v2613 = vpack.c.bf16 %v2517, %v2513
      %v2614 = vpack.c.bf16 %v2518, %v2514
      %v2615 = vpack.c.bf16 %v2523, %v2519
      %v2616 = vpack.c.bf16 %v2524, %v2520
      %v2617 = vpack.c.bf16 %v2525, %v2521
      %v2618 = vpack.c.bf16 %v2526, %v2522
      %v2619 = vpack.c.bf16 %v2531, %v2527
      %v2620 = vpack.c.bf16 %v2532, %v2528
      %v2621 = vpack.c.bf16 %v2533, %v2529
      %v2622 = vpack.c.bf16 %v2534, %v2530
      %v2623 = vpack.c.bf16 %v2539, %v2535
      %v2624 = vpack.c.bf16 %v2540, %v2536
      %v2625 = vpack.c.bf16 %v2541, %v2537
      %v2626 = vpack.c.bf16 %v2542, %v2538
      %v2627 = vpack.c.bf16 %v2547, %v2543
      %v2628 = vpack.c.bf16 %v2548, %v2544
      %v2629 = vpack.c.bf16 %v2549, %v2545
      %v2630 = vpack.c.bf16 %v2550, %v2546
      %v2631 = vpack.c.bf16 %v2555, %v2551
      %v2632 = vpack.c.bf16 %v2556, %v2552
      %v2633 = vpack.c.bf16 %v2557, %v2553
      %v2634 = vpack.c.bf16 %v2558, %v2554
      %s2635 = scalar_lea.vmem %s2, 256
      %v2636 = vld [vmem:[%s2635] sm:$0xf]
      %v2637 = vld [vmem:[%s2635 + $0x4] sm:$0xf]
      %v2638 = vld [vmem:[%s2635 + $0x8] sm:$0xf]
      %v2639 = vld [vmem:[%s2635 + $0xc] sm:$0xf]
      %v2640 = vld [vmem:[%s2635 + $0x10] sm:$0xf]
      %v2641 = vld [vmem:[%s2635 + $0x14] sm:$0xf]
      %v2642 = vld [vmem:[%s2635 + $0x18] sm:$0xf]
      %v2643 = vld [vmem:[%s2635 + $0x1c] sm:$0xf]
      %v2644 = vld [vmem:[%s2635 + $0x20] sm:$0xf]
      %v2645 = vld [vmem:[%s2635 + $0x24] sm:$0xf]
      %v2646 = vld [vmem:[%s2635 + $0x28] sm:$0xf]
      %v2647 = vld [vmem:[%s2635 + $0x2c] sm:$0xf]
      %v2648 = vld [vmem:[%s2635 + $0x30] sm:$0xf]
      %v2649 = vld [vmem:[%s2635 + $0x34] sm:$0xf]
      %v2650 = vld [vmem:[%s2635 + $0x38] sm:$0xf]
      %v2651 = vld [vmem:[%s2635 + $0x3c] sm:$0xf]
      %v2652 = vld [vmem:[%s2635 + $0x40] sm:$0xf]
      %v2653 = vld [vmem:[%s2635 + $0x44] sm:$0xf]
      %v2654 = vld [vmem:[%s2635 + $0x48] sm:$0xf]
      %v2655 = vld [vmem:[%s2635 + $0x4c] sm:$0xf]
      %v2656 = vld [vmem:[%s2635 + $0x50] sm:$0xf]
      %v2657 = vld [vmem:[%s2635 + $0x54] sm:$0xf]
      %v2658 = vld [vmem:[%s2635 + $0x58] sm:$0xf]
      %v2659 = vld [vmem:[%s2635 + $0x5c] sm:$0xf]
      %v2660 = vld [vmem:[%s2635 + $0x60] sm:$0xf]
      %v2661 = vld [vmem:[%s2635 + $0x64] sm:$0xf]
      %v2662 = vld [vmem:[%s2635 + $0x68] sm:$0xf]
      %v2663 = vld [vmem:[%s2635 + $0x6c] sm:$0xf]
      %v2664 = vld [vmem:[%s2635 + $0x70] sm:$0xf]
      %v2665 = vld [vmem:[%s2635 + $0x74] sm:$0xf]
      %v2666 = vld [vmem:[%s2635 + $0x78] sm:$0xf]
      %v2667 = vld [vmem:[%s2635 + $0x7c] sm:$0xf]
      %v2668 = vld [vmem:[%s2635 + $0x80] sm:$0xf]
      %v2669 = vld [vmem:[%s2635 + $0x84] sm:$0xf]
      %v2670 = vld [vmem:[%s2635 + $0x88] sm:$0xf]
      %v2671 = vld [vmem:[%s2635 + $0x8c] sm:$0xf]
      %v2672 = vld [vmem:[%s2635 + $0x90] sm:$0xf]
      %v2673 = vld [vmem:[%s2635 + $0x94] sm:$0xf]
      %v2674 = vld [vmem:[%s2635 + $0x98] sm:$0xf]
      %v2675 = vld [vmem:[%s2635 + $0x9c] sm:$0xf]
      %v2676 = vld [vmem:[%s2635 + $0xa0] sm:$0xf]
      %v2677 = vld [vmem:[%s2635 + $0xa4] sm:$0xf]
      %v2678 = vld [vmem:[%s2635 + $0xa8] sm:$0xf]
      %v2679 = vld [vmem:[%s2635 + $0xac] sm:$0xf]
      %v2680 = vld [vmem:[%s2635 + $0xb0] sm:$0xf]
      %v2681 = vld [vmem:[%s2635 + $0xb4] sm:$0xf]
      %v2682 = vld [vmem:[%s2635 + $0xb8] sm:$0xf]
      %v2683 = vld [vmem:[%s2635 + $0xbc] sm:$0xf]
      %v2684 = vld [vmem:[%s2635 + $0xc0] sm:$0xf]
      %v2685 = vld [vmem:[%s2635 + $0xc4] sm:$0xf]
      %v2686 = vld [vmem:[%s2635 + $0xc8] sm:$0xf]
      %v2687 = vld [vmem:[%s2635 + $0xcc] sm:$0xf]
      %v2688 = vld [vmem:[%s2635 + $0xd0] sm:$0xf]
      %v2689 = vld [vmem:[%s2635 + $0xd4] sm:$0xf]
      %v2690 = vld [vmem:[%s2635 + $0xd8] sm:$0xf]
      %v2691 = vld [vmem:[%s2635 + $0xdc] sm:$0xf]
      %v2692 = vld [vmem:[%s2635 + $0xe0] sm:$0xf]
      %v2693 = vld [vmem:[%s2635 + $0xe4] sm:$0xf]
      %v2694 = vld [vmem:[%s2635 + $0xe8] sm:$0xf]
      %v2695 = vld [vmem:[%s2635 + $0xec] sm:$0xf]
      %v2696 = vld [vmem:[%s2635 + $0xf0] sm:$0xf]
      %v2697 = vld [vmem:[%s2635 + $0xf4] sm:$0xf]
      %v2698 = vld [vmem:[%s2635 + $0xf8] sm:$0xf]
      %v2699 = vld [vmem:[%s2635 + $0xfc] sm:$0xf]
      %v2700 = vld [vmem:[%s4 + $0x3] ss:$0 sm:$0xff]
      %v2765 = vunpack.c.l.b16 %v2636
      %v2766 = vunpack.c.l.b16 %v2637
      %v2767 = vunpack.c.l.b16 %v2638
      %v2768 = vunpack.c.l.b16 %v2639
      %v2769 = vunpack.c.l.b16 %v2640
      %v2770 = vunpack.c.l.b16 %v2641
      %v2771 = vunpack.c.l.b16 %v2642
      %v2772 = vunpack.c.l.b16 %v2643
      %v2773 = vunpack.c.l.b16 %v2644
      %v2774 = vunpack.c.l.b16 %v2645
      %v2775 = vunpack.c.l.b16 %v2646
      %v2776 = vunpack.c.l.b16 %v2647
      %v2777 = vunpack.c.l.b16 %v2648
      %v2778 = vunpack.c.l.b16 %v2649
      %v2779 = vunpack.c.l.b16 %v2650
      %v2780 = vunpack.c.l.b16 %v2651
      %v2781 = vunpack.c.l.b16 %v2652
      %v2782 = vunpack.c.l.b16 %v2653
      %v2783 = vunpack.c.l.b16 %v2654
      %v2784 = vunpack.c.l.b16 %v2655
      %v2785 = vunpack.c.l.b16 %v2656
      %v2786 = vunpack.c.l.b16 %v2657
      %v2787 = vunpack.c.l.b16 %v2658
      %v2788 = vunpack.c.l.b16 %v2659
      %v2789 = vunpack.c.l.b16 %v2660
      %v2790 = vunpack.c.l.b16 %v2661
      %v2791 = vunpack.c.l.b16 %v2662
      %v2792 = vunpack.c.l.b16 %v2663
      %v2793 = vunpack.c.l.b16 %v2664
      %v2794 = vunpack.c.l.b16 %v2665
      %v2795 = vunpack.c.l.b16 %v2666
      %v2796 = vunpack.c.l.b16 %v2667
      %v2797 = vunpack.c.l.b16 %v2668
      %v2798 = vunpack.c.l.b16 %v2669
      %v2799 = vunpack.c.l.b16 %v2670
      %v2800 = vunpack.c.l.b16 %v2671
      %v2801 = vunpack.c.l.b16 %v2672
      %v2802 = vunpack.c.l.b16 %v2673
      %v2803 = vunpack.c.l.b16 %v2674
      %v2804 = vunpack.c.l.b16 %v2675
      %v2805 = vunpack.c.l.b16 %v2676
      %v2806 = vunpack.c.l.b16 %v2677
      %v2807 = vunpack.c.l.b16 %v2678
      %v2808 = vunpack.c.l.b16 %v2679
      %v2809 = vunpack.c.l.b16 %v2680
      %v2810 = vunpack.c.l.b16 %v2681
      %v2811 = vunpack.c.l.b16 %v2682
      %v2812 = vunpack.c.l.b16 %v2683
      %v2813 = vunpack.c.l.b16 %v2684
      %v2814 = vunpack.c.l.b16 %v2685
      %v2815 = vunpack.c.l.b16 %v2686
      %v2816 = vunpack.c.l.b16 %v2687
      %v2817 = vunpack.c.l.b16 %v2688
      %v2818 = vunpack.c.l.b16 %v2689
      %v2819 = vunpack.c.l.b16 %v2690
      %v2820 = vunpack.c.l.b16 %v2691
      %v2821 = vunpack.c.l.b16 %v2692
      %v2822 = vunpack.c.l.b16 %v2693
      %v2823 = vunpack.c.l.b16 %v2694
      %v2824 = vunpack.c.l.b16 %v2695
      %v2825 = vunpack.c.l.b16 %v2696
      %v2826 = vunpack.c.l.b16 %v2697
      %v2827 = vunpack.c.l.b16 %v2698
      %v2828 = vunpack.c.l.b16 %v2699
      %v2829 = vpack.c.b16 %v2766, %v2765
      %v2830 = vpack.c.b16 %v2768, %v2767
      %v2831 = vpack.c.b16 %v2770, %v2769
      %v2832 = vpack.c.b16 %v2772, %v2771
      %v2833 = vpack.c.b16 %v2774, %v2773
      %v2834 = vpack.c.b16 %v2776, %v2775
      %v2835 = vpack.c.b16 %v2778, %v2777
      %v2836 = vpack.c.b16 %v2780, %v2779
      %v2837 = vpack.c.b16 %v2782, %v2781
      %v2838 = vpack.c.b16 %v2784, %v2783
      %v2839 = vpack.c.b16 %v2786, %v2785
      %v2840 = vpack.c.b16 %v2788, %v2787
      %v2841 = vpack.c.b16 %v2790, %v2789
      %v2842 = vpack.c.b16 %v2792, %v2791
      %v2843 = vpack.c.b16 %v2794, %v2793
      %v2844 = vpack.c.b16 %v2796, %v2795
      %v2845 = vpack.c.b16 %v2798, %v2797
      %v2846 = vpack.c.b16 %v2800, %v2799
      %v2847 = vpack.c.b16 %v2802, %v2801
      %v2848 = vpack.c.b16 %v2804, %v2803
      %v2849 = vpack.c.b16 %v2806, %v2805
      %v2850 = vpack.c.b16 %v2808, %v2807
      %v2851 = vpack.c.b16 %v2810, %v2809
      %v2852 = vpack.c.b16 %v2812, %v2811
      %v2853 = vpack.c.b16 %v2814, %v2813
      %v2854 = vpack.c.b16 %v2816, %v2815
      %v2855 = vpack.c.b16 %v2818, %v2817
      %v2856 = vpack.c.b16 %v2820, %v2819
      %v2857 = vpack.c.b16 %v2822, %v2821
      %v2858 = vpack.c.b16 %v2824, %v2823
      %v2859 = vpack.c.b16 %v2826, %v2825
      %v2860 = vpack.c.b16 %v2828, %v2827
      %2893 = vmatprep.subr.bf16.mxu0 0
      %2894 = vmatpush1.bf16.msra.mxu0 %v2829
      %2895 = vmatprep.subr.bf16.mxu0 0
      %2896 = vmatpush1.bf16.msra.mxu0 %v2830
      %2897 = vmatprep.subr.bf16.mxu0 0
      %2898 = vmatpush1.bf16.msra.mxu0 %v2831
      %2899 = vmatprep.subr.bf16.mxu0 0
      %2900 = vmatpush1.bf16.msra.mxu0 %v2832
      %2901 = vmatprep.subr.bf16.mxu0 0
      %2902 = vmatpush1.bf16.msra.mxu0 %v2833
      %2903 = vmatprep.subr.bf16.mxu0 0
      %2904 = vmatpush1.bf16.msra.mxu0 %v2834
      %2905 = vmatprep.subr.bf16.mxu0 0
      %2906 = vmatpush1.bf16.msra.mxu0 %v2835
      %2907 = vmatprep.subr.bf16.mxu0 0
      %2908 = vmatpush1.bf16.msra.mxu0 %v2836
      %2909 = vmatprep.subr.bf16.mxu0 0
      %2910 = vmatpush1.bf16.msra.mxu0 %v2837
      %2911 = vmatprep.subr.bf16.mxu0 0
      %2912 = vmatpush1.bf16.msra.mxu0 %v2838
      %2913 = vmatprep.subr.bf16.mxu0 0
      %2914 = vmatpush1.bf16.msra.mxu0 %v2839
      %2915 = vmatprep.subr.bf16.mxu0 0
      %2916 = vmatpush1.bf16.msra.mxu0 %v2840
      %2917 = vmatprep.subr.bf16.mxu0 0
      %2918 = vmatpush1.bf16.msra.mxu0 %v2841
      %2919 = vmatprep.subr.bf16.mxu0 0
      %2920 = vmatpush1.bf16.msra.mxu0 %v2842
      %2921 = vmatprep.subr.bf16.mxu0 0
      %2922 = vmatpush1.bf16.msra.mxu0 %v2843
      %2923 = vmatprep.subr.bf16.mxu0 0
      %2924 = vmatpush1.bf16.msra.mxu0 %v2844
      %2925 = vmatprep.mubr.bf16.mxu0 %v2560
      %2926 = vmatmul.mubr.bf16.gmra.mrb[0].mxu0 %v2559
      %v2927 = vpop.f32.mrb[0].mxu0
      %v2928 = vadd.f32 %v2700, %v2927
      %v2929 = vpop.f32.mrb[0].mxu0
      %v2930 = vpop.f32.mrb[0].mxu0
      %v2931 = vadd.f32 %v2700, %v2930
      %v2932 = vpop.f32.mrb[0].mxu0
      %2933 = vmatprep.mubr.bf16.mxu0 %v2564
      %2934 = vmatmul.mubr.bf16.gmra.mrb[0].mxu0 %v2563
      %v2935 = vpop.f32.mrb[0].mxu0
      %v2936 = vadd.f32 %v2700, %v2935
      %v2937 = vpop.f32.mrb[0].mxu0
      %v2938 = vpop.f32.mrb[0].mxu0
      %v2939 = vadd.f32 %v2700, %v2938
      %v2940 = vpop.f32.mrb[0].mxu0
      %2941 = vmatprep.mubr.bf16.mxu0 %v2568
      %2942 = vmatmul.mubr.bf16.gmra.mrb[0].mxu0 %v2567
      %v2943 = vpop.f32.mrb[0].mxu0
      %v2944 = vadd.f32 %v2700, %v2943
      %v2945 = vpop.f32.mrb[0].mxu0
      %v2946 = vpop.f32.mrb[0].mxu0
      %v2947 = vadd.f32 %v2700, %v2946
      %v2948 = vpop.f32.mrb[0].mxu0
      %2949 = vmatprep.mubr.bf16.mxu0 %v2572
      %2950 = vmatmul.mubr.bf16.gmra.mrb[0].mxu0 %v2571
      %v2951 = vpop.f32.mrb[0].mxu0
      %v2952 = vadd.f32 %v2700, %v2951
      %v2953 = vpop.f32.mrb[0].mxu0
      %v2954 = vpop.f32.mrb[0].mxu0
      %v2955 = vadd.f32 %v2700, %v2954
      %v2956 = vpop.f32.mrb[0].mxu0
      %2957 = vmatprep.mubr.bf16.mxu0 %v2576
      %2958 = vmatmul.mubr.bf16.gmra.mrb[0].mxu0 %v2575
      %v2959 = vpop.f32.mrb[0].mxu0
      %v2960 = vadd.f32 %v2700, %v2959
      %v2961 = vpop.f32.mrb[0].mxu0
      %v2962 = vpop.f32.mrb[0].mxu0
      %v2963 = vadd.f32 %v2700, %v2962
      %v2964 = vpop.f32.mrb[0].mxu0
      %2965 = vmatprep.mubr.bf16.mxu0 %v2580
      %2966 = vmatmul.mubr.bf16.gmra.mrb[0].mxu0 %v2579
      %v2967 = vpop.f32.mrb[0].mxu0
      %v2968 = vadd.f32 %v2700, %v2967
      %v2969 = vpop.f32.mrb[0].mxu0
      %v2970 = vpop.f32.mrb[0].mxu0
      %v2971 = vadd.f32 %v2700, %v2970
      %v2972 = vpop.f32.mrb[0].mxu0
      %2973 = vmatprep.mubr.bf16.mxu0 %v2584
      %2974 = vmatmul.mubr.bf16.gmra.mrb[0].mxu0 %v2583
      %v2975 = vpop.f32.mrb[0].mxu0
      %v2976 = vadd.f32 %v2700, %v2975
      %v2977 = vpop.f32.mrb[0].mxu0
      %v2978 = vpop.f32.mrb[0].mxu0
      %v2979 = vadd.f32 %v2700, %v2978
      %v2980 = vpop.f32.mrb[0].mxu0
      %2981 = vmatprep.mubr.bf16.mxu0 %v2588
      %2982 = vmatmul.mubr.bf16.gmra.mrb[0].mxu0 %v2587
      %v2983 = vpop.f32.mrb[0].mxu0
      %v2984 = vadd.f32 %v2700, %v2983
      %v2985 = vpop.f32.mrb[0].mxu0
      %v2986 = vpop.f32.mrb[0].mxu0
      %v2987 = vadd.f32 %v2700, %v2986
      %v2988 = vpop.f32.mrb[0].mxu0
      %2989 = vmatprep.mubr.bf16.mxu0 %v2592
      %2990 = vmatmul.mubr.bf16.gmra.mrb[0].mxu0 %v2591
      %v2991 = vpop.f32.mrb[0].mxu0
      %v2992 = vadd.f32 %v2700, %v2991
      %v2993 = vpop.f32.mrb[0].mxu0
      %v2994 = vpop.f32.mrb[0].mxu0
      %v2995 = vadd.f32 %v2700, %v2994
      %v2996 = vpop.f32.mrb[0].mxu0
      %2997 = vmatprep.mubr.bf16.mxu0 %v2596
      %2998 = vmatmul.mubr.bf16.gmra.mrb[0].mxu0 %v2595
      %v2999 = vpop.f32.mrb[0].mxu0
      %v3000 = vadd.f32 %v2700, %v2999
      %v3001 = vpop.f32.mrb[0].mxu0
      %v3002 = vpop.f32.mrb[0].mxu0
      %v3003 = vadd.f32 %v2700, %v3002
      %v3004 = vpop.f32.mrb[0].mxu0
      %3005 = vmatprep.mubr.bf16.mxu0 %v2600
      %3006 = vmatmul.mubr.bf16.gmra.mrb[0].mxu0 %v2599
      %v3007 = vpop.f32.mrb[0].mxu0
      %v3008 = vadd.f32 %v2700, %v3007
      %v3009 = vpop.f32.mrb[0].mxu0
      %v3010 = vpop.f32.mrb[0].mxu0
      %v3011 = vadd.f32 %v2700, %v3010
      %v3012 = vpop.f32.mrb[0].mxu0
      %3013 = vmatprep.mubr.bf16.mxu0 %v2604
      %3014 = vmatmul.mubr.bf16.gmra.mrb[0].mxu0 %v2603
      %v3015 = vpop.f32.mrb[0].mxu0
      %v3016 = vadd.f32 %v2700, %v3015
      %v3017 = vpop.f32.mrb[0].mxu0
      %v3018 = vpop.f32.mrb[0].mxu0
      %v3019 = vadd.f32 %v2700, %v3018
      %v3020 = vpop.f32.mrb[0].mxu0
      %3021 = vmatprep.mubr.bf16.mxu0 %v2608
      %3022 = vmatmul.mubr.bf16.gmra.mrb[0].mxu0 %v2607
      %v3023 = vpop.f32.mrb[0].mxu0
      %v3024 = vadd.f32 %v2700, %v3023
      %v3025 = vpop.f32.mrb[0].mxu0
      %v3026 = vpop.f32.mrb[0].mxu0
      %v3027 = vadd.f32 %v2700, %v3026
      %v3028 = vpop.f32.mrb[0].mxu0
      %3029 = vmatprep.mubr.bf16.mxu0 %v2612
      %3030 = vmatmul.mubr.bf16.gmra.mrb[0].mxu0 %v2611
      %v3031 = vpop.f32.mrb[0].mxu0
      %v3032 = vadd.f32 %v2700, %v3031
      %v3033 = vpop.f32.mrb[0].mxu0
      %v3034 = vpop.f32.mrb[0].mxu0
      %v3035 = vadd.f32 %v2700, %v3034
      %v3036 = vpop.f32.mrb[0].mxu0
      %3037 = vmatprep.mubr.bf16.mxu0 %v2616
      %3038 = vmatmul.mubr.bf16.gmra.mrb[0].mxu0 %v2615
      %v3039 = vpop.f32.mrb[0].mxu0
      %v3040 = vadd.f32 %v2700, %v3039
      %v3041 = vpop.f32.mrb[0].mxu0
      %v3042 = vpop.f32.mrb[0].mxu0
      %v3043 = vadd.f32 %v2700, %v3042
      %v3044 = vpop.f32.mrb[0].mxu0
      %3045 = vmatprep.mubr.bf16.mxu0 %v2620
      %3046 = vmatmul.mubr.bf16.gmra.mrb[0].mxu0 %v2619
      %v3047 = vpop.f32.mrb[0].mxu0
      %v3048 = vadd.f32 %v2700, %v3047
      %v3049 = vpop.f32.mrb[0].mxu0
      %v3050 = vpop.f32.mrb[0].mxu0
      %v3051 = vadd.f32 %v2700, %v3050
      %v3052 = vpop.f32.mrb[0].mxu0
      %3053 = vmatprep.mubr.bf16.mxu0 %v2624
      %3054 = vmatmul.mubr.bf16.gmra.mrb[0].mxu0 %v2623
      %v3055 = vpop.f32.mrb[0].mxu0
      %v3056 = vadd.f32 %v2700, %v3055
      %v3057 = vpop.f32.mrb[0].mxu0
      %v3058 = vpop.f32.mrb[0].mxu0
      %v3059 = vadd.f32 %v2700, %v3058
      %v3060 = vpop.f32.mrb[0].mxu0
      %3061 = vmatprep.mubr.bf16.mxu0 %v2628
      %3062 = vmatmul.mubr.bf16.gmra.mrb[0].mxu0 %v2627
      %v3063 = vpop.f32.mrb[0].mxu0
      %v3064 = vadd.f32 %v2700, %v3063
      %v3065 = vpop.f32.mrb[0].mxu0
      %v3066 = vpop.f32.mrb[0].mxu0
      %v3067 = vadd.f32 %v2700, %v3066
      %v3068 = vpop.f32.mrb[0].mxu0
      %3069 = vmatprep.mubr.bf16.mxu0 %v2632
      %3070 = vmatmul.mubr.bf16.gmra.mrb[0].mxu0 %v2631
      %v3071 = vpop.f32.mrb[0].mxu0
      %v3072 = vadd.f32 %v2700, %v3071
      %v3073 = vpop.f32.mrb[0].mxu0
      %v3074 = vpop.f32.mrb[0].mxu0
      %v3075 = vadd.f32 %v2700, %v3074
      %v3076 = vpop.f32.mrb[0].mxu0
      %3077 = vdwg.mxu0
      %3078 = vmatprep.subr.bf16.mxu0 0
      %3079 = vmatpush1.bf16.msra.mxu0 %v2845
      %3080 = vmatprep.subr.bf16.mxu0 0
      %3081 = vmatpush1.bf16.msra.mxu0 %v2846
      %3082 = vmatprep.subr.bf16.mxu0 0
      %3083 = vmatpush1.bf16.msra.mxu0 %v2847
      %3084 = vmatprep.subr.bf16.mxu0 0
      %3085 = vmatpush1.bf16.msra.mxu0 %v2848
      %3086 = vmatprep.subr.bf16.mxu0 0
      %3087 = vmatpush1.bf16.msra.mxu0 %v2849
      %3088 = vmatprep.subr.bf16.mxu0 0
      %3089 = vmatpush1.bf16.msra.mxu0 %v2850
      %3090 = vmatprep.subr.bf16.mxu0 0
      %3091 = vmatpush1.bf16.msra.mxu0 %v2851
      %3092 = vmatprep.subr.bf16.mxu0 0
      %3093 = vmatpush1.bf16.msra.mxu0 %v2852
      %3094 = vmatprep.subr.bf16.mxu0 0
      %3095 = vmatpush1.bf16.msra.mxu0 %v2853
      %3096 = vmatprep.subr.bf16.mxu0 0
      %3097 = vmatpush1.bf16.msra.mxu0 %v2854
      %3098 = vmatprep.subr.bf16.mxu0 0
      %3099 = vmatpush1.bf16.msra.mxu0 %v2855
      %3100 = vmatprep.subr.bf16.mxu0 0
      %3101 = vmatpush1.bf16.msra.mxu0 %v2856
      %3102 = vmatprep.subr.bf16.mxu0 0
      %3103 = vmatpush1.bf16.msra.mxu0 %v2857
      %3104 = vmatprep.subr.bf16.mxu0 0
      %3105 = vmatpush1.bf16.msra.mxu0 %v2858
      %3106 = vmatprep.subr.bf16.mxu0 0
      %3107 = vmatpush1.bf16.msra.mxu0 %v2859
      %3108 = vmatprep.subr.bf16.mxu0 0
      %3109 = vmatpush1.bf16.msra.mxu0 %v2860
      %3110 = vmatprep.mubr.bf16.mxu0 %v2562
      %3111 = vmatmul.mubr.bf16.gmra.mrb[0].mxu0 %v2561
      %v3112 = vpop.f32.mrb[0].mxu0
      %v3113 = vadd.f32 %v2928, %v3112
      %v3114 = vpop.f32.mrb[0].mxu0
      %v3115 = vpop.f32.mrb[0].mxu0
      %v3116 = vadd.f32 %v2931, %v3115
      %v3117 = vpop.f32.mrb[0].mxu0
      %3118 = vmatprep.mubr.bf16.mxu0 %v2566
      %3119 = vmatmul.mubr.bf16.gmra.mrb[0].mxu0 %v2565
      %v3120 = vpop.f32.mrb[0].mxu0
      %v3121 = vadd.f32 %v2936, %v3120
      %v3122 = vpop.f32.mrb[0].mxu0
      %v3123 = vpop.f32.mrb[0].mxu0
      %v3124 = vadd.f32 %v2939, %v3123
      %v3125 = vpop.f32.mrb[0].mxu0
      %3126 = vmatprep.mubr.bf16.mxu0 %v2570
      %3127 = vmatmul.mubr.bf16.gmra.mrb[0].mxu0 %v2569
      %v3128 = vpop.f32.mrb[0].mxu0
      %v3129 = vadd.f32 %v2944, %v3128
      %v3130 = vpop.f32.mrb[0].mxu0
      %v3131 = vpop.f32.mrb[0].mxu0
      %v3132 = vadd.f32 %v2947, %v3131
      %v3133 = vpop.f32.mrb[0].mxu0
      %3134 = vmatprep.mubr.bf16.mxu0 %v2574
      %3135 = vmatmul.mubr.bf16.gmra.mrb[0].mxu0 %v2573
      %v3136 = vpop.f32.mrb[0].mxu0
      %v3137 = vadd.f32 %v2952, %v3136
      %v3138 = vpop.f32.mrb[0].mxu0
      %v3139 = vpop.f32.mrb[0].mxu0
      %v3140 = vadd.f32 %v2955, %v3139
      %v3141 = vpop.f32.mrb[0].mxu0
      %3142 = vmatprep.mubr.bf16.mxu0 %v2578
      %3143 = vmatmul.mubr.bf16.gmra.mrb[0].mxu0 %v2577
      %v3144 = vpop.f32.mrb[0].mxu0
      %v3145 = vadd.f32 %v2960, %v3144
      %v3146 = vpop.f32.mrb[0].mxu0
      %v3147 = vpop.f32.mrb[0].mxu0
      %v3148 = vadd.f32 %v2963, %v3147
      %v3149 = vpop.f32.mrb[0].mxu0
      %3150 = vmatprep.mubr.bf16.mxu0 %v2582
      %3151 = vmatmul.mubr.bf16.gmra.mrb[0].mxu0 %v2581
      %v3152 = vpop.f32.mrb[0].mxu0
      %v3153 = vadd.f32 %v2968, %v3152
      %v3154 = vpop.f32.mrb[0].mxu0
      %v3155 = vpop.f32.mrb[0].mxu0
      %v3156 = vadd.f32 %v2971, %v3155
      %v3157 = vpop.f32.mrb[0].mxu0
      %3158 = vmatprep.mubr.bf16.mxu0 %v2586
      %3159 = vmatmul.mubr.bf16.gmra.mrb[0].mxu0 %v2585
      %v3160 = vpop.f32.mrb[0].mxu0
      %v3161 = vadd.f32 %v2976, %v3160
      %v3162 = vpop.f32.mrb[0].mxu0
      %v3163 = vpop.f32.mrb[0].mxu0
      %v3164 = vadd.f32 %v2979, %v3163
      %v3165 = vpop.f32.mrb[0].mxu0
      %3166 = vmatprep.mubr.bf16.mxu0 %v2590
      %3167 = vmatmul.mubr.bf16.gmra.mrb[0].mxu0 %v2589
      %v3168 = vpop.f32.mrb[0].mxu0
      %v3169 = vadd.f32 %v2984, %v3168
      %v3170 = vpop.f32.mrb[0].mxu0
      %v3171 = vpop.f32.mrb[0].mxu0
      %v3172 = vadd.f32 %v2987, %v3171
      %v3173 = vpop.f32.mrb[0].mxu0
      %3174 = vmatprep.mubr.bf16.mxu0 %v2594
      %3175 = vmatmul.mubr.bf16.gmra.mrb[0].mxu0 %v2593
      %v3176 = vpop.f32.mrb[0].mxu0
      %v3177 = vadd.f32 %v2992, %v3176
      %v3178 = vpop.f32.mrb[0].mxu0
      %v3179 = vpop.f32.mrb[0].mxu0
      %v3180 = vadd.f32 %v2995, %v3179
      %v3181 = vpop.f32.mrb[0].mxu0
      %3182 = vmatprep.mubr.bf16.mxu0 %v2598
      %3183 = vmatmul.mubr.bf16.gmra.mrb[0].mxu0 %v2597
      %v3184 = vpop.f32.mrb[0].mxu0
      %v3185 = vadd.f32 %v3000, %v3184
      %v3186 = vpop.f32.mrb[0].mxu0
      %v3187 = vpop.f32.mrb[0].mxu0
      %v3188 = vadd.f32 %v3003, %v3187
      %v3189 = vpop.f32.mrb[0].mxu0
      %3190 = vmatprep.mubr.bf16.mxu0 %v2602
      %3191 = vmatmul.mubr.bf16.gmra.mrb[0].mxu0 %v2601
      %v3192 = vpop.f32.mrb[0].mxu0
      %v3193 = vadd.f32 %v3008, %v3192
      %v3194 = vpop.f32.mrb[0].mxu0
      %v3195 = vpop.f32.mrb[0].mxu0
      %v3196 = vadd.f32 %v3011, %v3195
      %v3197 = vpop.f32.mrb[0].mxu0
      %3198 = vmatprep.mubr.bf16.mxu0 %v2606
      %3199 = vmatmul.mubr.bf16.gmra.mrb[0].mxu0 %v2605
      %v3200 = vpop.f32.mrb[0].mxu0
      %v3201 = vadd.f32 %v3016, %v3200
      %v3202 = vpop.f32.mrb[0].mxu0
      %v3203 = vpop.f32.mrb[0].mxu0
      %v3204 = vadd.f32 %v3019, %v3203
      %v3205 = vpop.f32.mrb[0].mxu0
      %3206 = vmatprep.mubr.bf16.mxu0 %v2610
      %3207 = vmatmul.mubr.bf16.gmra.mrb[0].mxu0 %v2609
      %v3208 = vpop.f32.mrb[0].mxu0
      %v3209 = vadd.f32 %v3024, %v3208
      %v3210 = vpop.f32.mrb[0].mxu0
      %v3211 = vpop.f32.mrb[0].mxu0
      %v3212 = vadd.f32 %v3027, %v3211
      %v3213 = vpop.f32.mrb[0].mxu0
      %3214 = vmatprep.mubr.bf16.mxu0 %v2614
      %3215 = vmatmul.mubr.bf16.gmra.mrb[0].mxu0 %v2613
      %v3216 = vpop.f32.mrb[0].mxu0
      %v3217 = vadd.f32 %v3032, %v3216
      %v3218 = vpop.f32.mrb[0].mxu0
      %v3219 = vpop.f32.mrb[0].mxu0
      %v3220 = vadd.f32 %v3035, %v3219
      %v3221 = vpop.f32.mrb[0].mxu0
      %3222 = vmatprep.mubr.bf16.mxu0 %v2618
      %3223 = vmatmul.mubr.bf16.gmra.mrb[0].mxu0 %v2617
      %v3224 = vpop.f32.mrb[0].mxu0
      %v3225 = vadd.f32 %v3040, %v3224
      %v3226 = vpop.f32.mrb[0].mxu0
      %v3227 = vpop.f32.mrb[0].mxu0
      %v3228 = vadd.f32 %v3043, %v3227
      %v3229 = vpop.f32.mrb[0].mxu0
      %3230 = vmatprep.mubr.bf16.mxu0 %v2622
      %3231 = vmatmul.mubr.bf16.gmra.mrb[0].mxu0 %v2621
      %v3232 = vpop.f32.mrb[0].mxu0
      %v3233 = vadd.f32 %v3048, %v3232
      %v3234 = vpop.f32.mrb[0].mxu0
      %v3235 = vpop.f32.mrb[0].mxu0
      %v3236 = vadd.f32 %v3051, %v3235
      %v3237 = vpop.f32.mrb[0].mxu0
      %3238 = vmatprep.mubr.bf16.mxu0 %v2626
      %3239 = vmatmul.mubr.bf16.gmra.mrb[0].mxu0 %v2625
      %v3240 = vpop.f32.mrb[0].mxu0
      %v3241 = vadd.f32 %v3056, %v3240
      %v3242 = vpop.f32.mrb[0].mxu0
      %v3243 = vpop.f32.mrb[0].mxu0
      %v3244 = vadd.f32 %v3059, %v3243
      %v3245 = vpop.f32.mrb[0].mxu0
      %3246 = vmatprep.mubr.bf16.mxu0 %v2630
      %3247 = vmatmul.mubr.bf16.gmra.mrb[0].mxu0 %v2629
      %v3248 = vpop.f32.mrb[0].mxu0
      %v3249 = vadd.f32 %v3064, %v3248
      %v3250 = vpop.f32.mrb[0].mxu0
      %v3251 = vpop.f32.mrb[0].mxu0
      %v3252 = vadd.f32 %v3067, %v3251
      %v3253 = vpop.f32.mrb[0].mxu0
      %3254 = vmatprep.mubr.bf16.mxu0 %v2634
      %3255 = vmatmul.mubr.bf16.gmra.mrb[0].mxu0 %v2633
      %v3256 = vpop.f32.mrb[0].mxu0
      %v3257 = vadd.f32 %v3072, %v3256
      %v3258 = vpop.f32.mrb[0].mxu0
      %v3259 = vpop.f32.mrb[0].mxu0
      %v3260 = vadd.f32 %v3075, %v3259
      %v3261 = vpop.f32.mrb[0].mxu0
      %3262 = vdwg.mxu0
      %v3263 = vmax.f32 %v3113, 0.0
      %v3264 = vmax.f32 %v3116, 0.0
      %v3265 = vmax.f32 %v3121, 0.0
      %v3266 = vmax.f32 %v3124, 0.0
      %v3267 = vmax.f32 %v3129, 0.0
      %v3268 = vmax.f32 %v3132, 0.0
      %v3269 = vmax.f32 %v3137, 0.0
      %v3270 = vmax.f32 %v3140, 0.0
      %v3271 = vmax.f32 %v3145, 0.0
      %v3272 = vmax.f32 %v3148, 0.0
      %v3273 = vmax.f32 %v3153, 0.0
      %v3274 = vmax.f32 %v3156, 0.0
      %v3275 = vmax.f32 %v3161, 0.0
      %v3276 = vmax.f32 %v3164, 0.0
      %v3277 = vmax.f32 %v3169, 0.0
      %v3278 = vmax.f32 %v3172, 0.0
      %v3279 = vmax.f32 %v3177, 0.0
      %v3280 = vmax.f32 %v3180, 0.0
      %v3281 = vmax.f32 %v3185, 0.0
      %v3282 = vmax.f32 %v3188, 0.0
      %v3283 = vmax.f32 %v3193, 0.0
      %v3284 = vmax.f32 %v3196, 0.0
      %v3285 = vmax.f32 %v3201, 0.0
      %v3286 = vmax.f32 %v3204, 0.0
      %v3287 = vmax.f32 %v3209, 0.0
      %v3288 = vmax.f32 %v3212, 0.0
      %v3289 = vmax.f32 %v3217, 0.0
      %v3290 = vmax.f32 %v3220, 0.0
      %v3291 = vmax.f32 %v3225, 0.0
      %v3292 = vmax.f32 %v3228, 0.0
      %v3293 = vmax.f32 %v3233, 0.0
      %v3294 = vmax.f32 %v3236, 0.0
      %v3295 = vmax.f32 %v3241, 0.0
      %v3296 = vmax.f32 %v3244, 0.0
      %v3297 = vmax.f32 %v3249, 0.0
      %v3298 = vmax.f32 %v3252, 0.0
      %v3299 = vmax.f32 %v3257, 0.0
      %v3300 = vmax.f32 %v3260, 0.0
      %v3301 = vpack.c.bf16 %v3264, %v3263
      %v3302 = vpack.c.bf16 %v3266, %v3265
      %v3303 = vpack.c.bf16 %v3268, %v3267
      %v3304 = vpack.c.bf16 %v3270, %v3269
      %v3305 = vpack.c.bf16 %v3272, %v3271
      %v3306 = vpack.c.bf16 %v3274, %v3273
      %v3307 = vpack.c.bf16 %v3276, %v3275
      %v3308 = vpack.c.bf16 %v3278, %v3277
      %v3309 = vpack.c.bf16 %v3280, %v3279
      %v3310 = vpack.c.bf16 %v3282, %v3281
      %v3311 = vpack.c.bf16 %v3284, %v3283
      %v3312 = vpack.c.bf16 %v3286, %v3285
      %v3313 = vpack.c.bf16 %v3288, %v3287
      %v3314 = vpack.c.bf16 %v3290, %v3289
      %v3315 = vpack.c.bf16 %v3292, %v3291
      %v3316 = vpack.c.bf16 %v3294, %v3293
      %v3317 = vpack.c.bf16 %v3296, %v3295
      %v3318 = vpack.c.bf16 %v3298, %v3297
      %v3319 = vpack.c.bf16 %v3300, %v3299
      %s3320 = scalar_lea.vmem %s3, 256
      %v3321 = vld [vmem:[%s3320] sm:$0xff]
      %v3322 = vld [vmem:[%s3320 + $0x8] sm:$0xff]
      %v3323 = vld [vmem:[%s3320 + $0x10] sm:$0xff]
      %v3324 = vld [vmem:[%s3320 + $0x18] sm:$0xff]
      %v3325 = vld [vmem:[%s3320 + $0x20] sm:$0xff]
      %v3326 = vld [vmem:[%s3320 + $0x28] sm:$0xff]
      %v3327 = vld [vmem:[%s3320 + $0x30] sm:$0xff]
      %v3328 = vld [vmem:[%s3320 + $0x38] sm:$0xff]
      %v3329 = vld [vmem:[%s3320 + $0x40] sm:$0xff]
      %v3330 = vld [vmem:[%s3320 + $0x48] sm:$0xff]
      %v3331 = vld [vmem:[%s3320 + $0x50] sm:$0xff]
      %v3332 = vld [vmem:[%s3320 + $0x58] sm:$0xff]
      %v3333 = vld [vmem:[%s3320 + $0x60] sm:$0xff]
      %v3334 = vld [vmem:[%s3320 + $0x68] sm:$0xff]
      %v3335 = vld [vmem:[%s3320 + $0x70] sm:$0xff]
      %v3336 = vld [vmem:[%s3320 + $0x78] sm:$0xff]
      %v3337 = vld [vmem:[%s3320 + $0x80] sm:$0xff]
      %v3338 = vld [vmem:[%s3320 + $0x88] sm:$0xff]
      %v3339 = vld [vmem:[%s3320 + $0x90] sm:$0xff]
      %v3340 = vld [vmem:[%s3320 + $0x98] sm:$0xff]
      %v3341 = vld [vmem:[%s3320 + $0xa0] sm:$0xff]
      %v3342 = vld [vmem:[%s3320 + $0xa8] sm:$0xff]
      %v3343 = vld [vmem:[%s3320 + $0xb0] sm:$0xff]
      %v3344 = vld [vmem:[%s3320 + $0xb8] sm:$0xff]
      %v3345 = vld [vmem:[%s3320 + $0xc0] sm:$0xff]
      %v3346 = vld [vmem:[%s3320 + $0xc8] sm:$0xff]
      %v3347 = vld [vmem:[%s3320 + $0xd0] sm:$0xff]
      %v3348 = vld [vmem:[%s3320 + $0xd8] sm:$0xff]
      %v3349 = vld [vmem:[%s3320 + $0xe0] sm:$0xff]
      %v3350 = vld [vmem:[%s3320 + $0xe8] sm:$0xff]
      %v3351 = vld [vmem:[%s3320 + $0xf0] sm:$0xff]
      %v3352 = vld [vmem:[%s3320 + $0xf8] sm:$0xff]
      %s3353 = scalar_lea.vmem %s4, 4
      %v3354 = vld [vmem:[%s3353] ss:$8 sm:$0xf]
      %v3356 = vlaneseq
      %v3357 = vshrl.u32 %v3356, 7
      %v3358 = vsub.s32 0, %v3357
      %v3359 = vrot.slane %v3354, %v3358
      %v3360 = vlaneseq
      %v3361 = vshrl.u32 %v3360, 7
      %v3362 = vsub.s32 1, %v3361
      %v3363 = vrot.slane %v3354, %v3362
      %v3364 = vlaneseq
      %v3365 = vshrl.u32 %v3364, 7
      %v3366 = vsub.s32 2, %v3365
      %v3367 = vrot.slane %v3354, %v3366
      %v3368 = vlaneseq
      %v3369 = vshrl.u32 %v3368, 7
      %v3370 = vsub.s32 3, %v3369
      %v3371 = vrot.slane %v3354, %v3370
      %v3408 = vunpack.c.l.b16 %v3321
      %v3409 = vunpack.c.h.b16 %v3321
      %v3410 = vunpack.c.l.b16 %v3322
      %v3411 = vunpack.c.h.b16 %v3322
      %v3412 = vunpack.c.l.b16 %v3323
      %v3413 = vunpack.c.h.b16 %v3323
      %v3414 = vunpack.c.l.b16 %v3324
      %v3415 = vunpack.c.h.b16 %v3324
      %v3416 = vunpack.c.l.b16 %v3325
      %v3417 = vunpack.c.h.b16 %v3325
      %v3418 = vunpack.c.l.b16 %v3326
      %v3419 = vunpack.c.h.b16 %v3326
      %v3420 = vunpack.c.l.b16 %v3327
      %v3421 = vunpack.c.h.b16 %v3327
      %v3422 = vunpack.c.l.b16 %v3328
      %v3423 = vunpack.c.h.b16 %v3328
      %v3424 = vunpack.c.l.b16 %v3329
      %v3425 = vunpack.c.h.b16 %v3329
      %v3426 = vunpack.c.l.b16 %v3330
      %v3427 = vunpack.c.h.b16 %v3330
      %v3428 = vunpack.c.l.b16 %v3331
      %v3429 = vunpack.c.h.b16 %v3331
      %v3430 = vunpack.c.l.b16 %v3332
      %v3431 = vunpack.c.h.b16 %v3332
      %v3432 = vunpack.c.l.b16 %v3333
      %v3433 = vunpack.c.h.b16 %v3333
      %v3434 = vunpack.c.l.b16 %v3334
      %v3435 = vunpack.c.h.b16 %v3334
      %v3436 = vunpack.c.l.b16 %v3335
      %v3437 = vunpack.c.h.b16 %v3335
      %v3438 = vunpack.c.l.b16 %v3336
      %v3439 = vunpack.c.h.b16 %v3336
      %v3440 = vunpack.c.l.b16 %v3337
      %v3441 = vunpack.c.h.b16 %v3337
      %v3442 = vunpack.c.l.b16 %v3338
      %v3443 = vunpack.c.h.b16 %v3338
      %v3444 = vunpack.c.l.b16 %v3339
      %v3445 = vunpack.c.h.b16 %v3339
      %v3446 = vunpack.c.l.b16 %v3340
      %v3447 = vunpack.c.h.b16 %v3340
      %v3448 = vunpack.c.l.b16 %v3341
      %v3449 = vunpack.c.h.b16 %v3341
      %v3450 = vunpack.c.l.b16 %v3342
      %v3451 = vunpack.c.h.b16 %v3342
      %v3452 = vunpack.c.l.b16 %v3343
      %v3453 = vunpack.c.h.b16 %v3343
      %v3454 = vunpack.c.l.b16 %v3344
      %v3455 = vunpack.c.h.b16 %v3344
      %v3456 = vunpack.c.l.b16 %v3345
      %v3457 = vunpack.c.h.b16 %v3345
      %v3458 = vunpack.c.l.b16 %v3346
      %v3459 = vunpack.c.h.b16 %v3346
      %v3460 = vunpack.c.l.b16 %v3347
      %v3461 = vunpack.c.h.b16 %v3347
      %v3462 = vunpack.c.l.b16 %v3348
      %v3463 = vunpack.c.h.b16 %v3348
      %v3464 = vunpack.c.l.b16 %v3349
      %v3465 = vunpack.c.h.b16 %v3349
      %v3466 = vunpack.c.l.b16 %v3350
      %v3467 = vunpack.c.h.b16 %v3350
      %v3468 = vunpack.c.l.b16 %v3351
      %v3469 = vunpack.c.h.b16 %v3351
      %v3470 = vunpack.c.l.b16 %v3352
      %v3471 = vunpack.c.h.b16 %v3352
      %v3472 = vpack.c.b16 %v3412, %v3408
      %v3473 = vpack.c.b16 %v3413, %v3409
      %v3474 = vpack.c.b16 %v3414, %v3410
      %v3475 = vpack.c.b16 %v3415, %v3411
      %v3476 = vpack.c.b16 %v3420, %v3416
      %v3477 = vpack.c.b16 %v3421, %v3417
      %v3478 = vpack.c.b16 %v3422, %v3418
      %v3479 = vpack.c.b16 %v3423, %v3419
      %v3480 = vpack.c.b16 %v3428, %v3424
      %v3481 = vpack.c.b16 %v3429, %v3425
      %v3482 = vpack.c.b16 %v3430, %v3426
      %v3483 = vpack.c.b16 %v3431, %v3427
      %v3484 = vpack.c.b16 %v3436, %v3432
      %v3485 = vpack.c.b16 %v3437, %v3433
      %v3486 = vpack.c.b16 %v3438, %v3434
      %v3487 = vpack.c.b16 %v3439, %v3435
      %v3488 = vpack.c.b16 %v3444, %v3440
      %v3489 = vpack.c.b16 %v3445, %v3441
      %v3490 = vpack.c.b16 %v3446, %v3442
      %v3491 = vpack.c.b16 %v3447, %v3443
      %v3492 = vpack.c.b16 %v3452, %v3448
      %v3493 = vpack.c.b16 %v3453, %v3449
      %v3494 = vpack.c.b16 %v3454, %v3450
      %v3495 = vpack.c.b16 %v3455, %v3451
      %v3496 = vpack.c.b16 %v3460, %v3456
      %v3497 = vpack.c.b16 %v3461, %v3457
      %v3498 = vpack.c.b16 %v3462, %v3458
      %v3499 = vpack.c.b16 %v3463, %v3459
      %v3500 = vpack.c.b16 %v3468, %v3464
      %v3501 = vpack.c.b16 %v3469, %v3465
      %v3502 = vpack.c.b16 %v3470, %v3466
      %v3503 = vpack.c.b16 %v3471, %v3467
      %3536 = vmatprep.subr.bf16.mxu0 %v3473
      %3537 = vmatpush1.bf16.msra.mxu0 %v3472
      %3538 = vmatprep.subr.bf16.mxu0 %v3477
      %3539 = vmatpush1.bf16.msra.mxu0 %v3476
      %3540 = vmatprep.subr.bf16.mxu0 %v3481
      %3541 = vmatpush1.bf16.msra.mxu0 %v3480
      %3542 = vmatprep.subr.bf16.mxu0 %v3485
      %3543 = vmatpush1.bf16.msra.mxu0 %v3484
      %3544 = vmatprep.subr.bf16.mxu0 %v3489
      %3545 = vmatpush1.bf16.msra.mxu0 %v3488
      %3546 = vmatprep.subr.bf16.mxu0 %v3493
      %3547 = vmatpush1.bf16.msra.mxu0 %v3492
      %3548 = vmatprep.subr.bf16.mxu0 %v3497
      %3549 = vmatpush1.bf16.msra.mxu0 %v3496
      %3550 = vmatprep.subr.bf16.mxu0 %v3501
      %3551 = vmatpush1.bf16.msra.mxu0 %v3500
      %3552 = vmatprep.subr.bf16.mxu0 0
      %3553 = vmatpush1.bf16.msra.mxu0 0
      %3554 = vmatprep.subr.bf16.mxu0 0
      %3555 = vmatpush1.bf16.msra.mxu0 0
      %3556 = vmatprep.subr.bf16.mxu0 0
      %3557 = vmatpush1.bf16.msra.mxu0 0
      %3558 = vmatprep.subr.bf16.mxu0 0
      %3559 = vmatpush1.bf16.msra.mxu0 0
      %3560 = vmatprep.subr.bf16.mxu0 0
      %3561 = vmatpush1.bf16.msra.mxu0 0
      %3562 = vmatprep.subr.bf16.mxu0 0
      %3563 = vmatpush1.bf16.msra.mxu0 0
      %3564 = vmatprep.subr.bf16.mxu0 0
      %3565 = vmatpush1.bf16.msra.mxu0 0
      %3566 = vmatprep.subr.bf16.mxu0 0
      %3567 = vmatpush1.bf16.msra.mxu0 0
      %3568 = vmatprep.mubr.bf16.mxu0 0
      %3569 = vmatmul.mubr.bf16.gmra.mrb[0].mxu0 %v3301
      %v3570 = vpop.f32.mrb[0].mxu0
      %v3571 = vadd.f32 %v3359, %v3570
      %v3572 = vpop.f32.mrb[0].mxu0
      %v3573 = vadd.f32 %v3363, %v3572
      %v3574 = vpop.f32.mrb[0].mxu0
      %v3575 = vadd.f32 %v3359, %v3574
      %v3576 = vpop.f32.mrb[0].mxu0
      %v3577 = vadd.f32 %v3363, %v3576
      %3578 = vmatprep.mubr.bf16.mxu0 0
      %3579 = vmatmul.mubr.bf16.gmra.mrb[0].mxu0 %v3302
      %v3580 = vpop.f32.mrb[0].mxu0
      %v3581 = vadd.f32 %v3359, %v3580
      %v3582 = vpop.f32.mrb[0].mxu0
      %v3583 = vadd.f32 %v3363, %v3582
      %v3584 = vpop.f32.mrb[0].mxu0
      %v3585 = vadd.f32 %v3359, %v3584
      %v3586 = vpop.f32.mrb[0].mxu0
      %v3587 = vadd.f32 %v3363, %v3586
      %3588 = vmatprep.mubr.bf16.mxu0 0
      %3589 = vmatmul.mubr.bf16.gmra.mrb[0].mxu0 %v3303
      %v3590 = vpop.f32.mrb[0].mxu0
      %v3591 = vadd.f32 %v3359, %v3590
      %v3592 = vpop.f32.mrb[0].mxu0
      %v3593 = vadd.f32 %v3363, %v3592
      %v3594 = vpop.f32.mrb[0].mxu0
      %v3595 = vadd.f32 %v3359, %v3594
      %v3596 = vpop.f32.mrb[0].mxu0
      %v3597 = vadd.f32 %v3363, %v3596
      %3598 = vmatprep.mubr.bf16.mxu0 0
      %3599 = vmatmul.mubr.bf16.gmra.mrb[0].mxu0 %v3304
      %v3600 = vpop.f32.mrb[0].mxu0
      %v3601 = vadd.f32 %v3359, %v3600
      %v3602 = vpop.f32.mrb[0].mxu0
      %v3603 = vadd.f32 %v3363, %v3602
      %v3604 = vpop.f32.mrb[0].mxu0
      %v3605 = vadd.f32 %v3359, %v3604
      %v3606 = vpop.f32.mrb[0].mxu0
      %v3607 = vadd.f32 %v3363, %v3606
      %3608 = vmatprep.mubr.bf16.mxu0 0
      %3609 = vmatmul.mubr.bf16.gmra.mrb[0].mxu0 %v3305
      %v3610 = vpop.f32.mrb[0].mxu0
      %v3611 = vadd.f32 %v3359, %v3610
      %v3612 = vpop.f32.mrb[0].mxu0
      %v3613 = vadd.f32 %v3363, %v3612
      %v3614 = vpop.f32.mrb[0].mxu0
      %v3615 = vadd.f32 %v3359, %v3614
      %v3616 = vpop.f32.mrb[0].mxu0
      %v3617 = vadd.f32 %v3363, %v3616
      %3618 = vmatprep.mubr.bf16.mxu0 0
      %3619 = vmatmul.mubr.bf16.gmra.mrb[0].mxu0 %v3306
      %v3620 = vpop.f32.mrb[0].mxu0
      %v3621 = vadd.f32 %v3359, %v3620
      %v3622 = vpop.f32.mrb[0].mxu0
      %v3623 = vadd.f32 %v3363, %v3622
      %v3624 = vpop.f32.mrb[0].mxu0
      %v3625 = vadd.f32 %v3359, %v3624
      %v3626 = vpop.f32.mrb[0].mxu0
      %v3627 = vadd.f32 %v3363, %v3626
      %3628 = vmatprep.mubr.bf16.mxu0 0
      %3629 = vmatmul.mubr.bf16.gmra.mrb[0].mxu0 %v3307
      %v3630 = vpop.f32.mrb[0].mxu0
      %v3631 = vadd.f32 %v3359, %v3630
      %v3632 = vpop.f32.mrb[0].mxu0
      %v3633 = vadd.f32 %v3363, %v3632
      %v3634 = vpop.f32.mrb[0].mxu0
      %v3635 = vadd.f32 %v3359, %v3634
      %v3636 = vpop.f32.mrb[0].mxu0
      %v3637 = vadd.f32 %v3363, %v3636
      %3638 = vmatprep.mubr.bf16.mxu0 0
      %3639 = vmatmul.mubr.bf16.gmra.mrb[0].mxu0 %v3308
      %v3640 = vpop.f32.mrb[0].mxu0
      %v3641 = vadd.f32 %v3359, %v3640
      %v3642 = vpop.f32.mrb[0].mxu0
      %v3643 = vadd.f32 %v3363, %v3642
      %v3644 = vpop.f32.mrb[0].mxu0
      %v3645 = vadd.f32 %v3359, %v3644
      %v3646 = vpop.f32.mrb[0].mxu0
      %v3647 = vadd.f32 %v3363, %v3646
      %3648 = vmatprep.mubr.bf16.mxu0 0
      %3649 = vmatmul.mubr.bf16.gmra.mrb[0].mxu0 %v3309
      %v3650 = vpop.f32.mrb[0].mxu0
      %v3651 = vadd.f32 %v3359, %v3650
      %v3652 = vpop.f32.mrb[0].mxu0
      %v3653 = vadd.f32 %v3363, %v3652
      %v3654 = vpop.f32.mrb[0].mxu0
      %v3655 = vadd.f32 %v3359, %v3654
      %v3656 = vpop.f32.mrb[0].mxu0
      %v3657 = vadd.f32 %v3363, %v3656
      %3658 = vmatprep.mubr.bf16.mxu0 0
      %3659 = vmatmul.mubr.bf16.gmra.mrb[0].mxu0 %v3310
      %v3660 = vpop.f32.mrb[0].mxu0
      %v3661 = vadd.f32 %v3359, %v3660
      %v3662 = vpop.f32.mrb[0].mxu0
      %v3663 = vadd.f32 %v3363, %v3662
      %v3664 = vpop.f32.mrb[0].mxu0
      %v3665 = vadd.f32 %v3359, %v3664
      %v3666 = vpop.f32.mrb[0].mxu0
      %v3667 = vadd.f32 %v3363, %v3666
      %3668 = vmatprep.mubr.bf16.mxu0 0
      %3669 = vmatmul.mubr.bf16.gmra.mrb[0].mxu0 %v3311
      %v3670 = vpop.f32.mrb[0].mxu0
      %v3671 = vadd.f32 %v3359, %v3670
      %v3672 = vpop.f32.mrb[0].mxu0
      %v3673 = vadd.f32 %v3363, %v3672
      %v3674 = vpop.f32.mrb[0].mxu0
      %v3675 = vadd.f32 %v3359, %v3674
      %v3676 = vpop.f32.mrb[0].mxu0
      %v3677 = vadd.f32 %v3363, %v3676
      %3678 = vmatprep.mubr.bf16.mxu0 0
      %3679 = vmatmul.mubr.bf16.gmra.mrb[0].mxu0 %v3312
      %v3680 = vpop.f32.mrb[0].mxu0
      %v3681 = vadd.f32 %v3359, %v3680
      %v3682 = vpop.f32.mrb[0].mxu0
      %v3683 = vadd.f32 %v3363, %v3682
      %v3684 = vpop.f32.mrb[0].mxu0
      %v3685 = vadd.f32 %v3359, %v3684
      %v3686 = vpop.f32.mrb[0].mxu0
      %v3687 = vadd.f32 %v3363, %v3686
      %3688 = vmatprep.mubr.bf16.mxu0 0
      %3689 = vmatmul.mubr.bf16.gmra.mrb[0].mxu0 %v3313
      %v3690 = vpop.f32.mrb[0].mxu0
      %v3691 = vadd.f32 %v3359, %v3690
      %v3692 = vpop.f32.mrb[0].mxu0
      %v3693 = vadd.f32 %v3363, %v3692
      %v3694 = vpop.f32.mrb[0].mxu0
      %v3695 = vadd.f32 %v3359, %v3694
      %v3696 = vpop.f32.mrb[0].mxu0
      %v3697 = vadd.f32 %v3363, %v3696
      %3698 = vmatprep.mubr.bf16.mxu0 0
      %3699 = vmatmul.mubr.bf16.gmra.mrb[0].mxu0 %v3314
      %v3700 = vpop.f32.mrb[0].mxu0
      %v3701 = vadd.f32 %v3359, %v3700
      %v3702 = vpop.f32.mrb[0].mxu0
      %v3703 = vadd.f32 %v3363, %v3702
      %v3704 = vpop.f32.mrb[0].mxu0
      %v3705 = vadd.f32 %v3359, %v3704
      %v3706 = vpop.f32.mrb[0].mxu0
      %v3707 = vadd.f32 %v3363, %v3706
      %3708 = vmatprep.mubr.bf16.mxu0 0
      %3709 = vmatmul.mubr.bf16.gmra.mrb[0].mxu0 %v3315
      %v3710 = vpop.f32.mrb[0].mxu0
      %v3711 = vadd.f32 %v3359, %v3710
      %v3712 = vpop.f32.mrb[0].mxu0
      %v3713 = vadd.f32 %v3363, %v3712
      %v3714 = vpop.f32.mrb[0].mxu0
      %v3715 = vadd.f32 %v3359, %v3714
      %v3716 = vpop.f32.mrb[0].mxu0
      %v3717 = vadd.f32 %v3363, %v3716
      %3718 = vmatprep.mubr.bf16.mxu0 0
      %3719 = vmatmul.mubr.bf16.gmra.mrb[0].mxu0 %v3316
      %v3720 = vpop.f32.mrb[0].mxu0
      %v3721 = vadd.f32 %v3359, %v3720
      %v3722 = vpop.f32.mrb[0].mxu0
      %v3723 = vadd.f32 %v3363, %v3722
      %v3724 = vpop.f32.mrb[0].mxu0
      %v3725 = vadd.f32 %v3359, %v3724
      %v3726 = vpop.f32.mrb[0].mxu0
      %v3727 = vadd.f32 %v3363, %v3726
      %3728 = vmatprep.mubr.bf16.mxu0 0
      %3729 = vmatmul.mubr.bf16.gmra.mrb[0].mxu0 %v3317
      %v3730 = vpop.f32.mrb[0].mxu0
      %v3731 = vadd.f32 %v3359, %v3730
      %v3732 = vpop.f32.mrb[0].mxu0
      %v3733 = vadd.f32 %v3363, %v3732
      %v3734 = vpop.f32.mrb[0].mxu0
      %v3735 = vadd.f32 %v3359, %v3734
      %v3736 = vpop.f32.mrb[0].mxu0
      %v3737 = vadd.f32 %v3363, %v3736
      %3738 = vmatprep.mubr.bf16.mxu0 0
      %3739 = vmatmul.mubr.bf16.gmra.mrb[0].mxu0 %v3318
      %v3740 = vpop.f32.mrb[0].mxu0
      %v3741 = vadd.f32 %v3359, %v3740
      %v3742 = vpop.f32.mrb[0].mxu0
      %v3743 = vadd.f32 %v3363, %v3742
      %v3744 = vpop.f32.mrb[0].mxu0
      %v3745 = vadd.f32 %v3359, %v3744
      %v3746 = vpop.f32.mrb[0].mxu0
      %v3747 = vadd.f32 %v3363, %v3746
      %3748 = vmatprep.mubr.bf16.mxu0 0
      %3749 = vmatmul.mubr.bf16.gmra.mrb[0].mxu0 %v3319
      %v3750 = vpop.f32.mrb[0].mxu0
      %v3751 = vadd.f32 %v3359, %v3750
      %v3752 = vpop.f32.mrb[0].mxu0
      %v3753 = vadd.f32 %v3363, %v3752
      %v3754 = vpop.f32.mrb[0].mxu0
      %v3755 = vadd.f32 %v3359, %v3754
      %v3756 = vpop.f32.mrb[0].mxu0
      %v3757 = vadd.f32 %v3363, %v3756
      %3758 = vdwg.mxu0
      %3759 = vmatprep.subr.bf16.mxu0 %v3475
      %3760 = vmatpush1.bf16.msra.mxu0 %v3474
      %3761 = vmatprep.subr.bf16.mxu0 %v3479
      %3762 = vmatpush1.bf16.msra.mxu0 %v3478
      %3763 = vmatprep.subr.bf16.mxu0 %v3483
      %3764 = vmatpush1.bf16.msra.mxu0 %v3482
      %3765 = vmatprep.subr.bf16.mxu0 %v3487
      %3766 = vmatpush1.bf16.msra.mxu0 %v3486
      %3767 = vmatprep.subr.bf16.mxu0 %v3491
      %3768 = vmatpush1.bf16.msra.mxu0 %v3490
      %3769 = vmatprep.subr.bf16.mxu0 %v3495
      %3770 = vmatpush1.bf16.msra.mxu0 %v3494
      %3771 = vmatprep.subr.bf16.mxu0 %v3499
      %3772 = vmatpush1.bf16.msra.mxu0 %v3498
      %3773 = vmatprep.subr.bf16.mxu0 %v3503
      %3774 = vmatpush1.bf16.msra.mxu0 %v3502
      %3775 = vmatprep.subr.bf16.mxu0 0
      %3776 = vmatpush1.bf16.msra.mxu0 0
      %3777 = vmatprep.subr.bf16.mxu0 0
      %3778 = vmatpush1.bf16.msra.mxu0 0
      %3779 = vmatprep.subr.bf16.mxu0 0
      %3780 = vmatpush1.bf16.msra.mxu0 0
      %3781 = vmatprep.subr.bf16.mxu0 0
      %3782 = vmatpush1.bf16.msra.mxu0 0
      %3783 = vmatprep.subr.bf16.mxu0 0
      %3784 = vmatpush1.bf16.msra.mxu0 0
      %3785 = vmatprep.subr.bf16.mxu0 0
      %3786 = vmatpush1.bf16.msra.mxu0 0
      %3787 = vmatprep.subr.bf16.mxu0 0
      %3788 = vmatpush1.bf16.msra.mxu0 0
      %3789 = vmatprep.subr.bf16.mxu0 0
      %3790 = vmatpush1.bf16.msra.mxu0 0
      %3791 = vmatprep.mubr.bf16.mxu0 0
      %3792 = vmatmul.mubr.bf16.gmra.mrb[0].mxu0 %v3301
      %v3793 = vpop.f32.mrb[0].mxu0
      %v3794 = vadd.f32 %v3367, %v3793
      %v3795 = vpop.f32.mrb[0].mxu0
      %v3796 = vadd.f32 %v3371, %v3795
      %v3797 = vpop.f32.mrb[0].mxu0
      %v3798 = vadd.f32 %v3367, %v3797
      %v3799 = vpop.f32.mrb[0].mxu0
      %v3800 = vadd.f32 %v3371, %v3799
      %3801 = vmatprep.mubr.bf16.mxu0 0
      %3802 = vmatmul.mubr.bf16.gmra.mrb[0].mxu0 %v3302
      %v3803 = vpop.f32.mrb[0].mxu0
      %v3804 = vadd.f32 %v3367, %v3803
      %v3805 = vpop.f32.mrb[0].mxu0
      %v3806 = vadd.f32 %v3371, %v3805
      %v3807 = vpop.f32.mrb[0].mxu0
      %v3808 = vadd.f32 %v3367, %v3807
      %v3809 = vpop.f32.mrb[0].mxu0
      %v3810 = vadd.f32 %v3371, %v3809
      %3811 = vmatprep.mubr.bf16.mxu0 0
      %3812 = vmatmul.mubr.bf16.gmra.mrb[0].mxu0 %v3303
      %v3813 = vpop.f32.mrb[0].mxu0
      %v3814 = vadd.f32 %v3367, %v3813
      %v3815 = vpop.f32.mrb[0].mxu0
      %v3816 = vadd.f32 %v3371, %v3815
      %v3817 = vpop.f32.mrb[0].mxu0
      %v3818 = vadd.f32 %v3367, %v3817
      %v3819 = vpop.f32.mrb[0].mxu0
      %v3820 = vadd.f32 %v3371, %v3819
      %3821 = vmatprep.mubr.bf16.mxu0 0
      %3822 = vmatmul.mubr.bf16.gmra.mrb[0].mxu0 %v3304
      %v3823 = vpop.f32.mrb[0].mxu0
      %v3824 = vadd.f32 %v3367, %v3823
      %v3825 = vpop.f32.mrb[0].mxu0
      %v3826 = vadd.f32 %v3371, %v3825
      %v3827 = vpop.f32.mrb[0].mxu0
      %v3828 = vadd.f32 %v3367, %v3827
      %v3829 = vpop.f32.mrb[0].mxu0
      %v3830 = vadd.f32 %v3371, %v3829
      %3831 = vmatprep.mubr.bf16.mxu0 0
      %3832 = vmatmul.mubr.bf16.gmra.mrb[0].mxu0 %v3305
      %v3833 = vpop.f32.mrb[0].mxu0
      %v3834 = vadd.f32 %v3367, %v3833
      %v3835 = vpop.f32.mrb[0].mxu0
      %v3836 = vadd.f32 %v3371, %v3835
      %v3837 = vpop.f32.mrb[0].mxu0
      %v3838 = vadd.f32 %v3367, %v3837
      %v3839 = vpop.f32.mrb[0].mxu0
      %v3840 = vadd.f32 %v3371, %v3839
      %3841 = vmatprep.mubr.bf16.mxu0 0
      %3842 = vmatmul.mubr.bf16.gmra.mrb[0].mxu0 %v3306
      %v3843 = vpop.f32.mrb[0].mxu0
      %v3844 = vadd.f32 %v3367, %v3843
      %v3845 = vpop.f32.mrb[0].mxu0
      %v3846 = vadd.f32 %v3371, %v3845
      %v3847 = vpop.f32.mrb[0].mxu0
      %v3848 = vadd.f32 %v3367, %v3847
      %v3849 = vpop.f32.mrb[0].mxu0
      %v3850 = vadd.f32 %v3371, %v3849
      %3851 = vmatprep.mubr.bf16.mxu0 0
      %3852 = vmatmul.mubr.bf16.gmra.mrb[0].mxu0 %v3307
      %v3853 = vpop.f32.mrb[0].mxu0
      %v3854 = vadd.f32 %v3367, %v3853
      %v3855 = vpop.f32.mrb[0].mxu0
      %v3856 = vadd.f32 %v3371, %v3855
      %v3857 = vpop.f32.mrb[0].mxu0
      %v3858 = vadd.f32 %v3367, %v3857
      %v3859 = vpop.f32.mrb[0].mxu0
      %v3860 = vadd.f32 %v3371, %v3859
      %3861 = vmatprep.mubr.bf16.mxu0 0
      %3862 = vmatmul.mubr.bf16.gmra.mrb[0].mxu0 %v3308
      %v3863 = vpop.f32.mrb[0].mxu0
      %v3864 = vadd.f32 %v3367, %v3863
      %v3865 = vpop.f32.mrb[0].mxu0
      %v3866 = vadd.f32 %v3371, %v3865
      %v3867 = vpop.f32.mrb[0].mxu0
      %v3868 = vadd.f32 %v3367, %v3867
      %v3869 = vpop.f32.mrb[0].mxu0
      %v3870 = vadd.f32 %v3371, %v3869
      %3871 = vmatprep.mubr.bf16.mxu0 0
      %3872 = vmatmul.mubr.bf16.gmra.mrb[0].mxu0 %v3309
      %v3873 = vpop.f32.mrb[0].mxu0
      %v3874 = vadd.f32 %v3367, %v3873
      %v3875 = vpop.f32.mrb[0].mxu0
      %v3876 = vadd.f32 %v3371, %v3875
      %v3877 = vpop.f32.mrb[0].mxu0
      %v3878 = vadd.f32 %v3367, %v3877
      %v3879 = vpop.f32.mrb[0].mxu0
      %v3880 = vadd.f32 %v3371, %v3879
      %3881 = vmatprep.mubr.bf16.mxu0 0
      %3882 = vmatmul.mubr.bf16.gmra.mrb[0].mxu0 %v3310
      %v3883 = vpop.f32.mrb[0].mxu0
      %v3884 = vadd.f32 %v3367, %v3883
      %v3885 = vpop.f32.mrb[0].mxu0
      %v3886 = vadd.f32 %v3371, %v3885
      %v3887 = vpop.f32.mrb[0].mxu0
      %v3888 = vadd.f32 %v3367, %v3887
      %v3889 = vpop.f32.mrb[0].mxu0
      %v3890 = vadd.f32 %v3371, %v3889
      %3891 = vmatprep.mubr.bf16.mxu0 0
      %3892 = vmatmul.mubr.bf16.gmra.mrb[0].mxu0 %v3311
      %v3893 = vpop.f32.mrb[0].mxu0
      %v3894 = vadd.f32 %v3367, %v3893
      %v3895 = vpop.f32.mrb[0].mxu0
      %v3896 = vadd.f32 %v3371, %v3895
      %v3897 = vpop.f32.mrb[0].mxu0
      %v3898 = vadd.f32 %v3367, %v3897
      %v3899 = vpop.f32.mrb[0].mxu0
      %v3900 = vadd.f32 %v3371, %v3899
      %3901 = vmatprep.mubr.bf16.mxu0 0
      %3902 = vmatmul.mubr.bf16.gmra.mrb[0].mxu0 %v3312
      %v3903 = vpop.f32.mrb[0].mxu0
      %v3904 = vadd.f32 %v3367, %v3903
      %v3905 = vpop.f32.mrb[0].mxu0
      %v3906 = vadd.f32 %v3371, %v3905
      %v3907 = vpop.f32.mrb[0].mxu0
      %v3908 = vadd.f32 %v3367, %v3907
      %v3909 = vpop.f32.mrb[0].mxu0
      %v3910 = vadd.f32 %v3371, %v3909
      %3911 = vmatprep.mubr.bf16.mxu0 0
      %3912 = vmatmul.mubr.bf16.gmra.mrb[0].mxu0 %v3313
      %v3913 = vpop.f32.mrb[0].mxu0
      %v3914 = vadd.f32 %v3367, %v3913
      %v3915 = vpop.f32.mrb[0].mxu0
      %v3916 = vadd.f32 %v3371, %v3915
      %v3917 = vpop.f32.mrb[0].mxu0
      %v3918 = vadd.f32 %v3367, %v3917
      %v3919 = vpop.f32.mrb[0].mxu0
      %v3920 = vadd.f32 %v3371, %v3919
      %3921 = vmatprep.mubr.bf16.mxu0 0
      %3922 = vmatmul.mubr.bf16.gmra.mrb[0].mxu0 %v3314
      %v3923 = vpop.f32.mrb[0].mxu0
      %v3924 = vadd.f32 %v3367, %v3923
      %v3925 = vpop.f32.mrb[0].mxu0
      %v3926 = vadd.f32 %v3371, %v3925
      %v3927 = vpop.f32.mrb[0].mxu0
      %v3928 = vadd.f32 %v3367, %v3927
      %v3929 = vpop.f32.mrb[0].mxu0
      %v3930 = vadd.f32 %v3371, %v3929
      %3931 = vmatprep.mubr.bf16.mxu0 0
      %3932 = vmatmul.mubr.bf16.gmra.mrb[0].mxu0 %v3315
      %v3933 = vpop.f32.mrb[0].mxu0
      %v3934 = vadd.f32 %v3367, %v3933
      %v3935 = vpop.f32.mrb[0].mxu0
      %v3936 = vadd.f32 %v3371, %v3935
      %v3937 = vpop.f32.mrb[0].mxu0
      %v3938 = vadd.f32 %v3367, %v3937
      %v3939 = vpop.f32.mrb[0].mxu0
      %v3940 = vadd.f32 %v3371, %v3939
      %3941 = vmatprep.mubr.bf16.mxu0 0
      %3942 = vmatmul.mubr.bf16.gmra.mrb[0].mxu0 %v3316
      %v3943 = vpop.f32.mrb[0].mxu0
      %v3944 = vadd.f32 %v3367, %v3943
      %v3945 = vpop.f32.mrb[0].mxu0
      %v3946 = vadd.f32 %v3371, %v3945
      %v3947 = vpop.f32.mrb[0].mxu0
      %v3948 = vadd.f32 %v3367, %v3947
      %v3949 = vpop.f32.mrb[0].mxu0
      %v3950 = vadd.f32 %v3371, %v3949
      %3951 = vmatprep.mubr.bf16.mxu0 0
      %3952 = vmatmul.mubr.bf16.gmra.mrb[0].mxu0 %v3317
      %v3953 = vpop.f32.mrb[0].mxu0
      %v3954 = vadd.f32 %v3367, %v3953
      %v3955 = vpop.f32.mrb[0].mxu0
      %v3956 = vadd.f32 %v3371, %v3955
      %v3957 = vpop.f32.mrb[0].mxu0
      %v3958 = vadd.f32 %v3367, %v3957
      %v3959 = vpop.f32.mrb[0].mxu0
      %v3960 = vadd.f32 %v3371, %v3959
      %3961 = vmatprep.mubr.bf16.mxu0 0
      %3962 = vmatmul.mubr.bf16.gmra.mrb[0].mxu0 %v3318
      %v3963 = vpop.f32.mrb[0].mxu0
      %v3964 = vadd.f32 %v3367, %v3963
      %v3965 = vpop.f32.mrb[0].mxu0
      %v3966 = vadd.f32 %v3371, %v3965
      %v3967 = vpop.f32.mrb[0].mxu0
      %v3968 = vadd.f32 %v3367, %v3967
      %v3969 = vpop.f32.mrb[0].mxu0
      %v3970 = vadd.f32 %v3371, %v3969
      %3971 = vmatprep.mubr.bf16.mxu0 0
      %3972 = vmatmul.mubr.bf16.gmra.mrb[0].mxu0 %v3319
      %v3973 = vpop.f32.mrb[0].mxu0
      %v3974 = vadd.f32 %v3367, %v3973
      %v3975 = vpop.f32.mrb[0].mxu0
      %v3976 = vadd.f32 %v3371, %v3975
      %v3977 = vpop.f32.mrb[0].mxu0
      %v3978 = vadd.f32 %v3367, %v3977
      %v3979 = vpop.f32.mrb[0].mxu0
      %v3980 = vadd.f32 %v3371, %v3979
      %3981 = vdwg.mxu0
      %v3982 = vmax.f32 %v3571, 0.0
      %v3983 = vmax.f32 %v3573, 0.0
      %v3984 = vmax.f32 %v3794, 0.0
      %v3985 = vmax.f32 %v3796, 0.0
      %v3986 = vmax.f32 %v3575, 0.0
      %v3987 = vmax.f32 %v3577, 0.0
      %v3988 = vmax.f32 %v3798, 0.0
      %v3989 = vmax.f32 %v3800, 0.0
      %v3990 = vmax.f32 %v3581, 0.0
      %v3991 = vmax.f32 %v3583, 0.0
      %v3992 = vmax.f32 %v3804, 0.0
      %v3993 = vmax.f32 %v3806, 0.0
      %v3994 = vmax.f32 %v3585, 0.0
      %v3995 = vmax.f32 %v3587, 0.0
      %v3996 = vmax.f32 %v3808, 0.0
      %v3997 = vmax.f32 %v3810, 0.0
      %v3998 = vmax.f32 %v3591, 0.0
      %v3999 = vmax.f32 %v3593, 0.0
      %v4000 = vmax.f32 %v3814, 0.0
      %v4001 = vmax.f32 %v3816, 0.0
      %v4002 = vmax.f32 %v3595, 0.0
      %v4003 = vmax.f32 %v3597, 0.0
      %v4004 = vmax.f32 %v3818, 0.0
      %v4005 = vmax.f32 %v3820, 0.0
      %v4006 = vmax.f32 %v3601, 0.0
      %v4007 = vmax.f32 %v3603, 0.0
      %v4008 = vmax.f32 %v3824, 0.0
      %v4009 = vmax.f32 %v3826, 0.0
      %v4010 = vmax.f32 %v3605, 0.0
      %v4011 = vmax.f32 %v3607, 0.0
      %v4012 = vmax.f32 %v3828, 0.0
      %v4013 = vmax.f32 %v3830, 0.0
      %v4014 = vmax.f32 %v3611, 0.0
      %v4015 = vmax.f32 %v3613, 0.0
      %v4016 = vmax.f32 %v3834, 0.0
      %v4017 = vmax.f32 %v3836, 0.0
      %v4018 = vmax.f32 %v3615, 0.0
      %v4019 = vmax.f32 %v3617, 0.0
      %v4020 = vmax.f32 %v3838, 0.0
      %v4021 = vmax.f32 %v3840, 0.0
      %v4022 = vmax.f32 %v3621, 0.0
      %v4023 = vmax.f32 %v3623, 0.0
      %v4024 = vmax.f32 %v3844, 0.0
      %v4025 = vmax.f32 %v3846, 0.0
      %v4026 = vmax.f32 %v3625, 0.0
      %v4027 = vmax.f32 %v3627, 0.0
      %v4028 = vmax.f32 %v3848, 0.0
      %v4029 = vmax.f32 %v3850, 0.0
      %v4030 = vmax.f32 %v3631, 0.0
      %v4031 = vmax.f32 %v3633, 0.0
      %v4032 = vmax.f32 %v3854, 0.0
      %v4033 = vmax.f32 %v3856, 0.0
      %v4034 = vmax.f32 %v3635, 0.0
      %v4035 = vmax.f32 %v3637, 0.0
      %v4036 = vmax.f32 %v3858, 0.0
      %v4037 = vmax.f32 %v3860, 0.0
      %v4038 = vmax.f32 %v3641, 0.0
      %v4039 = vmax.f32 %v3643, 0.0
      %v4040 = vmax.f32 %v3864, 0.0
      %v4041 = vmax.f32 %v3866, 0.0
      %v4042 = vmax.f32 %v3645, 0.0
      %v4043 = vmax.f32 %v3647, 0.0
      %v4044 = vmax.f32 %v3868, 0.0
      %v4045 = vmax.f32 %v3870, 0.0
      %v4046 = vmax.f32 %v3651, 0.0
      %v4047 = vmax.f32 %v3653, 0.0
      %v4048 = vmax.f32 %v3874, 0.0
      %v4049 = vmax.f32 %v3876, 0.0
      %v4050 = vmax.f32 %v3655, 0.0
      %v4051 = vmax.f32 %v3657, 0.0
      %v4052 = vmax.f32 %v3878, 0.0
      %v4053 = vmax.f32 %v3880, 0.0
      %v4054 = vmax.f32 %v3661, 0.0
      %v4055 = vmax.f32 %v3663, 0.0
      %v4056 = vmax.f32 %v3884, 0.0
      %v4057 = vmax.f32 %v3886, 0.0
      %v4058 = vmax.f32 %v3665, 0.0
      %v4059 = vmax.f32 %v3667, 0.0
      %v4060 = vmax.f32 %v3888, 0.0
      %v4061 = vmax.f32 %v3890, 0.0
      %v4062 = vmax.f32 %v3671, 0.0
      %v4063 = vmax.f32 %v3673, 0.0
      %v4064 = vmax.f32 %v3894, 0.0
      %v4065 = vmax.f32 %v3896, 0.0
      %v4066 = vmax.f32 %v3675, 0.0
      %v4067 = vmax.f32 %v3677, 0.0
      %v4068 = vmax.f32 %v3898, 0.0
      %v4069 = vmax.f32 %v3900, 0.0
      %v4070 = vmax.f32 %v3681, 0.0
      %v4071 = vmax.f32 %v3683, 0.0
      %v4072 = vmax.f32 %v3904, 0.0
      %v4073 = vmax.f32 %v3906, 0.0
      %v4074 = vmax.f32 %v3685, 0.0
      %v4075 = vmax.f32 %v3687, 0.0
      %v4076 = vmax.f32 %v3908, 0.0
      %v4077 = vmax.f32 %v3910, 0.0
      %v4078 = vmax.f32 %v3691, 0.0
      %v4079 = vmax.f32 %v3693, 0.0
      %v4080 = vmax.f32 %v3914, 0.0
      %v4081 = vmax.f32 %v3916, 0.0
      %v4082 = vmax.f32 %v3695, 0.0
      %v4083 = vmax.f32 %v3697, 0.0
      %v4084 = vmax.f32 %v3918, 0.0
      %v4085 = vmax.f32 %v3920, 0.0
      %v4086 = vmax.f32 %v3701, 0.0
      %v4087 = vmax.f32 %v3703, 0.0
      %v4088 = vmax.f32 %v3924, 0.0
      %v4089 = vmax.f32 %v3926, 0.0
      %v4090 = vmax.f32 %v3705, 0.0
      %v4091 = vmax.f32 %v3707, 0.0
      %v4092 = vmax.f32 %v3928, 0.0
      %v4093 = vmax.f32 %v3930, 0.0
      %v4094 = vmax.f32 %v3711, 0.0
      %v4095 = vmax.f32 %v3713, 0.0
      %v4096 = vmax.f32 %v3934, 0.0
      %v4097 = vmax.f32 %v3936, 0.0
      %v4098 = vmax.f32 %v3715, 0.0
      %v4099 = vmax.f32 %v3717, 0.0
      %v4100 = vmax.f32 %v3938, 0.0
      %v4101 = vmax.f32 %v3940, 0.0
      %v4102 = vmax.f32 %v3721, 0.0
      %v4103 = vmax.f32 %v3723, 0.0
      %v4104 = vmax.f32 %v3944, 0.0
      %v4105 = vmax.f32 %v3946, 0.0
      %v4106 = vmax.f32 %v3725, 0.0
      %v4107 = vmax.f32 %v3727, 0.0
      %v4108 = vmax.f32 %v3948, 0.0
      %v4109 = vmax.f32 %v3950, 0.0
      %v4110 = vmax.f32 %v3731, 0.0
      %v4111 = vmax.f32 %v3733, 0.0
      %v4112 = vmax.f32 %v3954, 0.0
      %v4113 = vmax.f32 %v3956, 0.0
      %v4114 = vmax.f32 %v3735, 0.0
      %v4115 = vmax.f32 %v3737, 0.0
      %v4116 = vmax.f32 %v3958, 0.0
      %v4117 = vmax.f32 %v3960, 0.0
      %v4118 = vmax.f32 %v3741, 0.0
      %v4119 = vmax.f32 %v3743, 0.0
      %v4120 = vmax.f32 %v3964, 0.0
      %v4121 = vmax.f32 %v3966, 0.0
      %v4122 = vmax.f32 %v3745, 0.0
      %v4123 = vmax.f32 %v3747, 0.0
      %v4124 = vmax.f32 %v3968, 0.0
      %v4125 = vmax.f32 %v3970, 0.0
      %v4126 = vmax.f32 %v3751, 0.0
      %v4127 = vmax.f32 %v3753, 0.0
      %v4128 = vmax.f32 %v3974, 0.0
      %v4129 = vmax.f32 %v3976, 0.0
      %v4130 = vmax.f32 %v3755, 0.0
      %v4131 = vmax.f32 %v3757, 0.0
      %v4132 = vmax.f32 %v3978, 0.0
      %v4133 = vmax.f32 %v3980, 0.0
      %v4134 = vpack.c.bf16 %v3986, %v3982
      %v4135 = vpack.c.bf16 %v3987, %v3983
      %v4136 = vpack.c.bf16 %v3988, %v3984
      %v4137 = vpack.c.bf16 %v3989, %v3985
      %v4138 = vpack.c.bf16 %v3994, %v3990
      %v4139 = vpack.c.bf16 %v3995, %v3991
      %v4140 = vpack.c.bf16 %v3996, %v3992
      %v4141 = vpack.c.bf16 %v3997, %v3993
      %v4142 = vpack.c.bf16 %v4002, %v3998
      %v4143 = vpack.c.bf16 %v4003, %v3999
      %v4144 = vpack.c.bf16 %v4004, %v4000
      %v4145 = vpack.c.bf16 %v4005, %v4001
      %v4146 = vpack.c.bf16 %v4010, %v4006
      %v4147 = vpack.c.bf16 %v4011, %v4007
      %v4148 = vpack.c.bf16 %v4012, %v4008
      %v4149 = vpack.c.bf16 %v4013, %v4009
      %v4150 = vpack.c.bf16 %v4018, %v4014
      %v4151 = vpack.c.bf16 %v4019, %v4015
      %v4152 = vpack.c.bf16 %v4020, %v4016
      %v4153 = vpack.c.bf16 %v4021, %v4017
      %v4154 = vpack.c.bf16 %v4026, %v4022
      %v4155 = vpack.c.bf16 %v4027, %v4023
      %v4156 = vpack.c.bf16 %v4028, %v4024
      %v4157 = vpack.c.bf16 %v4029, %v4025
      %v4158 = vpack.c.bf16 %v4034, %v4030
      %v4159 = vpack.c.bf16 %v4035, %v4031
      %v4160 = vpack.c.bf16 %v4036, %v4032
      %v4161 = vpack.c.bf16 %v4037, %v4033
      %v4162 = vpack.c.bf16 %v4042, %v4038
      %v4163 = vpack.c.bf16 %v4043, %v4039
      %v4164 = vpack.c.bf16 %v4044, %v4040
      %v4165 = vpack.c.bf16 %v4045, %v4041
      %v4166 = vpack.c.bf16 %v4050, %v4046
      %v4167 = vpack.c.bf16 %v4051, %v4047
      %v4168 = vpack.c.bf16 %v4052, %v4048
      %v4169 = vpack.c.bf16 %v4053, %v4049
      %v4170 = vpack.c.bf16 %v4058, %v4054
      %v4171 = vpack.c.bf16 %v4059, %v4055
      %v4172 = vpack.c.bf16 %v4060, %v4056
      %v4173 = vpack.c.bf16 %v4061, %v4057
      %v4174 = vpack.c.bf16 %v4066, %v4062
      %v4175 = vpack.c.bf16 %v4067, %v4063
      %v4176 = vpack.c.bf16 %v4068, %v4064
      %v4177 = vpack.c.bf16 %v4069, %v4065
      %v4178 = vpack.c.bf16 %v4074, %v4070
      %v4179 = vpack.c.bf16 %v4075, %v4071
      %v4180 = vpack.c.bf16 %v4076, %v4072
      %v4181 = vpack.c.bf16 %v4077, %v4073
      %v4182 = vpack.c.bf16 %v4082, %v4078
      %v4183 = vpack.c.bf16 %v4083, %v4079
      %v4184 = vpack.c.bf16 %v4084, %v4080
      %v4185 = vpack.c.bf16 %v4085, %v4081
      %v4186 = vpack.c.bf16 %v4090, %v4086
      %v4187 = vpack.c.bf16 %v4091, %v4087
      %v4188 = vpack.c.bf16 %v4092, %v4088
      %v4189 = vpack.c.bf16 %v4093, %v4089
      %v4190 = vpack.c.bf16 %v4098, %v4094
      %v4191 = vpack.c.bf16 %v4099, %v4095
      %v4192 = vpack.c.bf16 %v4100, %v4096
      %v4193 = vpack.c.bf16 %v4101, %v4097
      %v4194 = vpack.c.bf16 %v4106, %v4102
      %v4195 = vpack.c.bf16 %v4107, %v4103
      %v4196 = vpack.c.bf16 %v4108, %v4104
      %v4197 = vpack.c.bf16 %v4109, %v4105
      %v4198 = vpack.c.bf16 %v4114, %v4110
      %v4199 = vpack.c.bf16 %v4115, %v4111
      %v4200 = vpack.c.bf16 %v4116, %v4112
      %v4201 = vpack.c.bf16 %v4117, %v4113
      %v4202 = vpack.c.bf16 %v4122, %v4118
      %v4203 = vpack.c.bf16 %v4123, %v4119
      %v4204 = vpack.c.bf16 %v4124, %v4120
      %v4205 = vpack.c.bf16 %v4125, %v4121
      %v4206 = vpack.c.bf16 %v4130, %v4126
      %v4207 = vpack.c.bf16 %v4131, %v4127
      %v4208 = vpack.c.bf16 %v4132, %v4128
      %v4209 = vpack.c.bf16 %v4133, %v4129
      %s4210 = scalar_lea.vmem %s2, 512
      %v4211 = vld [vmem:[%s4210] sm:$0xf]
      %v4212 = vld [vmem:[%s4210 + $0x4] sm:$0xf]
      %v4213 = vld [vmem:[%s4210 + $0x8] sm:$0xf]
      %v4214 = vld [vmem:[%s4210 + $0xc] sm:$0xf]
      %v4215 = vld [vmem:[%s4210 + $0x10] sm:$0xf]
      %v4216 = vld [vmem:[%s4210 + $0x14] sm:$0xf]
      %v4217 = vld [vmem:[%s4210 + $0x18] sm:$0xf]
      %v4218 = vld [vmem:[%s4210 + $0x1c] sm:$0xf]
      %v4219 = vld [vmem:[%s4210 + $0x20] sm:$0xf]
      %v4220 = vld [vmem:[%s4210 + $0x24] sm:$0xf]
      %v4221 = vld [vmem:[%s4210 + $0x28] sm:$0xf]
      %v4222 = vld [vmem:[%s4210 + $0x2c] sm:$0xf]
      %v4223 = vld [vmem:[%s4210 + $0x30] sm:$0xf]
      %v4224 = vld [vmem:[%s4210 + $0x34] sm:$0xf]
      %v4225 = vld [vmem:[%s4210 + $0x38] sm:$0xf]
      %v4226 = vld [vmem:[%s4210 + $0x3c] sm:$0xf]
      %v4227 = vld [vmem:[%s4210 + $0x40] sm:$0xf]
      %v4228 = vld [vmem:[%s4210 + $0x44] sm:$0xf]
      %v4229 = vld [vmem:[%s4210 + $0x48] sm:$0xf]
      %v4230 = vld [vmem:[%s4210 + $0x4c] sm:$0xf]
      %v4231 = vld [vmem:[%s4210 + $0x50] sm:$0xf]
      %v4232 = vld [vmem:[%s4210 + $0x54] sm:$0xf]
      %v4233 = vld [vmem:[%s4210 + $0x58] sm:$0xf]
      %v4234 = vld [vmem:[%s4210 + $0x5c] sm:$0xf]
      %v4235 = vld [vmem:[%s4210 + $0x60] sm:$0xf]
      %v4236 = vld [vmem:[%s4210 + $0x64] sm:$0xf]
      %v4237 = vld [vmem:[%s4210 + $0x68] sm:$0xf]
      %v4238 = vld [vmem:[%s4210 + $0x6c] sm:$0xf]
      %v4239 = vld [vmem:[%s4210 + $0x70] sm:$0xf]
      %v4240 = vld [vmem:[%s4210 + $0x74] sm:$0xf]
      %v4241 = vld [vmem:[%s4210 + $0x78] sm:$0xf]
      %v4242 = vld [vmem:[%s4210 + $0x7c] sm:$0xf]
      %v4243 = vld [vmem:[%s4210 + $0x80] sm:$0xf]
      %v4244 = vld [vmem:[%s4210 + $0x84] sm:$0xf]
      %v4245 = vld [vmem:[%s4210 + $0x88] sm:$0xf]
      %v4246 = vld [vmem:[%s4210 + $0x8c] sm:$0xf]
      %v4247 = vld [vmem:[%s4210 + $0x90] sm:$0xf]
      %v4248 = vld [vmem:[%s4210 + $0x94] sm:$0xf]
      %v4249 = vld [vmem:[%s4210 + $0x98] sm:$0xf]
      %v4250 = vld [vmem:[%s4210 + $0x9c] sm:$0xf]
      %v4251 = vld [vmem:[%s4210 + $0xa0] sm:$0xf]
      %v4252 = vld [vmem:[%s4210 + $0xa4] sm:$0xf]
      %v4253 = vld [vmem:[%s4210 + $0xa8] sm:$0xf]
      %v4254 = vld [vmem:[%s4210 + $0xac] sm:$0xf]
      %v4255 = vld [vmem:[%s4210 + $0xb0] sm:$0xf]
      %v4256 = vld [vmem:[%s4210 + $0xb4] sm:$0xf]
      %v4257 = vld [vmem:[%s4210 + $0xb8] sm:$0xf]
      %v4258 = vld [vmem:[%s4210 + $0xbc] sm:$0xf]
      %v4259 = vld [vmem:[%s4210 + $0xc0] sm:$0xf]
      %v4260 = vld [vmem:[%s4210 + $0xc4] sm:$0xf]
      %v4261 = vld [vmem:[%s4210 + $0xc8] sm:$0xf]
      %v4262 = vld [vmem:[%s4210 + $0xcc] sm:$0xf]
      %v4263 = vld [vmem:[%s4210 + $0xd0] sm:$0xf]
      %v4264 = vld [vmem:[%s4210 + $0xd4] sm:$0xf]
      %v4265 = vld [vmem:[%s4210 + $0xd8] sm:$0xf]
      %v4266 = vld [vmem:[%s4210 + $0xdc] sm:$0xf]
      %v4267 = vld [vmem:[%s4210 + $0xe0] sm:$0xf]
      %v4268 = vld [vmem:[%s4210 + $0xe4] sm:$0xf]
      %v4269 = vld [vmem:[%s4210 + $0xe8] sm:$0xf]
      %v4270 = vld [vmem:[%s4210 + $0xec] sm:$0xf]
      %v4271 = vld [vmem:[%s4210 + $0xf0] sm:$0xf]
      %v4272 = vld [vmem:[%s4210 + $0xf4] sm:$0xf]
      %v4273 = vld [vmem:[%s4210 + $0xf8] sm:$0xf]
      %v4274 = vld [vmem:[%s4210 + $0xfc] sm:$0xf]
      %v4275 = vld [vmem:[%s4 + $0x5] ss:$0 sm:$0xff]
      %v4340 = vunpack.c.l.b16 %v4211
      %v4341 = vunpack.c.l.b16 %v4212
      %v4342 = vunpack.c.l.b16 %v4213
      %v4343 = vunpack.c.l.b16 %v4214
      %v4344 = vunpack.c.l.b16 %v4215
      %v4345 = vunpack.c.l.b16 %v4216
      %v4346 = vunpack.c.l.b16 %v4217
      %v4347 = vunpack.c.l.b16 %v4218
      %v4348 = vunpack.c.l.b16 %v4219
      %v4349 = vunpack.c.l.b16 %v4220
      %v4350 = vunpack.c.l.b16 %v4221
      %v4351 = vunpack.c.l.b16 %v4222
      %v4352 = vunpack.c.l.b16 %v4223
      %v4353 = vunpack.c.l.b16 %v4224
      %v4354 = vunpack.c.l.b16 %v4225
      %v4355 = vunpack.c.l.b16 %v4226
      %v4356 = vunpack.c.l.b16 %v4227
      %v4357 = vunpack.c.l.b16 %v4228
      %v4358 = vunpack.c.l.b16 %v4229
      %v4359 = vunpack.c.l.b16 %v4230
      %v4360 = vunpack.c.l.b16 %v4231
      %v4361 = vunpack.c.l.b16 %v4232
      %v4362 = vunpack.c.l.b16 %v4233
      %v4363 = vunpack.c.l.b16 %v4234
      %v4364 = vunpack.c.l.b16 %v4235
      %v4365 = vunpack.c.l.b16 %v4236
      %v4366 = vunpack.c.l.b16 %v4237
      %v4367 = vunpack.c.l.b16 %v4238
      %v4368 = vunpack.c.l.b16 %v4239
      %v4369 = vunpack.c.l.b16 %v4240
      %v4370 = vunpack.c.l.b16 %v4241
      %v4371 = vunpack.c.l.b16 %v4242
      %v4372 = vunpack.c.l.b16 %v4243
      %v4373 = vunpack.c.l.b16 %v4244
      %v4374 = vunpack.c.l.b16 %v4245
      %v4375 = vunpack.c.l.b16 %v4246
      %v4376 = vunpack.c.l.b16 %v4247
      %v4377 = vunpack.c.l.b16 %v4248
      %v4378 = vunpack.c.l.b16 %v4249
      %v4379 = vunpack.c.l.b16 %v4250
      %v4380 = vunpack.c.l.b16 %v4251
      %v4381 = vunpack.c.l.b16 %v4252
      %v4382 = vunpack.c.l.b16 %v4253
      %v4383 = vunpack.c.l.b16 %v4254
      %v4384 = vunpack.c.l.b16 %v4255
      %v4385 = vunpack.c.l.b16 %v4256
      %v4386 = vunpack.c.l.b16 %v4257
      %v4387 = vunpack.c.l.b16 %v4258
      %v4388 = vunpack.c.l.b16 %v4259
      %v4389 = vunpack.c.l.b16 %v4260
      %v4390 = vunpack.c.l.b16 %v4261
      %v4391 = vunpack.c.l.b16 %v4262
      %v4392 = vunpack.c.l.b16 %v4263
      %v4393 = vunpack.c.l.b16 %v4264
      %v4394 = vunpack.c.l.b16 %v4265
      %v4395 = vunpack.c.l.b16 %v4266
      %v4396 = vunpack.c.l.b16 %v4267
      %v4397 = vunpack.c.l.b16 %v4268
      %v4398 = vunpack.c.l.b16 %v4269
      %v4399 = vunpack.c.l.b16 %v4270
      %v4400 = vunpack.c.l.b16 %v4271
      %v4401 = vunpack.c.l.b16 %v4272
      %v4402 = vunpack.c.l.b16 %v4273
      %v4403 = vunpack.c.l.b16 %v4274
      %v4404 = vpack.c.b16 %v4341, %v4340
      %v4405 = vpack.c.b16 %v4343, %v4342
      %v4406 = vpack.c.b16 %v4345, %v4344
      %v4407 = vpack.c.b16 %v4347, %v4346
      %v4408 = vpack.c.b16 %v4349, %v4348
      %v4409 = vpack.c.b16 %v4351, %v4350
      %v4410 = vpack.c.b16 %v4353, %v4352
      %v4411 = vpack.c.b16 %v4355, %v4354
      %v4412 = vpack.c.b16 %v4357, %v4356
      %v4413 = vpack.c.b16 %v4359, %v4358
      %v4414 = vpack.c.b16 %v4361, %v4360
      %v4415 = vpack.c.b16 %v4363, %v4362
      %v4416 = vpack.c.b16 %v4365, %v4364
      %v4417 = vpack.c.b16 %v4367, %v4366
      %v4418 = vpack.c.b16 %v4369, %v4368
      %v4419 = vpack.c.b16 %v4371, %v4370
      %v4420 = vpack.c.b16 %v4373, %v4372
      %v4421 = vpack.c.b16 %v4375, %v4374
      %v4422 = vpack.c.b16 %v4377, %v4376
      %v4423 = vpack.c.b16 %v4379, %v4378
      %v4424 = vpack.c.b16 %v4381, %v4380
      %v4425 = vpack.c.b16 %v4383, %v4382
      %v4426 = vpack.c.b16 %v4385, %v4384
      %v4427 = vpack.c.b16 %v4387, %v4386
      %v4428 = vpack.c.b16 %v4389, %v4388
      %v4429 = vpack.c.b16 %v4391, %v4390
      %v4430 = vpack.c.b16 %v4393, %v4392
      %v4431 = vpack.c.b16 %v4395, %v4394
      %v4432 = vpack.c.b16 %v4397, %v4396
      %v4433 = vpack.c.b16 %v4399, %v4398
      %v4434 = vpack.c.b16 %v4401, %v4400
      %v4435 = vpack.c.b16 %v4403, %v4402
      %4468 = vmatprep.subr.bf16.mxu0 0
      %4469 = vmatpush1.bf16.msra.mxu0 %v4404
      %4470 = vmatprep.subr.bf16.mxu0 0
      %4471 = vmatpush1.bf16.msra.mxu0 %v4405
      %4472 = vmatprep.subr.bf16.mxu0 0
      %4473 = vmatpush1.bf16.msra.mxu0 %v4406
      %4474 = vmatprep.subr.bf16.mxu0 0
      %4475 = vmatpush1.bf16.msra.mxu0 %v4407
      %4476 = vmatprep.subr.bf16.mxu0 0
      %4477 = vmatpush1.bf16.msra.mxu0 %v4408
      %4478 = vmatprep.subr.bf16.mxu0 0
      %4479 = vmatpush1.bf16.msra.mxu0 %v4409
      %4480 = vmatprep.subr.bf16.mxu0 0
      %4481 = vmatpush1.bf16.msra.mxu0 %v4410
      %4482 = vmatprep.subr.bf16.mxu0 0
      %4483 = vmatpush1.bf16.msra.mxu0 %v4411
      %4484 = vmatprep.subr.bf16.mxu0 0
      %4485 = vmatpush1.bf16.msra.mxu0 %v4412
      %4486 = vmatprep.subr.bf16.mxu0 0
      %4487 = vmatpush1.bf16.msra.mxu0 %v4413
      %4488 = vmatprep.subr.bf16.mxu0 0
      %4489 = vmatpush1.bf16.msra.mxu0 %v4414
      %4490 = vmatprep.subr.bf16.mxu0 0
      %4491 = vmatpush1.bf16.msra.mxu0 %v4415
      %4492 = vmatprep.subr.bf16.mxu0 0
      %4493 = vmatpush1.bf16.msra.mxu0 %v4416
      %4494 = vmatprep.subr.bf16.mxu0 0
      %4495 = vmatpush1.bf16.msra.mxu0 %v4417
      %4496 = vmatprep.subr.bf16.mxu0 0
      %4497 = vmatpush1.bf16.msra.mxu0 %v4418
      %4498 = vmatprep.subr.bf16.mxu0 0
      %4499 = vmatpush1.bf16.msra.mxu0 %v4419
      %4500 = vmatprep.mubr.bf16.mxu0 %v4135
      %4501 = vmatmul.mubr.bf16.gmra.mrb[0].mxu0 %v4134
      %v4502 = vpop.f32.mrb[0].mxu0
      %v4503 = vadd.f32 %v4275, %v4502
      %v4504 = vpop.f32.mrb[0].mxu0
      %v4505 = vpop.f32.mrb[0].mxu0
      %v4506 = vadd.f32 %v4275, %v4505
      %v4507 = vpop.f32.mrb[0].mxu0
      %4508 = vmatprep.mubr.bf16.mxu0 %v4139
      %4509 = vmatmul.mubr.bf16.gmra.mrb[0].mxu0 %v4138
      %v4510 = vpop.f32.mrb[0].mxu0
      %v4511 = vadd.f32 %v4275, %v4510
      %v4512 = vpop.f32.mrb[0].mxu0
      %v4513 = vpop.f32.mrb[0].mxu0
      %v4514 = vadd.f32 %v4275, %v4513
      %v4515 = vpop.f32.mrb[0].mxu0
      %4516 = vmatprep.mubr.bf16.mxu0 %v4143
      %4517 = vmatmul.mubr.bf16.gmra.mrb[0].mxu0 %v4142
      %v4518 = vpop.f32.mrb[0].mxu0
      %v4519 = vadd.f32 %v4275, %v4518
      %v4520 = vpop.f32.mrb[0].mxu0
      %v4521 = vpop.f32.mrb[0].mxu0
      %v4522 = vadd.f32 %v4275, %v4521
      %v4523 = vpop.f32.mrb[0].mxu0
      %4524 = vmatprep.mubr.bf16.mxu0 %v4147
      %4525 = vmatmul.mubr.bf16.gmra.mrb[0].mxu0 %v4146
      %v4526 = vpop.f32.mrb[0].mxu0
      %v4527 = vadd.f32 %v4275, %v4526
      %v4528 = vpop.f32.mrb[0].mxu0
      %v4529 = vpop.f32.mrb[0].mxu0
      %v4530 = vadd.f32 %v4275, %v4529
      %v4531 = vpop.f32.mrb[0].mxu0
      %4532 = vmatprep.mubr.bf16.mxu0 %v4151
      %4533 = vmatmul.mubr.bf16.gmra.mrb[0].mxu0 %v4150
      %v4534 = vpop.f32.mrb[0].mxu0
      %v4535 = vadd.f32 %v4275, %v4534
      %v4536 = vpop.f32.mrb[0].mxu0
      %v4537 = vpop.f32.mrb[0].mxu0
      %v4538 = vadd.f32 %v4275, %v4537
      %v4539 = vpop.f32.mrb[0].mxu0
      %4540 = vmatprep.mubr.bf16.mxu0 %v4155
      %4541 = vmatmul.mubr.bf16.gmra.mrb[0].mxu0 %v4154
      %v4542 = vpop.f32.mrb[0].mxu0
      %v4543 = vadd.f32 %v4275, %v4542
      %v4544 = vpop.f32.mrb[0].mxu0
      %v4545 = vpop.f32.mrb[0].mxu0
      %v4546 = vadd.f32 %v4275, %v4545
      %v4547 = vpop.f32.mrb[0].mxu0
      %4548 = vmatprep.mubr.bf16.mxu0 %v4159
      %4549 = vmatmul.mubr.bf16.gmra.mrb[0].mxu0 %v4158
      %v4550 = vpop.f32.mrb[0].mxu0
      %v4551 = vadd.f32 %v4275, %v4550
      %v4552 = vpop.f32.mrb[0].mxu0
      %v4553 = vpop.f32.mrb[0].mxu0
      %v4554 = vadd.f32 %v4275, %v4553
      %v4555 = vpop.f32.mrb[0].mxu0
      %4556 = vmatprep.mubr.bf16.mxu0 %v4163
      %4557 = vmatmul.mubr.bf16.gmra.mrb[0].mxu0 %v4162
      %v4558 = vpop.f32.mrb[0].mxu0
      %v4559 = vadd.f32 %v4275, %v4558
      %v4560 = vpop.f32.mrb[0].mxu0
      %v4561 = vpop.f32.mrb[0].mxu0
      %v4562 = vadd.f32 %v4275, %v4561
      %v4563 = vpop.f32.mrb[0].mxu0
      %4564 = vmatprep.mubr.bf16.mxu0 %v4167
      %4565 = vmatmul.mubr.bf16.gmra.mrb[0].mxu0 %v4166
      %v4566 = vpop.f32.mrb[0].mxu0
      %v4567 = vadd.f32 %v4275, %v4566
      %v4568 = vpop.f32.mrb[0].mxu0
      %v4569 = vpop.f32.mrb[0].mxu0
      %v4570 = vadd.f32 %v4275, %v4569
      %v4571 = vpop.f32.mrb[0].mxu0
      %4572 = vmatprep.mubr.bf16.mxu0 %v4171
      %4573 = vmatmul.mubr.bf16.gmra.mrb[0].mxu0 %v4170
      %v4574 = vpop.f32.mrb[0].mxu0
      %v4575 = vadd.f32 %v4275, %v4574
      %v4576 = vpop.f32.mrb[0].mxu0
      %v4577 = vpop.f32.mrb[0].mxu0
      %v4578 = vadd.f32 %v4275, %v4577
      %v4579 = vpop.f32.mrb[0].mxu0
      %4580 = vmatprep.mubr.bf16.mxu0 %v4175
      %4581 = vmatmul.mubr.bf16.gmra.mrb[0].mxu0 %v4174
      %v4582 = vpop.f32.mrb[0].mxu0
      %v4583 = vadd.f32 %v4275, %v4582
      %v4584 = vpop.f32.mrb[0].mxu0
      %v4585 = vpop.f32.mrb[0].mxu0
      %v4586 = vadd.f32 %v4275, %v4585
      %v4587 = vpop.f32.mrb[0].mxu0
      %4588 = vmatprep.mubr.bf16.mxu0 %v4179
      %4589 = vmatmul.mubr.bf16.gmra.mrb[0].mxu0 %v4178
      %v4590 = vpop.f32.mrb[0].mxu0
      %v4591 = vadd.f32 %v4275, %v4590
      %v4592 = vpop.f32.mrb[0].mxu0
      %v4593 = vpop.f32.mrb[0].mxu0
      %v4594 = vadd.f32 %v4275, %v4593
      %v4595 = vpop.f32.mrb[0].mxu0
      %4596 = vmatprep.mubr.bf16.mxu0 %v4183
      %4597 = vmatmul.mubr.bf16.gmra.mrb[0].mxu0 %v4182
      %v4598 = vpop.f32.mrb[0].mxu0
      %v4599 = vadd.f32 %v4275, %v4598
      %v4600 = vpop.f32.mrb[0].mxu0
      %v4601 = vpop.f32.mrb[0].mxu0
      %v4602 = vadd.f32 %v4275, %v4601
      %v4603 = vpop.f32.mrb[0].mxu0
      %4604 = vmatprep.mubr.bf16.mxu0 %v4187
      %4605 = vmatmul.mubr.bf16.gmra.mrb[0].mxu0 %v4186
      %v4606 = vpop.f32.mrb[0].mxu0
      %v4607 = vadd.f32 %v4275, %v4606
      %v4608 = vpop.f32.mrb[0].mxu0
      %v4609 = vpop.f32.mrb[0].mxu0
      %v4610 = vadd.f32 %v4275, %v4609
      %v4611 = vpop.f32.mrb[0].mxu0
      %4612 = vmatprep.mubr.bf16.mxu0 %v4191
      %4613 = vmatmul.mubr.bf16.gmra.mrb[0].mxu0 %v4190
      %v4614 = vpop.f32.mrb[0].mxu0
      %v4615 = vadd.f32 %v4275, %v4614
      %v4616 = vpop.f32.mrb[0].mxu0
      %v4617 = vpop.f32.mrb[0].mxu0
      %v4618 = vadd.f32 %v4275, %v4617
      %v4619 = vpop.f32.mrb[0].mxu0
      %4620 = vmatprep.mubr.bf16.mxu0 %v4195
      %4621 = vmatmul.mubr.bf16.gmra.mrb[0].mxu0 %v4194
      %v4622 = vpop.f32.mrb[0].mxu0
      %v4623 = vadd.f32 %v4275, %v4622
      %v4624 = vpop.f32.mrb[0].mxu0
      %v4625 = vpop.f32.mrb[0].mxu0
      %v4626 = vadd.f32 %v4275, %v4625
      %v4627 = vpop.f32.mrb[0].mxu0
      %4628 = vmatprep.mubr.bf16.mxu0 %v4199
      %4629 = vmatmul.mubr.bf16.gmra.mrb[0].mxu0 %v4198
      %v4630 = vpop.f32.mrb[0].mxu0
      %v4631 = vadd.f32 %v4275, %v4630
      %v4632 = vpop.f32.mrb[0].mxu0
      %v4633 = vpop.f32.mrb[0].mxu0
      %v4634 = vadd.f32 %v4275, %v4633
      %v4635 = vpop.f32.mrb[0].mxu0
      %4636 = vmatprep.mubr.bf16.mxu0 %v4203
      %4637 = vmatmul.mubr.bf16.gmra.mrb[0].mxu0 %v4202
      %v4638 = vpop.f32.mrb[0].mxu0
      %v4639 = vadd.f32 %v4275, %v4638
      %v4640 = vpop.f32.mrb[0].mxu0
      %v4641 = vpop.f32.mrb[0].mxu0
      %v4642 = vadd.f32 %v4275, %v4641
      %v4643 = vpop.f32.mrb[0].mxu0
      %4644 = vmatprep.mubr.bf16.mxu0 %v4207
      %4645 = vmatmul.mubr.bf16.gmra.mrb[0].mxu0 %v4206
      %v4646 = vpop.f32.mrb[0].mxu0
      %v4647 = vadd.f32 %v4275, %v4646
      %v4648 = vpop.f32.mrb[0].mxu0
      %v4649 = vpop.f32.mrb[0].mxu0
      %v4650 = vadd.f32 %v4275, %v4649
      %v4651 = vpop.f32.mrb[0].mxu0
      %4652 = vdwg.mxu0
      %4653 = vmatprep.subr.bf16.mxu0 0
      %4654 = vmatpush1.bf16.msra.mxu0 %v4420
      %4655 = vmatprep.subr.bf16.mxu0 0
      %4656 = vmatpush1.bf16.msra.mxu0 %v4421
      %4657 = vmatprep.subr.bf16.mxu0 0
      %4658 = vmatpush1.bf16.msra.mxu0 %v4422
      %4659 = vmatprep.subr.bf16.mxu0 0
      %4660 = vmatpush1.bf16.msra.mxu0 %v4423
      %4661 = vmatprep.subr.bf16.mxu0 0
      %4662 = vmatpush1.bf16.msra.mxu0 %v4424
      %4663 = vmatprep.subr.bf16.mxu0 0
      %4664 = vmatpush1.bf16.msra.mxu0 %v4425
      %4665 = vmatprep.subr.bf16.mxu0 0
      %4666 = vmatpush1.bf16.msra.mxu0 %v4426
      %4667 = vmatprep.subr.bf16.mxu0 0
      %4668 = vmatpush1.bf16.msra.mxu0 %v4427
      %4669 = vmatprep.subr.bf16.mxu0 0
      %4670 = vmatpush1.bf16.msra.mxu0 %v4428
      %4671 = vmatprep.subr.bf16.mxu0 0
      %4672 = vmatpush1.bf16.msra.mxu0 %v4429
      %4673 = vmatprep.subr.bf16.mxu0 0
      %4674 = vmatpush1.bf16.msra.mxu0 %v4430
      %4675 = vmatprep.subr.bf16.mxu0 0
      %4676 = vmatpush1.bf16.msra.mxu0 %v4431
      %4677 = vmatprep.subr.bf16.mxu0 0
      %4678 = vmatpush1.bf16.msra.mxu0 %v4432
      %4679 = vmatprep.subr.bf16.mxu0 0
      %4680 = vmatpush1.bf16.msra.mxu0 %v4433
      %4681 = vmatprep.subr.bf16.mxu0 0
      %4682 = vmatpush1.bf16.msra.mxu0 %v4434
      %4683 = vmatprep.subr.bf16.mxu0 0
      %4684 = vmatpush1.bf16.msra.mxu0 %v4435
      %4685 = vmatprep.mubr.bf16.mxu0 %v4137
      %4686 = vmatmul.mubr.bf16.gmra.mrb[0].mxu0 %v4136
      %v4687 = vpop.f32.mrb[0].mxu0
      %v4688 = vadd.f32 %v4503, %v4687
      %v4689 = vpop.f32.mrb[0].mxu0
      %v4690 = vpop.f32.mrb[0].mxu0
      %v4691 = vadd.f32 %v4506, %v4690
      %v4692 = vpop.f32.mrb[0].mxu0
      %4693 = vmatprep.mubr.bf16.mxu0 %v4141
      %4694 = vmatmul.mubr.bf16.gmra.mrb[0].mxu0 %v4140
      %v4695 = vpop.f32.mrb[0].mxu0
      %v4696 = vadd.f32 %v4511, %v4695
      %v4697 = vpop.f32.mrb[0].mxu0
      %v4698 = vpop.f32.mrb[0].mxu0
      %v4699 = vadd.f32 %v4514, %v4698
      %v4700 = vpop.f32.mrb[0].mxu0
      %4701 = vmatprep.mubr.bf16.mxu0 %v4145
      %4702 = vmatmul.mubr.bf16.gmra.mrb[0].mxu0 %v4144
      %v4703 = vpop.f32.mrb[0].mxu0
      %v4704 = vadd.f32 %v4519, %v4703
      %v4705 = vpop.f32.mrb[0].mxu0
      %v4706 = vpop.f32.mrb[0].mxu0
      %v4707 = vadd.f32 %v4522, %v4706
      %v4708 = vpop.f32.mrb[0].mxu0
      %4709 = vmatprep.mubr.bf16.mxu0 %v4149
      %4710 = vmatmul.mubr.bf16.gmra.mrb[0].mxu0 %v4148
      %v4711 = vpop.f32.mrb[0].mxu0
      %v4712 = vadd.f32 %v4527, %v4711
      %v4713 = vpop.f32.mrb[0].mxu0
      %v4714 = vpop.f32.mrb[0].mxu0
      %v4715 = vadd.f32 %v4530, %v4714
      %v4716 = vpop.f32.mrb[0].mxu0
      %4717 = vmatprep.mubr.bf16.mxu0 %v4153
      %4718 = vmatmul.mubr.bf16.gmra.mrb[0].mxu0 %v4152
      %v4719 = vpop.f32.mrb[0].mxu0
      %v4720 = vadd.f32 %v4535, %v4719
      %v4721 = vpop.f32.mrb[0].mxu0
      %v4722 = vpop.f32.mrb[0].mxu0
      %v4723 = vadd.f32 %v4538, %v4722
      %v4724 = vpop.f32.mrb[0].mxu0
      %4725 = vmatprep.mubr.bf16.mxu0 %v4157
      %4726 = vmatmul.mubr.bf16.gmra.mrb[0].mxu0 %v4156
      %v4727 = vpop.f32.mrb[0].mxu0
      %v4728 = vadd.f32 %v4543, %v4727
      %v4729 = vpop.f32.mrb[0].mxu0
      %v4730 = vpop.f32.mrb[0].mxu0
      %v4731 = vadd.f32 %v4546, %v4730
      %v4732 = vpop.f32.mrb[0].mxu0
      %4733 = vmatprep.mubr.bf16.mxu0 %v4161
      %4734 = vmatmul.mubr.bf16.gmra.mrb[0].mxu0 %v4160
      %v4735 = vpop.f32.mrb[0].mxu0
      %v4736 = vadd.f32 %v4551, %v4735
      %v4737 = vpop.f32.mrb[0].mxu0
      %v4738 = vpop.f32.mrb[0].mxu0
      %v4739 = vadd.f32 %v4554, %v4738
      %v4740 = vpop.f32.mrb[0].mxu0
      %4741 = vmatprep.mubr.bf16.mxu0 %v4165
      %4742 = vmatmul.mubr.bf16.gmra.mrb[0].mxu0 %v4164
      %v4743 = vpop.f32.mrb[0].mxu0
      %v4744 = vadd.f32 %v4559, %v4743
      %v4745 = vpop.f32.mrb[0].mxu0
      %v4746 = vpop.f32.mrb[0].mxu0
      %v4747 = vadd.f32 %v4562, %v4746
      %v4748 = vpop.f32.mrb[0].mxu0
      %4749 = vmatprep.mubr.bf16.mxu0 %v4169
      %4750 = vmatmul.mubr.bf16.gmra.mrb[0].mxu0 %v4168
      %v4751 = vpop.f32.mrb[0].mxu0
      %v4752 = vadd.f32 %v4567, %v4751
      %v4753 = vpop.f32.mrb[0].mxu0
      %v4754 = vpop.f32.mrb[0].mxu0
      %v4755 = vadd.f32 %v4570, %v4754
      %v4756 = vpop.f32.mrb[0].mxu0
      %4757 = vmatprep.mubr.bf16.mxu0 %v4173
      %4758 = vmatmul.mubr.bf16.gmra.mrb[0].mxu0 %v4172
      %v4759 = vpop.f32.mrb[0].mxu0
      %v4760 = vadd.f32 %v4575, %v4759
      %v4761 = vpop.f32.mrb[0].mxu0
      %v4762 = vpop.f32.mrb[0].mxu0
      %v4763 = vadd.f32 %v4578, %v4762
      %v4764 = vpop.f32.mrb[0].mxu0
      %4765 = vmatprep.mubr.bf16.mxu0 %v4177
      %4766 = vmatmul.mubr.bf16.gmra.mrb[0].mxu0 %v4176
      %v4767 = vpop.f32.mrb[0].mxu0
      %v4768 = vadd.f32 %v4583, %v4767
      %v4769 = vpop.f32.mrb[0].mxu0
      %v4770 = vpop.f32.mrb[0].mxu0
      %v4771 = vadd.f32 %v4586, %v4770
      %v4772 = vpop.f32.mrb[0].mxu0
      %4773 = vmatprep.mubr.bf16.mxu0 %v4181
      %4774 = vmatmul.mubr.bf16.gmra.mrb[0].mxu0 %v4180
      %v4775 = vpop.f32.mrb[0].mxu0
      %v4776 = vadd.f32 %v4591, %v4775
      %v4777 = vpop.f32.mrb[0].mxu0
      %v4778 = vpop.f32.mrb[0].mxu0
      %v4779 = vadd.f32 %v4594, %v4778
      %v4780 = vpop.f32.mrb[0].mxu0
      %4781 = vmatprep.mubr.bf16.mxu0 %v4185
      %4782 = vmatmul.mubr.bf16.gmra.mrb[0].mxu0 %v4184
      %v4783 = vpop.f32.mrb[0].mxu0
      %v4784 = vadd.f32 %v4599, %v4783
      %v4785 = vpop.f32.mrb[0].mxu0
      %v4786 = vpop.f32.mrb[0].mxu0
      %v4787 = vadd.f32 %v4602, %v4786
      %v4788 = vpop.f32.mrb[0].mxu0
      %4789 = vmatprep.mubr.bf16.mxu0 %v4189
      %4790 = vmatmul.mubr.bf16.gmra.mrb[0].mxu0 %v4188
      %v4791 = vpop.f32.mrb[0].mxu0
      %v4792 = vadd.f32 %v4607, %v4791
      %v4793 = vpop.f32.mrb[0].mxu0
      %v4794 = vpop.f32.mrb[0].mxu0
      %v4795 = vadd.f32 %v4610, %v4794
      %v4796 = vpop.f32.mrb[0].mxu0
      %4797 = vmatprep.mubr.bf16.mxu0 %v4193
      %4798 = vmatmul.mubr.bf16.gmra.mrb[0].mxu0 %v4192
      %v4799 = vpop.f32.mrb[0].mxu0
      %v4800 = vadd.f32 %v4615, %v4799
      %v4801 = vpop.f32.mrb[0].mxu0
      %v4802 = vpop.f32.mrb[0].mxu0
      %v4803 = vadd.f32 %v4618, %v4802
      %v4804 = vpop.f32.mrb[0].mxu0
      %4805 = vmatprep.mubr.bf16.mxu0 %v4197
      %4806 = vmatmul.mubr.bf16.gmra.mrb[0].mxu0 %v4196
      %v4807 = vpop.f32.mrb[0].mxu0
      %v4808 = vadd.f32 %v4623, %v4807
      %v4809 = vpop.f32.mrb[0].mxu0
      %v4810 = vpop.f32.mrb[0].mxu0
      %v4811 = vadd.f32 %v4626, %v4810
      %v4812 = vpop.f32.mrb[0].mxu0
      %4813 = vmatprep.mubr.bf16.mxu0 %v4201
      %4814 = vmatmul.mubr.bf16.gmra.mrb[0].mxu0 %v4200
      %v4815 = vpop.f32.mrb[0].mxu0
      %v4816 = vadd.f32 %v4631, %v4815
      %v4817 = vpop.f32.mrb[0].mxu0
      %v4818 = vpop.f32.mrb[0].mxu0
      %v4819 = vadd.f32 %v4634, %v4818
      %v4820 = vpop.f32.mrb[0].mxu0
      %4821 = vmatprep.mubr.bf16.mxu0 %v4205
      %4822 = vmatmul.mubr.bf16.gmra.mrb[0].mxu0 %v4204
      %v4823 = vpop.f32.mrb[0].mxu0
      %v4824 = vadd.f32 %v4639, %v4823
      %v4825 = vpop.f32.mrb[0].mxu0
      %v4826 = vpop.f32.mrb[0].mxu0
      %v4827 = vadd.f32 %v4642, %v4826
      %v4828 = vpop.f32.mrb[0].mxu0
      %4829 = vmatprep.mubr.bf16.mxu0 %v4209
      %4830 = vmatmul.mubr.bf16.gmra.mrb[0].mxu0 %v4208
      %v4831 = vpop.f32.mrb[0].mxu0
      %v4832 = vadd.f32 %v4647, %v4831
      %v4833 = vpop.f32.mrb[0].mxu0
      %v4834 = vpop.f32.mrb[0].mxu0
      %v4835 = vadd.f32 %v4650, %v4834
      %v4836 = vpop.f32.mrb[0].mxu0
      %4837 = vdwg.mxu0
      %v4838 = vmax.f32 %v4688, 0.0
      %v4839 = vmax.f32 %v4691, 0.0
      %v4840 = vmax.f32 %v4696, 0.0
      %v4841 = vmax.f32 %v4699, 0.0
      %v4842 = vmax.f32 %v4704, 0.0
      %v4843 = vmax.f32 %v4707, 0.0
      %v4844 = vmax.f32 %v4712, 0.0
      %v4845 = vmax.f32 %v4715, 0.0
      %v4846 = vmax.f32 %v4720, 0.0
      %v4847 = vmax.f32 %v4723, 0.0
      %v4848 = vmax.f32 %v4728, 0.0
      %v4849 = vmax.f32 %v4731, 0.0
      %v4850 = vmax.f32 %v4736, 0.0
      %v4851 = vmax.f32 %v4739, 0.0
      %v4852 = vmax.f32 %v4744, 0.0
      %v4853 = vmax.f32 %v4747, 0.0
      %v4854 = vmax.f32 %v4752, 0.0
      %v4855 = vmax.f32 %v4755, 0.0
      %v4856 = vmax.f32 %v4760, 0.0
      %v4857 = vmax.f32 %v4763, 0.0
      %v4858 = vmax.f32 %v4768, 0.0
      %v4859 = vmax.f32 %v4771, 0.0
      %v4860 = vmax.f32 %v4776, 0.0
      %v4861 = vmax.f32 %v4779, 0.0
      %v4862 = vmax.f32 %v4784, 0.0
      %v4863 = vmax.f32 %v4787, 0.0
      %v4864 = vmax.f32 %v4792, 0.0
      %v4865 = vmax.f32 %v4795, 0.0
      %v4866 = vmax.f32 %v4800, 0.0
      %v4867 = vmax.f32 %v4803, 0.0
      %v4868 = vmax.f32 %v4808, 0.0
      %v4869 = vmax.f32 %v4811, 0.0
      %v4870 = vmax.f32 %v4816, 0.0
      %v4871 = vmax.f32 %v4819, 0.0
      %v4872 = vmax.f32 %v4824, 0.0
      %v4873 = vmax.f32 %v4827, 0.0
      %v4874 = vmax.f32 %v4832, 0.0
      %v4875 = vmax.f32 %v4835, 0.0
      %v4876 = vpack.c.bf16 %v4839, %v4838
      %v4877 = vpack.c.bf16 %v4841, %v4840
      %v4878 = vpack.c.bf16 %v4843, %v4842
      %v4879 = vpack.c.bf16 %v4845, %v4844
      %v4880 = vpack.c.bf16 %v4847, %v4846
      %v4881 = vpack.c.bf16 %v4849, %v4848
      %v4882 = vpack.c.bf16 %v4851, %v4850
      %v4883 = vpack.c.bf16 %v4853, %v4852
      %v4884 = vpack.c.bf16 %v4855, %v4854
      %v4885 = vpack.c.bf16 %v4857, %v4856
      %v4886 = vpack.c.bf16 %v4859, %v4858
      %v4887 = vpack.c.bf16 %v4861, %v4860
      %v4888 = vpack.c.bf16 %v4863, %v4862
      %v4889 = vpack.c.bf16 %v4865, %v4864
      %v4890 = vpack.c.bf16 %v4867, %v4866
      %v4891 = vpack.c.bf16 %v4869, %v4868
      %v4892 = vpack.c.bf16 %v4871, %v4870
      %v4893 = vpack.c.bf16 %v4873, %v4872
      %v4894 = vpack.c.bf16 %v4875, %v4874
      %s4895 = scalar_lea.vmem %s3, 512
      %v4896 = vld [vmem:[%s4895] sm:$0xff]
      %v4897 = vld [vmem:[%s4895 + $0x8] sm:$0xff]
      %v4898 = vld [vmem:[%s4895 + $0x10] sm:$0xff]
      %v4899 = vld [vmem:[%s4895 + $0x18] sm:$0xff]
      %v4900 = vld [vmem:[%s4895 + $0x20] sm:$0xff]
      %v4901 = vld [vmem:[%s4895 + $0x28] sm:$0xff]
      %v4902 = vld [vmem:[%s4895 + $0x30] sm:$0xff]
      %v4903 = vld [vmem:[%s4895 + $0x38] sm:$0xff]
      %v4904 = vld [vmem:[%s4895 + $0x40] sm:$0xff]
      %v4905 = vld [vmem:[%s4895 + $0x48] sm:$0xff]
      %v4906 = vld [vmem:[%s4895 + $0x50] sm:$0xff]
      %v4907 = vld [vmem:[%s4895 + $0x58] sm:$0xff]
      %v4908 = vld [vmem:[%s4895 + $0x60] sm:$0xff]
      %v4909 = vld [vmem:[%s4895 + $0x68] sm:$0xff]
      %v4910 = vld [vmem:[%s4895 + $0x70] sm:$0xff]
      %v4911 = vld [vmem:[%s4895 + $0x78] sm:$0xff]
      %v4912 = vld [vmem:[%s4895 + $0x80] sm:$0xff]
      %v4913 = vld [vmem:[%s4895 + $0x88] sm:$0xff]
      %v4914 = vld [vmem:[%s4895 + $0x90] sm:$0xff]
      %v4915 = vld [vmem:[%s4895 + $0x98] sm:$0xff]
      %v4916 = vld [vmem:[%s4895 + $0xa0] sm:$0xff]
      %v4917 = vld [vmem:[%s4895 + $0xa8] sm:$0xff]
      %v4918 = vld [vmem:[%s4895 + $0xb0] sm:$0xff]
      %v4919 = vld [vmem:[%s4895 + $0xb8] sm:$0xff]
      %v4920 = vld [vmem:[%s4895 + $0xc0] sm:$0xff]
      %v4921 = vld [vmem:[%s4895 + $0xc8] sm:$0xff]
      %v4922 = vld [vmem:[%s4895 + $0xd0] sm:$0xff]
      %v4923 = vld [vmem:[%s4895 + $0xd8] sm:$0xff]
      %v4924 = vld [vmem:[%s4895 + $0xe0] sm:$0xff]
      %v4925 = vld [vmem:[%s4895 + $0xe8] sm:$0xff]
      %v4926 = vld [vmem:[%s4895 + $0xf0] sm:$0xff]
      %v4927 = vld [vmem:[%s4895 + $0xf8] sm:$0xff]
      %s4928 = scalar_lea.vmem %s4, 6
      %v4929 = vld [vmem:[%s4928] ss:$8 sm:$0xf]
      %v4931 = vlaneseq
      %v4932 = vshrl.u32 %v4931, 7
      %v4933 = vsub.s32 0, %v4932
      %v4934 = vrot.slane %v4929, %v4933
      %v4935 = vlaneseq
      %v4936 = vshrl.u32 %v4935, 7
      %v4937 = vsub.s32 1, %v4936
      %v4938 = vrot.slane %v4929, %v4937
      %v4939 = vlaneseq
      %v4940 = vshrl.u32 %v4939, 7
      %v4941 = vsub.s32 2, %v4940
      %v4942 = vrot.slane %v4929, %v4941
      %v4943 = vlaneseq
      %v4944 = vshrl.u32 %v4943, 7
      %v4945 = vsub.s32 3, %v4944
      %v4946 = vrot.slane %v4929, %v4945
      %v4983 = vunpack.c.l.b16 %v4896
      %v4984 = vunpack.c.h.b16 %v4896
      %v4985 = vunpack.c.l.b16 %v4897
      %v4986 = vunpack.c.h.b16 %v4897
      %v4987 = vunpack.c.l.b16 %v4898
      %v4988 = vunpack.c.h.b16 %v4898
      %v4989 = vunpack.c.l.b16 %v4899
      %v4990 = vunpack.c.h.b16 %v4899
      %v4991 = vunpack.c.l.b16 %v4900
      %v4992 = vunpack.c.h.b16 %v4900
      %v4993 = vunpack.c.l.b16 %v4901
      %v4994 = vunpack.c.h.b16 %v4901
      %v4995 = vunpack.c.l.b16 %v4902
      %v4996 = vunpack.c.h.b16 %v4902
      %v4997 = vunpack.c.l.b16 %v4903
      %v4998 = vunpack.c.h.b16 %v4903
      %v4999 = vunpack.c.l.b16 %v4904
      %v5000 = vunpack.c.h.b16 %v4904
      %v5001 = vunpack.c.l.b16 %v4905
      %v5002 = vunpack.c.h.b16 %v4905
      %v5003 = vunpack.c.l.b16 %v4906
      %v5004 = vunpack.c.h.b16 %v4906
      %v5005 = vunpack.c.l.b16 %v4907
      %v5006 = vunpack.c.h.b16 %v4907
      %v5007 = vunpack.c.l.b16 %v4908
      %v5008 = vunpack.c.h.b16 %v4908
      %v5009 = vunpack.c.l.b16 %v4909
      %v5010 = vunpack.c.h.b16 %v4909
      %v5011 = vunpack.c.l.b16 %v4910
      %v5012 = vunpack.c.h.b16 %v4910
      %v5013 = vunpack.c.l.b16 %v4911
      %v5014 = vunpack.c.h.b16 %v4911
      %v5015 = vunpack.c.l.b16 %v4912
      %v5016 = vunpack.c.h.b16 %v4912
      %v5017 = vunpack.c.l.b16 %v4913
      %v5018 = vunpack.c.h.b16 %v4913
      %v5019 = vunpack.c.l.b16 %v4914
      %v5020 = vunpack.c.h.b16 %v4914
      %v5021 = vunpack.c.l.b16 %v4915
      %v5022 = vunpack.c.h.b16 %v4915
      %v5023 = vunpack.c.l.b16 %v4916
      %v5024 = vunpack.c.h.b16 %v4916
      %v5025 = vunpack.c.l.b16 %v4917
      %v5026 = vunpack.c.h.b16 %v4917
      %v5027 = vunpack.c.l.b16 %v4918
      %v5028 = vunpack.c.h.b16 %v4918
      %v5029 = vunpack.c.l.b16 %v4919
      %v5030 = vunpack.c.h.b16 %v4919
      %v5031 = vunpack.c.l.b16 %v4920
      %v5032 = vunpack.c.h.b16 %v4920
      %v5033 = vunpack.c.l.b16 %v4921
      %v5034 = vunpack.c.h.b16 %v4921
      %v5035 = vunpack.c.l.b16 %v4922
      %v5036 = vunpack.c.h.b16 %v4922
      %v5037 = vunpack.c.l.b16 %v4923
      %v5038 = vunpack.c.h.b16 %v4923
      %v5039 = vunpack.c.l.b16 %v4924
      %v5040 = vunpack.c.h.b16 %v4924
      %v5041 = vunpack.c.l.b16 %v4925
      %v5042 = vunpack.c.h.b16 %v4925
      %v5043 = vunpack.c.l.b16 %v4926
      %v5044 = vunpack.c.h.b16 %v4926
      %v5045 = vunpack.c.l.b16 %v4927
      %v5046 = vunpack.c.h.b16 %v4927
      %v5047 = vpack.c.b16 %v4987, %v4983
      %v5048 = vpack.c.b16 %v4988, %v4984
      %v5049 = vpack.c.b16 %v4989, %v4985
      %v5050 = vpack.c.b16 %v4990, %v4986
      %v5051 = vpack.c.b16 %v4995, %v4991
      %v5052 = vpack.c.b16 %v4996, %v4992
      %v5053 = vpack.c.b16 %v4997, %v4993
      %v5054 = vpack.c.b16 %v4998, %v4994
      %v5055 = vpack.c.b16 %v5003, %v4999
      %v5056 = vpack.c.b16 %v5004, %v5000
      %v5057 = vpack.c.b16 %v5005, %v5001
      %v5058 = vpack.c.b16 %v5006, %v5002
      %v5059 = vpack.c.b16 %v5011, %v5007
      %v5060 = vpack.c.b16 %v5012, %v5008
      %v5061 = vpack.c.b16 %v5013, %v5009
      %v5062 = vpack.c.b16 %v5014, %v5010
      %v5063 = vpack.c.b16 %v5019, %v5015
      %v5064 = vpack.c.b16 %v5020, %v5016
      %v5065 = vpack.c.b16 %v5021, %v5017
      %v5066 = vpack.c.b16 %v5022, %v5018
      %v5067 = vpack.c.b16 %v5027, %v5023
      %v5068 = vpack.c.b16 %v5028, %v5024
      %v5069 = vpack.c.b16 %v5029, %v5025
      %v5070 = vpack.c.b16 %v5030, %v5026
      %v5071 = vpack.c.b16 %v5035, %v5031
      %v5072 = vpack.c.b16 %v5036, %v5032
      %v5073 = vpack.c.b16 %v5037, %v5033
      %v5074 = vpack.c.b16 %v5038, %v5034
      %v5075 = vpack.c.b16 %v5043, %v5039
      %v5076 = vpack.c.b16 %v5044, %v5040
      %v5077 = vpack.c.b16 %v5045, %v5041
      %v5078 = vpack.c.b16 %v5046, %v5042
      %5111 = vmatprep.subr.bf16.mxu0 %v5048
      %5112 = vmatpush1.bf16.msra.mxu0 %v5047
      %5113 = vmatprep.subr.bf16.mxu0 %v5052
      %5114 = vmatpush1.bf16.msra.mxu0 %v5051
      %5115 = vmatprep.subr.bf16.mxu0 %v5056
      %5116 = vmatpush1.bf16.msra.mxu0 %v5055
      %5117 = vmatprep.subr.bf16.mxu0 %v5060
      %5118 = vmatpush1.bf16.msra.mxu0 %v5059
      %5119 = vmatprep.subr.bf16.mxu0 %v5064
      %5120 = vmatpush1.bf16.msra.mxu0 %v5063
      %5121 = vmatprep.subr.bf16.mxu0 %v5068
      %5122 = vmatpush1.bf16.msra.mxu0 %v5067
      %5123 = vmatprep.subr.bf16.mxu0 %v5072
      %5124 = vmatpush1.bf16.msra.mxu0 %v5071
      %5125 = vmatprep.subr.bf16.mxu0 %v5076
      %5126 = vmatpush1.bf16.msra.mxu0 %v5075
      %5127 = vmatprep.subr.bf16.mxu0 0
      %5128 = vmatpush1.bf16.msra.mxu0 0
      %5129 = vmatprep.subr.bf16.mxu0 0
      %5130 = vmatpush1.bf16.msra.mxu0 0
      %5131 = vmatprep.subr.bf16.mxu0 0
      %5132 = vmatpush1.bf16.msra.mxu0 0
      %5133 = vmatprep.subr.bf16.mxu0 0
      %5134 = vmatpush1.bf16.msra.mxu0 0
      %5135 = vmatprep.subr.bf16.mxu0 0
      %5136 = vmatpush1.bf16.msra.mxu0 0
      %5137 = vmatprep.subr.bf16.mxu0 0
      %5138 = vmatpush1.bf16.msra.mxu0 0
      %5139 = vmatprep.subr.bf16.mxu0 0
      %5140 = vmatpush1.bf16.msra.mxu0 0
      %5141 = vmatprep.subr.bf16.mxu0 0
      %5142 = vmatpush1.bf16.msra.mxu0 0
      %5143 = vmatprep.mubr.bf16.mxu0 0
      %5144 = vmatmul.mubr.bf16.gmra.mrb[0].mxu0 %v4876
      %v5145 = vpop.f32.mrb[0].mxu0
      %v5146 = vadd.f32 %v4934, %v5145
      %v5147 = vpop.f32.mrb[0].mxu0
      %v5148 = vadd.f32 %v4938, %v5147
      %v5149 = vpop.f32.mrb[0].mxu0
      %v5150 = vadd.f32 %v4934, %v5149
      %v5151 = vpop.f32.mrb[0].mxu0
      %v5152 = vadd.f32 %v4938, %v5151
      %5153 = vmatprep.mubr.bf16.mxu0 0
      %5154 = vmatmul.mubr.bf16.gmra.mrb[0].mxu0 %v4877
      %v5155 = vpop.f32.mrb[0].mxu0
      %v5156 = vadd.f32 %v4934, %v5155
      %v5157 = vpop.f32.mrb[0].mxu0
      %v5158 = vadd.f32 %v4938, %v5157
      %v5159 = vpop.f32.mrb[0].mxu0
      %v5160 = vadd.f32 %v4934, %v5159
      %v5161 = vpop.f32.mrb[0].mxu0
      %v5162 = vadd.f32 %v4938, %v5161
      %5163 = vmatprep.mubr.bf16.mxu0 0
      %5164 = vmatmul.mubr.bf16.gmra.mrb[0].mxu0 %v4878
      %v5165 = vpop.f32.mrb[0].mxu0
      %v5166 = vadd.f32 %v4934, %v5165
      %v5167 = vpop.f32.mrb[0].mxu0
      %v5168 = vadd.f32 %v4938, %v5167
      %v5169 = vpop.f32.mrb[0].mxu0
      %v5170 = vadd.f32 %v4934, %v5169
      %v5171 = vpop.f32.mrb[0].mxu0
      %v5172 = vadd.f32 %v4938, %v5171
      %5173 = vmatprep.mubr.bf16.mxu0 0
      %5174 = vmatmul.mubr.bf16.gmra.mrb[0].mxu0 %v4879
      %v5175 = vpop.f32.mrb[0].mxu0
      %v5176 = vadd.f32 %v4934, %v5175
      %v5177 = vpop.f32.mrb[0].mxu0
      %v5178 = vadd.f32 %v4938, %v5177
      %v5179 = vpop.f32.mrb[0].mxu0
      %v5180 = vadd.f32 %v4934, %v5179
      %v5181 = vpop.f32.mrb[0].mxu0
      %v5182 = vadd.f32 %v4938, %v5181
      %5183 = vmatprep.mubr.bf16.mxu0 0
      %5184 = vmatmul.mubr.bf16.gmra.mrb[0].mxu0 %v4880
      %v5185 = vpop.f32.mrb[0].mxu0
      %v5186 = vadd.f32 %v4934, %v5185
      %v5187 = vpop.f32.mrb[0].mxu0
      %v5188 = vadd.f32 %v4938, %v5187
      %v5189 = vpop.f32.mrb[0].mxu0
      %v5190 = vadd.f32 %v4934, %v5189
      %v5191 = vpop.f32.mrb[0].mxu0
      %v5192 = vadd.f32 %v4938, %v5191
      %5193 = vmatprep.mubr.bf16.mxu0 0
      %5194 = vmatmul.mubr.bf16.gmra.mrb[0].mxu0 %v4881
      %v5195 = vpop.f32.mrb[0].mxu0
      %v5196 = vadd.f32 %v4934, %v5195
      %v5197 = vpop.f32.mrb[0].mxu0
      %v5198 = vadd.f32 %v4938, %v5197
      %v5199 = vpop.f32.mrb[0].mxu0
      %v5200 = vadd.f32 %v4934, %v5199
      %v5201 = vpop.f32.mrb[0].mxu0
      %v5202 = vadd.f32 %v4938, %v5201
      %5203 = vmatprep.mubr.bf16.mxu0 0
      %5204 = vmatmul.mubr.bf16.gmra.mrb[0].mxu0 %v4882
      %v5205 = vpop.f32.mrb[0].mxu0
      %v5206 = vadd.f32 %v4934, %v5205
      %v5207 = vpop.f32.mrb[0].mxu0
      %v5208 = vadd.f32 %v4938, %v5207
      %v5209 = vpop.f32.mrb[0].mxu0
      %v5210 = vadd.f32 %v4934, %v5209
      %v5211 = vpop.f32.mrb[0].mxu0
      %v5212 = vadd.f32 %v4938, %v5211
      %5213 = vmatprep.mubr.bf16.mxu0 0
      %5214 = vmatmul.mubr.bf16.gmra.mrb[0].mxu0 %v4883
      %v5215 = vpop.f32.mrb[0].mxu0
      %v5216 = vadd.f32 %v4934, %v5215
      %v5217 = vpop.f32.mrb[0].mxu0
      %v5218 = vadd.f32 %v4938, %v5217
      %v5219 = vpop.f32.mrb[0].mxu0
      %v5220 = vadd.f32 %v4934, %v5219
      %v5221 = vpop.f32.mrb[0].mxu0
      %v5222 = vadd.f32 %v4938, %v5221
      %5223 = vmatprep.mubr.bf16.mxu0 0
      %5224 = vmatmul.mubr.bf16.gmra.mrb[0].mxu0 %v4884
      %v5225 = vpop.f32.mrb[0].mxu0
      %v5226 = vadd.f32 %v4934, %v5225
      %v5227 = vpop.f32.mrb[0].mxu0
      %v5228 = vadd.f32 %v4938, %v5227
      %v5229 = vpop.f32.mrb[0].mxu0
      %v5230 = vadd.f32 %v4934, %v5229
      %v5231 = vpop.f32.mrb[0].mxu0
      %v5232 = vadd.f32 %v4938, %v5231
      %5233 = vmatprep.mubr.bf16.mxu0 0
      %5234 = vmatmul.mubr.bf16.gmra.mrb[0].mxu0 %v4885
      %v5235 = vpop.f32.mrb[0].mxu0
      %v5236 = vadd.f32 %v4934, %v5235
      %v5237 = vpop.f32.mrb[0].mxu0
      %v5238 = vadd.f32 %v4938, %v5237
      %v5239 = vpop.f32.mrb[0].mxu0
      %v5240 = vadd.f32 %v4934, %v5239
      %v5241 = vpop.f32.mrb[0].mxu0
      %v5242 = vadd.f32 %v4938, %v5241
      %5243 = vmatprep.mubr.bf16.mxu0 0
      %5244 = vmatmul.mubr.bf16.gmra.mrb[0].mxu0 %v4886
      %v5245 = vpop.f32.mrb[0].mxu0
      %v5246 = vadd.f32 %v4934, %v5245
      %v5247 = vpop.f32.mrb[0].mxu0
      %v5248 = vadd.f32 %v4938, %v5247
      %v5249 = vpop.f32.mrb[0].mxu0
      %v5250 = vadd.f32 %v4934, %v5249
      %v5251 = vpop.f32.mrb[0].mxu0
      %v5252 = vadd.f32 %v4938, %v5251
      %5253 = vmatprep.mubr.bf16.mxu0 0
      %5254 = vmatmul.mubr.bf16.gmra.mrb[0].mxu0 %v4887
      %v5255 = vpop.f32.mrb[0].mxu0
      %v5256 = vadd.f32 %v4934, %v5255
      %v5257 = vpop.f32.mrb[0].mxu0
      %v5258 = vadd.f32 %v4938, %v5257
      %v5259 = vpop.f32.mrb[0].mxu0
      %v5260 = vadd.f32 %v4934, %v5259
      %v5261 = vpop.f32.mrb[0].mxu0
      %v5262 = vadd.f32 %v4938, %v5261
      %5263 = vmatprep.mubr.bf16.mxu0 0
      %5264 = vmatmul.mubr.bf16.gmra.mrb[0].mxu0 %v4888
      %v5265 = vpop.f32.mrb[0].mxu0
      %v5266 = vadd.f32 %v4934, %v5265
      %v5267 = vpop.f32.mrb[0].mxu0
      %v5268 = vadd.f32 %v4938, %v5267
      %v5269 = vpop.f32.mrb[0].mxu0
      %v5270 = vadd.f32 %v4934, %v5269
      %v5271 = vpop.f32.mrb[0].mxu0
      %v5272 = vadd.f32 %v4938, %v5271
      %5273 = vmatprep.mubr.bf16.mxu0 0
      %5274 = vmatmul.mubr.bf16.gmra.mrb[0].mxu0 %v4889
      %v5275 = vpop.f32.mrb[0].mxu0
      %v5276 = vadd.f32 %v4934, %v5275
      %v5277 = vpop.f32.mrb[0].mxu0
      %v5278 = vadd.f32 %v4938, %v5277
      %v5279 = vpop.f32.mrb[0].mxu0
      %v5280 = vadd.f32 %v4934, %v5279
      %v5281 = vpop.f32.mrb[0].mxu0
      %v5282 = vadd.f32 %v4938, %v5281
      %5283 = vmatprep.mubr.bf16.mxu0 0
      %5284 = vmatmul.mubr.bf16.gmra.mrb[0].mxu0 %v4890
      %v5285 = vpop.f32.mrb[0].mxu0
      %v5286 = vadd.f32 %v4934, %v5285
      %v5287 = vpop.f32.mrb[0].mxu0
      %v5288 = vadd.f32 %v4938, %v5287
      %v5289 = vpop.f32.mrb[0].mxu0
      %v5290 = vadd.f32 %v4934, %v5289
      %v5291 = vpop.f32.mrb[0].mxu0
      %v5292 = vadd.f32 %v4938, %v5291
      %5293 = vmatprep.mubr.bf16.mxu0 0
      %5294 = vmatmul.mubr.bf16.gmra.mrb[0].mxu0 %v4891
      %v5295 = vpop.f32.mrb[0].mxu0
      %v5296 = vadd.f32 %v4934, %v5295
      %v5297 = vpop.f32.mrb[0].mxu0
      %v5298 = vadd.f32 %v4938, %v5297
      %v5299 = vpop.f32.mrb[0].mxu0
      %v5300 = vadd.f32 %v4934, %v5299
      %v5301 = vpop.f32.mrb[0].mxu0
      %v5302 = vadd.f32 %v4938, %v5301
      %5303 = vmatprep.mubr.bf16.mxu0 0
      %5304 = vmatmul.mubr.bf16.gmra.mrb[0].mxu0 %v4892
      %v5305 = vpop.f32.mrb[0].mxu0
      %v5306 = vadd.f32 %v4934, %v5305
      %v5307 = vpop.f32.mrb[0].mxu0
      %v5308 = vadd.f32 %v4938, %v5307
      %v5309 = vpop.f32.mrb[0].mxu0
      %v5310 = vadd.f32 %v4934, %v5309
      %v5311 = vpop.f32.mrb[0].mxu0
      %v5312 = vadd.f32 %v4938, %v5311
      %5313 = vmatprep.mubr.bf16.mxu0 0
      %5314 = vmatmul.mubr.bf16.gmra.mrb[0].mxu0 %v4893
      %v5315 = vpop.f32.mrb[0].mxu0
      %v5316 = vadd.f32 %v4934, %v5315
      %v5317 = vpop.f32.mrb[0].mxu0
      %v5318 = vadd.f32 %v4938, %v5317
      %v5319 = vpop.f32.mrb[0].mxu0
      %v5320 = vadd.f32 %v4934, %v5319
      %v5321 = vpop.f32.mrb[0].mxu0
      %v5322 = vadd.f32 %v4938, %v5321
      %5323 = vmatprep.mubr.bf16.mxu0 0
      %5324 = vmatmul.mubr.bf16.gmra.mrb[0].mxu0 %v4894
      %v5325 = vpop.f32.mrb[0].mxu0
      %v5326 = vadd.f32 %v4934, %v5325
      %v5327 = vpop.f32.mrb[0].mxu0
      %v5328 = vadd.f32 %v4938, %v5327
      %v5329 = vpop.f32.mrb[0].mxu0
      %v5330 = vadd.f32 %v4934, %v5329
      %v5331 = vpop.f32.mrb[0].mxu0
      %v5332 = vadd.f32 %v4938, %v5331
      %5333 = vdwg.mxu0
      %5334 = vmatprep.subr.bf16.mxu0 %v5050
      %5335 = vmatpush1.bf16.msra.mxu0 %v5049
      %5336 = vmatprep.subr.bf16.mxu0 %v5054
      %5337 = vmatpush1.bf16.msra.mxu0 %v5053
      %5338 = vmatprep.subr.bf16.mxu0 %v5058
      %5339 = vmatpush1.bf16.msra.mxu0 %v5057
      %5340 = vmatprep.subr.bf16.mxu0 %v5062
      %5341 = vmatpush1.bf16.msra.mxu0 %v5061
      %5342 = vmatprep.subr.bf16.mxu0 %v5066
      %5343 = vmatpush1.bf16.msra.mxu0 %v5065
      %5344 = vmatprep.subr.bf16.mxu0 %v5070
      %5345 = vmatpush1.bf16.msra.mxu0 %v5069
      %5346 = vmatprep.subr.bf16.mxu0 %v5074
      %5347 = vmatpush1.bf16.msra.mxu0 %v5073
      %5348 = vmatprep.subr.bf16.mxu0 %v5078
      %5349 = vmatpush1.bf16.msra.mxu0 %v5077
      %5350 = vmatprep.subr.bf16.mxu0 0
      %5351 = vmatpush1.bf16.msra.mxu0 0
      %5352 = vmatprep.subr.bf16.mxu0 0
      %5353 = vmatpush1.bf16.msra.mxu0 0
      %5354 = vmatprep.subr.bf16.mxu0 0
      %5355 = vmatpush1.bf16.msra.mxu0 0
      %5356 = vmatprep.subr.bf16.mxu0 0
      %5357 = vmatpush1.bf16.msra.mxu0 0
      %5358 = vmatprep.subr.bf16.mxu0 0
      %5359 = vmatpush1.bf16.msra.mxu0 0
      %5360 = vmatprep.subr.bf16.mxu0 0
      %5361 = vmatpush1.bf16.msra.mxu0 0
      %5362 = vmatprep.subr.bf16.mxu0 0
      %5363 = vmatpush1.bf16.msra.mxu0 0
      %5364 = vmatprep.subr.bf16.mxu0 0
      %5365 = vmatpush1.bf16.msra.mxu0 0
      %5366 = vmatprep.mubr.bf16.mxu0 0
      %5367 = vmatmul.mubr.bf16.gmra.mrb[0].mxu0 %v4876
      %v5368 = vpop.f32.mrb[0].mxu0
      %v5369 = vadd.f32 %v4942, %v5368
      %v5370 = vpop.f32.mrb[0].mxu0
      %v5371 = vadd.f32 %v4946, %v5370
      %v5372 = vpop.f32.mrb[0].mxu0
      %v5373 = vadd.f32 %v4942, %v5372
      %v5374 = vpop.f32.mrb[0].mxu0
      %v5375 = vadd.f32 %v4946, %v5374
      %5376 = vmatprep.mubr.bf16.mxu0 0
      %5377 = vmatmul.mubr.bf16.gmra.mrb[0].mxu0 %v4877
      %v5378 = vpop.f32.mrb[0].mxu0
      %v5379 = vadd.f32 %v4942, %v5378
      %v5380 = vpop.f32.mrb[0].mxu0
      %v5381 = vadd.f32 %v4946, %v5380
      %v5382 = vpop.f32.mrb[0].mxu0
      %v5383 = vadd.f32 %v4942, %v5382
      %v5384 = vpop.f32.mrb[0].mxu0
      %v5385 = vadd.f32 %v4946, %v5384
      %5386 = vmatprep.mubr.bf16.mxu0 0
      %5387 = vmatmul.mubr.bf16.gmra.mrb[0].mxu0 %v4878
      %v5388 = vpop.f32.mrb[0].mxu0
      %v5389 = vadd.f32 %v4942, %v5388
      %v5390 = vpop.f32.mrb[0].mxu0
      %v5391 = vadd.f32 %v4946, %v5390
      %v5392 = vpop.f32.mrb[0].mxu0
      %v5393 = vadd.f32 %v4942, %v5392
      %v5394 = vpop.f32.mrb[0].mxu0
      %v5395 = vadd.f32 %v4946, %v5394
      %5396 = vmatprep.mubr.bf16.mxu0 0
      %5397 = vmatmul.mubr.bf16.gmra.mrb[0].mxu0 %v4879
      %v5398 = vpop.f32.mrb[0].mxu0
      %v5399 = vadd.f32 %v4942, %v5398
      %v5400 = vpop.f32.mrb[0].mxu0
      %v5401 = vadd.f32 %v4946, %v5400
      %v5402 = vpop.f32.mrb[0].mxu0
      %v5403 = vadd.f32 %v4942, %v5402
      %v5404 = vpop.f32.mrb[0].mxu0
      %v5405 = vadd.f32 %v4946, %v5404
      %5406 = vmatprep.mubr.bf16.mxu0 0
      %5407 = vmatmul.mubr.bf16.gmra.mrb[0].mxu0 %v4880
      %v5408 = vpop.f32.mrb[0].mxu0
      %v5409 = vadd.f32 %v4942, %v5408
      %v5410 = vpop.f32.mrb[0].mxu0
      %v5411 = vadd.f32 %v4946, %v5410
      %v5412 = vpop.f32.mrb[0].mxu0
      %v5413 = vadd.f32 %v4942, %v5412
      %v5414 = vpop.f32.mrb[0].mxu0
      %v5415 = vadd.f32 %v4946, %v5414
      %5416 = vmatprep.mubr.bf16.mxu0 0
      %5417 = vmatmul.mubr.bf16.gmra.mrb[0].mxu0 %v4881
      %v5418 = vpop.f32.mrb[0].mxu0
      %v5419 = vadd.f32 %v4942, %v5418
      %v5420 = vpop.f32.mrb[0].mxu0
      %v5421 = vadd.f32 %v4946, %v5420
      %v5422 = vpop.f32.mrb[0].mxu0
      %v5423 = vadd.f32 %v4942, %v5422
      %v5424 = vpop.f32.mrb[0].mxu0
      %v5425 = vadd.f32 %v4946, %v5424
      %5426 = vmatprep.mubr.bf16.mxu0 0
      %5427 = vmatmul.mubr.bf16.gmra.mrb[0].mxu0 %v4882
      %v5428 = vpop.f32.mrb[0].mxu0
      %v5429 = vadd.f32 %v4942, %v5428
      %v5430 = vpop.f32.mrb[0].mxu0
      %v5431 = vadd.f32 %v4946, %v5430
      %v5432 = vpop.f32.mrb[0].mxu0
      %v5433 = vadd.f32 %v4942, %v5432
      %v5434 = vpop.f32.mrb[0].mxu0
      %v5435 = vadd.f32 %v4946, %v5434
      %5436 = vmatprep.mubr.bf16.mxu0 0
      %5437 = vmatmul.mubr.bf16.gmra.mrb[0].mxu0 %v4883
      %v5438 = vpop.f32.mrb[0].mxu0
      %v5439 = vadd.f32 %v4942, %v5438
      %v5440 = vpop.f32.mrb[0].mxu0
      %v5441 = vadd.f32 %v4946, %v5440
      %v5442 = vpop.f32.mrb[0].mxu0
      %v5443 = vadd.f32 %v4942, %v5442
      %v5444 = vpop.f32.mrb[0].mxu0
      %v5445 = vadd.f32 %v4946, %v5444
      %5446 = vmatprep.mubr.bf16.mxu0 0
      %5447 = vmatmul.mubr.bf16.gmra.mrb[0].mxu0 %v4884
      %v5448 = vpop.f32.mrb[0].mxu0
      %v5449 = vadd.f32 %v4942, %v5448
      %v5450 = vpop.f32.mrb[0].mxu0
      %v5451 = vadd.f32 %v4946, %v5450
      %v5452 = vpop.f32.mrb[0].mxu0
      %v5453 = vadd.f32 %v4942, %v5452
      %v5454 = vpop.f32.mrb[0].mxu0
      %v5455 = vadd.f32 %v4946, %v5454
      %5456 = vmatprep.mubr.bf16.mxu0 0
      %5457 = vmatmul.mubr.bf16.gmra.mrb[0].mxu0 %v4885
      %v5458 = vpop.f32.mrb[0].mxu0
      %v5459 = vadd.f32 %v4942, %v5458
      %v5460 = vpop.f32.mrb[0].mxu0
      %v5461 = vadd.f32 %v4946, %v5460
      %v5462 = vpop.f32.mrb[0].mxu0
      %v5463 = vadd.f32 %v4942, %v5462
      %v5464 = vpop.f32.mrb[0].mxu0
      %v5465 = vadd.f32 %v4946, %v5464
      %5466 = vmatprep.mubr.bf16.mxu0 0
      %5467 = vmatmul.mubr.bf16.gmra.mrb[0].mxu0 %v4886
      %v5468 = vpop.f32.mrb[0].mxu0
      %v5469 = vadd.f32 %v4942, %v5468
      %v5470 = vpop.f32.mrb[0].mxu0
      %v5471 = vadd.f32 %v4946, %v5470
      %v5472 = vpop.f32.mrb[0].mxu0
      %v5473 = vadd.f32 %v4942, %v5472
      %v5474 = vpop.f32.mrb[0].mxu0
      %v5475 = vadd.f32 %v4946, %v5474
      %5476 = vmatprep.mubr.bf16.mxu0 0
      %5477 = vmatmul.mubr.bf16.gmra.mrb[0].mxu0 %v4887
      %v5478 = vpop.f32.mrb[0].mxu0
      %v5479 = vadd.f32 %v4942, %v5478
      %v5480 = vpop.f32.mrb[0].mxu0
      %v5481 = vadd.f32 %v4946, %v5480
      %v5482 = vpop.f32.mrb[0].mxu0
      %v5483 = vadd.f32 %v4942, %v5482
      %v5484 = vpop.f32.mrb[0].mxu0
      %v5485 = vadd.f32 %v4946, %v5484
      %5486 = vmatprep.mubr.bf16.mxu0 0
      %5487 = vmatmul.mubr.bf16.gmra.mrb[0].mxu0 %v4888
      %v5488 = vpop.f32.mrb[0].mxu0
      %v5489 = vadd.f32 %v4942, %v5488
      %v5490 = vpop.f32.mrb[0].mxu0
      %v5491 = vadd.f32 %v4946, %v5490
      %v5492 = vpop.f32.mrb[0].mxu0
      %v5493 = vadd.f32 %v4942, %v5492
      %v5494 = vpop.f32.mrb[0].mxu0
      %v5495 = vadd.f32 %v4946, %v5494
      %5496 = vmatprep.mubr.bf16.mxu0 0
      %5497 = vmatmul.mubr.bf16.gmra.mrb[0].mxu0 %v4889
      %v5498 = vpop.f32.mrb[0].mxu0
      %v5499 = vadd.f32 %v4942, %v5498
      %v5500 = vpop.f32.mrb[0].mxu0
      %v5501 = vadd.f32 %v4946, %v5500
      %v5502 = vpop.f32.mrb[0].mxu0
      %v5503 = vadd.f32 %v4942, %v5502
      %v5504 = vpop.f32.mrb[0].mxu0
      %v5505 = vadd.f32 %v4946, %v5504
      %5506 = vmatprep.mubr.bf16.mxu0 0
      %5507 = vmatmul.mubr.bf16.gmra.mrb[0].mxu0 %v4890
      %v5508 = vpop.f32.mrb[0].mxu0
      %v5509 = vadd.f32 %v4942, %v5508
      %v5510 = vpop.f32.mrb[0].mxu0
      %v5511 = vadd.f32 %v4946, %v5510
      %v5512 = vpop.f32.mrb[0].mxu0
      %v5513 = vadd.f32 %v4942, %v5512
      %v5514 = vpop.f32.mrb[0].mxu0
      %v5515 = vadd.f32 %v4946, %v5514
      %5516 = vmatprep.mubr.bf16.mxu0 0
      %5517 = vmatmul.mubr.bf16.gmra.mrb[0].mxu0 %v4891
      %v5518 = vpop.f32.mrb[0].mxu0
      %v5519 = vadd.f32 %v4942, %v5518
      %v5520 = vpop.f32.mrb[0].mxu0
      %v5521 = vadd.f32 %v4946, %v5520
      %v5522 = vpop.f32.mrb[0].mxu0
      %v5523 = vadd.f32 %v4942, %v5522
      %v5524 = vpop.f32.mrb[0].mxu0
      %v5525 = vadd.f32 %v4946, %v5524
      %5526 = vmatprep.mubr.bf16.mxu0 0
      %5527 = vmatmul.mubr.bf16.gmra.mrb[0].mxu0 %v4892
      %v5528 = vpop.f32.mrb[0].mxu0
      %v5529 = vadd.f32 %v4942, %v5528
      %v5530 = vpop.f32.mrb[0].mxu0
      %v5531 = vadd.f32 %v4946, %v5530
      %v5532 = vpop.f32.mrb[0].mxu0
      %v5533 = vadd.f32 %v4942, %v5532
      %v5534 = vpop.f32.mrb[0].mxu0
      %v5535 = vadd.f32 %v4946, %v5534
      %5536 = vmatprep.mubr.bf16.mxu0 0
      %5537 = vmatmul.mubr.bf16.gmra.mrb[0].mxu0 %v4893
      %v5538 = vpop.f32.mrb[0].mxu0
      %v5539 = vadd.f32 %v4942, %v5538
      %v5540 = vpop.f32.mrb[0].mxu0
      %v5541 = vadd.f32 %v4946, %v5540
      %v5542 = vpop.f32.mrb[0].mxu0
      %v5543 = vadd.f32 %v4942, %v5542
      %v5544 = vpop.f32.mrb[0].mxu0
      %v5545 = vadd.f32 %v4946, %v5544
      %5546 = vmatprep.mubr.bf16.mxu0 0
      %5547 = vmatmul.mubr.bf16.gmra.mrb[0].mxu0 %v4894
      %v5548 = vpop.f32.mrb[0].mxu0
      %v5549 = vadd.f32 %v4942, %v5548
      %v5550 = vpop.f32.mrb[0].mxu0
      %v5551 = vadd.f32 %v4946, %v5550
      %v5552 = vpop.f32.mrb[0].mxu0
      %v5553 = vadd.f32 %v4942, %v5552
      %v5554 = vpop.f32.mrb[0].mxu0
      %v5555 = vadd.f32 %v4946, %v5554
      %5556 = vdwg.mxu0
      %v5557 = vmax.f32 %v5146, 0.0
      %v5558 = vmax.f32 %v5148, 0.0
      %v5559 = vmax.f32 %v5369, 0.0
      %v5560 = vmax.f32 %v5371, 0.0
      %v5561 = vmax.f32 %v5150, 0.0
      %v5562 = vmax.f32 %v5152, 0.0
      %v5563 = vmax.f32 %v5373, 0.0
      %v5564 = vmax.f32 %v5375, 0.0
      %v5565 = vmax.f32 %v5156, 0.0
      %v5566 = vmax.f32 %v5158, 0.0
      %v5567 = vmax.f32 %v5379, 0.0
      %v5568 = vmax.f32 %v5381, 0.0
      %v5569 = vmax.f32 %v5160, 0.0
      %v5570 = vmax.f32 %v5162, 0.0
      %v5571 = vmax.f32 %v5383, 0.0
      %v5572 = vmax.f32 %v5385, 0.0
      %v5573 = vmax.f32 %v5166, 0.0
      %v5574 = vmax.f32 %v5168, 0.0
      %v5575 = vmax.f32 %v5389, 0.0
      %v5576 = vmax.f32 %v5391, 0.0
      %v5577 = vmax.f32 %v5170, 0.0
      %v5578 = vmax.f32 %v5172, 0.0
      %v5579 = vmax.f32 %v5393, 0.0
      %v5580 = vmax.f32 %v5395, 0.0
      %v5581 = vmax.f32 %v5176, 0.0
      %v5582 = vmax.f32 %v5178, 0.0
      %v5583 = vmax.f32 %v5399, 0.0
      %v5584 = vmax.f32 %v5401, 0.0
      %v5585 = vmax.f32 %v5180, 0.0
      %v5586 = vmax.f32 %v5182, 0.0
      %v5587 = vmax.f32 %v5403, 0.0
      %v5588 = vmax.f32 %v5405, 0.0
      %v5589 = vmax.f32 %v5186, 0.0
      %v5590 = vmax.f32 %v5188, 0.0
      %v5591 = vmax.f32 %v5409, 0.0
      %v5592 = vmax.f32 %v5411, 0.0
      %v5593 = vmax.f32 %v5190, 0.0
      %v5594 = vmax.f32 %v5192, 0.0
      %v5595 = vmax.f32 %v5413, 0.0
      %v5596 = vmax.f32 %v5415, 0.0
      %v5597 = vmax.f32 %v5196, 0.0
      %v5598 = vmax.f32 %v5198, 0.0
      %v5599 = vmax.f32 %v5419, 0.0
      %v5600 = vmax.f32 %v5421, 0.0
      %v5601 = vmax.f32 %v5200, 0.0
      %v5602 = vmax.f32 %v5202, 0.0
      %v5603 = vmax.f32 %v5423, 0.0
      %v5604 = vmax.f32 %v5425, 0.0
      %v5605 = vmax.f32 %v5206, 0.0
      %v5606 = vmax.f32 %v5208, 0.0
      %v5607 = vmax.f32 %v5429, 0.0
      %v5608 = vmax.f32 %v5431, 0.0
      %v5609 = vmax.f32 %v5210, 0.0
      %v5610 = vmax.f32 %v5212, 0.0
      %v5611 = vmax.f32 %v5433, 0.0
      %v5612 = vmax.f32 %v5435, 0.0
      %v5613 = vmax.f32 %v5216, 0.0
      %v5614 = vmax.f32 %v5218, 0.0
      %v5615 = vmax.f32 %v5439, 0.0
      %v5616 = vmax.f32 %v5441, 0.0
      %v5617 = vmax.f32 %v5220, 0.0
      %v5618 = vmax.f32 %v5222, 0.0
      %v5619 = vmax.f32 %v5443, 0.0
      %v5620 = vmax.f32 %v5445, 0.0
      %v5621 = vmax.f32 %v5226, 0.0
      %v5622 = vmax.f32 %v5228, 0.0
      %v5623 = vmax.f32 %v5449, 0.0
      %v5624 = vmax.f32 %v5451, 0.0
      %v5625 = vmax.f32 %v5230, 0.0
      %v5626 = vmax.f32 %v5232, 0.0
      %v5627 = vmax.f32 %v5453, 0.0
      %v5628 = vmax.f32 %v5455, 0.0
      %v5629 = vmax.f32 %v5236, 0.0
      %v5630 = vmax.f32 %v5238, 0.0
      %v5631 = vmax.f32 %v5459, 0.0
      %v5632 = vmax.f32 %v5461, 0.0
      %v5633 = vmax.f32 %v5240, 0.0
      %v5634 = vmax.f32 %v5242, 0.0
      %v5635 = vmax.f32 %v5463, 0.0
      %v5636 = vmax.f32 %v5465, 0.0
      %v5637 = vmax.f32 %v5246, 0.0
      %v5638 = vmax.f32 %v5248, 0.0
      %v5639 = vmax.f32 %v5469, 0.0
      %v5640 = vmax.f32 %v5471, 0.0
      %v5641 = vmax.f32 %v5250, 0.0
      %v5642 = vmax.f32 %v5252, 0.0
      %v5643 = vmax.f32 %v5473, 0.0
      %v5644 = vmax.f32 %v5475, 0.0
      %v5645 = vmax.f32 %v5256, 0.0
      %v5646 = vmax.f32 %v5258, 0.0
      %v5647 = vmax.f32 %v5479, 0.0
      %v5648 = vmax.f32 %v5481, 0.0
      %v5649 = vmax.f32 %v5260, 0.0
      %v5650 = vmax.f32 %v5262, 0.0
      %v5651 = vmax.f32 %v5483, 0.0
      %v5652 = vmax.f32 %v5485, 0.0
      %v5653 = vmax.f32 %v5266, 0.0
      %v5654 = vmax.f32 %v5268, 0.0
      %v5655 = vmax.f32 %v5489, 0.0
      %v5656 = vmax.f32 %v5491, 0.0
      %v5657 = vmax.f32 %v5270, 0.0
      %v5658 = vmax.f32 %v5272, 0.0
      %v5659 = vmax.f32 %v5493, 0.0
      %v5660 = vmax.f32 %v5495, 0.0
      %v5661 = vmax.f32 %v5276, 0.0
      %v5662 = vmax.f32 %v5278, 0.0
      %v5663 = vmax.f32 %v5499, 0.0
      %v5664 = vmax.f32 %v5501, 0.0
      %v5665 = vmax.f32 %v5280, 0.0
      %v5666 = vmax.f32 %v5282, 0.0
      %v5667 = vmax.f32 %v5503, 0.0
      %v5668 = vmax.f32 %v5505, 0.0
      %v5669 = vmax.f32 %v5286, 0.0
      %v5670 = vmax.f32 %v5288, 0.0
      %v5671 = vmax.f32 %v5509, 0.0
      %v5672 = vmax.f32 %v5511, 0.0
      %v5673 = vmax.f32 %v5290, 0.0
      %v5674 = vmax.f32 %v5292, 0.0
      %v5675 = vmax.f32 %v5513, 0.0
      %v5676 = vmax.f32 %v5515, 0.0
      %v5677 = vmax.f32 %v5296, 0.0
      %v5678 = vmax.f32 %v5298, 0.0
      %v5679 = vmax.f32 %v5519, 0.0
      %v5680 = vmax.f32 %v5521, 0.0
      %v5681 = vmax.f32 %v5300, 0.0
      %v5682 = vmax.f32 %v5302, 0.0
      %v5683 = vmax.f32 %v5523, 0.0
      %v5684 = vmax.f32 %v5525, 0.0
      %v5685 = vmax.f32 %v5306, 0.0
      %v5686 = vmax.f32 %v5308, 0.0
      %v5687 = vmax.f32 %v5529, 0.0
      %v5688 = vmax.f32 %v5531, 0.0
      %v5689 = vmax.f32 %v5310, 0.0
      %v5690 = vmax.f32 %v5312, 0.0
      %v5691 = vmax.f32 %v5533, 0.0
      %v5692 = vmax.f32 %v5535, 0.0
      %v5693 = vmax.f32 %v5316, 0.0
      %v5694 = vmax.f32 %v5318, 0.0
      %v5695 = vmax.f32 %v5539, 0.0
      %v5696 = vmax.f32 %v5541, 0.0
      %v5697 = vmax.f32 %v5320, 0.0
      %v5698 = vmax.f32 %v5322, 0.0
      %v5699 = vmax.f32 %v5543, 0.0
      %v5700 = vmax.f32 %v5545, 0.0
      %v5701 = vmax.f32 %v5326, 0.0
      %v5702 = vmax.f32 %v5328, 0.0
      %v5703 = vmax.f32 %v5549, 0.0
      %v5704 = vmax.f32 %v5551, 0.0
      %v5705 = vmax.f32 %v5330, 0.0
      %v5706 = vmax.f32 %v5332, 0.0
      %v5707 = vmax.f32 %v5553, 0.0
      %v5708 = vmax.f32 %v5555, 0.0
      %s5709 = scalar_lea.vmem %s4, 7
      %v5710 = vld [vmem:[%s5709] ss:$8 sm:$0xf]
      %v5712 = vlaneseq
      %v5713 = vshrl.u32 %v5712, 7
      %v5714 = vsub.s32 0, %v5713
      %v5715 = vrot.slane %v5710, %v5714
      %v5716 = vlaneseq
      %v5717 = vshrl.u32 %v5716, 7
      %v5718 = vsub.s32 1, %v5717
      %v5719 = vrot.slane %v5710, %v5718
      %v5720 = vlaneseq
      %v5721 = vshrl.u32 %v5720, 7
      %v5722 = vsub.s32 2, %v5721
      %v5723 = vrot.slane %v5710, %v5722
      %v5724 = vlaneseq
      %v5725 = vshrl.u32 %v5724, 7
      %v5726 = vsub.s32 3, %v5725
      %v5727 = vrot.slane %v5710, %v5726
      %v5732 = vmul.f32 %v5557, %v5715
      %v5733 = vmul.f32 %v5558, %v5719
      %v5734 = vmul.f32 %v5559, %v5723
      %v5735 = vmul.f32 %v5560, %v5727
      %v5736 = vmul.f32 %v5561, %v5715
      %v5737 = vmul.f32 %v5562, %v5719
      %v5738 = vmul.f32 %v5563, %v5723
      %v5739 = vmul.f32 %v5564, %v5727
      %v5740 = vmul.f32 %v5565, %v5715
      %v5741 = vmul.f32 %v5566, %v5719
      %v5742 = vmul.f32 %v5567, %v5723
      %v5743 = vmul.f32 %v5568, %v5727
      %v5744 = vmul.f32 %v5569, %v5715
      %v5745 = vmul.f32 %v5570, %v5719
      %v5746 = vmul.f32 %v5571, %v5723
      %v5747 = vmul.f32 %v5572, %v5727
      %v5748 = vmul.f32 %v5573, %v5715
      %v5749 = vmul.f32 %v5574, %v5719
      %v5750 = vmul.f32 %v5575, %v5723
      %v5751 = vmul.f32 %v5576, %v5727
      %v5752 = vmul.f32 %v5577, %v5715
      %v5753 = vmul.f32 %v5578, %v5719
      %v5754 = vmul.f32 %v5579, %v5723
      %v5755 = vmul.f32 %v5580, %v5727
      %v5756 = vmul.f32 %v5581, %v5715
      %v5757 = vmul.f32 %v5582, %v5719
      %v5758 = vmul.f32 %v5583, %v5723
      %v5759 = vmul.f32 %v5584, %v5727
      %v5760 = vmul.f32 %v5585, %v5715
      %v5761 = vmul.f32 %v5586, %v5719
      %v5762 = vmul.f32 %v5587, %v5723
      %v5763 = vmul.f32 %v5588, %v5727
      %v5764 = vmul.f32 %v5589, %v5715
      %v5765 = vmul.f32 %v5590, %v5719
      %v5766 = vmul.f32 %v5591, %v5723
      %v5767 = vmul.f32 %v5592, %v5727
      %v5768 = vmul.f32 %v5593, %v5715
      %v5769 = vmul.f32 %v5594, %v5719
      %v5770 = vmul.f32 %v5595, %v5723
      %v5771 = vmul.f32 %v5596, %v5727
      %v5772 = vmul.f32 %v5597, %v5715
      %v5773 = vmul.f32 %v5598, %v5719
      %v5774 = vmul.f32 %v5599, %v5723
      %v5775 = vmul.f32 %v5600, %v5727
      %v5776 = vmul.f32 %v5601, %v5715
      %v5777 = vmul.f32 %v5602, %v5719
      %v5778 = vmul.f32 %v5603, %v5723
      %v5779 = vmul.f32 %v5604, %v5727
      %v5780 = vmul.f32 %v5605, %v5715
      %v5781 = vmul.f32 %v5606, %v5719
      %v5782 = vmul.f32 %v5607, %v5723
      %v5783 = vmul.f32 %v5608, %v5727
      %v5784 = vmul.f32 %v5609, %v5715
      %v5785 = vmul.f32 %v5610, %v5719
      %v5786 = vmul.f32 %v5611, %v5723
      %v5787 = vmul.f32 %v5612, %v5727
      %v5788 = vmul.f32 %v5613, %v5715
      %v5789 = vmul.f32 %v5614, %v5719
      %v5790 = vmul.f32 %v5615, %v5723
      %v5791 = vmul.f32 %v5616, %v5727
      %v5792 = vmul.f32 %v5617, %v5715
      %v5793 = vmul.f32 %v5618, %v5719
      %v5794 = vmul.f32 %v5619, %v5723
      %v5795 = vmul.f32 %v5620, %v5727
      %v5796 = vmul.f32 %v5621, %v5715
      %v5797 = vmul.f32 %v5622, %v5719
      %v5798 = vmul.f32 %v5623, %v5723
      %v5799 = vmul.f32 %v5624, %v5727
      %v5800 = vmul.f32 %v5625, %v5715
      %v5801 = vmul.f32 %v5626, %v5719
      %v5802 = vmul.f32 %v5627, %v5723
      %v5803 = vmul.f32 %v5628, %v5727
      %v5804 = vmul.f32 %v5629, %v5715
      %v5805 = vmul.f32 %v5630, %v5719
      %v5806 = vmul.f32 %v5631, %v5723
      %v5807 = vmul.f32 %v5632, %v5727
      %v5808 = vmul.f32 %v5633, %v5715
      %v5809 = vmul.f32 %v5634, %v5719
      %v5810 = vmul.f32 %v5635, %v5723
      %v5811 = vmul.f32 %v5636, %v5727
      %v5812 = vmul.f32 %v5637, %v5715
      %v5813 = vmul.f32 %v5638, %v5719
      %v5814 = vmul.f32 %v5639, %v5723
      %v5815 = vmul.f32 %v5640, %v5727
      %v5816 = vmul.f32 %v5641, %v5715
      %v5817 = vmul.f32 %v5642, %v5719
      %v5818 = vmul.f32 %v5643, %v5723
      %v5819 = vmul.f32 %v5644, %v5727
      %v5820 = vmul.f32 %v5645, %v5715
      %v5821 = vmul.f32 %v5646, %v5719
      %v5822 = vmul.f32 %v5647, %v5723
      %v5823 = vmul.f32 %v5648, %v5727
      %v5824 = vmul.f32 %v5649, %v5715
      %v5825 = vmul.f32 %v5650, %v5719
      %v5826 = vmul.f32 %v5651, %v5723
      %v5827 = vmul.f32 %v5652, %v5727
      %v5828 = vmul.f32 %v5653, %v5715
      %v5829 = vmul.f32 %v5654, %v5719
      %v5830 = vmul.f32 %v5655, %v5723
      %v5831 = vmul.f32 %v5656, %v5727
      %v5832 = vmul.f32 %v5657, %v5715
      %v5833 = vmul.f32 %v5658, %v5719
      %v5834 = vmul.f32 %v5659, %v5723
      %v5835 = vmul.f32 %v5660, %v5727
      %v5836 = vmul.f32 %v5661, %v5715
      %v5837 = vmul.f32 %v5662, %v5719
      %v5838 = vmul.f32 %v5663, %v5723
      %v5839 = vmul.f32 %v5664, %v5727
      %v5840 = vmul.f32 %v5665, %v5715
      %v5841 = vmul.f32 %v5666, %v5719
      %v5842 = vmul.f32 %v5667, %v5723
      %v5843 = vmul.f32 %v5668, %v5727
      %v5844 = vmul.f32 %v5669, %v5715
      %v5845 = vmul.f32 %v5670, %v5719
      %v5846 = vmul.f32 %v5671, %v5723
      %v5847 = vmul.f32 %v5672, %v5727
      %v5848 = vmul.f32 %v5673, %v5715
      %v5849 = vmul.f32 %v5674, %v5719
      %v5850 = vmul.f32 %v5675, %v5723
      %v5851 = vmul.f32 %v5676, %v5727
      %v5852 = vmul.f32 %v5677, %v5715
      %v5853 = vmul.f32 %v5678, %v5719
      %v5854 = vmul.f32 %v5679, %v5723
      %v5855 = vmul.f32 %v5680, %v5727
      %v5856 = vmul.f32 %v5681, %v5715
      %v5857 = vmul.f32 %v5682, %v5719
      %v5858 = vmul.f32 %v5683, %v5723
      %v5859 = vmul.f32 %v5684, %v5727
      %v5860 = vmul.f32 %v5685, %v5715
      %v5861 = vmul.f32 %v5686, %v5719
      %v5862 = vmul.f32 %v5687, %v5723
      %v5863 = vmul.f32 %v5688, %v5727
      %v5864 = vmul.f32 %v5689, %v5715
      %v5865 = vmul.f32 %v5690, %v5719
      %v5866 = vmul.f32 %v5691, %v5723
      %v5867 = vmul.f32 %v5692, %v5727
      %v5868 = vmul.f32 %v5693, %v5715
      %v5869 = vmul.f32 %v5694, %v5719
      %v5870 = vmul.f32 %v5695, %v5723
      %v5871 = vmul.f32 %v5696, %v5727
      %v5872 = vmul.f32 %v5697, %v5715
      %v5873 = vmul.f32 %v5698, %v5719
      %v5874 = vmul.f32 %v5699, %v5723
      %v5875 = vmul.f32 %v5700, %v5727
      %v5876 = vmul.f32 %v5701, %v5715
      %v5877 = vmul.f32 %v5702, %v5719
      %v5878 = vmul.f32 %v5703, %v5723
      %v5879 = vmul.f32 %v5704, %v5727
      %v5880 = vmul.f32 %v5705, %v5715
      %v5881 = vmul.f32 %v5706, %v5719
      %v5882 = vmul.f32 %v5707, %v5723
      %v5883 = vmul.f32 %v5708, %v5727
      %v5884 = vadd.f32 %v5732, %v5733
      %v5885 = vadd.f32 %v5884, %v5734
      %v5886 = vadd.f32 %v5885, %v5735
      %5887 = vadd.xlane.f32.xlu0 %v5886
      %v5888 = vpop.xlane.xlu0 %5887
      %v5889 = vadd.f32 %v5736, %v5737
      %v5890 = vadd.f32 %v5889, %v5738
      %v5891 = vadd.f32 %v5890, %v5739
      %5892 = vadd.xlane.f32.xlu0 %v5891
      %v5893 = vpop.xlane.xlu0 %5892
      %v5894 = vadd.f32 %v5740, %v5741
      %v5895 = vadd.f32 %v5894, %v5742
      %v5896 = vadd.f32 %v5895, %v5743
      %5897 = vadd.xlane.f32.xlu0 %v5896
      %v5898 = vpop.xlane.xlu0 %5897
      %v5899 = vadd.f32 %v5744, %v5745
      %v5900 = vadd.f32 %v5899, %v5746
      %v5901 = vadd.f32 %v5900, %v5747
      %5902 = vadd.xlane.f32.xlu0 %v5901
      %v5903 = vpop.xlane.xlu0 %5902
      %v5904 = vadd.f32 %v5748, %v5749
      %v5905 = vadd.f32 %v5904, %v5750
      %v5906 = vadd.f32 %v5905, %v5751
      %5907 = vadd.xlane.f32.xlu0 %v5906
      %v5908 = vpop.xlane.xlu0 %5907
      %v5909 = vadd.f32 %v5752, %v5753
      %v5910 = vadd.f32 %v5909, %v5754
      %v5911 = vadd.f32 %v5910, %v5755
      %5912 = vadd.xlane.f32.xlu0 %v5911
      %v5913 = vpop.xlane.xlu0 %5912
      %v5914 = vadd.f32 %v5756, %v5757
      %v5915 = vadd.f32 %v5914, %v5758
      %v5916 = vadd.f32 %v5915, %v5759
      %5917 = vadd.xlane.f32.xlu0 %v5916
      %v5918 = vpop.xlane.xlu0 %5917
      %v5919 = vadd.f32 %v5760, %v5761
      %v5920 = vadd.f32 %v5919, %v5762
      %v5921 = vadd.f32 %v5920, %v5763
      %5922 = vadd.xlane.f32.xlu0 %v5921
      %v5923 = vpop.xlane.xlu0 %5922
      %v5924 = vadd.f32 %v5764, %v5765
      %v5925 = vadd.f32 %v5924, %v5766
      %v5926 = vadd.f32 %v5925, %v5767
      %5927 = vadd.xlane.f32.xlu0 %v5926
      %v5928 = vpop.xlane.xlu0 %5927
      %v5929 = vadd.f32 %v5768, %v5769
      %v5930 = vadd.f32 %v5929, %v5770
      %v5931 = vadd.f32 %v5930, %v5771
      %5932 = vadd.xlane.f32.xlu0 %v5931
      %v5933 = vpop.xlane.xlu0 %5932
      %v5934 = vadd.f32 %v5772, %v5773
      %v5935 = vadd.f32 %v5934, %v5774
      %v5936 = vadd.f32 %v5935, %v5775
      %5937 = vadd.xlane.f32.xlu0 %v5936
      %v5938 = vpop.xlane.xlu0 %5937
      %v5939 = vadd.f32 %v5776, %v5777
      %v5940 = vadd.f32 %v5939, %v5778
      %v5941 = vadd.f32 %v5940, %v5779
      %5942 = vadd.xlane.f32.xlu0 %v5941
      %v5943 = vpop.xlane.xlu0 %5942
      %v5944 = vadd.f32 %v5780, %v5781
      %v5945 = vadd.f32 %v5944, %v5782
      %v5946 = vadd.f32 %v5945, %v5783
      %5947 = vadd.xlane.f32.xlu0 %v5946
      %v5948 = vpop.xlane.xlu0 %5947
      %v5949 = vadd.f32 %v5784, %v5785
      %v5950 = vadd.f32 %v5949, %v5786
      %v5951 = vadd.f32 %v5950, %v5787
      %5952 = vadd.xlane.f32.xlu0 %v5951
      %v5953 = vpop.xlane.xlu0 %5952
      %v5954 = vadd.f32 %v5788, %v5789
      %v5955 = vadd.f32 %v5954, %v5790
      %v5956 = vadd.f32 %v5955, %v5791
      %5957 = vadd.xlane.f32.xlu0 %v5956
      %v5958 = vpop.xlane.xlu0 %5957
      %v5959 = vadd.f32 %v5792, %v5793
      %v5960 = vadd.f32 %v5959, %v5794
      %v5961 = vadd.f32 %v5960, %v5795
      %5962 = vadd.xlane.f32.xlu0 %v5961
      %v5963 = vpop.xlane.xlu0 %5962
      %v5964 = vadd.f32 %v5796, %v5797
      %v5965 = vadd.f32 %v5964, %v5798
      %v5966 = vadd.f32 %v5965, %v5799
      %5967 = vadd.xlane.f32.xlu0 %v5966
      %v5968 = vpop.xlane.xlu0 %5967
      %v5969 = vadd.f32 %v5800, %v5801
      %v5970 = vadd.f32 %v5969, %v5802
      %v5971 = vadd.f32 %v5970, %v5803
      %5972 = vadd.xlane.f32.xlu0 %v5971
      %v5973 = vpop.xlane.xlu0 %5972
      %v5974 = vadd.f32 %v5804, %v5805
      %v5975 = vadd.f32 %v5974, %v5806
      %v5976 = vadd.f32 %v5975, %v5807
      %5977 = vadd.xlane.f32.xlu0 %v5976
      %v5978 = vpop.xlane.xlu0 %5977
      %v5979 = vadd.f32 %v5808, %v5809
      %v5980 = vadd.f32 %v5979, %v5810
      %v5981 = vadd.f32 %v5980, %v5811
      %5982 = vadd.xlane.f32.xlu0 %v5981
      %v5983 = vpop.xlane.xlu0 %5982
      %v5984 = vadd.f32 %v5812, %v5813
      %v5985 = vadd.f32 %v5984, %v5814
      %v5986 = vadd.f32 %v5985, %v5815
      %5987 = vadd.xlane.f32.xlu0 %v5986
      %v5988 = vpop.xlane.xlu0 %5987
      %v5989 = vadd.f32 %v5816, %v5817
      %v5990 = vadd.f32 %v5989, %v5818
      %v5991 = vadd.f32 %v5990, %v5819
      %5992 = vadd.xlane.f32.xlu0 %v5991
      %v5993 = vpop.xlane.xlu0 %5992
      %v5994 = vadd.f32 %v5820, %v5821
      %v5995 = vadd.f32 %v5994, %v5822
      %v5996 = vadd.f32 %v5995, %v5823
      %5997 = vadd.xlane.f32.xlu0 %v5996
      %v5998 = vpop.xlane.xlu0 %5997
      %v5999 = vadd.f32 %v5824, %v5825
      %v6000 = vadd.f32 %v5999, %v5826
      %v6001 = vadd.f32 %v6000, %v5827
      %6002 = vadd.xlane.f32.xlu0 %v6001
      %v6003 = vpop.xlane.xlu0 %6002
      %v6004 = vadd.f32 %v5828, %v5829
      %v6005 = vadd.f32 %v6004, %v5830
      %v6006 = vadd.f32 %v6005, %v5831
      %6007 = vadd.xlane.f32.xlu0 %v6006
      %v6008 = vpop.xlane.xlu0 %6007
      %v6009 = vadd.f32 %v5832, %v5833
      %v6010 = vadd.f32 %v6009, %v5834
      %v6011 = vadd.f32 %v6010, %v5835
      %6012 = vadd.xlane.f32.xlu0 %v6011
      %v6013 = vpop.xlane.xlu0 %6012
      %v6014 = vadd.f32 %v5836, %v5837
      %v6015 = vadd.f32 %v6014, %v5838
      %v6016 = vadd.f32 %v6015, %v5839
      %6017 = vadd.xlane.f32.xlu0 %v6016
      %v6018 = vpop.xlane.xlu0 %6017
      %v6019 = vadd.f32 %v5840, %v5841
      %v6020 = vadd.f32 %v6019, %v5842
      %v6021 = vadd.f32 %v6020, %v5843
      %6022 = vadd.xlane.f32.xlu0 %v6021
      %v6023 = vpop.xlane.xlu0 %6022
      %v6024 = vadd.f32 %v5844, %v5845
      %v6025 = vadd.f32 %v6024, %v5846
      %v6026 = vadd.f32 %v6025, %v5847
      %6027 = vadd.xlane.f32.xlu0 %v6026
      %v6028 = vpop.xlane.xlu0 %6027
      %v6029 = vadd.f32 %v5848, %v5849
      %v6030 = vadd.f32 %v6029, %v5850
      %v6031 = vadd.f32 %v6030, %v5851
      %6032 = vadd.xlane.f32.xlu0 %v6031
      %v6033 = vpop.xlane.xlu0 %6032
      %v6034 = vadd.f32 %v5852, %v5853
      %v6035 = vadd.f32 %v6034, %v5854
      %v6036 = vadd.f32 %v6035, %v5855
      %6037 = vadd.xlane.f32.xlu0 %v6036
      %v6038 = vpop.xlane.xlu0 %6037
      %v6039 = vadd.f32 %v5856, %v5857
      %v6040 = vadd.f32 %v6039, %v5858
      %v6041 = vadd.f32 %v6040, %v5859
      %6042 = vadd.xlane.f32.xlu0 %v6041
      %v6043 = vpop.xlane.xlu0 %6042
      %v6044 = vadd.f32 %v5860, %v5861
      %v6045 = vadd.f32 %v6044, %v5862
      %v6046 = vadd.f32 %v6045, %v5863
      %6047 = vadd.xlane.f32.xlu0 %v6046
      %v6048 = vpop.xlane.xlu0 %6047
      %v6049 = vadd.f32 %v5864, %v5865
      %v6050 = vadd.f32 %v6049, %v5866
      %v6051 = vadd.f32 %v6050, %v5867
      %6052 = vadd.xlane.f32.xlu0 %v6051
      %v6053 = vpop.xlane.xlu0 %6052
      %v6054 = vadd.f32 %v5868, %v5869
      %v6055 = vadd.f32 %v6054, %v5870
      %v6056 = vadd.f32 %v6055, %v5871
      %6057 = vadd.xlane.f32.xlu0 %v6056
      %v6058 = vpop.xlane.xlu0 %6057
      %v6059 = vadd.f32 %v5872, %v5873
      %v6060 = vadd.f32 %v6059, %v5874
      %v6061 = vadd.f32 %v6060, %v5875
      %6062 = vadd.xlane.f32.xlu0 %v6061
      %v6063 = vpop.xlane.xlu0 %6062
      %v6064 = vadd.f32 %v5876, %v5877
      %v6065 = vadd.f32 %v6064, %v5878
      %v6066 = vadd.f32 %v6065, %v5879
      %6067 = vadd.xlane.f32.xlu0 %v6066
      %v6068 = vpop.xlane.xlu0 %6067
      %v6069 = vadd.f32 %v5880, %v5881
      %v6070 = vadd.f32 %v6069, %v5882
      %v6071 = vadd.f32 %v6070, %v5883
      %6072 = vadd.xlane.f32.xlu0 %v6071
      %v6073 = vpop.xlane.xlu0 %6072
      %v6074 = vld [vmem:[%s4 + $0x20] ss:$0 sm:$0xff]
      %v6075 = vadd.f32 %v5888, %v6074
      %v6076 = vadd.f32 %v5893, %v6074
      %v6077 = vadd.f32 %v5898, %v6074
      %v6078 = vadd.f32 %v5903, %v6074
      %v6079 = vadd.f32 %v5908, %v6074
      %v6080 = vadd.f32 %v5913, %v6074
      %v6081 = vadd.f32 %v5918, %v6074
      %v6082 = vadd.f32 %v5923, %v6074
      %v6083 = vadd.f32 %v5928, %v6074
      %v6084 = vadd.f32 %v5933, %v6074
      %v6085 = vadd.f32 %v5938, %v6074
      %v6086 = vadd.f32 %v5943, %v6074
      %v6087 = vadd.f32 %v5948, %v6074
      %v6088 = vadd.f32 %v5953, %v6074
      %v6089 = vadd.f32 %v5958, %v6074
      %v6090 = vadd.f32 %v5963, %v6074
      %v6091 = vadd.f32 %v5968, %v6074
      %v6092 = vadd.f32 %v5973, %v6074
      %v6093 = vadd.f32 %v5978, %v6074
      %v6094 = vadd.f32 %v5983, %v6074
      %v6095 = vadd.f32 %v5988, %v6074
      %v6096 = vadd.f32 %v5993, %v6074
      %v6097 = vadd.f32 %v5998, %v6074
      %v6098 = vadd.f32 %v6003, %v6074
      %v6099 = vadd.f32 %v6008, %v6074
      %v6100 = vadd.f32 %v6013, %v6074
      %v6101 = vadd.f32 %v6018, %v6074
      %v6102 = vadd.f32 %v6023, %v6074
      %v6103 = vadd.f32 %v6028, %v6074
      %v6104 = vadd.f32 %v6033, %v6074
      %v6105 = vadd.f32 %v6038, %v6074
      %v6106 = vadd.f32 %v6043, %v6074
      %v6107 = vadd.f32 %v6048, %v6074
      %v6108 = vadd.f32 %v6053, %v6074
      %v6109 = vadd.f32 %v6058, %v6074
      %v6110 = vadd.f32 %v6063, %v6074
      %v6111 = vadd.f32 %v6068, %v6074
      %v6112 = vadd.f32 %v6073, %v6074
      %v6151 = vcombine.high %v6075, %v6075
      %v6153 = vunpack.c.l.s4 1966171168
      %v6154 = vunpack.c.0.s8 %v6153
      %v6155 = vlaneseq
      %v6156 = vshrl.u32 %v6155, 7
      %v6157 = vsub.s32 %v6154, %v6156
      %v6158 = vrot.slane %v6075, %v6157
      %v6160 = vunpack.c.l.s4 1966171168
      %v6161 = vunpack.c.0.s8 %v6160
      %v6162 = vlaneseq
      %v6163 = vshrl.u32 %v6162, 7
      %v6164 = vsub.s32 %v6161, %v6163
      %v6165 = vrot.slane %v6151, %v6164
      %v6166 = vcombine.high %v6158, %v6158
      %v6167 = vcombine.high %v6165, %v6165
      %v6169 = vunpack.c.l.s4 1966171168
      %v6170 = vunpack.c.0.s8 %v6169
      %v6171 = vlaneseq
      %v6172 = vshrl.u32 %v6171, 7
      %v6173 = vsub.s32 %v6170, %v6172
      %v6174 = vrot.slane %v6158, %v6173
      %v6176 = vunpack.c.l.s4 1966171168
      %v6177 = vunpack.c.0.s8 %v6176
      %v6178 = vlaneseq
      %v6179 = vshrl.u32 %v6178, 7
      %v6180 = vsub.s32 %v6177, %v6179
      %v6181 = vrot.slane %v6165, %v6180
      %v6183 = vunpack.c.l.s4 1966171168
      %v6184 = vunpack.c.0.s8 %v6183
      %v6185 = vlaneseq
      %v6186 = vshrl.u32 %v6185, 7
      %v6187 = vsub.s32 %v6184, %v6186
      %v6188 = vrot.slane %v6166, %v6187
      %v6190 = vunpack.c.l.s4 1966171168
      %v6191 = vunpack.c.0.s8 %v6190
      %v6192 = vlaneseq
      %v6193 = vshrl.u32 %v6192, 7
      %v6194 = vsub.s32 %v6191, %v6193
      %v6195 = vrot.slane %v6167, %v6194
      %v6196 = vcombine.high %v6174, %v6174
      %v6197 = vcombine.high %v6181, %v6181
      %v6198 = vcombine.high %v6188, %v6188
      %v6199 = vcombine.high %v6195, %v6195
      %v6200 = vcombine.high %v6076, %v6076
      %v6202 = vunpack.c.l.s4 1966171168
      %v6203 = vunpack.c.0.s8 %v6202
      %v6204 = vlaneseq
      %v6205 = vshrl.u32 %v6204, 7
      %v6206 = vsub.s32 %v6203, %v6205
      %v6207 = vrot.slane %v6076, %v6206
      %v6209 = vunpack.c.l.s4 1966171168
      %v6210 = vunpack.c.0.s8 %v6209
      %v6211 = vlaneseq
      %v6212 = vshrl.u32 %v6211, 7
      %v6213 = vsub.s32 %v6210, %v6212
      %v6214 = vrot.slane %v6200, %v6213
      %v6215 = vcombine.high %v6207, %v6207
      %v6216 = vcombine.high %v6214, %v6214
      %v6218 = vunpack.c.l.s4 1966171168
      %v6219 = vunpack.c.0.s8 %v6218
      %v6220 = vlaneseq
      %v6221 = vshrl.u32 %v6220, 7
      %v6222 = vsub.s32 %v6219, %v6221
      %v6223 = vrot.slane %v6207, %v6222
      %v6225 = vunpack.c.l.s4 1966171168
      %v6226 = vunpack.c.0.s8 %v6225
      %v6227 = vlaneseq
      %v6228 = vshrl.u32 %v6227, 7
      %v6229 = vsub.s32 %v6226, %v6228
      %v6230 = vrot.slane %v6214, %v6229
      %v6232 = vunpack.c.l.s4 1966171168
      %v6233 = vunpack.c.0.s8 %v6232
      %v6234 = vlaneseq
      %v6235 = vshrl.u32 %v6234, 7
      %v6236 = vsub.s32 %v6233, %v6235
      %v6237 = vrot.slane %v6215, %v6236
      %v6239 = vunpack.c.l.s4 1966171168
      %v6240 = vunpack.c.0.s8 %v6239
      %v6241 = vlaneseq
      %v6242 = vshrl.u32 %v6241, 7
      %v6243 = vsub.s32 %v6240, %v6242
      %v6244 = vrot.slane %v6216, %v6243
      %v6245 = vcombine.high %v6223, %v6223
      %v6246 = vcombine.high %v6230, %v6230
      %v6247 = vcombine.high %v6237, %v6237
      %v6248 = vcombine.high %v6244, %v6244
      %v6249 = vcombine.high %v6077, %v6077
      %v6251 = vunpack.c.l.s4 1966171168
      %v6252 = vunpack.c.0.s8 %v6251
      %v6253 = vlaneseq
      %v6254 = vshrl.u32 %v6253, 7
      %v6255 = vsub.s32 %v6252, %v6254
      %v6256 = vrot.slane %v6077, %v6255
      %v6258 = vunpack.c.l.s4 1966171168
      %v6259 = vunpack.c.0.s8 %v6258
      %v6260 = vlaneseq
      %v6261 = vshrl.u32 %v6260, 7
      %v6262 = vsub.s32 %v6259, %v6261
      %v6263 = vrot.slane %v6249, %v6262
      %v6264 = vcombine.high %v6256, %v6256
      %v6265 = vcombine.high %v6263, %v6263
      %v6267 = vunpack.c.l.s4 1966171168
      %v6268 = vunpack.c.0.s8 %v6267
      %v6269 = vlaneseq
      %v6270 = vshrl.u32 %v6269, 7
      %v6271 = vsub.s32 %v6268, %v6270
      %v6272 = vrot.slane %v6256, %v6271
      %v6274 = vunpack.c.l.s4 1966171168
      %v6275 = vunpack.c.0.s8 %v6274
      %v6276 = vlaneseq
      %v6277 = vshrl.u32 %v6276, 7
      %v6278 = vsub.s32 %v6275, %v6277
      %v6279 = vrot.slane %v6263, %v6278
      %v6281 = vunpack.c.l.s4 1966171168
      %v6282 = vunpack.c.0.s8 %v6281
      %v6283 = vlaneseq
      %v6284 = vshrl.u32 %v6283, 7
      %v6285 = vsub.s32 %v6282, %v6284
      %v6286 = vrot.slane %v6264, %v6285
      %v6288 = vunpack.c.l.s4 1966171168
      %v6289 = vunpack.c.0.s8 %v6288
      %v6290 = vlaneseq
      %v6291 = vshrl.u32 %v6290, 7
      %v6292 = vsub.s32 %v6289, %v6291
      %v6293 = vrot.slane %v6265, %v6292
      %v6294 = vcombine.high %v6272, %v6272
      %v6295 = vcombine.high %v6279, %v6279
      %v6296 = vcombine.high %v6286, %v6286
      %v6297 = vcombine.high %v6293, %v6293
      %v6298 = vcombine.high %v6078, %v6078
      %v6300 = vunpack.c.l.s4 1966171168
      %v6301 = vunpack.c.0.s8 %v6300
      %v6302 = vlaneseq
      %v6303 = vshrl.u32 %v6302, 7
      %v6304 = vsub.s32 %v6301, %v6303
      %v6305 = vrot.slane %v6078, %v6304
      %v6307 = vunpack.c.l.s4 1966171168
      %v6308 = vunpack.c.0.s8 %v6307
      %v6309 = vlaneseq
      %v6310 = vshrl.u32 %v6309, 7
      %v6311 = vsub.s32 %v6308, %v6310
      %v6312 = vrot.slane %v6298, %v6311
      %v6313 = vcombine.high %v6305, %v6305
      %v6314 = vcombine.high %v6312, %v6312
      %v6316 = vunpack.c.l.s4 1966171168
      %v6317 = vunpack.c.0.s8 %v6316
      %v6318 = vlaneseq
      %v6319 = vshrl.u32 %v6318, 7
      %v6320 = vsub.s32 %v6317, %v6319
      %v6321 = vrot.slane %v6305, %v6320
      %v6323 = vunpack.c.l.s4 1966171168
      %v6324 = vunpack.c.0.s8 %v6323
      %v6325 = vlaneseq
      %v6326 = vshrl.u32 %v6325, 7
      %v6327 = vsub.s32 %v6324, %v6326
      %v6328 = vrot.slane %v6312, %v6327
      %v6330 = vunpack.c.l.s4 1966171168
      %v6331 = vunpack.c.0.s8 %v6330
      %v6332 = vlaneseq
      %v6333 = vshrl.u32 %v6332, 7
      %v6334 = vsub.s32 %v6331, %v6333
      %v6335 = vrot.slane %v6313, %v6334
      %v6337 = vunpack.c.l.s4 1966171168
      %v6338 = vunpack.c.0.s8 %v6337
      %v6339 = vlaneseq
      %v6340 = vshrl.u32 %v6339, 7
      %v6341 = vsub.s32 %v6338, %v6340
      %v6342 = vrot.slane %v6314, %v6341
      %v6343 = vcombine.high %v6321, %v6321
      %v6344 = vcombine.high %v6328, %v6328
      %v6345 = vcombine.high %v6335, %v6335
      %v6346 = vcombine.high %v6342, %v6342
      %v6347 = vcombine.high %v6079, %v6079
      %v6349 = vunpack.c.l.s4 1966171168
      %v6350 = vunpack.c.0.s8 %v6349
      %v6351 = vlaneseq
      %v6352 = vshrl.u32 %v6351, 7
      %v6353 = vsub.s32 %v6350, %v6352
      %v6354 = vrot.slane %v6079, %v6353
      %v6356 = vunpack.c.l.s4 1966171168
      %v6357 = vunpack.c.0.s8 %v6356
      %v6358 = vlaneseq
      %v6359 = vshrl.u32 %v6358, 7
      %v6360 = vsub.s32 %v6357, %v6359
      %v6361 = vrot.slane %v6347, %v6360
      %v6362 = vcombine.high %v6354, %v6354
      %v6363 = vcombine.high %v6361, %v6361
      %v6365 = vunpack.c.l.s4 1966171168
      %v6366 = vunpack.c.0.s8 %v6365
      %v6367 = vlaneseq
      %v6368 = vshrl.u32 %v6367, 7
      %v6369 = vsub.s32 %v6366, %v6368
      %v6370 = vrot.slane %v6354, %v6369
      %v6372 = vunpack.c.l.s4 1966171168
      %v6373 = vunpack.c.0.s8 %v6372
      %v6374 = vlaneseq
      %v6375 = vshrl.u32 %v6374, 7
      %v6376 = vsub.s32 %v6373, %v6375
      %v6377 = vrot.slane %v6361, %v6376
      %v6379 = vunpack.c.l.s4 1966171168
      %v6380 = vunpack.c.0.s8 %v6379
      %v6381 = vlaneseq
      %v6382 = vshrl.u32 %v6381, 7
      %v6383 = vsub.s32 %v6380, %v6382
      %v6384 = vrot.slane %v6362, %v6383
      %v6386 = vunpack.c.l.s4 1966171168
      %v6387 = vunpack.c.0.s8 %v6386
      %v6388 = vlaneseq
      %v6389 = vshrl.u32 %v6388, 7
      %v6390 = vsub.s32 %v6387, %v6389
      %v6391 = vrot.slane %v6363, %v6390
      %v6392 = vcombine.high %v6370, %v6370
      %v6393 = vcombine.high %v6377, %v6377
      %v6394 = vcombine.high %v6384, %v6384
      %v6395 = vcombine.high %v6391, %v6391
      %v6396 = vcombine.high %v6080, %v6080
      %v6398 = vunpack.c.l.s4 1966171168
      %v6399 = vunpack.c.0.s8 %v6398
      %v6400 = vlaneseq
      %v6401 = vshrl.u32 %v6400, 7
      %v6402 = vsub.s32 %v6399, %v6401
      %v6403 = vrot.slane %v6080, %v6402
      %v6405 = vunpack.c.l.s4 1966171168
      %v6406 = vunpack.c.0.s8 %v6405
      %v6407 = vlaneseq
      %v6408 = vshrl.u32 %v6407, 7
      %v6409 = vsub.s32 %v6406, %v6408
      %v6410 = vrot.slane %v6396, %v6409
      %v6411 = vcombine.high %v6403, %v6403
      %v6412 = vcombine.high %v6410, %v6410
      %v6414 = vunpack.c.l.s4 1966171168
      %v6415 = vunpack.c.0.s8 %v6414
      %v6416 = vlaneseq
      %v6417 = vshrl.u32 %v6416, 7
      %v6418 = vsub.s32 %v6415, %v6417
      %v6419 = vrot.slane %v6403, %v6418
      %v6421 = vunpack.c.l.s4 1966171168
      %v6422 = vunpack.c.0.s8 %v6421
      %v6423 = vlaneseq
      %v6424 = vshrl.u32 %v6423, 7
      %v6425 = vsub.s32 %v6422, %v6424
      %v6426 = vrot.slane %v6410, %v6425
      %v6428 = vunpack.c.l.s4 1966171168
      %v6429 = vunpack.c.0.s8 %v6428
      %v6430 = vlaneseq
      %v6431 = vshrl.u32 %v6430, 7
      %v6432 = vsub.s32 %v6429, %v6431
      %v6433 = vrot.slane %v6411, %v6432
      %v6435 = vunpack.c.l.s4 1966171168
      %v6436 = vunpack.c.0.s8 %v6435
      %v6437 = vlaneseq
      %v6438 = vshrl.u32 %v6437, 7
      %v6439 = vsub.s32 %v6436, %v6438
      %v6440 = vrot.slane %v6412, %v6439
      %v6441 = vcombine.high %v6419, %v6419
      %v6442 = vcombine.high %v6426, %v6426
      %v6443 = vcombine.high %v6433, %v6433
      %v6444 = vcombine.high %v6440, %v6440
      %v6445 = vcombine.high %v6081, %v6081
      %v6447 = vunpack.c.l.s4 1966171168
      %v6448 = vunpack.c.0.s8 %v6447
      %v6449 = vlaneseq
      %v6450 = vshrl.u32 %v6449, 7
      %v6451 = vsub.s32 %v6448, %v6450
      %v6452 = vrot.slane %v6081, %v6451
      %v6454 = vunpack.c.l.s4 1966171168
      %v6455 = vunpack.c.0.s8 %v6454
      %v6456 = vlaneseq
      %v6457 = vshrl.u32 %v6456, 7
      %v6458 = vsub.s32 %v6455, %v6457
      %v6459 = vrot.slane %v6445, %v6458
      %v6460 = vcombine.high %v6452, %v6452
      %v6461 = vcombine.high %v6459, %v6459
      %v6463 = vunpack.c.l.s4 1966171168
      %v6464 = vunpack.c.0.s8 %v6463
      %v6465 = vlaneseq
      %v6466 = vshrl.u32 %v6465, 7
      %v6467 = vsub.s32 %v6464, %v6466
      %v6468 = vrot.slane %v6452, %v6467
      %v6470 = vunpack.c.l.s4 1966171168
      %v6471 = vunpack.c.0.s8 %v6470
      %v6472 = vlaneseq
      %v6473 = vshrl.u32 %v6472, 7
      %v6474 = vsub.s32 %v6471, %v6473
      %v6475 = vrot.slane %v6459, %v6474
      %v6477 = vunpack.c.l.s4 1966171168
      %v6478 = vunpack.c.0.s8 %v6477
      %v6479 = vlaneseq
      %v6480 = vshrl.u32 %v6479, 7
      %v6481 = vsub.s32 %v6478, %v6480
      %v6482 = vrot.slane %v6460, %v6481
      %v6484 = vunpack.c.l.s4 1966171168
      %v6485 = vunpack.c.0.s8 %v6484
      %v6486 = vlaneseq
      %v6487 = vshrl.u32 %v6486, 7
      %v6488 = vsub.s32 %v6485, %v6487
      %v6489 = vrot.slane %v6461, %v6488
      %v6490 = vcombine.high %v6468, %v6468
      %v6491 = vcombine.high %v6475, %v6475
      %v6492 = vcombine.high %v6482, %v6482
      %v6493 = vcombine.high %v6489, %v6489
      %v6494 = vcombine.high %v6082, %v6082
      %v6496 = vunpack.c.l.s4 1966171168
      %v6497 = vunpack.c.0.s8 %v6496
      %v6498 = vlaneseq
      %v6499 = vshrl.u32 %v6498, 7
      %v6500 = vsub.s32 %v6497, %v6499
      %v6501 = vrot.slane %v6082, %v6500
      %v6503 = vunpack.c.l.s4 1966171168
      %v6504 = vunpack.c.0.s8 %v6503
      %v6505 = vlaneseq
      %v6506 = vshrl.u32 %v6505, 7
      %v6507 = vsub.s32 %v6504, %v6506
      %v6508 = vrot.slane %v6494, %v6507
      %v6509 = vcombine.high %v6501, %v6501
      %v6510 = vcombine.high %v6508, %v6508
      %v6512 = vunpack.c.l.s4 1966171168
      %v6513 = vunpack.c.0.s8 %v6512
      %v6514 = vlaneseq
      %v6515 = vshrl.u32 %v6514, 7
      %v6516 = vsub.s32 %v6513, %v6515
      %v6517 = vrot.slane %v6501, %v6516
      %v6519 = vunpack.c.l.s4 1966171168
      %v6520 = vunpack.c.0.s8 %v6519
      %v6521 = vlaneseq
      %v6522 = vshrl.u32 %v6521, 7
      %v6523 = vsub.s32 %v6520, %v6522
      %v6524 = vrot.slane %v6508, %v6523
      %v6526 = vunpack.c.l.s4 1966171168
      %v6527 = vunpack.c.0.s8 %v6526
      %v6528 = vlaneseq
      %v6529 = vshrl.u32 %v6528, 7
      %v6530 = vsub.s32 %v6527, %v6529
      %v6531 = vrot.slane %v6509, %v6530
      %v6533 = vunpack.c.l.s4 1966171168
      %v6534 = vunpack.c.0.s8 %v6533
      %v6535 = vlaneseq
      %v6536 = vshrl.u32 %v6535, 7
      %v6537 = vsub.s32 %v6534, %v6536
      %v6538 = vrot.slane %v6510, %v6537
      %v6539 = vcombine.high %v6517, %v6517
      %v6540 = vcombine.high %v6524, %v6524
      %v6541 = vcombine.high %v6531, %v6531
      %v6542 = vcombine.high %v6538, %v6538
      %v6543 = vcombine.high %v6083, %v6083
      %v6545 = vunpack.c.l.s4 1966171168
      %v6546 = vunpack.c.0.s8 %v6545
      %v6547 = vlaneseq
      %v6548 = vshrl.u32 %v6547, 7
      %v6549 = vsub.s32 %v6546, %v6548
      %v6550 = vrot.slane %v6083, %v6549
      %v6552 = vunpack.c.l.s4 1966171168
      %v6553 = vunpack.c.0.s8 %v6552
      %v6554 = vlaneseq
      %v6555 = vshrl.u32 %v6554, 7
      %v6556 = vsub.s32 %v6553, %v6555
      %v6557 = vrot.slane %v6543, %v6556
      %v6558 = vcombine.high %v6550, %v6550
      %v6559 = vcombine.high %v6557, %v6557
      %v6561 = vunpack.c.l.s4 1966171168
      %v6562 = vunpack.c.0.s8 %v6561
      %v6563 = vlaneseq
      %v6564 = vshrl.u32 %v6563, 7
      %v6565 = vsub.s32 %v6562, %v6564
      %v6566 = vrot.slane %v6550, %v6565
      %v6568 = vunpack.c.l.s4 1966171168
      %v6569 = vunpack.c.0.s8 %v6568
      %v6570 = vlaneseq
      %v6571 = vshrl.u32 %v6570, 7
      %v6572 = vsub.s32 %v6569, %v6571
      %v6573 = vrot.slane %v6557, %v6572
      %v6575 = vunpack.c.l.s4 1966171168
      %v6576 = vunpack.c.0.s8 %v6575
      %v6577 = vlaneseq
      %v6578 = vshrl.u32 %v6577, 7
      %v6579 = vsub.s32 %v6576, %v6578
      %v6580 = vrot.slane %v6558, %v6579
      %v6582 = vunpack.c.l.s4 1966171168
      %v6583 = vunpack.c.0.s8 %v6582
      %v6584 = vlaneseq
      %v6585 = vshrl.u32 %v6584, 7
      %v6586 = vsub.s32 %v6583, %v6585
      %v6587 = vrot.slane %v6559, %v6586
      %v6588 = vcombine.high %v6566, %v6566
      %v6589 = vcombine.high %v6573, %v6573
      %v6590 = vcombine.high %v6580, %v6580
      %v6591 = vcombine.high %v6587, %v6587
      %v6592 = vcombine.high %v6084, %v6084
      %v6594 = vunpack.c.l.s4 1966171168
      %v6595 = vunpack.c.0.s8 %v6594
      %v6596 = vlaneseq
      %v6597 = vshrl.u32 %v6596, 7
      %v6598 = vsub.s32 %v6595, %v6597
      %v6599 = vrot.slane %v6084, %v6598
      %v6601 = vunpack.c.l.s4 1966171168
      %v6602 = vunpack.c.0.s8 %v6601
      %v6603 = vlaneseq
      %v6604 = vshrl.u32 %v6603, 7
      %v6605 = vsub.s32 %v6602, %v6604
      %v6606 = vrot.slane %v6592, %v6605
      %v6607 = vcombine.high %v6599, %v6599
      %v6608 = vcombine.high %v6606, %v6606
      %v6610 = vunpack.c.l.s4 1966171168
      %v6611 = vunpack.c.0.s8 %v6610
      %v6612 = vlaneseq
      %v6613 = vshrl.u32 %v6612, 7
      %v6614 = vsub.s32 %v6611, %v6613
      %v6615 = vrot.slane %v6599, %v6614
      %v6617 = vunpack.c.l.s4 1966171168
      %v6618 = vunpack.c.0.s8 %v6617
      %v6619 = vlaneseq
      %v6620 = vshrl.u32 %v6619, 7
      %v6621 = vsub.s32 %v6618, %v6620
      %v6622 = vrot.slane %v6606, %v6621
      %v6624 = vunpack.c.l.s4 1966171168
      %v6625 = vunpack.c.0.s8 %v6624
      %v6626 = vlaneseq
      %v6627 = vshrl.u32 %v6626, 7
      %v6628 = vsub.s32 %v6625, %v6627
      %v6629 = vrot.slane %v6607, %v6628
      %v6631 = vunpack.c.l.s4 1966171168
      %v6632 = vunpack.c.0.s8 %v6631
      %v6633 = vlaneseq
      %v6634 = vshrl.u32 %v6633, 7
      %v6635 = vsub.s32 %v6632, %v6634
      %v6636 = vrot.slane %v6608, %v6635
      %v6637 = vcombine.high %v6615, %v6615
      %v6638 = vcombine.high %v6622, %v6622
      %v6639 = vcombine.high %v6629, %v6629
      %v6640 = vcombine.high %v6636, %v6636
      %v6641 = vcombine.high %v6085, %v6085
      %v6643 = vunpack.c.l.s4 1966171168
      %v6644 = vunpack.c.0.s8 %v6643
      %v6645 = vlaneseq
      %v6646 = vshrl.u32 %v6645, 7
      %v6647 = vsub.s32 %v6644, %v6646
      %v6648 = vrot.slane %v6085, %v6647
      %v6650 = vunpack.c.l.s4 1966171168
      %v6651 = vunpack.c.0.s8 %v6650
      %v6652 = vlaneseq
      %v6653 = vshrl.u32 %v6652, 7
      %v6654 = vsub.s32 %v6651, %v6653
      %v6655 = vrot.slane %v6641, %v6654
      %v6656 = vcombine.high %v6648, %v6648
      %v6657 = vcombine.high %v6655, %v6655
      %v6659 = vunpack.c.l.s4 1966171168
      %v6660 = vunpack.c.0.s8 %v6659
      %v6661 = vlaneseq
      %v6662 = vshrl.u32 %v6661, 7
      %v6663 = vsub.s32 %v6660, %v6662
      %v6664 = vrot.slane %v6648, %v6663
      %v6666 = vunpack.c.l.s4 1966171168
      %v6667 = vunpack.c.0.s8 %v6666
      %v6668 = vlaneseq
      %v6669 = vshrl.u32 %v6668, 7
      %v6670 = vsub.s32 %v6667, %v6669
      %v6671 = vrot.slane %v6655, %v6670
      %v6673 = vunpack.c.l.s4 1966171168
      %v6674 = vunpack.c.0.s8 %v6673
      %v6675 = vlaneseq
      %v6676 = vshrl.u32 %v6675, 7
      %v6677 = vsub.s32 %v6674, %v6676
      %v6678 = vrot.slane %v6656, %v6677
      %v6680 = vunpack.c.l.s4 1966171168
      %v6681 = vunpack.c.0.s8 %v6680
      %v6682 = vlaneseq
      %v6683 = vshrl.u32 %v6682, 7
      %v6684 = vsub.s32 %v6681, %v6683
      %v6685 = vrot.slane %v6657, %v6684
      %v6686 = vcombine.high %v6664, %v6664
      %v6687 = vcombine.high %v6671, %v6671
      %v6688 = vcombine.high %v6678, %v6678
      %v6689 = vcombine.high %v6685, %v6685
      %v6690 = vcombine.high %v6086, %v6086
      %v6692 = vunpack.c.l.s4 1966171168
      %v6693 = vunpack.c.0.s8 %v6692
      %v6694 = vlaneseq
      %v6695 = vshrl.u32 %v6694, 7
      %v6696 = vsub.s32 %v6693, %v6695
      %v6697 = vrot.slane %v6086, %v6696
      %v6699 = vunpack.c.l.s4 1966171168
      %v6700 = vunpack.c.0.s8 %v6699
      %v6701 = vlaneseq
      %v6702 = vshrl.u32 %v6701, 7
      %v6703 = vsub.s32 %v6700, %v6702
      %v6704 = vrot.slane %v6690, %v6703
      %v6705 = vcombine.high %v6697, %v6697
      %v6706 = vcombine.high %v6704, %v6704
      %v6708 = vunpack.c.l.s4 1966171168
      %v6709 = vunpack.c.0.s8 %v6708
      %v6710 = vlaneseq
      %v6711 = vshrl.u32 %v6710, 7
      %v6712 = vsub.s32 %v6709, %v6711
      %v6713 = vrot.slane %v6697, %v6712
      %v6715 = vunpack.c.l.s4 1966171168
      %v6716 = vunpack.c.0.s8 %v6715
      %v6717 = vlaneseq
      %v6718 = vshrl.u32 %v6717, 7
      %v6719 = vsub.s32 %v6716, %v6718
      %v6720 = vrot.slane %v6704, %v6719
      %v6722 = vunpack.c.l.s4 1966171168
      %v6723 = vunpack.c.0.s8 %v6722
      %v6724 = vlaneseq
      %v6725 = vshrl.u32 %v6724, 7
      %v6726 = vsub.s32 %v6723, %v6725
      %v6727 = vrot.slane %v6705, %v6726
      %v6729 = vunpack.c.l.s4 1966171168
      %v6730 = vunpack.c.0.s8 %v6729
      %v6731 = vlaneseq
      %v6732 = vshrl.u32 %v6731, 7
      %v6733 = vsub.s32 %v6730, %v6732
      %v6734 = vrot.slane %v6706, %v6733
      %v6735 = vcombine.high %v6713, %v6713
      %v6736 = vcombine.high %v6720, %v6720
      %v6737 = vcombine.high %v6727, %v6727
      %v6738 = vcombine.high %v6734, %v6734
      %v6739 = vcombine.high %v6087, %v6087
      %v6741 = vunpack.c.l.s4 1966171168
      %v6742 = vunpack.c.0.s8 %v6741
      %v6743 = vlaneseq
      %v6744 = vshrl.u32 %v6743, 7
      %v6745 = vsub.s32 %v6742, %v6744
      %v6746 = vrot.slane %v6087, %v6745
      %v6748 = vunpack.c.l.s4 1966171168
      %v6749 = vunpack.c.0.s8 %v6748
      %v6750 = vlaneseq
      %v6751 = vshrl.u32 %v6750, 7
      %v6752 = vsub.s32 %v6749, %v6751
      %v6753 = vrot.slane %v6739, %v6752
      %v6754 = vcombine.high %v6746, %v6746
      %v6755 = vcombine.high %v6753, %v6753
      %v6757 = vunpack.c.l.s4 1966171168
      %v6758 = vunpack.c.0.s8 %v6757
      %v6759 = vlaneseq
      %v6760 = vshrl.u32 %v6759, 7
      %v6761 = vsub.s32 %v6758, %v6760
      %v6762 = vrot.slane %v6746, %v6761
      %v6764 = vunpack.c.l.s4 1966171168
      %v6765 = vunpack.c.0.s8 %v6764
      %v6766 = vlaneseq
      %v6767 = vshrl.u32 %v6766, 7
      %v6768 = vsub.s32 %v6765, %v6767
      %v6769 = vrot.slane %v6753, %v6768
      %v6771 = vunpack.c.l.s4 1966171168
      %v6772 = vunpack.c.0.s8 %v6771
      %v6773 = vlaneseq
      %v6774 = vshrl.u32 %v6773, 7
      %v6775 = vsub.s32 %v6772, %v6774
      %v6776 = vrot.slane %v6754, %v6775
      %v6778 = vunpack.c.l.s4 1966171168
      %v6779 = vunpack.c.0.s8 %v6778
      %v6780 = vlaneseq
      %v6781 = vshrl.u32 %v6780, 7
      %v6782 = vsub.s32 %v6779, %v6781
      %v6783 = vrot.slane %v6755, %v6782
      %v6784 = vcombine.high %v6762, %v6762
      %v6785 = vcombine.high %v6769, %v6769
      %v6786 = vcombine.high %v6776, %v6776
      %v6787 = vcombine.high %v6783, %v6783
      %v6788 = vcombine.high %v6088, %v6088
      %v6790 = vunpack.c.l.s4 1966171168
      %v6791 = vunpack.c.0.s8 %v6790
      %v6792 = vlaneseq
      %v6793 = vshrl.u32 %v6792, 7
      %v6794 = vsub.s32 %v6791, %v6793
      %v6795 = vrot.slane %v6088, %v6794
      %v6797 = vunpack.c.l.s4 1966171168
      %v6798 = vunpack.c.0.s8 %v6797
      %v6799 = vlaneseq
      %v6800 = vshrl.u32 %v6799, 7
      %v6801 = vsub.s32 %v6798, %v6800
      %v6802 = vrot.slane %v6788, %v6801
      %v6803 = vcombine.high %v6795, %v6795
      %v6804 = vcombine.high %v6802, %v6802
      %v6806 = vunpack.c.l.s4 1966171168
      %v6807 = vunpack.c.0.s8 %v6806
      %v6808 = vlaneseq
      %v6809 = vshrl.u32 %v6808, 7
      %v6810 = vsub.s32 %v6807, %v6809
      %v6811 = vrot.slane %v6795, %v6810
      %v6813 = vunpack.c.l.s4 1966171168
      %v6814 = vunpack.c.0.s8 %v6813
      %v6815 = vlaneseq
      %v6816 = vshrl.u32 %v6815, 7
      %v6817 = vsub.s32 %v6814, %v6816
      %v6818 = vrot.slane %v6802, %v6817
      %v6820 = vunpack.c.l.s4 1966171168
      %v6821 = vunpack.c.0.s8 %v6820
      %v6822 = vlaneseq
      %v6823 = vshrl.u32 %v6822, 7
      %v6824 = vsub.s32 %v6821, %v6823
      %v6825 = vrot.slane %v6803, %v6824
      %v6827 = vunpack.c.l.s4 1966171168
      %v6828 = vunpack.c.0.s8 %v6827
      %v6829 = vlaneseq
      %v6830 = vshrl.u32 %v6829, 7
      %v6831 = vsub.s32 %v6828, %v6830
      %v6832 = vrot.slane %v6804, %v6831
      %v6833 = vcombine.high %v6811, %v6811
      %v6834 = vcombine.high %v6818, %v6818
      %v6835 = vcombine.high %v6825, %v6825
      %v6836 = vcombine.high %v6832, %v6832
      %v6837 = vcombine.high %v6089, %v6089
      %v6839 = vunpack.c.l.s4 1966171168
      %v6840 = vunpack.c.0.s8 %v6839
      %v6841 = vlaneseq
      %v6842 = vshrl.u32 %v6841, 7
      %v6843 = vsub.s32 %v6840, %v6842
      %v6844 = vrot.slane %v6089, %v6843
      %v6846 = vunpack.c.l.s4 1966171168
      %v6847 = vunpack.c.0.s8 %v6846
      %v6848 = vlaneseq
      %v6849 = vshrl.u32 %v6848, 7
      %v6850 = vsub.s32 %v6847, %v6849
      %v6851 = vrot.slane %v6837, %v6850
      %v6852 = vcombine.high %v6844, %v6844
      %v6853 = vcombine.high %v6851, %v6851
      %v6855 = vunpack.c.l.s4 1966171168
      %v6856 = vunpack.c.0.s8 %v6855
      %v6857 = vlaneseq
      %v6858 = vshrl.u32 %v6857, 7
      %v6859 = vsub.s32 %v6856, %v6858
      %v6860 = vrot.slane %v6844, %v6859
      %v6862 = vunpack.c.l.s4 1966171168
      %v6863 = vunpack.c.0.s8 %v6862
      %v6864 = vlaneseq
      %v6865 = vshrl.u32 %v6864, 7
      %v6866 = vsub.s32 %v6863, %v6865
      %v6867 = vrot.slane %v6851, %v6866
      %v6869 = vunpack.c.l.s4 1966171168
      %v6870 = vunpack.c.0.s8 %v6869
      %v6871 = vlaneseq
      %v6872 = vshrl.u32 %v6871, 7
      %v6873 = vsub.s32 %v6870, %v6872
      %v6874 = vrot.slane %v6852, %v6873
      %v6876 = vunpack.c.l.s4 1966171168
      %v6877 = vunpack.c.0.s8 %v6876
      %v6878 = vlaneseq
      %v6879 = vshrl.u32 %v6878, 7
      %v6880 = vsub.s32 %v6877, %v6879
      %v6881 = vrot.slane %v6853, %v6880
      %v6882 = vcombine.high %v6860, %v6860
      %v6883 = vcombine.high %v6867, %v6867
      %v6884 = vcombine.high %v6874, %v6874
      %v6885 = vcombine.high %v6881, %v6881
      %v6886 = vcombine.high %v6090, %v6090
      %v6888 = vunpack.c.l.s4 1966171168
      %v6889 = vunpack.c.0.s8 %v6888
      %v6890 = vlaneseq
      %v6891 = vshrl.u32 %v6890, 7
      %v6892 = vsub.s32 %v6889, %v6891
      %v6893 = vrot.slane %v6090, %v6892
      %v6895 = vunpack.c.l.s4 1966171168
      %v6896 = vunpack.c.0.s8 %v6895
      %v6897 = vlaneseq
      %v6898 = vshrl.u32 %v6897, 7
      %v6899 = vsub.s32 %v6896, %v6898
      %v6900 = vrot.slane %v6886, %v6899
      %v6901 = vcombine.high %v6893, %v6893
      %v6902 = vcombine.high %v6900, %v6900
      %v6904 = vunpack.c.l.s4 1966171168
      %v6905 = vunpack.c.0.s8 %v6904
      %v6906 = vlaneseq
      %v6907 = vshrl.u32 %v6906, 7
      %v6908 = vsub.s32 %v6905, %v6907
      %v6909 = vrot.slane %v6893, %v6908
      %v6911 = vunpack.c.l.s4 1966171168
      %v6912 = vunpack.c.0.s8 %v6911
      %v6913 = vlaneseq
      %v6914 = vshrl.u32 %v6913, 7
      %v6915 = vsub.s32 %v6912, %v6914
      %v6916 = vrot.slane %v6900, %v6915
      %v6918 = vunpack.c.l.s4 1966171168
      %v6919 = vunpack.c.0.s8 %v6918
      %v6920 = vlaneseq
      %v6921 = vshrl.u32 %v6920, 7
      %v6922 = vsub.s32 %v6919, %v6921
      %v6923 = vrot.slane %v6901, %v6922
      %v6925 = vunpack.c.l.s4 1966171168
      %v6926 = vunpack.c.0.s8 %v6925
      %v6927 = vlaneseq
      %v6928 = vshrl.u32 %v6927, 7
      %v6929 = vsub.s32 %v6926, %v6928
      %v6930 = vrot.slane %v6902, %v6929
      %v6931 = vcombine.high %v6909, %v6909
      %v6932 = vcombine.high %v6916, %v6916
      %v6933 = vcombine.high %v6923, %v6923
      %v6934 = vcombine.high %v6930, %v6930
      %v6935 = vcombine.high %v6091, %v6091
      %v6937 = vunpack.c.l.s4 1966171168
      %v6938 = vunpack.c.0.s8 %v6937
      %v6939 = vlaneseq
      %v6940 = vshrl.u32 %v6939, 7
      %v6941 = vsub.s32 %v6938, %v6940
      %v6942 = vrot.slane %v6091, %v6941
      %v6944 = vunpack.c.l.s4 1966171168
      %v6945 = vunpack.c.0.s8 %v6944
      %v6946 = vlaneseq
      %v6947 = vshrl.u32 %v6946, 7
      %v6948 = vsub.s32 %v6945, %v6947
      %v6949 = vrot.slane %v6935, %v6948
      %v6950 = vcombine.high %v6942, %v6942
      %v6951 = vcombine.high %v6949, %v6949
      %v6953 = vunpack.c.l.s4 1966171168
      %v6954 = vunpack.c.0.s8 %v6953
      %v6955 = vlaneseq
      %v6956 = vshrl.u32 %v6955, 7
      %v6957 = vsub.s32 %v6954, %v6956
      %v6958 = vrot.slane %v6942, %v6957
      %v6960 = vunpack.c.l.s4 1966171168
      %v6961 = vunpack.c.0.s8 %v6960
      %v6962 = vlaneseq
      %v6963 = vshrl.u32 %v6962, 7
      %v6964 = vsub.s32 %v6961, %v6963
      %v6965 = vrot.slane %v6949, %v6964
      %v6967 = vunpack.c.l.s4 1966171168
      %v6968 = vunpack.c.0.s8 %v6967
      %v6969 = vlaneseq
      %v6970 = vshrl.u32 %v6969, 7
      %v6971 = vsub.s32 %v6968, %v6970
      %v6972 = vrot.slane %v6950, %v6971
      %v6974 = vunpack.c.l.s4 1966171168
      %v6975 = vunpack.c.0.s8 %v6974
      %v6976 = vlaneseq
      %v6977 = vshrl.u32 %v6976, 7
      %v6978 = vsub.s32 %v6975, %v6977
      %v6979 = vrot.slane %v6951, %v6978
      %v6980 = vcombine.high %v6958, %v6958
      %v6981 = vcombine.high %v6965, %v6965
      %v6982 = vcombine.high %v6972, %v6972
      %v6983 = vcombine.high %v6979, %v6979
      %v6984 = vcombine.high %v6092, %v6092
      %v6986 = vunpack.c.l.s4 1966171168
      %v6987 = vunpack.c.0.s8 %v6986
      %v6988 = vlaneseq
      %v6989 = vshrl.u32 %v6988, 7
      %v6990 = vsub.s32 %v6987, %v6989
      %v6991 = vrot.slane %v6092, %v6990
      %v6993 = vunpack.c.l.s4 1966171168
      %v6994 = vunpack.c.0.s8 %v6993
      %v6995 = vlaneseq
      %v6996 = vshrl.u32 %v6995, 7
      %v6997 = vsub.s32 %v6994, %v6996
      %v6998 = vrot.slane %v6984, %v6997
      %v6999 = vcombine.high %v6991, %v6991
      %v7000 = vcombine.high %v6998, %v6998
      %v7002 = vunpack.c.l.s4 1966171168
      %v7003 = vunpack.c.0.s8 %v7002
      %v7004 = vlaneseq
      %v7005 = vshrl.u32 %v7004, 7
      %v7006 = vsub.s32 %v7003, %v7005
      %v7007 = vrot.slane %v6991, %v7006
      %v7009 = vunpack.c.l.s4 1966171168
      %v7010 = vunpack.c.0.s8 %v7009
      %v7011 = vlaneseq
      %v7012 = vshrl.u32 %v7011, 7
      %v7013 = vsub.s32 %v7010, %v7012
      %v7014 = vrot.slane %v6998, %v7013
      %v7016 = vunpack.c.l.s4 1966171168
      %v7017 = vunpack.c.0.s8 %v7016
      %v7018 = vlaneseq
      %v7019 = vshrl.u32 %v7018, 7
      %v7020 = vsub.s32 %v7017, %v7019
      %v7021 = vrot.slane %v6999, %v7020
      %v7023 = vunpack.c.l.s4 1966171168
      %v7024 = vunpack.c.0.s8 %v7023
      %v7025 = vlaneseq
      %v7026 = vshrl.u32 %v7025, 7
      %v7027 = vsub.s32 %v7024, %v7026
      %v7028 = vrot.slane %v7000, %v7027
      %v7029 = vcombine.high %v7007, %v7007
      %v7030 = vcombine.high %v7014, %v7014
      %v7031 = vcombine.high %v7021, %v7021
      %v7032 = vcombine.high %v7028, %v7028
      %v7033 = vcombine.high %v6093, %v6093
      %v7035 = vunpack.c.l.s4 1966171168
      %v7036 = vunpack.c.0.s8 %v7035
      %v7037 = vlaneseq
      %v7038 = vshrl.u32 %v7037, 7
      %v7039 = vsub.s32 %v7036, %v7038
      %v7040 = vrot.slane %v6093, %v7039
      %v7042 = vunpack.c.l.s4 1966171168
      %v7043 = vunpack.c.0.s8 %v7042
      %v7044 = vlaneseq
      %v7045 = vshrl.u32 %v7044, 7
      %v7046 = vsub.s32 %v7043, %v7045
      %v7047 = vrot.slane %v7033, %v7046
      %v7048 = vcombine.high %v7040, %v7040
      %v7049 = vcombine.high %v7047, %v7047
      %v7051 = vunpack.c.l.s4 1966171168
      %v7052 = vunpack.c.0.s8 %v7051
      %v7053 = vlaneseq
      %v7054 = vshrl.u32 %v7053, 7
      %v7055 = vsub.s32 %v7052, %v7054
      %v7056 = vrot.slane %v7040, %v7055
      %v7058 = vunpack.c.l.s4 1966171168
      %v7059 = vunpack.c.0.s8 %v7058
      %v7060 = vlaneseq
      %v7061 = vshrl.u32 %v7060, 7
      %v7062 = vsub.s32 %v7059, %v7061
      %v7063 = vrot.slane %v7047, %v7062
      %v7065 = vunpack.c.l.s4 1966171168
      %v7066 = vunpack.c.0.s8 %v7065
      %v7067 = vlaneseq
      %v7068 = vshrl.u32 %v7067, 7
      %v7069 = vsub.s32 %v7066, %v7068
      %v7070 = vrot.slane %v7048, %v7069
      %v7072 = vunpack.c.l.s4 1966171168
      %v7073 = vunpack.c.0.s8 %v7072
      %v7074 = vlaneseq
      %v7075 = vshrl.u32 %v7074, 7
      %v7076 = vsub.s32 %v7073, %v7075
      %v7077 = vrot.slane %v7049, %v7076
      %v7078 = vcombine.high %v7056, %v7056
      %v7079 = vcombine.high %v7063, %v7063
      %v7080 = vcombine.high %v7070, %v7070
      %v7081 = vcombine.high %v7077, %v7077
      %v7082 = vcombine.high %v6094, %v6094
      %v7084 = vunpack.c.l.s4 1966171168
      %v7085 = vunpack.c.0.s8 %v7084
      %v7086 = vlaneseq
      %v7087 = vshrl.u32 %v7086, 7
      %v7088 = vsub.s32 %v7085, %v7087
      %v7089 = vrot.slane %v6094, %v7088
      %v7091 = vunpack.c.l.s4 1966171168
      %v7092 = vunpack.c.0.s8 %v7091
      %v7093 = vlaneseq
      %v7094 = vshrl.u32 %v7093, 7
      %v7095 = vsub.s32 %v7092, %v7094
      %v7096 = vrot.slane %v7082, %v7095
      %v7097 = vcombine.high %v7089, %v7089
      %v7098 = vcombine.high %v7096, %v7096
      %v7100 = vunpack.c.l.s4 1966171168
      %v7101 = vunpack.c.0.s8 %v7100
      %v7102 = vlaneseq
      %v7103 = vshrl.u32 %v7102, 7
      %v7104 = vsub.s32 %v7101, %v7103
      %v7105 = vrot.slane %v7089, %v7104
      %v7107 = vunpack.c.l.s4 1966171168
      %v7108 = vunpack.c.0.s8 %v7107
      %v7109 = vlaneseq
      %v7110 = vshrl.u32 %v7109, 7
      %v7111 = vsub.s32 %v7108, %v7110
      %v7112 = vrot.slane %v7096, %v7111
      %v7114 = vunpack.c.l.s4 1966171168
      %v7115 = vunpack.c.0.s8 %v7114
      %v7116 = vlaneseq
      %v7117 = vshrl.u32 %v7116, 7
      %v7118 = vsub.s32 %v7115, %v7117
      %v7119 = vrot.slane %v7097, %v7118
      %v7121 = vunpack.c.l.s4 1966171168
      %v7122 = vunpack.c.0.s8 %v7121
      %v7123 = vlaneseq
      %v7124 = vshrl.u32 %v7123, 7
      %v7125 = vsub.s32 %v7122, %v7124
      %v7126 = vrot.slane %v7098, %v7125
      %v7127 = vcombine.high %v7105, %v7105
      %v7128 = vcombine.high %v7112, %v7112
      %v7129 = vcombine.high %v7119, %v7119
      %v7130 = vcombine.high %v7126, %v7126
      %v7131 = vcombine.high %v6095, %v6095
      %v7133 = vunpack.c.l.s4 1966171168
      %v7134 = vunpack.c.0.s8 %v7133
      %v7135 = vlaneseq
      %v7136 = vshrl.u32 %v7135, 7
      %v7137 = vsub.s32 %v7134, %v7136
      %v7138 = vrot.slane %v6095, %v7137
      %v7140 = vunpack.c.l.s4 1966171168
      %v7141 = vunpack.c.0.s8 %v7140
      %v7142 = vlaneseq
      %v7143 = vshrl.u32 %v7142, 7
      %v7144 = vsub.s32 %v7141, %v7143
      %v7145 = vrot.slane %v7131, %v7144
      %v7146 = vcombine.high %v7138, %v7138
      %v7147 = vcombine.high %v7145, %v7145
      %v7149 = vunpack.c.l.s4 1966171168
      %v7150 = vunpack.c.0.s8 %v7149
      %v7151 = vlaneseq
      %v7152 = vshrl.u32 %v7151, 7
      %v7153 = vsub.s32 %v7150, %v7152
      %v7154 = vrot.slane %v7138, %v7153
      %v7156 = vunpack.c.l.s4 1966171168
      %v7157 = vunpack.c.0.s8 %v7156
      %v7158 = vlaneseq
      %v7159 = vshrl.u32 %v7158, 7
      %v7160 = vsub.s32 %v7157, %v7159
      %v7161 = vrot.slane %v7145, %v7160
      %v7163 = vunpack.c.l.s4 1966171168
      %v7164 = vunpack.c.0.s8 %v7163
      %v7165 = vlaneseq
      %v7166 = vshrl.u32 %v7165, 7
      %v7167 = vsub.s32 %v7164, %v7166
      %v7168 = vrot.slane %v7146, %v7167
      %v7170 = vunpack.c.l.s4 1966171168
      %v7171 = vunpack.c.0.s8 %v7170
      %v7172 = vlaneseq
      %v7173 = vshrl.u32 %v7172, 7
      %v7174 = vsub.s32 %v7171, %v7173
      %v7175 = vrot.slane %v7147, %v7174
      %v7176 = vcombine.high %v7154, %v7154
      %v7177 = vcombine.high %v7161, %v7161
      %v7178 = vcombine.high %v7168, %v7168
      %v7179 = vcombine.high %v7175, %v7175
      %v7180 = vcombine.high %v6096, %v6096
      %v7182 = vunpack.c.l.s4 1966171168
      %v7183 = vunpack.c.0.s8 %v7182
      %v7184 = vlaneseq
      %v7185 = vshrl.u32 %v7184, 7
      %v7186 = vsub.s32 %v7183, %v7185
      %v7187 = vrot.slane %v6096, %v7186
      %v7189 = vunpack.c.l.s4 1966171168
      %v7190 = vunpack.c.0.s8 %v7189
      %v7191 = vlaneseq
      %v7192 = vshrl.u32 %v7191, 7
      %v7193 = vsub.s32 %v7190, %v7192
      %v7194 = vrot.slane %v7180, %v7193
      %v7195 = vcombine.high %v7187, %v7187
      %v7196 = vcombine.high %v7194, %v7194
      %v7198 = vunpack.c.l.s4 1966171168
      %v7199 = vunpack.c.0.s8 %v7198
      %v7200 = vlaneseq
      %v7201 = vshrl.u32 %v7200, 7
      %v7202 = vsub.s32 %v7199, %v7201
      %v7203 = vrot.slane %v7187, %v7202
      %v7205 = vunpack.c.l.s4 1966171168
      %v7206 = vunpack.c.0.s8 %v7205
      %v7207 = vlaneseq
      %v7208 = vshrl.u32 %v7207, 7
      %v7209 = vsub.s32 %v7206, %v7208
      %v7210 = vrot.slane %v7194, %v7209
      %v7212 = vunpack.c.l.s4 1966171168
      %v7213 = vunpack.c.0.s8 %v7212
      %v7214 = vlaneseq
      %v7215 = vshrl.u32 %v7214, 7
      %v7216 = vsub.s32 %v7213, %v7215
      %v7217 = vrot.slane %v7195, %v7216
      %v7219 = vunpack.c.l.s4 1966171168
      %v7220 = vunpack.c.0.s8 %v7219
      %v7221 = vlaneseq
      %v7222 = vshrl.u32 %v7221, 7
      %v7223 = vsub.s32 %v7220, %v7222
      %v7224 = vrot.slane %v7196, %v7223
      %v7225 = vcombine.high %v7203, %v7203
      %v7226 = vcombine.high %v7210, %v7210
      %v7227 = vcombine.high %v7217, %v7217
      %v7228 = vcombine.high %v7224, %v7224
      %v7229 = vcombine.high %v6097, %v6097
      %v7231 = vunpack.c.l.s4 1966171168
      %v7232 = vunpack.c.0.s8 %v7231
      %v7233 = vlaneseq
      %v7234 = vshrl.u32 %v7233, 7
      %v7235 = vsub.s32 %v7232, %v7234
      %v7236 = vrot.slane %v6097, %v7235
      %v7238 = vunpack.c.l.s4 1966171168
      %v7239 = vunpack.c.0.s8 %v7238
      %v7240 = vlaneseq
      %v7241 = vshrl.u32 %v7240, 7
      %v7242 = vsub.s32 %v7239, %v7241
      %v7243 = vrot.slane %v7229, %v7242
      %v7244 = vcombine.high %v7236, %v7236
      %v7245 = vcombine.high %v7243, %v7243
      %v7247 = vunpack.c.l.s4 1966171168
      %v7248 = vunpack.c.0.s8 %v7247
      %v7249 = vlaneseq
      %v7250 = vshrl.u32 %v7249, 7
      %v7251 = vsub.s32 %v7248, %v7250
      %v7252 = vrot.slane %v7236, %v7251
      %v7254 = vunpack.c.l.s4 1966171168
      %v7255 = vunpack.c.0.s8 %v7254
      %v7256 = vlaneseq
      %v7257 = vshrl.u32 %v7256, 7
      %v7258 = vsub.s32 %v7255, %v7257
      %v7259 = vrot.slane %v7243, %v7258
      %v7261 = vunpack.c.l.s4 1966171168
      %v7262 = vunpack.c.0.s8 %v7261
      %v7263 = vlaneseq
      %v7264 = vshrl.u32 %v7263, 7
      %v7265 = vsub.s32 %v7262, %v7264
      %v7266 = vrot.slane %v7244, %v7265
      %v7268 = vunpack.c.l.s4 1966171168
      %v7269 = vunpack.c.0.s8 %v7268
      %v7270 = vlaneseq
      %v7271 = vshrl.u32 %v7270, 7
      %v7272 = vsub.s32 %v7269, %v7271
      %v7273 = vrot.slane %v7245, %v7272
      %v7274 = vcombine.high %v7252, %v7252
      %v7275 = vcombine.high %v7259, %v7259
      %v7276 = vcombine.high %v7266, %v7266
      %v7277 = vcombine.high %v7273, %v7273
      %v7278 = vcombine.high %v6098, %v6098
      %v7280 = vunpack.c.l.s4 1966171168
      %v7281 = vunpack.c.0.s8 %v7280
      %v7282 = vlaneseq
      %v7283 = vshrl.u32 %v7282, 7
      %v7284 = vsub.s32 %v7281, %v7283
      %v7285 = vrot.slane %v6098, %v7284
      %v7287 = vunpack.c.l.s4 1966171168
      %v7288 = vunpack.c.0.s8 %v7287
      %v7289 = vlaneseq
      %v7290 = vshrl.u32 %v7289, 7
      %v7291 = vsub.s32 %v7288, %v7290
      %v7292 = vrot.slane %v7278, %v7291
      %v7293 = vcombine.high %v7285, %v7285
      %v7294 = vcombine.high %v7292, %v7292
      %v7296 = vunpack.c.l.s4 1966171168
      %v7297 = vunpack.c.0.s8 %v7296
      %v7298 = vlaneseq
      %v7299 = vshrl.u32 %v7298, 7
      %v7300 = vsub.s32 %v7297, %v7299
      %v7301 = vrot.slane %v7285, %v7300
      %v7303 = vunpack.c.l.s4 1966171168
      %v7304 = vunpack.c.0.s8 %v7303
      %v7305 = vlaneseq
      %v7306 = vshrl.u32 %v7305, 7
      %v7307 = vsub.s32 %v7304, %v7306
      %v7308 = vrot.slane %v7292, %v7307
      %v7310 = vunpack.c.l.s4 1966171168
      %v7311 = vunpack.c.0.s8 %v7310
      %v7312 = vlaneseq
      %v7313 = vshrl.u32 %v7312, 7
      %v7314 = vsub.s32 %v7311, %v7313
      %v7315 = vrot.slane %v7293, %v7314
      %v7317 = vunpack.c.l.s4 1966171168
      %v7318 = vunpack.c.0.s8 %v7317
      %v7319 = vlaneseq
      %v7320 = vshrl.u32 %v7319, 7
      %v7321 = vsub.s32 %v7318, %v7320
      %v7322 = vrot.slane %v7294, %v7321
      %v7323 = vcombine.high %v7301, %v7301
      %v7324 = vcombine.high %v7308, %v7308
      %v7325 = vcombine.high %v7315, %v7315
      %v7326 = vcombine.high %v7322, %v7322
      %v7327 = vcombine.high %v6099, %v6099
      %v7329 = vunpack.c.l.s4 1966171168
      %v7330 = vunpack.c.0.s8 %v7329
      %v7331 = vlaneseq
      %v7332 = vshrl.u32 %v7331, 7
      %v7333 = vsub.s32 %v7330, %v7332
      %v7334 = vrot.slane %v6099, %v7333
      %v7336 = vunpack.c.l.s4 1966171168
      %v7337 = vunpack.c.0.s8 %v7336
      %v7338 = vlaneseq
      %v7339 = vshrl.u32 %v7338, 7
      %v7340 = vsub.s32 %v7337, %v7339
      %v7341 = vrot.slane %v7327, %v7340
      %v7342 = vcombine.high %v7334, %v7334
      %v7343 = vcombine.high %v7341, %v7341
      %v7345 = vunpack.c.l.s4 1966171168
      %v7346 = vunpack.c.0.s8 %v7345
      %v7347 = vlaneseq
      %v7348 = vshrl.u32 %v7347, 7
      %v7349 = vsub.s32 %v7346, %v7348
      %v7350 = vrot.slane %v7334, %v7349
      %v7352 = vunpack.c.l.s4 1966171168
      %v7353 = vunpack.c.0.s8 %v7352
      %v7354 = vlaneseq
      %v7355 = vshrl.u32 %v7354, 7
      %v7356 = vsub.s32 %v7353, %v7355
      %v7357 = vrot.slane %v7341, %v7356
      %v7359 = vunpack.c.l.s4 1966171168
      %v7360 = vunpack.c.0.s8 %v7359
      %v7361 = vlaneseq
      %v7362 = vshrl.u32 %v7361, 7
      %v7363 = vsub.s32 %v7360, %v7362
      %v7364 = vrot.slane %v7342, %v7363
      %v7366 = vunpack.c.l.s4 1966171168
      %v7367 = vunpack.c.0.s8 %v7366
      %v7368 = vlaneseq
      %v7369 = vshrl.u32 %v7368, 7
      %v7370 = vsub.s32 %v7367, %v7369
      %v7371 = vrot.slane %v7343, %v7370
      %v7372 = vcombine.high %v7350, %v7350
      %v7373 = vcombine.high %v7357, %v7357
      %v7374 = vcombine.high %v7364, %v7364
      %v7375 = vcombine.high %v7371, %v7371
      %v7376 = vcombine.high %v6100, %v6100
      %v7378 = vunpack.c.l.s4 1966171168
      %v7379 = vunpack.c.0.s8 %v7378
      %v7380 = vlaneseq
      %v7381 = vshrl.u32 %v7380, 7
      %v7382 = vsub.s32 %v7379, %v7381
      %v7383 = vrot.slane %v6100, %v7382
      %v7385 = vunpack.c.l.s4 1966171168
      %v7386 = vunpack.c.0.s8 %v7385
      %v7387 = vlaneseq
      %v7388 = vshrl.u32 %v7387, 7
      %v7389 = vsub.s32 %v7386, %v7388
      %v7390 = vrot.slane %v7376, %v7389
      %v7391 = vcombine.high %v7383, %v7383
      %v7392 = vcombine.high %v7390, %v7390
      %v7394 = vunpack.c.l.s4 1966171168
      %v7395 = vunpack.c.0.s8 %v7394
      %v7396 = vlaneseq
      %v7397 = vshrl.u32 %v7396, 7
      %v7398 = vsub.s32 %v7395, %v7397
      %v7399 = vrot.slane %v7383, %v7398
      %v7401 = vunpack.c.l.s4 1966171168
      %v7402 = vunpack.c.0.s8 %v7401
      %v7403 = vlaneseq
      %v7404 = vshrl.u32 %v7403, 7
      %v7405 = vsub.s32 %v7402, %v7404
      %v7406 = vrot.slane %v7390, %v7405
      %v7408 = vunpack.c.l.s4 1966171168
      %v7409 = vunpack.c.0.s8 %v7408
      %v7410 = vlaneseq
      %v7411 = vshrl.u32 %v7410, 7
      %v7412 = vsub.s32 %v7409, %v7411
      %v7413 = vrot.slane %v7391, %v7412
      %v7415 = vunpack.c.l.s4 1966171168
      %v7416 = vunpack.c.0.s8 %v7415
      %v7417 = vlaneseq
      %v7418 = vshrl.u32 %v7417, 7
      %v7419 = vsub.s32 %v7416, %v7418
      %v7420 = vrot.slane %v7392, %v7419
      %v7421 = vcombine.high %v7399, %v7399
      %v7422 = vcombine.high %v7406, %v7406
      %v7423 = vcombine.high %v7413, %v7413
      %v7424 = vcombine.high %v7420, %v7420
      %v7425 = vcombine.high %v6101, %v6101
      %v7427 = vunpack.c.l.s4 1966171168
      %v7428 = vunpack.c.0.s8 %v7427
      %v7429 = vlaneseq
      %v7430 = vshrl.u32 %v7429, 7
      %v7431 = vsub.s32 %v7428, %v7430
      %v7432 = vrot.slane %v6101, %v7431
      %v7434 = vunpack.c.l.s4 1966171168
      %v7435 = vunpack.c.0.s8 %v7434
      %v7436 = vlaneseq
      %v7437 = vshrl.u32 %v7436, 7
      %v7438 = vsub.s32 %v7435, %v7437
      %v7439 = vrot.slane %v7425, %v7438
      %v7440 = vcombine.high %v7432, %v7432
      %v7441 = vcombine.high %v7439, %v7439
      %v7443 = vunpack.c.l.s4 1966171168
      %v7444 = vunpack.c.0.s8 %v7443
      %v7445 = vlaneseq
      %v7446 = vshrl.u32 %v7445, 7
      %v7447 = vsub.s32 %v7444, %v7446
      %v7448 = vrot.slane %v7432, %v7447
      %v7450 = vunpack.c.l.s4 1966171168
      %v7451 = vunpack.c.0.s8 %v7450
      %v7452 = vlaneseq
      %v7453 = vshrl.u32 %v7452, 7
      %v7454 = vsub.s32 %v7451, %v7453
      %v7455 = vrot.slane %v7439, %v7454
      %v7457 = vunpack.c.l.s4 1966171168
      %v7458 = vunpack.c.0.s8 %v7457
      %v7459 = vlaneseq
      %v7460 = vshrl.u32 %v7459, 7
      %v7461 = vsub.s32 %v7458, %v7460
      %v7462 = vrot.slane %v7440, %v7461
      %v7464 = vunpack.c.l.s4 1966171168
      %v7465 = vunpack.c.0.s8 %v7464
      %v7466 = vlaneseq
      %v7467 = vshrl.u32 %v7466, 7
      %v7468 = vsub.s32 %v7465, %v7467
      %v7469 = vrot.slane %v7441, %v7468
      %v7470 = vcombine.high %v7448, %v7448
      %v7471 = vcombine.high %v7455, %v7455
      %v7472 = vcombine.high %v7462, %v7462
      %v7473 = vcombine.high %v7469, %v7469
      %v7474 = vcombine.high %v6102, %v6102
      %v7476 = vunpack.c.l.s4 1966171168
      %v7477 = vunpack.c.0.s8 %v7476
      %v7478 = vlaneseq
      %v7479 = vshrl.u32 %v7478, 7
      %v7480 = vsub.s32 %v7477, %v7479
      %v7481 = vrot.slane %v6102, %v7480
      %v7483 = vunpack.c.l.s4 1966171168
      %v7484 = vunpack.c.0.s8 %v7483
      %v7485 = vlaneseq
      %v7486 = vshrl.u32 %v7485, 7
      %v7487 = vsub.s32 %v7484, %v7486
      %v7488 = vrot.slane %v7474, %v7487
      %v7489 = vcombine.high %v7481, %v7481
      %v7490 = vcombine.high %v7488, %v7488
      %v7492 = vunpack.c.l.s4 1966171168
      %v7493 = vunpack.c.0.s8 %v7492
      %v7494 = vlaneseq
      %v7495 = vshrl.u32 %v7494, 7
      %v7496 = vsub.s32 %v7493, %v7495
      %v7497 = vrot.slane %v7481, %v7496
      %v7499 = vunpack.c.l.s4 1966171168
      %v7500 = vunpack.c.0.s8 %v7499
      %v7501 = vlaneseq
      %v7502 = vshrl.u32 %v7501, 7
      %v7503 = vsub.s32 %v7500, %v7502
      %v7504 = vrot.slane %v7488, %v7503
      %v7506 = vunpack.c.l.s4 1966171168
      %v7507 = vunpack.c.0.s8 %v7506
      %v7508 = vlaneseq
      %v7509 = vshrl.u32 %v7508, 7
      %v7510 = vsub.s32 %v7507, %v7509
      %v7511 = vrot.slane %v7489, %v7510
      %v7513 = vunpack.c.l.s4 1966171168
      %v7514 = vunpack.c.0.s8 %v7513
      %v7515 = vlaneseq
      %v7516 = vshrl.u32 %v7515, 7
      %v7517 = vsub.s32 %v7514, %v7516
      %v7518 = vrot.slane %v7490, %v7517
      %v7519 = vcombine.high %v7497, %v7497
      %v7520 = vcombine.high %v7504, %v7504
      %v7521 = vcombine.high %v7511, %v7511
      %v7522 = vcombine.high %v7518, %v7518
      %v7523 = vcombine.high %v6103, %v6103
      %v7525 = vunpack.c.l.s4 1966171168
      %v7526 = vunpack.c.0.s8 %v7525
      %v7527 = vlaneseq
      %v7528 = vshrl.u32 %v7527, 7
      %v7529 = vsub.s32 %v7526, %v7528
      %v7530 = vrot.slane %v6103, %v7529
      %v7532 = vunpack.c.l.s4 1966171168
      %v7533 = vunpack.c.0.s8 %v7532
      %v7534 = vlaneseq
      %v7535 = vshrl.u32 %v7534, 7
      %v7536 = vsub.s32 %v7533, %v7535
      %v7537 = vrot.slane %v7523, %v7536
      %v7538 = vcombine.high %v7530, %v7530
      %v7539 = vcombine.high %v7537, %v7537
      %v7541 = vunpack.c.l.s4 1966171168
      %v7542 = vunpack.c.0.s8 %v7541
      %v7543 = vlaneseq
      %v7544 = vshrl.u32 %v7543, 7
      %v7545 = vsub.s32 %v7542, %v7544
      %v7546 = vrot.slane %v7530, %v7545
      %v7548 = vunpack.c.l.s4 1966171168
      %v7549 = vunpack.c.0.s8 %v7548
      %v7550 = vlaneseq
      %v7551 = vshrl.u32 %v7550, 7
      %v7552 = vsub.s32 %v7549, %v7551
      %v7553 = vrot.slane %v7537, %v7552
      %v7555 = vunpack.c.l.s4 1966171168
      %v7556 = vunpack.c.0.s8 %v7555
      %v7557 = vlaneseq
      %v7558 = vshrl.u32 %v7557, 7
      %v7559 = vsub.s32 %v7556, %v7558
      %v7560 = vrot.slane %v7538, %v7559
      %v7562 = vunpack.c.l.s4 1966171168
      %v7563 = vunpack.c.0.s8 %v7562
      %v7564 = vlaneseq
      %v7565 = vshrl.u32 %v7564, 7
      %v7566 = vsub.s32 %v7563, %v7565
      %v7567 = vrot.slane %v7539, %v7566
      %v7568 = vcombine.high %v7546, %v7546
      %v7569 = vcombine.high %v7553, %v7553
      %v7570 = vcombine.high %v7560, %v7560
      %v7571 = vcombine.high %v7567, %v7567
      %v7572 = vcombine.high %v6104, %v6104
      %v7574 = vunpack.c.l.s4 1966171168
      %v7575 = vunpack.c.0.s8 %v7574
      %v7576 = vlaneseq
      %v7577 = vshrl.u32 %v7576, 7
      %v7578 = vsub.s32 %v7575, %v7577
      %v7579 = vrot.slane %v6104, %v7578
      %v7581 = vunpack.c.l.s4 1966171168
      %v7582 = vunpack.c.0.s8 %v7581
      %v7583 = vlaneseq
      %v7584 = vshrl.u32 %v7583, 7
      %v7585 = vsub.s32 %v7582, %v7584
      %v7586 = vrot.slane %v7572, %v7585
      %v7587 = vcombine.high %v7579, %v7579
      %v7588 = vcombine.high %v7586, %v7586
      %v7590 = vunpack.c.l.s4 1966171168
      %v7591 = vunpack.c.0.s8 %v7590
      %v7592 = vlaneseq
      %v7593 = vshrl.u32 %v7592, 7
      %v7594 = vsub.s32 %v7591, %v7593
      %v7595 = vrot.slane %v7579, %v7594
      %v7597 = vunpack.c.l.s4 1966171168
      %v7598 = vunpack.c.0.s8 %v7597
      %v7599 = vlaneseq
      %v7600 = vshrl.u32 %v7599, 7
      %v7601 = vsub.s32 %v7598, %v7600
      %v7602 = vrot.slane %v7586, %v7601
      %v7604 = vunpack.c.l.s4 1966171168
      %v7605 = vunpack.c.0.s8 %v7604
      %v7606 = vlaneseq
      %v7607 = vshrl.u32 %v7606, 7
      %v7608 = vsub.s32 %v7605, %v7607
      %v7609 = vrot.slane %v7587, %v7608
      %v7611 = vunpack.c.l.s4 1966171168
      %v7612 = vunpack.c.0.s8 %v7611
      %v7613 = vlaneseq
      %v7614 = vshrl.u32 %v7613, 7
      %v7615 = vsub.s32 %v7612, %v7614
      %v7616 = vrot.slane %v7588, %v7615
      %v7617 = vcombine.high %v7595, %v7595
      %v7618 = vcombine.high %v7602, %v7602
      %v7619 = vcombine.high %v7609, %v7609
      %v7620 = vcombine.high %v7616, %v7616
      %v7621 = vcombine.high %v6105, %v6105
      %v7623 = vunpack.c.l.s4 1966171168
      %v7624 = vunpack.c.0.s8 %v7623
      %v7625 = vlaneseq
      %v7626 = vshrl.u32 %v7625, 7
      %v7627 = vsub.s32 %v7624, %v7626
      %v7628 = vrot.slane %v6105, %v7627
      %v7630 = vunpack.c.l.s4 1966171168
      %v7631 = vunpack.c.0.s8 %v7630
      %v7632 = vlaneseq
      %v7633 = vshrl.u32 %v7632, 7
      %v7634 = vsub.s32 %v7631, %v7633
      %v7635 = vrot.slane %v7621, %v7634
      %v7636 = vcombine.high %v7628, %v7628
      %v7637 = vcombine.high %v7635, %v7635
      %v7639 = vunpack.c.l.s4 1966171168
      %v7640 = vunpack.c.0.s8 %v7639
      %v7641 = vlaneseq
      %v7642 = vshrl.u32 %v7641, 7
      %v7643 = vsub.s32 %v7640, %v7642
      %v7644 = vrot.slane %v7628, %v7643
      %v7646 = vunpack.c.l.s4 1966171168
      %v7647 = vunpack.c.0.s8 %v7646
      %v7648 = vlaneseq
      %v7649 = vshrl.u32 %v7648, 7
      %v7650 = vsub.s32 %v7647, %v7649
      %v7651 = vrot.slane %v7635, %v7650
      %v7653 = vunpack.c.l.s4 1966171168
      %v7654 = vunpack.c.0.s8 %v7653
      %v7655 = vlaneseq
      %v7656 = vshrl.u32 %v7655, 7
      %v7657 = vsub.s32 %v7654, %v7656
      %v7658 = vrot.slane %v7636, %v7657
      %v7660 = vunpack.c.l.s4 1966171168
      %v7661 = vunpack.c.0.s8 %v7660
      %v7662 = vlaneseq
      %v7663 = vshrl.u32 %v7662, 7
      %v7664 = vsub.s32 %v7661, %v7663
      %v7665 = vrot.slane %v7637, %v7664
      %v7666 = vcombine.high %v7644, %v7644
      %v7667 = vcombine.high %v7651, %v7651
      %v7668 = vcombine.high %v7658, %v7658
      %v7669 = vcombine.high %v7665, %v7665
      %v7670 = vcombine.high %v6106, %v6106
      %v7672 = vunpack.c.l.s4 1966171168
      %v7673 = vunpack.c.0.s8 %v7672
      %v7674 = vlaneseq
      %v7675 = vshrl.u32 %v7674, 7
      %v7676 = vsub.s32 %v7673, %v7675
      %v7677 = vrot.slane %v6106, %v7676
      %v7679 = vunpack.c.l.s4 1966171168
      %v7680 = vunpack.c.0.s8 %v7679
      %v7681 = vlaneseq
      %v7682 = vshrl.u32 %v7681, 7
      %v7683 = vsub.s32 %v7680, %v7682
      %v7684 = vrot.slane %v7670, %v7683
      %v7685 = vcombine.high %v7677, %v7677
      %v7686 = vcombine.high %v7684, %v7684
      %v7688 = vunpack.c.l.s4 1966171168
      %v7689 = vunpack.c.0.s8 %v7688
      %v7690 = vlaneseq
      %v7691 = vshrl.u32 %v7690, 7
      %v7692 = vsub.s32 %v7689, %v7691
      %v7693 = vrot.slane %v7677, %v7692
      %v7695 = vunpack.c.l.s4 1966171168
      %v7696 = vunpack.c.0.s8 %v7695
      %v7697 = vlaneseq
      %v7698 = vshrl.u32 %v7697, 7
      %v7699 = vsub.s32 %v7696, %v7698
      %v7700 = vrot.slane %v7684, %v7699
      %v7702 = vunpack.c.l.s4 1966171168
      %v7703 = vunpack.c.0.s8 %v7702
      %v7704 = vlaneseq
      %v7705 = vshrl.u32 %v7704, 7
      %v7706 = vsub.s32 %v7703, %v7705
      %v7707 = vrot.slane %v7685, %v7706
      %v7709 = vunpack.c.l.s4 1966171168
      %v7710 = vunpack.c.0.s8 %v7709
      %v7711 = vlaneseq
      %v7712 = vshrl.u32 %v7711, 7
      %v7713 = vsub.s32 %v7710, %v7712
      %v7714 = vrot.slane %v7686, %v7713
      %v7715 = vcombine.high %v7693, %v7693
      %v7716 = vcombine.high %v7700, %v7700
      %v7717 = vcombine.high %v7707, %v7707
      %v7718 = vcombine.high %v7714, %v7714
      %v7719 = vcombine.high %v6107, %v6107
      %v7721 = vunpack.c.l.s4 1966171168
      %v7722 = vunpack.c.0.s8 %v7721
      %v7723 = vlaneseq
      %v7724 = vshrl.u32 %v7723, 7
      %v7725 = vsub.s32 %v7722, %v7724
      %v7726 = vrot.slane %v6107, %v7725
      %v7728 = vunpack.c.l.s4 1966171168
      %v7729 = vunpack.c.0.s8 %v7728
      %v7730 = vlaneseq
      %v7731 = vshrl.u32 %v7730, 7
      %v7732 = vsub.s32 %v7729, %v7731
      %v7733 = vrot.slane %v7719, %v7732
      %v7734 = vcombine.high %v7726, %v7726
      %v7735 = vcombine.high %v7733, %v7733
      %v7737 = vunpack.c.l.s4 1966171168
      %v7738 = vunpack.c.0.s8 %v7737
      %v7739 = vlaneseq
      %v7740 = vshrl.u32 %v7739, 7
      %v7741 = vsub.s32 %v7738, %v7740
      %v7742 = vrot.slane %v7726, %v7741
      %v7744 = vunpack.c.l.s4 1966171168
      %v7745 = vunpack.c.0.s8 %v7744
      %v7746 = vlaneseq
      %v7747 = vshrl.u32 %v7746, 7
      %v7748 = vsub.s32 %v7745, %v7747
      %v7749 = vrot.slane %v7733, %v7748
      %v7751 = vunpack.c.l.s4 1966171168
      %v7752 = vunpack.c.0.s8 %v7751
      %v7753 = vlaneseq
      %v7754 = vshrl.u32 %v7753, 7
      %v7755 = vsub.s32 %v7752, %v7754
      %v7756 = vrot.slane %v7734, %v7755
      %v7758 = vunpack.c.l.s4 1966171168
      %v7759 = vunpack.c.0.s8 %v7758
      %v7760 = vlaneseq
      %v7761 = vshrl.u32 %v7760, 7
      %v7762 = vsub.s32 %v7759, %v7761
      %v7763 = vrot.slane %v7735, %v7762
      %v7764 = vcombine.high %v7742, %v7742
      %v7765 = vcombine.high %v7749, %v7749
      %v7766 = vcombine.high %v7756, %v7756
      %v7767 = vcombine.high %v7763, %v7763
      %v7768 = vcombine.high %v6108, %v6108
      %v7770 = vunpack.c.l.s4 1966171168
      %v7771 = vunpack.c.0.s8 %v7770
      %v7772 = vlaneseq
      %v7773 = vshrl.u32 %v7772, 7
      %v7774 = vsub.s32 %v7771, %v7773
      %v7775 = vrot.slane %v6108, %v7774
      %v7777 = vunpack.c.l.s4 1966171168
      %v7778 = vunpack.c.0.s8 %v7777
      %v7779 = vlaneseq
      %v7780 = vshrl.u32 %v7779, 7
      %v7781 = vsub.s32 %v7778, %v7780
      %v7782 = vrot.slane %v7768, %v7781
      %v7783 = vcombine.high %v7775, %v7775
      %v7784 = vcombine.high %v7782, %v7782
      %v7786 = vunpack.c.l.s4 1966171168
      %v7787 = vunpack.c.0.s8 %v7786
      %v7788 = vlaneseq
      %v7789 = vshrl.u32 %v7788, 7
      %v7790 = vsub.s32 %v7787, %v7789
      %v7791 = vrot.slane %v7775, %v7790
      %v7793 = vunpack.c.l.s4 1966171168
      %v7794 = vunpack.c.0.s8 %v7793
      %v7795 = vlaneseq
      %v7796 = vshrl.u32 %v7795, 7
      %v7797 = vsub.s32 %v7794, %v7796
      %v7798 = vrot.slane %v7782, %v7797
      %v7800 = vunpack.c.l.s4 1966171168
      %v7801 = vunpack.c.0.s8 %v7800
      %v7802 = vlaneseq
      %v7803 = vshrl.u32 %v7802, 7
      %v7804 = vsub.s32 %v7801, %v7803
      %v7805 = vrot.slane %v7783, %v7804
      %v7807 = vunpack.c.l.s4 1966171168
      %v7808 = vunpack.c.0.s8 %v7807
      %v7809 = vlaneseq
      %v7810 = vshrl.u32 %v7809, 7
      %v7811 = vsub.s32 %v7808, %v7810
      %v7812 = vrot.slane %v7784, %v7811
      %v7813 = vcombine.high %v7791, %v7791
      %v7814 = vcombine.high %v7798, %v7798
      %v7815 = vcombine.high %v7805, %v7805
      %v7816 = vcombine.high %v7812, %v7812
      %v7817 = vcombine.high %v6109, %v6109
      %v7819 = vunpack.c.l.s4 1966171168
      %v7820 = vunpack.c.0.s8 %v7819
      %v7821 = vlaneseq
      %v7822 = vshrl.u32 %v7821, 7
      %v7823 = vsub.s32 %v7820, %v7822
      %v7824 = vrot.slane %v6109, %v7823
      %v7826 = vunpack.c.l.s4 1966171168
      %v7827 = vunpack.c.0.s8 %v7826
      %v7828 = vlaneseq
      %v7829 = vshrl.u32 %v7828, 7
      %v7830 = vsub.s32 %v7827, %v7829
      %v7831 = vrot.slane %v7817, %v7830
      %v7832 = vcombine.high %v7824, %v7824
      %v7833 = vcombine.high %v7831, %v7831
      %v7835 = vunpack.c.l.s4 1966171168
      %v7836 = vunpack.c.0.s8 %v7835
      %v7837 = vlaneseq
      %v7838 = vshrl.u32 %v7837, 7
      %v7839 = vsub.s32 %v7836, %v7838
      %v7840 = vrot.slane %v7824, %v7839
      %v7842 = vunpack.c.l.s4 1966171168
      %v7843 = vunpack.c.0.s8 %v7842
      %v7844 = vlaneseq
      %v7845 = vshrl.u32 %v7844, 7
      %v7846 = vsub.s32 %v7843, %v7845
      %v7847 = vrot.slane %v7831, %v7846
      %v7849 = vunpack.c.l.s4 1966171168
      %v7850 = vunpack.c.0.s8 %v7849
      %v7851 = vlaneseq
      %v7852 = vshrl.u32 %v7851, 7
      %v7853 = vsub.s32 %v7850, %v7852
      %v7854 = vrot.slane %v7832, %v7853
      %v7856 = vunpack.c.l.s4 1966171168
      %v7857 = vunpack.c.0.s8 %v7856
      %v7858 = vlaneseq
      %v7859 = vshrl.u32 %v7858, 7
      %v7860 = vsub.s32 %v7857, %v7859
      %v7861 = vrot.slane %v7833, %v7860
      %v7862 = vcombine.high %v7840, %v7840
      %v7863 = vcombine.high %v7847, %v7847
      %v7864 = vcombine.high %v7854, %v7854
      %v7865 = vcombine.high %v7861, %v7861
      %v7866 = vcombine.high %v6110, %v6110
      %v7868 = vunpack.c.l.s4 1966171168
      %v7869 = vunpack.c.0.s8 %v7868
      %v7870 = vlaneseq
      %v7871 = vshrl.u32 %v7870, 7
      %v7872 = vsub.s32 %v7869, %v7871
      %v7873 = vrot.slane %v6110, %v7872
      %v7875 = vunpack.c.l.s4 1966171168
      %v7876 = vunpack.c.0.s8 %v7875
      %v7877 = vlaneseq
      %v7878 = vshrl.u32 %v7877, 7
      %v7879 = vsub.s32 %v7876, %v7878
      %v7880 = vrot.slane %v7866, %v7879
      %v7881 = vcombine.high %v7873, %v7873
      %v7882 = vcombine.high %v7880, %v7880
      %v7884 = vunpack.c.l.s4 1966171168
      %v7885 = vunpack.c.0.s8 %v7884
      %v7886 = vlaneseq
      %v7887 = vshrl.u32 %v7886, 7
      %v7888 = vsub.s32 %v7885, %v7887
      %v7889 = vrot.slane %v7873, %v7888
      %v7891 = vunpack.c.l.s4 1966171168
      %v7892 = vunpack.c.0.s8 %v7891
      %v7893 = vlaneseq
      %v7894 = vshrl.u32 %v7893, 7
      %v7895 = vsub.s32 %v7892, %v7894
      %v7896 = vrot.slane %v7880, %v7895
      %v7898 = vunpack.c.l.s4 1966171168
      %v7899 = vunpack.c.0.s8 %v7898
      %v7900 = vlaneseq
      %v7901 = vshrl.u32 %v7900, 7
      %v7902 = vsub.s32 %v7899, %v7901
      %v7903 = vrot.slane %v7881, %v7902
      %v7905 = vunpack.c.l.s4 1966171168
      %v7906 = vunpack.c.0.s8 %v7905
      %v7907 = vlaneseq
      %v7908 = vshrl.u32 %v7907, 7
      %v7909 = vsub.s32 %v7906, %v7908
      %v7910 = vrot.slane %v7882, %v7909
      %v7911 = vcombine.high %v7889, %v7889
      %v7912 = vcombine.high %v7896, %v7896
      %v7913 = vcombine.high %v7903, %v7903
      %v7914 = vcombine.high %v7910, %v7910
      %v7915 = vcombine.high %v6111, %v6111
      %v7917 = vunpack.c.l.s4 1966171168
      %v7918 = vunpack.c.0.s8 %v7917
      %v7919 = vlaneseq
      %v7920 = vshrl.u32 %v7919, 7
      %v7921 = vsub.s32 %v7918, %v7920
      %v7922 = vrot.slane %v6111, %v7921
      %v7924 = vunpack.c.l.s4 1966171168
      %v7925 = vunpack.c.0.s8 %v7924
      %v7926 = vlaneseq
      %v7927 = vshrl.u32 %v7926, 7
      %v7928 = vsub.s32 %v7925, %v7927
      %v7929 = vrot.slane %v7915, %v7928
      %v7930 = vcombine.high %v7922, %v7922
      %v7931 = vcombine.high %v7929, %v7929
      %v7933 = vunpack.c.l.s4 1966171168
      %v7934 = vunpack.c.0.s8 %v7933
      %v7935 = vlaneseq
      %v7936 = vshrl.u32 %v7935, 7
      %v7937 = vsub.s32 %v7934, %v7936
      %v7938 = vrot.slane %v7922, %v7937
      %v7940 = vunpack.c.l.s4 1966171168
      %v7941 = vunpack.c.0.s8 %v7940
      %v7942 = vlaneseq
      %v7943 = vshrl.u32 %v7942, 7
      %v7944 = vsub.s32 %v7941, %v7943
      %v7945 = vrot.slane %v7929, %v7944
      %v7947 = vunpack.c.l.s4 1966171168
      %v7948 = vunpack.c.0.s8 %v7947
      %v7949 = vlaneseq
      %v7950 = vshrl.u32 %v7949, 7
      %v7951 = vsub.s32 %v7948, %v7950
      %v7952 = vrot.slane %v7930, %v7951
      %v7954 = vunpack.c.l.s4 1966171168
      %v7955 = vunpack.c.0.s8 %v7954
      %v7956 = vlaneseq
      %v7957 = vshrl.u32 %v7956, 7
      %v7958 = vsub.s32 %v7955, %v7957
      %v7959 = vrot.slane %v7931, %v7958
      %v7960 = vcombine.high %v7938, %v7938
      %v7961 = vcombine.high %v7945, %v7945
      %v7962 = vcombine.high %v7952, %v7952
      %v7963 = vcombine.high %v7959, %v7959
      %v7964 = vcombine.high %v6112, %v6112
      %v7966 = vunpack.c.l.s4 1966171168
      %v7967 = vunpack.c.0.s8 %v7966
      %v7968 = vlaneseq
      %v7969 = vshrl.u32 %v7968, 7
      %v7970 = vsub.s32 %v7967, %v7969
      %v7971 = vrot.slane %v6112, %v7970
      %v7973 = vunpack.c.l.s4 1966171168
      %v7974 = vunpack.c.0.s8 %v7973
      %v7975 = vlaneseq
      %v7976 = vshrl.u32 %v7975, 7
      %v7977 = vsub.s32 %v7974, %v7976
      %v7978 = vrot.slane %v7964, %v7977
      %v7979 = vcombine.high %v7971, %v7971
      %v7980 = vcombine.high %v7978, %v7978
      %v7982 = vunpack.c.l.s4 1966171168
      %v7983 = vunpack.c.0.s8 %v7982
      %v7984 = vlaneseq
      %v7985 = vshrl.u32 %v7984, 7
      %v7986 = vsub.s32 %v7983, %v7985
      %v7987 = vrot.slane %v7971, %v7986
      %v7989 = vunpack.c.l.s4 1966171168
      %v7990 = vunpack.c.0.s8 %v7989
      %v7991 = vlaneseq
      %v7992 = vshrl.u32 %v7991, 7
      %v7993 = vsub.s32 %v7990, %v7992
      %v7994 = vrot.slane %v7978, %v7993
      %v7996 = vunpack.c.l.s4 1966171168
      %v7997 = vunpack.c.0.s8 %v7996
      %v7998 = vlaneseq
      %v7999 = vshrl.u32 %v7998, 7
      %v8000 = vsub.s32 %v7997, %v7999
      %v8001 = vrot.slane %v7979, %v8000
      %v8003 = vunpack.c.l.s4 1966171168
      %v8004 = vunpack.c.0.s8 %v8003
      %v8005 = vlaneseq
      %v8006 = vshrl.u32 %v8005, 7
      %v8007 = vsub.s32 %v8004, %v8006
      %v8008 = vrot.slane %v7980, %v8007
      %v8009 = vcombine.high %v7987, %v7987
      %v8010 = vcombine.high %v7994, %v7994
      %v8011 = vcombine.high %v8001, %v8001
      %v8012 = vcombine.high %v8008, %v8008
      %v8013 = vcombine.low %v6174, %v6188
      %v8014 = vcombine.low %v6196, %v6198
      %v8015 = vcombine.low %v6181, %v6195
      %v8016 = vcombine.low %v6197, %v6199
      %v8018 = vunpack.c.l.s4 1966171168
      %v8019 = vunpack.c.0.s8 %v8018
      %v8020 = vlaneseq
      %v8021 = vshrl.u32 %v8020, 7
      %v8022 = vsub.s32 %v8019, %v8021
      %v8023 = vrot.slane %v8013, %v8022
      %v8025 = vunpack.c.l.s4 1966171168
      %v8026 = vunpack.c.0.s8 %v8025
      %v8027 = vlaneseq
      %v8028 = vshrl.u32 %v8027, 7
      %v8029 = vsub.s32 %v8026, %v8028
      %v8030 = vrot.slane %v8014, %v8029
      %v8032 = vunpack.c.l.s4 1966171168
      %v8033 = vunpack.c.0.s8 %v8032
      %v8034 = vlaneseq
      %v8035 = vshrl.u32 %v8034, 7
      %v8036 = vsub.s32 %v8033, %v8035
      %v8037 = vrot.slane %v8015, %v8036
      %v8039 = vunpack.c.l.s4 1966171168
      %v8040 = vunpack.c.0.s8 %v8039
      %v8041 = vlaneseq
      %v8042 = vshrl.u32 %v8041, 7
      %v8043 = vsub.s32 %v8040, %v8042
      %v8044 = vrot.slane %v8016, %v8043
      %v8045 = vcombine.low %v8023, %v8030
      %v8046 = vcombine.low %v8037, %v8044
      %v8048 = vunpack.c.l.s4 1966171168
      %v8049 = vunpack.c.0.s8 %v8048
      %v8050 = vlaneseq
      %v8051 = vshrl.u32 %v8050, 7
      %v8052 = vsub.s32 %v8049, %v8051
      %v8053 = vrot.slane %v8045, %v8052
      %v8055 = vunpack.c.l.s4 1966171168
      %v8056 = vunpack.c.0.s8 %v8055
      %v8057 = vlaneseq
      %v8058 = vshrl.u32 %v8057, 7
      %v8059 = vsub.s32 %v8056, %v8058
      %v8060 = vrot.slane %v8046, %v8059
      %v8061 = vcombine.low %v8053, %v8060
      %v8062 = vcombine.low %v6223, %v6237
      %v8063 = vcombine.low %v6245, %v6247
      %v8064 = vcombine.low %v6230, %v6244
      %v8065 = vcombine.low %v6246, %v6248
      %v8067 = vunpack.c.l.s4 1966171168
      %v8068 = vunpack.c.0.s8 %v8067
      %v8069 = vlaneseq
      %v8070 = vshrl.u32 %v8069, 7
      %v8071 = vsub.s32 %v8068, %v8070
      %v8072 = vrot.slane %v8062, %v8071
      %v8074 = vunpack.c.l.s4 1966171168
      %v8075 = vunpack.c.0.s8 %v8074
      %v8076 = vlaneseq
      %v8077 = vshrl.u32 %v8076, 7
      %v8078 = vsub.s32 %v8075, %v8077
      %v8079 = vrot.slane %v8063, %v8078
      %v8081 = vunpack.c.l.s4 1966171168
      %v8082 = vunpack.c.0.s8 %v8081
      %v8083 = vlaneseq
      %v8084 = vshrl.u32 %v8083, 7
      %v8085 = vsub.s32 %v8082, %v8084
      %v8086 = vrot.slane %v8064, %v8085
      %v8088 = vunpack.c.l.s4 1966171168
      %v8089 = vunpack.c.0.s8 %v8088
      %v8090 = vlaneseq
      %v8091 = vshrl.u32 %v8090, 7
      %v8092 = vsub.s32 %v8089, %v8091
      %v8093 = vrot.slane %v8065, %v8092
      %v8094 = vcombine.low %v8072, %v8079
      %v8095 = vcombine.low %v8086, %v8093
      %v8097 = vunpack.c.l.s4 1966171168
      %v8098 = vunpack.c.0.s8 %v8097
      %v8099 = vlaneseq
      %v8100 = vshrl.u32 %v8099, 7
      %v8101 = vsub.s32 %v8098, %v8100
      %v8102 = vrot.slane %v8094, %v8101
      %v8104 = vunpack.c.l.s4 1966171168
      %v8105 = vunpack.c.0.s8 %v8104
      %v8106 = vlaneseq
      %v8107 = vshrl.u32 %v8106, 7
      %v8108 = vsub.s32 %v8105, %v8107
      %v8109 = vrot.slane %v8095, %v8108
      %v8110 = vcombine.low %v8102, %v8109
      %v8111 = vcombine.low %v6272, %v6286
      %v8112 = vcombine.low %v6294, %v6296
      %v8113 = vcombine.low %v6279, %v6293
      %v8114 = vcombine.low %v6295, %v6297
      %v8116 = vunpack.c.l.s4 1966171168
      %v8117 = vunpack.c.0.s8 %v8116
      %v8118 = vlaneseq
      %v8119 = vshrl.u32 %v8118, 7
      %v8120 = vsub.s32 %v8117, %v8119
      %v8121 = vrot.slane %v8111, %v8120
      %v8123 = vunpack.c.l.s4 1966171168
      %v8124 = vunpack.c.0.s8 %v8123
      %v8125 = vlaneseq
      %v8126 = vshrl.u32 %v8125, 7
      %v8127 = vsub.s32 %v8124, %v8126
      %v8128 = vrot.slane %v8112, %v8127
      %v8130 = vunpack.c.l.s4 1966171168
      %v8131 = vunpack.c.0.s8 %v8130
      %v8132 = vlaneseq
      %v8133 = vshrl.u32 %v8132, 7
      %v8134 = vsub.s32 %v8131, %v8133
      %v8135 = vrot.slane %v8113, %v8134
      %v8137 = vunpack.c.l.s4 1966171168
      %v8138 = vunpack.c.0.s8 %v8137
      %v8139 = vlaneseq
      %v8140 = vshrl.u32 %v8139, 7
      %v8141 = vsub.s32 %v8138, %v8140
      %v8142 = vrot.slane %v8114, %v8141
      %v8143 = vcombine.low %v8121, %v8128
      %v8144 = vcombine.low %v8135, %v8142
      %v8146 = vunpack.c.l.s4 1966171168
      %v8147 = vunpack.c.0.s8 %v8146
      %v8148 = vlaneseq
      %v8149 = vshrl.u32 %v8148, 7
      %v8150 = vsub.s32 %v8147, %v8149
      %v8151 = vrot.slane %v8143, %v8150
      %v8153 = vunpack.c.l.s4 1966171168
      %v8154 = vunpack.c.0.s8 %v8153
      %v8155 = vlaneseq
      %v8156 = vshrl.u32 %v8155, 7
      %v8157 = vsub.s32 %v8154, %v8156
      %v8158 = vrot.slane %v8144, %v8157
      %v8159 = vcombine.low %v8151, %v8158
      %v8160 = vcombine.low %v6321, %v6335
      %v8161 = vcombine.low %v6343, %v6345
      %v8162 = vcombine.low %v6328, %v6342
      %v8163 = vcombine.low %v6344, %v6346
      %v8165 = vunpack.c.l.s4 1966171168
      %v8166 = vunpack.c.0.s8 %v8165
      %v8167 = vlaneseq
      %v8168 = vshrl.u32 %v8167, 7
      %v8169 = vsub.s32 %v8166, %v8168
      %v8170 = vrot.slane %v8160, %v8169
      %v8172 = vunpack.c.l.s4 1966171168
      %v8173 = vunpack.c.0.s8 %v8172
      %v8174 = vlaneseq
      %v8175 = vshrl.u32 %v8174, 7
      %v8176 = vsub.s32 %v8173, %v8175
      %v8177 = vrot.slane %v8161, %v8176
      %v8179 = vunpack.c.l.s4 1966171168
      %v8180 = vunpack.c.0.s8 %v8179
      %v8181 = vlaneseq
      %v8182 = vshrl.u32 %v8181, 7
      %v8183 = vsub.s32 %v8180, %v8182
      %v8184 = vrot.slane %v8162, %v8183
      %v8186 = vunpack.c.l.s4 1966171168
      %v8187 = vunpack.c.0.s8 %v8186
      %v8188 = vlaneseq
      %v8189 = vshrl.u32 %v8188, 7
      %v8190 = vsub.s32 %v8187, %v8189
      %v8191 = vrot.slane %v8163, %v8190
      %v8192 = vcombine.low %v8170, %v8177
      %v8193 = vcombine.low %v8184, %v8191
      %v8195 = vunpack.c.l.s4 1966171168
      %v8196 = vunpack.c.0.s8 %v8195
      %v8197 = vlaneseq
      %v8198 = vshrl.u32 %v8197, 7
      %v8199 = vsub.s32 %v8196, %v8198
      %v8200 = vrot.slane %v8192, %v8199
      %v8202 = vunpack.c.l.s4 1966171168
      %v8203 = vunpack.c.0.s8 %v8202
      %v8204 = vlaneseq
      %v8205 = vshrl.u32 %v8204, 7
      %v8206 = vsub.s32 %v8203, %v8205
      %v8207 = vrot.slane %v8193, %v8206
      %v8208 = vcombine.low %v8200, %v8207
      %v8209 = vcombine.low %v6370, %v6384
      %v8210 = vcombine.low %v6392, %v6394
      %v8211 = vcombine.low %v6377, %v6391
      %v8212 = vcombine.low %v6393, %v6395
      %v8214 = vunpack.c.l.s4 1966171168
      %v8215 = vunpack.c.0.s8 %v8214
      %v8216 = vlaneseq
      %v8217 = vshrl.u32 %v8216, 7
      %v8218 = vsub.s32 %v8215, %v8217
      %v8219 = vrot.slane %v8209, %v8218
      %v8221 = vunpack.c.l.s4 1966171168
      %v8222 = vunpack.c.0.s8 %v8221
      %v8223 = vlaneseq
      %v8224 = vshrl.u32 %v8223, 7
      %v8225 = vsub.s32 %v8222, %v8224
      %v8226 = vrot.slane %v8210, %v8225
      %v8228 = vunpack.c.l.s4 1966171168
      %v8229 = vunpack.c.0.s8 %v8228
      %v8230 = vlaneseq
      %v8231 = vshrl.u32 %v8230, 7
      %v8232 = vsub.s32 %v8229, %v8231
      %v8233 = vrot.slane %v8211, %v8232
      %v8235 = vunpack.c.l.s4 1966171168
      %v8236 = vunpack.c.0.s8 %v8235
      %v8237 = vlaneseq
      %v8238 = vshrl.u32 %v8237, 7
      %v8239 = vsub.s32 %v8236, %v8238
      %v8240 = vrot.slane %v8212, %v8239
      %v8241 = vcombine.low %v8219, %v8226
      %v8242 = vcombine.low %v8233, %v8240
      %v8244 = vunpack.c.l.s4 1966171168
      %v8245 = vunpack.c.0.s8 %v8244
      %v8246 = vlaneseq
      %v8247 = vshrl.u32 %v8246, 7
      %v8248 = vsub.s32 %v8245, %v8247
      %v8249 = vrot.slane %v8241, %v8248
      %v8251 = vunpack.c.l.s4 1966171168
      %v8252 = vunpack.c.0.s8 %v8251
      %v8253 = vlaneseq
      %v8254 = vshrl.u32 %v8253, 7
      %v8255 = vsub.s32 %v8252, %v8254
      %v8256 = vrot.slane %v8242, %v8255
      %v8257 = vcombine.low %v8249, %v8256
      %v8258 = vcombine.low %v6419, %v6433
      %v8259 = vcombine.low %v6441, %v6443
      %v8260 = vcombine.low %v6426, %v6440
      %v8261 = vcombine.low %v6442, %v6444
      %v8263 = vunpack.c.l.s4 1966171168
      %v8264 = vunpack.c.0.s8 %v8263
      %v8265 = vlaneseq
      %v8266 = vshrl.u32 %v8265, 7
      %v8267 = vsub.s32 %v8264, %v8266
      %v8268 = vrot.slane %v8258, %v8267
      %v8270 = vunpack.c.l.s4 1966171168
      %v8271 = vunpack.c.0.s8 %v8270
      %v8272 = vlaneseq
      %v8273 = vshrl.u32 %v8272, 7
      %v8274 = vsub.s32 %v8271, %v8273
      %v8275 = vrot.slane %v8259, %v8274
      %v8277 = vunpack.c.l.s4 1966171168
      %v8278 = vunpack.c.0.s8 %v8277
      %v8279 = vlaneseq
      %v8280 = vshrl.u32 %v8279, 7
      %v8281 = vsub.s32 %v8278, %v8280
      %v8282 = vrot.slane %v8260, %v8281
      %v8284 = vunpack.c.l.s4 1966171168
      %v8285 = vunpack.c.0.s8 %v8284
      %v8286 = vlaneseq
      %v8287 = vshrl.u32 %v8286, 7
      %v8288 = vsub.s32 %v8285, %v8287
      %v8289 = vrot.slane %v8261, %v8288
      %v8290 = vcombine.low %v8268, %v8275
      %v8291 = vcombine.low %v8282, %v8289
      %v8293 = vunpack.c.l.s4 1966171168
      %v8294 = vunpack.c.0.s8 %v8293
      %v8295 = vlaneseq
      %v8296 = vshrl.u32 %v8295, 7
      %v8297 = vsub.s32 %v8294, %v8296
      %v8298 = vrot.slane %v8290, %v8297
      %v8300 = vunpack.c.l.s4 1966171168
      %v8301 = vunpack.c.0.s8 %v8300
      %v8302 = vlaneseq
      %v8303 = vshrl.u32 %v8302, 7
      %v8304 = vsub.s32 %v8301, %v8303
      %v8305 = vrot.slane %v8291, %v8304
      %v8306 = vcombine.low %v8298, %v8305
      %v8307 = vcombine.low %v6468, %v6482
      %v8308 = vcombine.low %v6490, %v6492
      %v8309 = vcombine.low %v6475, %v6489
      %v8310 = vcombine.low %v6491, %v6493
      %v8312 = vunpack.c.l.s4 1966171168
      %v8313 = vunpack.c.0.s8 %v8312
      %v8314 = vlaneseq
      %v8315 = vshrl.u32 %v8314, 7
      %v8316 = vsub.s32 %v8313, %v8315
      %v8317 = vrot.slane %v8307, %v8316
      %v8319 = vunpack.c.l.s4 1966171168
      %v8320 = vunpack.c.0.s8 %v8319
      %v8321 = vlaneseq
      %v8322 = vshrl.u32 %v8321, 7
      %v8323 = vsub.s32 %v8320, %v8322
      %v8324 = vrot.slane %v8308, %v8323
      %v8326 = vunpack.c.l.s4 1966171168
      %v8327 = vunpack.c.0.s8 %v8326
      %v8328 = vlaneseq
      %v8329 = vshrl.u32 %v8328, 7
      %v8330 = vsub.s32 %v8327, %v8329
      %v8331 = vrot.slane %v8309, %v8330
      %v8333 = vunpack.c.l.s4 1966171168
      %v8334 = vunpack.c.0.s8 %v8333
      %v8335 = vlaneseq
      %v8336 = vshrl.u32 %v8335, 7
      %v8337 = vsub.s32 %v8334, %v8336
      %v8338 = vrot.slane %v8310, %v8337
      %v8339 = vcombine.low %v8317, %v8324
      %v8340 = vcombine.low %v8331, %v8338
      %v8342 = vunpack.c.l.s4 1966171168
      %v8343 = vunpack.c.0.s8 %v8342
      %v8344 = vlaneseq
      %v8345 = vshrl.u32 %v8344, 7
      %v8346 = vsub.s32 %v8343, %v8345
      %v8347 = vrot.slane %v8339, %v8346
      %v8349 = vunpack.c.l.s4 1966171168
      %v8350 = vunpack.c.0.s8 %v8349
      %v8351 = vlaneseq
      %v8352 = vshrl.u32 %v8351, 7
      %v8353 = vsub.s32 %v8350, %v8352
      %v8354 = vrot.slane %v8340, %v8353
      %v8355 = vcombine.low %v8347, %v8354
      %v8356 = vcombine.low %v6517, %v6531
      %v8357 = vcombine.low %v6539, %v6541
      %v8358 = vcombine.low %v6524, %v6538
      %v8359 = vcombine.low %v6540, %v6542
      %v8361 = vunpack.c.l.s4 1966171168
      %v8362 = vunpack.c.0.s8 %v8361
      %v8363 = vlaneseq
      %v8364 = vshrl.u32 %v8363, 7
      %v8365 = vsub.s32 %v8362, %v8364
      %v8366 = vrot.slane %v8356, %v8365
      %v8368 = vunpack.c.l.s4 1966171168
      %v8369 = vunpack.c.0.s8 %v8368
      %v8370 = vlaneseq
      %v8371 = vshrl.u32 %v8370, 7
      %v8372 = vsub.s32 %v8369, %v8371
      %v8373 = vrot.slane %v8357, %v8372
      %v8375 = vunpack.c.l.s4 1966171168
      %v8376 = vunpack.c.0.s8 %v8375
      %v8377 = vlaneseq
      %v8378 = vshrl.u32 %v8377, 7
      %v8379 = vsub.s32 %v8376, %v8378
      %v8380 = vrot.slane %v8358, %v8379
      %v8382 = vunpack.c.l.s4 1966171168
      %v8383 = vunpack.c.0.s8 %v8382
      %v8384 = vlaneseq
      %v8385 = vshrl.u32 %v8384, 7
      %v8386 = vsub.s32 %v8383, %v8385
      %v8387 = vrot.slane %v8359, %v8386
      %v8388 = vcombine.low %v8366, %v8373
      %v8389 = vcombine.low %v8380, %v8387
      %v8391 = vunpack.c.l.s4 1966171168
      %v8392 = vunpack.c.0.s8 %v8391
      %v8393 = vlaneseq
      %v8394 = vshrl.u32 %v8393, 7
      %v8395 = vsub.s32 %v8392, %v8394
      %v8396 = vrot.slane %v8388, %v8395
      %v8398 = vunpack.c.l.s4 1966171168
      %v8399 = vunpack.c.0.s8 %v8398
      %v8400 = vlaneseq
      %v8401 = vshrl.u32 %v8400, 7
      %v8402 = vsub.s32 %v8399, %v8401
      %v8403 = vrot.slane %v8389, %v8402
      %v8404 = vcombine.low %v8396, %v8403
      %v8405 = vcombine.low %v6566, %v6580
      %v8406 = vcombine.low %v6588, %v6590
      %v8407 = vcombine.low %v6573, %v6587
      %v8408 = vcombine.low %v6589, %v6591
      %v8410 = vunpack.c.l.s4 1966171168
      %v8411 = vunpack.c.0.s8 %v8410
      %v8412 = vlaneseq
      %v8413 = vshrl.u32 %v8412, 7
      %v8414 = vsub.s32 %v8411, %v8413
      %v8415 = vrot.slane %v8405, %v8414
      %v8417 = vunpack.c.l.s4 1966171168
      %v8418 = vunpack.c.0.s8 %v8417
      %v8419 = vlaneseq
      %v8420 = vshrl.u32 %v8419, 7
      %v8421 = vsub.s32 %v8418, %v8420
      %v8422 = vrot.slane %v8406, %v8421
      %v8424 = vunpack.c.l.s4 1966171168
      %v8425 = vunpack.c.0.s8 %v8424
      %v8426 = vlaneseq
      %v8427 = vshrl.u32 %v8426, 7
      %v8428 = vsub.s32 %v8425, %v8427
      %v8429 = vrot.slane %v8407, %v8428
      %v8431 = vunpack.c.l.s4 1966171168
      %v8432 = vunpack.c.0.s8 %v8431
      %v8433 = vlaneseq
      %v8434 = vshrl.u32 %v8433, 7
      %v8435 = vsub.s32 %v8432, %v8434
      %v8436 = vrot.slane %v8408, %v8435
      %v8437 = vcombine.low %v8415, %v8422
      %v8438 = vcombine.low %v8429, %v8436
      %v8440 = vunpack.c.l.s4 1966171168
      %v8441 = vunpack.c.0.s8 %v8440
      %v8442 = vlaneseq
      %v8443 = vshrl.u32 %v8442, 7
      %v8444 = vsub.s32 %v8441, %v8443
      %v8445 = vrot.slane %v8437, %v8444
      %v8447 = vunpack.c.l.s4 1966171168
      %v8448 = vunpack.c.0.s8 %v8447
      %v8449 = vlaneseq
      %v8450 = vshrl.u32 %v8449, 7
      %v8451 = vsub.s32 %v8448, %v8450
      %v8452 = vrot.slane %v8438, %v8451
      %v8453 = vcombine.low %v8445, %v8452
      %v8454 = vcombine.low %v6615, %v6629
      %v8455 = vcombine.low %v6637, %v6639
      %v8456 = vcombine.low %v6622, %v6636
      %v8457 = vcombine.low %v6638, %v6640
      %v8459 = vunpack.c.l.s4 1966171168
      %v8460 = vunpack.c.0.s8 %v8459
      %v8461 = vlaneseq
      %v8462 = vshrl.u32 %v8461, 7
      %v8463 = vsub.s32 %v8460, %v8462
      %v8464 = vrot.slane %v8454, %v8463
      %v8466 = vunpack.c.l.s4 1966171168
      %v8467 = vunpack.c.0.s8 %v8466
      %v8468 = vlaneseq
      %v8469 = vshrl.u32 %v8468, 7
      %v8470 = vsub.s32 %v8467, %v8469
      %v8471 = vrot.slane %v8455, %v8470
      %v8473 = vunpack.c.l.s4 1966171168
      %v8474 = vunpack.c.0.s8 %v8473
      %v8475 = vlaneseq
      %v8476 = vshrl.u32 %v8475, 7
      %v8477 = vsub.s32 %v8474, %v8476
      %v8478 = vrot.slane %v8456, %v8477
      %v8480 = vunpack.c.l.s4 1966171168
      %v8481 = vunpack.c.0.s8 %v8480
      %v8482 = vlaneseq
      %v8483 = vshrl.u32 %v8482, 7
      %v8484 = vsub.s32 %v8481, %v8483
      %v8485 = vrot.slane %v8457, %v8484
      %v8486 = vcombine.low %v8464, %v8471
      %v8487 = vcombine.low %v8478, %v8485
      %v8489 = vunpack.c.l.s4 1966171168
      %v8490 = vunpack.c.0.s8 %v8489
      %v8491 = vlaneseq
      %v8492 = vshrl.u32 %v8491, 7
      %v8493 = vsub.s32 %v8490, %v8492
      %v8494 = vrot.slane %v8486, %v8493
      %v8496 = vunpack.c.l.s4 1966171168
      %v8497 = vunpack.c.0.s8 %v8496
      %v8498 = vlaneseq
      %v8499 = vshrl.u32 %v8498, 7
      %v8500 = vsub.s32 %v8497, %v8499
      %v8501 = vrot.slane %v8487, %v8500
      %v8502 = vcombine.low %v8494, %v8501
      %v8503 = vcombine.low %v6664, %v6678
      %v8504 = vcombine.low %v6686, %v6688
      %v8505 = vcombine.low %v6671, %v6685
      %v8506 = vcombine.low %v6687, %v6689
      %v8508 = vunpack.c.l.s4 1966171168
      %v8509 = vunpack.c.0.s8 %v8508
      %v8510 = vlaneseq
      %v8511 = vshrl.u32 %v8510, 7
      %v8512 = vsub.s32 %v8509, %v8511
      %v8513 = vrot.slane %v8503, %v8512
      %v8515 = vunpack.c.l.s4 1966171168
      %v8516 = vunpack.c.0.s8 %v8515
      %v8517 = vlaneseq
      %v8518 = vshrl.u32 %v8517, 7
      %v8519 = vsub.s32 %v8516, %v8518
      %v8520 = vrot.slane %v8504, %v8519
      %v8522 = vunpack.c.l.s4 1966171168
      %v8523 = vunpack.c.0.s8 %v8522
      %v8524 = vlaneseq
      %v8525 = vshrl.u32 %v8524, 7
      %v8526 = vsub.s32 %v8523, %v8525
      %v8527 = vrot.slane %v8505, %v8526
      %v8529 = vunpack.c.l.s4 1966171168
      %v8530 = vunpack.c.0.s8 %v8529
      %v8531 = vlaneseq
      %v8532 = vshrl.u32 %v8531, 7
      %v8533 = vsub.s32 %v8530, %v8532
      %v8534 = vrot.slane %v8506, %v8533
      %v8535 = vcombine.low %v8513, %v8520
      %v8536 = vcombine.low %v8527, %v8534
      %v8538 = vunpack.c.l.s4 1966171168
      %v8539 = vunpack.c.0.s8 %v8538
      %v8540 = vlaneseq
      %v8541 = vshrl.u32 %v8540, 7
      %v8542 = vsub.s32 %v8539, %v8541
      %v8543 = vrot.slane %v8535, %v8542
      %v8545 = vunpack.c.l.s4 1966171168
      %v8546 = vunpack.c.0.s8 %v8545
      %v8547 = vlaneseq
      %v8548 = vshrl.u32 %v8547, 7
      %v8549 = vsub.s32 %v8546, %v8548
      %v8550 = vrot.slane %v8536, %v8549
      %v8551 = vcombine.low %v8543, %v8550
      %v8552 = vcombine.low %v6713, %v6727
      %v8553 = vcombine.low %v6735, %v6737
      %v8554 = vcombine.low %v6720, %v6734
      %v8555 = vcombine.low %v6736, %v6738
      %v8557 = vunpack.c.l.s4 1966171168
      %v8558 = vunpack.c.0.s8 %v8557
      %v8559 = vlaneseq
      %v8560 = vshrl.u32 %v8559, 7
      %v8561 = vsub.s32 %v8558, %v8560
      %v8562 = vrot.slane %v8552, %v8561
      %v8564 = vunpack.c.l.s4 1966171168
      %v8565 = vunpack.c.0.s8 %v8564
      %v8566 = vlaneseq
      %v8567 = vshrl.u32 %v8566, 7
      %v8568 = vsub.s32 %v8565, %v8567
      %v8569 = vrot.slane %v8553, %v8568
      %v8571 = vunpack.c.l.s4 1966171168
      %v8572 = vunpack.c.0.s8 %v8571
      %v8573 = vlaneseq
      %v8574 = vshrl.u32 %v8573, 7
      %v8575 = vsub.s32 %v8572, %v8574
      %v8576 = vrot.slane %v8554, %v8575
      %v8578 = vunpack.c.l.s4 1966171168
      %v8579 = vunpack.c.0.s8 %v8578
      %v8580 = vlaneseq
      %v8581 = vshrl.u32 %v8580, 7
      %v8582 = vsub.s32 %v8579, %v8581
      %v8583 = vrot.slane %v8555, %v8582
      %v8584 = vcombine.low %v8562, %v8569
      %v8585 = vcombine.low %v8576, %v8583
      %v8587 = vunpack.c.l.s4 1966171168
      %v8588 = vunpack.c.0.s8 %v8587
      %v8589 = vlaneseq
      %v8590 = vshrl.u32 %v8589, 7
      %v8591 = vsub.s32 %v8588, %v8590
      %v8592 = vrot.slane %v8584, %v8591
      %v8594 = vunpack.c.l.s4 1966171168
      %v8595 = vunpack.c.0.s8 %v8594
      %v8596 = vlaneseq
      %v8597 = vshrl.u32 %v8596, 7
      %v8598 = vsub.s32 %v8595, %v8597
      %v8599 = vrot.slane %v8585, %v8598
      %v8600 = vcombine.low %v8592, %v8599
      %v8601 = vcombine.low %v6762, %v6776
      %v8602 = vcombine.low %v6784, %v6786
      %v8603 = vcombine.low %v6769, %v6783
      %v8604 = vcombine.low %v6785, %v6787
      %v8606 = vunpack.c.l.s4 1966171168
      %v8607 = vunpack.c.0.s8 %v8606
      %v8608 = vlaneseq
      %v8609 = vshrl.u32 %v8608, 7
      %v8610 = vsub.s32 %v8607, %v8609
      %v8611 = vrot.slane %v8601, %v8610
      %v8613 = vunpack.c.l.s4 1966171168
      %v8614 = vunpack.c.0.s8 %v8613
      %v8615 = vlaneseq
      %v8616 = vshrl.u32 %v8615, 7
      %v8617 = vsub.s32 %v8614, %v8616
      %v8618 = vrot.slane %v8602, %v8617
      %v8620 = vunpack.c.l.s4 1966171168
      %v8621 = vunpack.c.0.s8 %v8620
      %v8622 = vlaneseq
      %v8623 = vshrl.u32 %v8622, 7
      %v8624 = vsub.s32 %v8621, %v8623
      %v8625 = vrot.slane %v8603, %v8624
      %v8627 = vunpack.c.l.s4 1966171168
      %v8628 = vunpack.c.0.s8 %v8627
      %v8629 = vlaneseq
      %v8630 = vshrl.u32 %v8629, 7
      %v8631 = vsub.s32 %v8628, %v8630
      %v8632 = vrot.slane %v8604, %v8631
      %v8633 = vcombine.low %v8611, %v8618
      %v8634 = vcombine.low %v8625, %v8632
      %v8636 = vunpack.c.l.s4 1966171168
      %v8637 = vunpack.c.0.s8 %v8636
      %v8638 = vlaneseq
      %v8639 = vshrl.u32 %v8638, 7
      %v8640 = vsub.s32 %v8637, %v8639
      %v8641 = vrot.slane %v8633, %v8640
      %v8643 = vunpack.c.l.s4 1966171168
      %v8644 = vunpack.c.0.s8 %v8643
      %v8645 = vlaneseq
      %v8646 = vshrl.u32 %v8645, 7
      %v8647 = vsub.s32 %v8644, %v8646
      %v8648 = vrot.slane %v8634, %v8647
      %v8649 = vcombine.low %v8641, %v8648
      %v8650 = vcombine.low %v6811, %v6825
      %v8651 = vcombine.low %v6833, %v6835
      %v8652 = vcombine.low %v6818, %v6832
      %v8653 = vcombine.low %v6834, %v6836
      %v8655 = vunpack.c.l.s4 1966171168
      %v8656 = vunpack.c.0.s8 %v8655
      %v8657 = vlaneseq
      %v8658 = vshrl.u32 %v8657, 7
      %v8659 = vsub.s32 %v8656, %v8658
      %v8660 = vrot.slane %v8650, %v8659
      %v8662 = vunpack.c.l.s4 1966171168
      %v8663 = vunpack.c.0.s8 %v8662
      %v8664 = vlaneseq
      %v8665 = vshrl.u32 %v8664, 7
      %v8666 = vsub.s32 %v8663, %v8665
      %v8667 = vrot.slane %v8651, %v8666
      %v8669 = vunpack.c.l.s4 1966171168
      %v8670 = vunpack.c.0.s8 %v8669
      %v8671 = vlaneseq
      %v8672 = vshrl.u32 %v8671, 7
      %v8673 = vsub.s32 %v8670, %v8672
      %v8674 = vrot.slane %v8652, %v8673
      %v8676 = vunpack.c.l.s4 1966171168
      %v8677 = vunpack.c.0.s8 %v8676
      %v8678 = vlaneseq
      %v8679 = vshrl.u32 %v8678, 7
      %v8680 = vsub.s32 %v8677, %v8679
      %v8681 = vrot.slane %v8653, %v8680
      %v8682 = vcombine.low %v8660, %v8667
      %v8683 = vcombine.low %v8674, %v8681
      %v8685 = vunpack.c.l.s4 1966171168
      %v8686 = vunpack.c.0.s8 %v8685
      %v8687 = vlaneseq
      %v8688 = vshrl.u32 %v8687, 7
      %v8689 = vsub.s32 %v8686, %v8688
      %v8690 = vrot.slane %v8682, %v8689
      %v8692 = vunpack.c.l.s4 1966171168
      %v8693 = vunpack.c.0.s8 %v8692
      %v8694 = vlaneseq
      %v8695 = vshrl.u32 %v8694, 7
      %v8696 = vsub.s32 %v8693, %v8695
      %v8697 = vrot.slane %v8683, %v8696
      %v8698 = vcombine.low %v8690, %v8697
      %v8699 = vcombine.low %v6860, %v6874
      %v8700 = vcombine.low %v6882, %v6884
      %v8701 = vcombine.low %v6867, %v6881
      %v8702 = vcombine.low %v6883, %v6885
      %v8704 = vunpack.c.l.s4 1966171168
      %v8705 = vunpack.c.0.s8 %v8704
      %v8706 = vlaneseq
      %v8707 = vshrl.u32 %v8706, 7
      %v8708 = vsub.s32 %v8705, %v8707
      %v8709 = vrot.slane %v8699, %v8708
      %v8711 = vunpack.c.l.s4 1966171168
      %v8712 = vunpack.c.0.s8 %v8711
      %v8713 = vlaneseq
      %v8714 = vshrl.u32 %v8713, 7
      %v8715 = vsub.s32 %v8712, %v8714
      %v8716 = vrot.slane %v8700, %v8715
      %v8718 = vunpack.c.l.s4 1966171168
      %v8719 = vunpack.c.0.s8 %v8718
      %v8720 = vlaneseq
      %v8721 = vshrl.u32 %v8720, 7
      %v8722 = vsub.s32 %v8719, %v8721
      %v8723 = vrot.slane %v8701, %v8722
      %v8725 = vunpack.c.l.s4 1966171168
      %v8726 = vunpack.c.0.s8 %v8725
      %v8727 = vlaneseq
      %v8728 = vshrl.u32 %v8727, 7
      %v8729 = vsub.s32 %v8726, %v8728
      %v8730 = vrot.slane %v8702, %v8729
      %v8731 = vcombine.low %v8709, %v8716
      %v8732 = vcombine.low %v8723, %v8730
      %v8734 = vunpack.c.l.s4 1966171168
      %v8735 = vunpack.c.0.s8 %v8734
      %v8736 = vlaneseq
      %v8737 = vshrl.u32 %v8736, 7
      %v8738 = vsub.s32 %v8735, %v8737
      %v8739 = vrot.slane %v8731, %v8738
      %v8741 = vunpack.c.l.s4 1966171168
      %v8742 = vunpack.c.0.s8 %v8741
      %v8743 = vlaneseq
      %v8744 = vshrl.u32 %v8743, 7
      %v8745 = vsub.s32 %v8742, %v8744
      %v8746 = vrot.slane %v8732, %v8745
      %v8747 = vcombine.low %v8739, %v8746
      %v8748 = vcombine.low %v6909, %v6923
      %v8749 = vcombine.low %v6931, %v6933
      %v8750 = vcombine.low %v6916, %v6930
      %v8751 = vcombine.low %v6932, %v6934
      %v8753 = vunpack.c.l.s4 1966171168
      %v8754 = vunpack.c.0.s8 %v8753
      %v8755 = vlaneseq
      %v8756 = vshrl.u32 %v8755, 7
      %v8757 = vsub.s32 %v8754, %v8756
      %v8758 = vrot.slane %v8748, %v8757
      %v8760 = vunpack.c.l.s4 1966171168
      %v8761 = vunpack.c.0.s8 %v8760
      %v8762 = vlaneseq
      %v8763 = vshrl.u32 %v8762, 7
      %v8764 = vsub.s32 %v8761, %v8763
      %v8765 = vrot.slane %v8749, %v8764
      %v8767 = vunpack.c.l.s4 1966171168
      %v8768 = vunpack.c.0.s8 %v8767
      %v8769 = vlaneseq
      %v8770 = vshrl.u32 %v8769, 7
      %v8771 = vsub.s32 %v8768, %v8770
      %v8772 = vrot.slane %v8750, %v8771
      %v8774 = vunpack.c.l.s4 1966171168
      %v8775 = vunpack.c.0.s8 %v8774
      %v8776 = vlaneseq
      %v8777 = vshrl.u32 %v8776, 7
      %v8778 = vsub.s32 %v8775, %v8777
      %v8779 = vrot.slane %v8751, %v8778
      %v8780 = vcombine.low %v8758, %v8765
      %v8781 = vcombine.low %v8772, %v8779
      %v8783 = vunpack.c.l.s4 1966171168
      %v8784 = vunpack.c.0.s8 %v8783
      %v8785 = vlaneseq
      %v8786 = vshrl.u32 %v8785, 7
      %v8787 = vsub.s32 %v8784, %v8786
      %v8788 = vrot.slane %v8780, %v8787
      %v8790 = vunpack.c.l.s4 1966171168
      %v8791 = vunpack.c.0.s8 %v8790
      %v8792 = vlaneseq
      %v8793 = vshrl.u32 %v8792, 7
      %v8794 = vsub.s32 %v8791, %v8793
      %v8795 = vrot.slane %v8781, %v8794
      %v8796 = vcombine.low %v8788, %v8795
      %v8797 = vcombine.low %v6958, %v6972
      %v8798 = vcombine.low %v6980, %v6982
      %v8799 = vcombine.low %v6965, %v6979
      %v8800 = vcombine.low %v6981, %v6983
      %v8802 = vunpack.c.l.s4 1966171168
      %v8803 = vunpack.c.0.s8 %v8802
      %v8804 = vlaneseq
      %v8805 = vshrl.u32 %v8804, 7
      %v8806 = vsub.s32 %v8803, %v8805
      %v8807 = vrot.slane %v8797, %v8806
      %v8809 = vunpack.c.l.s4 1966171168
      %v8810 = vunpack.c.0.s8 %v8809
      %v8811 = vlaneseq
      %v8812 = vshrl.u32 %v8811, 7
      %v8813 = vsub.s32 %v8810, %v8812
      %v8814 = vrot.slane %v8798, %v8813
      %v8816 = vunpack.c.l.s4 1966171168
      %v8817 = vunpack.c.0.s8 %v8816
      %v8818 = vlaneseq
      %v8819 = vshrl.u32 %v8818, 7
      %v8820 = vsub.s32 %v8817, %v8819
      %v8821 = vrot.slane %v8799, %v8820
      %v8823 = vunpack.c.l.s4 1966171168
      %v8824 = vunpack.c.0.s8 %v8823
      %v8825 = vlaneseq
      %v8826 = vshrl.u32 %v8825, 7
      %v8827 = vsub.s32 %v8824, %v8826
      %v8828 = vrot.slane %v8800, %v8827
      %v8829 = vcombine.low %v8807, %v8814
      %v8830 = vcombine.low %v8821, %v8828
      %v8832 = vunpack.c.l.s4 1966171168
      %v8833 = vunpack.c.0.s8 %v8832
      %v8834 = vlaneseq
      %v8835 = vshrl.u32 %v8834, 7
      %v8836 = vsub.s32 %v8833, %v8835
      %v8837 = vrot.slane %v8829, %v8836
      %v8839 = vunpack.c.l.s4 1966171168
      %v8840 = vunpack.c.0.s8 %v8839
      %v8841 = vlaneseq
      %v8842 = vshrl.u32 %v8841, 7
      %v8843 = vsub.s32 %v8840, %v8842
      %v8844 = vrot.slane %v8830, %v8843
      %v8845 = vcombine.low %v8837, %v8844
      %v8846 = vcombine.low %v7007, %v7021
      %v8847 = vcombine.low %v7029, %v7031
      %v8848 = vcombine.low %v7014, %v7028
      %v8849 = vcombine.low %v7030, %v7032
      %v8851 = vunpack.c.l.s4 1966171168
      %v8852 = vunpack.c.0.s8 %v8851
      %v8853 = vlaneseq
      %v8854 = vshrl.u32 %v8853, 7
      %v8855 = vsub.s32 %v8852, %v8854
      %v8856 = vrot.slane %v8846, %v8855
      %v8858 = vunpack.c.l.s4 1966171168
      %v8859 = vunpack.c.0.s8 %v8858
      %v8860 = vlaneseq
      %v8861 = vshrl.u32 %v8860, 7
      %v8862 = vsub.s32 %v8859, %v8861
      %v8863 = vrot.slane %v8847, %v8862
      %v8865 = vunpack.c.l.s4 1966171168
      %v8866 = vunpack.c.0.s8 %v8865
      %v8867 = vlaneseq
      %v8868 = vshrl.u32 %v8867, 7
      %v8869 = vsub.s32 %v8866, %v8868
      %v8870 = vrot.slane %v8848, %v8869
      %v8872 = vunpack.c.l.s4 1966171168
      %v8873 = vunpack.c.0.s8 %v8872
      %v8874 = vlaneseq
      %v8875 = vshrl.u32 %v8874, 7
      %v8876 = vsub.s32 %v8873, %v8875
      %v8877 = vrot.slane %v8849, %v8876
      %v8878 = vcombine.low %v8856, %v8863
      %v8879 = vcombine.low %v8870, %v8877
      %v8881 = vunpack.c.l.s4 1966171168
      %v8882 = vunpack.c.0.s8 %v8881
      %v8883 = vlaneseq
      %v8884 = vshrl.u32 %v8883, 7
      %v8885 = vsub.s32 %v8882, %v8884
      %v8886 = vrot.slane %v8878, %v8885
      %v8888 = vunpack.c.l.s4 1966171168
      %v8889 = vunpack.c.0.s8 %v8888
      %v8890 = vlaneseq
      %v8891 = vshrl.u32 %v8890, 7
      %v8892 = vsub.s32 %v8889, %v8891
      %v8893 = vrot.slane %v8879, %v8892
      %v8894 = vcombine.low %v8886, %v8893
      %v8895 = vcombine.low %v7056, %v7070
      %v8896 = vcombine.low %v7078, %v7080
      %v8897 = vcombine.low %v7063, %v7077
      %v8898 = vcombine.low %v7079, %v7081
      %v8900 = vunpack.c.l.s4 1966171168
      %v8901 = vunpack.c.0.s8 %v8900
      %v8902 = vlaneseq
      %v8903 = vshrl.u32 %v8902, 7
      %v8904 = vsub.s32 %v8901, %v8903
      %v8905 = vrot.slane %v8895, %v8904
      %v8907 = vunpack.c.l.s4 1966171168
      %v8908 = vunpack.c.0.s8 %v8907
      %v8909 = vlaneseq
      %v8910 = vshrl.u32 %v8909, 7
      %v8911 = vsub.s32 %v8908, %v8910
      %v8912 = vrot.slane %v8896, %v8911
      %v8914 = vunpack.c.l.s4 1966171168
      %v8915 = vunpack.c.0.s8 %v8914
      %v8916 = vlaneseq
      %v8917 = vshrl.u32 %v8916, 7
      %v8918 = vsub.s32 %v8915, %v8917
      %v8919 = vrot.slane %v8897, %v8918
      %v8921 = vunpack.c.l.s4 1966171168
      %v8922 = vunpack.c.0.s8 %v8921
      %v8923 = vlaneseq
      %v8924 = vshrl.u32 %v8923, 7
      %v8925 = vsub.s32 %v8922, %v8924
      %v8926 = vrot.slane %v8898, %v8925
      %v8927 = vcombine.low %v8905, %v8912
      %v8928 = vcombine.low %v8919, %v8926
      %v8930 = vunpack.c.l.s4 1966171168
      %v8931 = vunpack.c.0.s8 %v8930
      %v8932 = vlaneseq
      %v8933 = vshrl.u32 %v8932, 7
      %v8934 = vsub.s32 %v8931, %v8933
      %v8935 = vrot.slane %v8927, %v8934
      %v8937 = vunpack.c.l.s4 1966171168
      %v8938 = vunpack.c.0.s8 %v8937
      %v8939 = vlaneseq
      %v8940 = vshrl.u32 %v8939, 7
      %v8941 = vsub.s32 %v8938, %v8940
      %v8942 = vrot.slane %v8928, %v8941
      %v8943 = vcombine.low %v8935, %v8942
      %v8944 = vcombine.low %v7105, %v7119
      %v8945 = vcombine.low %v7127, %v7129
      %v8946 = vcombine.low %v7112, %v7126
      %v8947 = vcombine.low %v7128, %v7130
      %v8949 = vunpack.c.l.s4 1966171168
      %v8950 = vunpack.c.0.s8 %v8949
      %v8951 = vlaneseq
      %v8952 = vshrl.u32 %v8951, 7
      %v8953 = vsub.s32 %v8950, %v8952
      %v8954 = vrot.slane %v8944, %v8953
      %v8956 = vunpack.c.l.s4 1966171168
      %v8957 = vunpack.c.0.s8 %v8956
      %v8958 = vlaneseq
      %v8959 = vshrl.u32 %v8958, 7
      %v8960 = vsub.s32 %v8957, %v8959
      %v8961 = vrot.slane %v8945, %v8960
      %v8963 = vunpack.c.l.s4 1966171168
      %v8964 = vunpack.c.0.s8 %v8963
      %v8965 = vlaneseq
      %v8966 = vshrl.u32 %v8965, 7
      %v8967 = vsub.s32 %v8964, %v8966
      %v8968 = vrot.slane %v8946, %v8967
      %v8970 = vunpack.c.l.s4 1966171168
      %v8971 = vunpack.c.0.s8 %v8970
      %v8972 = vlaneseq
      %v8973 = vshrl.u32 %v8972, 7
      %v8974 = vsub.s32 %v8971, %v8973
      %v8975 = vrot.slane %v8947, %v8974
      %v8976 = vcombine.low %v8954, %v8961
      %v8977 = vcombine.low %v8968, %v8975
      %v8979 = vunpack.c.l.s4 1966171168
      %v8980 = vunpack.c.0.s8 %v8979
      %v8981 = vlaneseq
      %v8982 = vshrl.u32 %v8981, 7
      %v8983 = vsub.s32 %v8980, %v8982
      %v8984 = vrot.slane %v8976, %v8983
      %v8986 = vunpack.c.l.s4 1966171168
      %v8987 = vunpack.c.0.s8 %v8986
      %v8988 = vlaneseq
      %v8989 = vshrl.u32 %v8988, 7
      %v8990 = vsub.s32 %v8987, %v8989
      %v8991 = vrot.slane %v8977, %v8990
      %v8992 = vcombine.low %v8984, %v8991
      %v8993 = vcombine.low %v7154, %v7168
      %v8994 = vcombine.low %v7176, %v7178
      %v8995 = vcombine.low %v7161, %v7175
      %v8996 = vcombine.low %v7177, %v7179
      %v8998 = vunpack.c.l.s4 1966171168
      %v8999 = vunpack.c.0.s8 %v8998
      %v9000 = vlaneseq
      %v9001 = vshrl.u32 %v9000, 7
      %v9002 = vsub.s32 %v8999, %v9001
      %v9003 = vrot.slane %v8993, %v9002
      %v9005 = vunpack.c.l.s4 1966171168
      %v9006 = vunpack.c.0.s8 %v9005
      %v9007 = vlaneseq
      %v9008 = vshrl.u32 %v9007, 7
      %v9009 = vsub.s32 %v9006, %v9008
      %v9010 = vrot.slane %v8994, %v9009
      %v9012 = vunpack.c.l.s4 1966171168
      %v9013 = vunpack.c.0.s8 %v9012
      %v9014 = vlaneseq
      %v9015 = vshrl.u32 %v9014, 7
      %v9016 = vsub.s32 %v9013, %v9015
      %v9017 = vrot.slane %v8995, %v9016
      %v9019 = vunpack.c.l.s4 1966171168
      %v9020 = vunpack.c.0.s8 %v9019
      %v9021 = vlaneseq
      %v9022 = vshrl.u32 %v9021, 7
      %v9023 = vsub.s32 %v9020, %v9022
      %v9024 = vrot.slane %v8996, %v9023
      %v9025 = vcombine.low %v9003, %v9010
      %v9026 = vcombine.low %v9017, %v9024
      %v9028 = vunpack.c.l.s4 1966171168
      %v9029 = vunpack.c.0.s8 %v9028
      %v9030 = vlaneseq
      %v9031 = vshrl.u32 %v9030, 7
      %v9032 = vsub.s32 %v9029, %v9031
      %v9033 = vrot.slane %v9025, %v9032
      %v9035 = vunpack.c.l.s4 1966171168
      %v9036 = vunpack.c.0.s8 %v9035
      %v9037 = vlaneseq
      %v9038 = vshrl.u32 %v9037, 7
      %v9039 = vsub.s32 %v9036, %v9038
      %v9040 = vrot.slane %v9026, %v9039
      %v9041 = vcombine.low %v9033, %v9040
      %v9042 = vcombine.low %v7203, %v7217
      %v9043 = vcombine.low %v7225, %v7227
      %v9044 = vcombine.low %v7210, %v7224
      %v9045 = vcombine.low %v7226, %v7228
      %v9047 = vunpack.c.l.s4 1966171168
      %v9048 = vunpack.c.0.s8 %v9047
      %v9049 = vlaneseq
      %v9050 = vshrl.u32 %v9049, 7
      %v9051 = vsub.s32 %v9048, %v9050
      %v9052 = vrot.slane %v9042, %v9051
      %v9054 = vunpack.c.l.s4 1966171168
      %v9055 = vunpack.c.0.s8 %v9054
      %v9056 = vlaneseq
      %v9057 = vshrl.u32 %v9056, 7
      %v9058 = vsub.s32 %v9055, %v9057
      %v9059 = vrot.slane %v9043, %v9058
      %v9061 = vunpack.c.l.s4 1966171168
      %v9062 = vunpack.c.0.s8 %v9061
      %v9063 = vlaneseq
      %v9064 = vshrl.u32 %v9063, 7
      %v9065 = vsub.s32 %v9062, %v9064
      %v9066 = vrot.slane %v9044, %v9065
      %v9068 = vunpack.c.l.s4 1966171168
      %v9069 = vunpack.c.0.s8 %v9068
      %v9070 = vlaneseq
      %v9071 = vshrl.u32 %v9070, 7
      %v9072 = vsub.s32 %v9069, %v9071
      %v9073 = vrot.slane %v9045, %v9072
      %v9074 = vcombine.low %v9052, %v9059
      %v9075 = vcombine.low %v9066, %v9073
      %v9077 = vunpack.c.l.s4 1966171168
      %v9078 = vunpack.c.0.s8 %v9077
      %v9079 = vlaneseq
      %v9080 = vshrl.u32 %v9079, 7
      %v9081 = vsub.s32 %v9078, %v9080
      %v9082 = vrot.slane %v9074, %v9081
      %v9084 = vunpack.c.l.s4 1966171168
      %v9085 = vunpack.c.0.s8 %v9084
      %v9086 = vlaneseq
      %v9087 = vshrl.u32 %v9086, 7
      %v9088 = vsub.s32 %v9085, %v9087
      %v9089 = vrot.slane %v9075, %v9088
      %v9090 = vcombine.low %v9082, %v9089
      %v9091 = vcombine.low %v7252, %v7266
      %v9092 = vcombine.low %v7274, %v7276
      %v9093 = vcombine.low %v7259, %v7273
      %v9094 = vcombine.low %v7275, %v7277
      %v9096 = vunpack.c.l.s4 1966171168
      %v9097 = vunpack.c.0.s8 %v9096
      %v9098 = vlaneseq
      %v9099 = vshrl.u32 %v9098, 7
      %v9100 = vsub.s32 %v9097, %v9099
      %v9101 = vrot.slane %v9091, %v9100
      %v9103 = vunpack.c.l.s4 1966171168
      %v9104 = vunpack.c.0.s8 %v9103
      %v9105 = vlaneseq
      %v9106 = vshrl.u32 %v9105, 7
      %v9107 = vsub.s32 %v9104, %v9106
      %v9108 = vrot.slane %v9092, %v9107
      %v9110 = vunpack.c.l.s4 1966171168
      %v9111 = vunpack.c.0.s8 %v9110
      %v9112 = vlaneseq
      %v9113 = vshrl.u32 %v9112, 7
      %v9114 = vsub.s32 %v9111, %v9113
      %v9115 = vrot.slane %v9093, %v9114
      %v9117 = vunpack.c.l.s4 1966171168
      %v9118 = vunpack.c.0.s8 %v9117
      %v9119 = vlaneseq
      %v9120 = vshrl.u32 %v9119, 7
      %v9121 = vsub.s32 %v9118, %v9120
      %v9122 = vrot.slane %v9094, %v9121
      %v9123 = vcombine.low %v9101, %v9108
      %v9124 = vcombine.low %v9115, %v9122
      %v9126 = vunpack.c.l.s4 1966171168
      %v9127 = vunpack.c.0.s8 %v9126
      %v9128 = vlaneseq
      %v9129 = vshrl.u32 %v9128, 7
      %v9130 = vsub.s32 %v9127, %v9129
      %v9131 = vrot.slane %v9123, %v9130
      %v9133 = vunpack.c.l.s4 1966171168
      %v9134 = vunpack.c.0.s8 %v9133
      %v9135 = vlaneseq
      %v9136 = vshrl.u32 %v9135, 7
      %v9137 = vsub.s32 %v9134, %v9136
      %v9138 = vrot.slane %v9124, %v9137
      %v9139 = vcombine.low %v9131, %v9138
      %v9140 = vcombine.low %v7301, %v7315
      %v9141 = vcombine.low %v7323, %v7325
      %v9142 = vcombine.low %v7308, %v7322
      %v9143 = vcombine.low %v7324, %v7326
      %v9145 = vunpack.c.l.s4 1966171168
      %v9146 = vunpack.c.0.s8 %v9145
      %v9147 = vlaneseq
      %v9148 = vshrl.u32 %v9147, 7
      %v9149 = vsub.s32 %v9146, %v9148
      %v9150 = vrot.slane %v9140, %v9149
      %v9152 = vunpack.c.l.s4 1966171168
      %v9153 = vunpack.c.0.s8 %v9152
      %v9154 = vlaneseq
      %v9155 = vshrl.u32 %v9154, 7
      %v9156 = vsub.s32 %v9153, %v9155
      %v9157 = vrot.slane %v9141, %v9156
      %v9159 = vunpack.c.l.s4 1966171168
      %v9160 = vunpack.c.0.s8 %v9159
      %v9161 = vlaneseq
      %v9162 = vshrl.u32 %v9161, 7
      %v9163 = vsub.s32 %v9160, %v9162
      %v9164 = vrot.slane %v9142, %v9163
      %v9166 = vunpack.c.l.s4 1966171168
      %v9167 = vunpack.c.0.s8 %v9166
      %v9168 = vlaneseq
      %v9169 = vshrl.u32 %v9168, 7
      %v9170 = vsub.s32 %v9167, %v9169
      %v9171 = vrot.slane %v9143, %v9170
      %v9172 = vcombine.low %v9150, %v9157
      %v9173 = vcombine.low %v9164, %v9171
      %v9175 = vunpack.c.l.s4 1966171168
      %v9176 = vunpack.c.0.s8 %v9175
      %v9177 = vlaneseq
      %v9178 = vshrl.u32 %v9177, 7
      %v9179 = vsub.s32 %v9176, %v9178
      %v9180 = vrot.slane %v9172, %v9179
      %v9182 = vunpack.c.l.s4 1966171168
      %v9183 = vunpack.c.0.s8 %v9182
      %v9184 = vlaneseq
      %v9185 = vshrl.u32 %v9184, 7
      %v9186 = vsub.s32 %v9183, %v9185
      %v9187 = vrot.slane %v9173, %v9186
      %v9188 = vcombine.low %v9180, %v9187
      %v9189 = vcombine.low %v7350, %v7364
      %v9190 = vcombine.low %v7372, %v7374
      %v9191 = vcombine.low %v7357, %v7371
      %v9192 = vcombine.low %v7373, %v7375
      %v9194 = vunpack.c.l.s4 1966171168
      %v9195 = vunpack.c.0.s8 %v9194
      %v9196 = vlaneseq
      %v9197 = vshrl.u32 %v9196, 7
      %v9198 = vsub.s32 %v9195, %v9197
      %v9199 = vrot.slane %v9189, %v9198
      %v9201 = vunpack.c.l.s4 1966171168
      %v9202 = vunpack.c.0.s8 %v9201
      %v9203 = vlaneseq
      %v9204 = vshrl.u32 %v9203, 7
      %v9205 = vsub.s32 %v9202, %v9204
      %v9206 = vrot.slane %v9190, %v9205
      %v9208 = vunpack.c.l.s4 1966171168
      %v9209 = vunpack.c.0.s8 %v9208
      %v9210 = vlaneseq
      %v9211 = vshrl.u32 %v9210, 7
      %v9212 = vsub.s32 %v9209, %v9211
      %v9213 = vrot.slane %v9191, %v9212
      %v9215 = vunpack.c.l.s4 1966171168
      %v9216 = vunpack.c.0.s8 %v9215
      %v9217 = vlaneseq
      %v9218 = vshrl.u32 %v9217, 7
      %v9219 = vsub.s32 %v9216, %v9218
      %v9220 = vrot.slane %v9192, %v9219
      %v9221 = vcombine.low %v9199, %v9206
      %v9222 = vcombine.low %v9213, %v9220
      %v9224 = vunpack.c.l.s4 1966171168
      %v9225 = vunpack.c.0.s8 %v9224
      %v9226 = vlaneseq
      %v9227 = vshrl.u32 %v9226, 7
      %v9228 = vsub.s32 %v9225, %v9227
      %v9229 = vrot.slane %v9221, %v9228
      %v9231 = vunpack.c.l.s4 1966171168
      %v9232 = vunpack.c.0.s8 %v9231
      %v9233 = vlaneseq
      %v9234 = vshrl.u32 %v9233, 7
      %v9235 = vsub.s32 %v9232, %v9234
      %v9236 = vrot.slane %v9222, %v9235
      %v9237 = vcombine.low %v9229, %v9236
      %v9238 = vcombine.low %v7399, %v7413
      %v9239 = vcombine.low %v7421, %v7423
      %v9240 = vcombine.low %v7406, %v7420
      %v9241 = vcombine.low %v7422, %v7424
      %v9243 = vunpack.c.l.s4 1966171168
      %v9244 = vunpack.c.0.s8 %v9243
      %v9245 = vlaneseq
      %v9246 = vshrl.u32 %v9245, 7
      %v9247 = vsub.s32 %v9244, %v9246
      %v9248 = vrot.slane %v9238, %v9247
      %v9250 = vunpack.c.l.s4 1966171168
      %v9251 = vunpack.c.0.s8 %v9250
      %v9252 = vlaneseq
      %v9253 = vshrl.u32 %v9252, 7
      %v9254 = vsub.s32 %v9251, %v9253
      %v9255 = vrot.slane %v9239, %v9254
      %v9257 = vunpack.c.l.s4 1966171168
      %v9258 = vunpack.c.0.s8 %v9257
      %v9259 = vlaneseq
      %v9260 = vshrl.u32 %v9259, 7
      %v9261 = vsub.s32 %v9258, %v9260
      %v9262 = vrot.slane %v9240, %v9261
      %v9264 = vunpack.c.l.s4 1966171168
      %v9265 = vunpack.c.0.s8 %v9264
      %v9266 = vlaneseq
      %v9267 = vshrl.u32 %v9266, 7
      %v9268 = vsub.s32 %v9265, %v9267
      %v9269 = vrot.slane %v9241, %v9268
      %v9270 = vcombine.low %v9248, %v9255
      %v9271 = vcombine.low %v9262, %v9269
      %v9273 = vunpack.c.l.s4 1966171168
      %v9274 = vunpack.c.0.s8 %v9273
      %v9275 = vlaneseq
      %v9276 = vshrl.u32 %v9275, 7
      %v9277 = vsub.s32 %v9274, %v9276
      %v9278 = vrot.slane %v9270, %v9277
      %v9280 = vunpack.c.l.s4 1966171168
      %v9281 = vunpack.c.0.s8 %v9280
      %v9282 = vlaneseq
      %v9283 = vshrl.u32 %v9282, 7
      %v9284 = vsub.s32 %v9281, %v9283
      %v9285 = vrot.slane %v9271, %v9284
      %v9286 = vcombine.low %v9278, %v9285
      %v9287 = vcombine.low %v7448, %v7462
      %v9288 = vcombine.low %v7470, %v7472
      %v9289 = vcombine.low %v7455, %v7469
      %v9290 = vcombine.low %v7471, %v7473
      %v9292 = vunpack.c.l.s4 1966171168
      %v9293 = vunpack.c.0.s8 %v9292
      %v9294 = vlaneseq
      %v9295 = vshrl.u32 %v9294, 7
      %v9296 = vsub.s32 %v9293, %v9295
      %v9297 = vrot.slane %v9287, %v9296
      %v9299 = vunpack.c.l.s4 1966171168
      %v9300 = vunpack.c.0.s8 %v9299
      %v9301 = vlaneseq
      %v9302 = vshrl.u32 %v9301, 7
      %v9303 = vsub.s32 %v9300, %v9302
      %v9304 = vrot.slane %v9288, %v9303
      %v9306 = vunpack.c.l.s4 1966171168
      %v9307 = vunpack.c.0.s8 %v9306
      %v9308 = vlaneseq
      %v9309 = vshrl.u32 %v9308, 7
      %v9310 = vsub.s32 %v9307, %v9309
      %v9311 = vrot.slane %v9289, %v9310
      %v9313 = vunpack.c.l.s4 1966171168
      %v9314 = vunpack.c.0.s8 %v9313
      %v9315 = vlaneseq
      %v9316 = vshrl.u32 %v9315, 7
      %v9317 = vsub.s32 %v9314, %v9316
      %v9318 = vrot.slane %v9290, %v9317
      %v9319 = vcombine.low %v9297, %v9304
      %v9320 = vcombine.low %v9311, %v9318
      %v9322 = vunpack.c.l.s4 1966171168
      %v9323 = vunpack.c.0.s8 %v9322
      %v9324 = vlaneseq
      %v9325 = vshrl.u32 %v9324, 7
      %v9326 = vsub.s32 %v9323, %v9325
      %v9327 = vrot.slane %v9319, %v9326
      %v9329 = vunpack.c.l.s4 1966171168
      %v9330 = vunpack.c.0.s8 %v9329
      %v9331 = vlaneseq
      %v9332 = vshrl.u32 %v9331, 7
      %v9333 = vsub.s32 %v9330, %v9332
      %v9334 = vrot.slane %v9320, %v9333
      %v9335 = vcombine.low %v9327, %v9334
      %v9336 = vcombine.low %v7497, %v7511
      %v9337 = vcombine.low %v7519, %v7521
      %v9338 = vcombine.low %v7504, %v7518
      %v9339 = vcombine.low %v7520, %v7522
      %v9341 = vunpack.c.l.s4 1966171168
      %v9342 = vunpack.c.0.s8 %v9341
      %v9343 = vlaneseq
      %v9344 = vshrl.u32 %v9343, 7
      %v9345 = vsub.s32 %v9342, %v9344
      %v9346 = vrot.slane %v9336, %v9345
      %v9348 = vunpack.c.l.s4 1966171168
      %v9349 = vunpack.c.0.s8 %v9348
      %v9350 = vlaneseq
      %v9351 = vshrl.u32 %v9350, 7
      %v9352 = vsub.s32 %v9349, %v9351
      %v9353 = vrot.slane %v9337, %v9352
      %v9355 = vunpack.c.l.s4 1966171168
      %v9356 = vunpack.c.0.s8 %v9355
      %v9357 = vlaneseq
      %v9358 = vshrl.u32 %v9357, 7
      %v9359 = vsub.s32 %v9356, %v9358
      %v9360 = vrot.slane %v9338, %v9359
      %v9362 = vunpack.c.l.s4 1966171168
      %v9363 = vunpack.c.0.s8 %v9362
      %v9364 = vlaneseq
      %v9365 = vshrl.u32 %v9364, 7
      %v9366 = vsub.s32 %v9363, %v9365
      %v9367 = vrot.slane %v9339, %v9366
      %v9368 = vcombine.low %v9346, %v9353
      %v9369 = vcombine.low %v9360, %v9367
      %v9371 = vunpack.c.l.s4 1966171168
      %v9372 = vunpack.c.0.s8 %v9371
      %v9373 = vlaneseq
      %v9374 = vshrl.u32 %v9373, 7
      %v9375 = vsub.s32 %v9372, %v9374
      %v9376 = vrot.slane %v9368, %v9375
      %v9378 = vunpack.c.l.s4 1966171168
      %v9379 = vunpack.c.0.s8 %v9378
      %v9380 = vlaneseq
      %v9381 = vshrl.u32 %v9380, 7
      %v9382 = vsub.s32 %v9379, %v9381
      %v9383 = vrot.slane %v9369, %v9382
      %v9384 = vcombine.low %v9376, %v9383
      %v9385 = vcombine.low %v7546, %v7560
      %v9386 = vcombine.low %v7568, %v7570
      %v9387 = vcombine.low %v7553, %v7567
      %v9388 = vcombine.low %v7569, %v7571
      %v9390 = vunpack.c.l.s4 1966171168
      %v9391 = vunpack.c.0.s8 %v9390
      %v9392 = vlaneseq
      %v9393 = vshrl.u32 %v9392, 7
      %v9394 = vsub.s32 %v9391, %v9393
      %v9395 = vrot.slane %v9385, %v9394
      %v9397 = vunpack.c.l.s4 1966171168
      %v9398 = vunpack.c.0.s8 %v9397
      %v9399 = vlaneseq
      %v9400 = vshrl.u32 %v9399, 7
      %v9401 = vsub.s32 %v9398, %v9400
      %v9402 = vrot.slane %v9386, %v9401
      %v9404 = vunpack.c.l.s4 1966171168
      %v9405 = vunpack.c.0.s8 %v9404
      %v9406 = vlaneseq
      %v9407 = vshrl.u32 %v9406, 7
      %v9408 = vsub.s32 %v9405, %v9407
      %v9409 = vrot.slane %v9387, %v9408
      %v9411 = vunpack.c.l.s4 1966171168
      %v9412 = vunpack.c.0.s8 %v9411
      %v9413 = vlaneseq
      %v9414 = vshrl.u32 %v9413, 7
      %v9415 = vsub.s32 %v9412, %v9414
      %v9416 = vrot.slane %v9388, %v9415
      %v9417 = vcombine.low %v9395, %v9402
      %v9418 = vcombine.low %v9409, %v9416
      %v9420 = vunpack.c.l.s4 1966171168
      %v9421 = vunpack.c.0.s8 %v9420
      %v9422 = vlaneseq
      %v9423 = vshrl.u32 %v9422, 7
      %v9424 = vsub.s32 %v9421, %v9423
      %v9425 = vrot.slane %v9417, %v9424
      %v9427 = vunpack.c.l.s4 1966171168
      %v9428 = vunpack.c.0.s8 %v9427
      %v9429 = vlaneseq
      %v9430 = vshrl.u32 %v9429, 7
      %v9431 = vsub.s32 %v9428, %v9430
      %v9432 = vrot.slane %v9418, %v9431
      %v9433 = vcombine.low %v9425, %v9432
      %v9434 = vcombine.low %v7595, %v7609
      %v9435 = vcombine.low %v7617, %v7619
      %v9436 = vcombine.low %v7602, %v7616
      %v9437 = vcombine.low %v7618, %v7620
      %v9439 = vunpack.c.l.s4 1966171168
      %v9440 = vunpack.c.0.s8 %v9439
      %v9441 = vlaneseq
      %v9442 = vshrl.u32 %v9441, 7
      %v9443 = vsub.s32 %v9440, %v9442
      %v9444 = vrot.slane %v9434, %v9443
      %v9446 = vunpack.c.l.s4 1966171168
      %v9447 = vunpack.c.0.s8 %v9446
      %v9448 = vlaneseq
      %v9449 = vshrl.u32 %v9448, 7
      %v9450 = vsub.s32 %v9447, %v9449
      %v9451 = vrot.slane %v9435, %v9450
      %v9453 = vunpack.c.l.s4 1966171168
      %v9454 = vunpack.c.0.s8 %v9453
      %v9455 = vlaneseq
      %v9456 = vshrl.u32 %v9455, 7
      %v9457 = vsub.s32 %v9454, %v9456
      %v9458 = vrot.slane %v9436, %v9457
      %v9460 = vunpack.c.l.s4 1966171168
      %v9461 = vunpack.c.0.s8 %v9460
      %v9462 = vlaneseq
      %v9463 = vshrl.u32 %v9462, 7
      %v9464 = vsub.s32 %v9461, %v9463
      %v9465 = vrot.slane %v9437, %v9464
      %v9466 = vcombine.low %v9444, %v9451
      %v9467 = vcombine.low %v9458, %v9465
      %v9469 = vunpack.c.l.s4 1966171168
      %v9470 = vunpack.c.0.s8 %v9469
      %v9471 = vlaneseq
      %v9472 = vshrl.u32 %v9471, 7
      %v9473 = vsub.s32 %v9470, %v9472
      %v9474 = vrot.slane %v9466, %v9473
      %v9476 = vunpack.c.l.s4 1966171168
      %v9477 = vunpack.c.0.s8 %v9476
      %v9478 = vlaneseq
      %v9479 = vshrl.u32 %v9478, 7
      %v9480 = vsub.s32 %v9477, %v9479
      %v9481 = vrot.slane %v9467, %v9480
      %v9482 = vcombine.low %v9474, %v9481
      %v9483 = vcombine.low %v7644, %v7658
      %v9484 = vcombine.low %v7666, %v7668
      %v9485 = vcombine.low %v7651, %v7665
      %v9486 = vcombine.low %v7667, %v7669
      %v9488 = vunpack.c.l.s4 1966171168
      %v9489 = vunpack.c.0.s8 %v9488
      %v9490 = vlaneseq
      %v9491 = vshrl.u32 %v9490, 7
      %v9492 = vsub.s32 %v9489, %v9491
      %v9493 = vrot.slane %v9483, %v9492
      %v9495 = vunpack.c.l.s4 1966171168
      %v9496 = vunpack.c.0.s8 %v9495
      %v9497 = vlaneseq
      %v9498 = vshrl.u32 %v9497, 7
      %v9499 = vsub.s32 %v9496, %v9498
      %v9500 = vrot.slane %v9484, %v9499
      %v9502 = vunpack.c.l.s4 1966171168
      %v9503 = vunpack.c.0.s8 %v9502
      %v9504 = vlaneseq
      %v9505 = vshrl.u32 %v9504, 7
      %v9506 = vsub.s32 %v9503, %v9505
      %v9507 = vrot.slane %v9485, %v9506
      %v9509 = vunpack.c.l.s4 1966171168
      %v9510 = vunpack.c.0.s8 %v9509
      %v9511 = vlaneseq
      %v9512 = vshrl.u32 %v9511, 7
      %v9513 = vsub.s32 %v9510, %v9512
      %v9514 = vrot.slane %v9486, %v9513
      %v9515 = vcombine.low %v9493, %v9500
      %v9516 = vcombine.low %v9507, %v9514
      %v9518 = vunpack.c.l.s4 1966171168
      %v9519 = vunpack.c.0.s8 %v9518
      %v9520 = vlaneseq
      %v9521 = vshrl.u32 %v9520, 7
      %v9522 = vsub.s32 %v9519, %v9521
      %v9523 = vrot.slane %v9515, %v9522
      %v9525 = vunpack.c.l.s4 1966171168
      %v9526 = vunpack.c.0.s8 %v9525
      %v9527 = vlaneseq
      %v9528 = vshrl.u32 %v9527, 7
      %v9529 = vsub.s32 %v9526, %v9528
      %v9530 = vrot.slane %v9516, %v9529
      %v9531 = vcombine.low %v9523, %v9530
      %v9532 = vcombine.low %v7693, %v7707
      %v9533 = vcombine.low %v7715, %v7717
      %v9534 = vcombine.low %v7700, %v7714
      %v9535 = vcombine.low %v7716, %v7718
      %v9537 = vunpack.c.l.s4 1966171168
      %v9538 = vunpack.c.0.s8 %v9537
      %v9539 = vlaneseq
      %v9540 = vshrl.u32 %v9539, 7
      %v9541 = vsub.s32 %v9538, %v9540
      %v9542 = vrot.slane %v9532, %v9541
      %v9544 = vunpack.c.l.s4 1966171168
      %v9545 = vunpack.c.0.s8 %v9544
      %v9546 = vlaneseq
      %v9547 = vshrl.u32 %v9546, 7
      %v9548 = vsub.s32 %v9545, %v9547
      %v9549 = vrot.slane %v9533, %v9548
      %v9551 = vunpack.c.l.s4 1966171168
      %v9552 = vunpack.c.0.s8 %v9551
      %v9553 = vlaneseq
      %v9554 = vshrl.u32 %v9553, 7
      %v9555 = vsub.s32 %v9552, %v9554
      %v9556 = vrot.slane %v9534, %v9555
      %v9558 = vunpack.c.l.s4 1966171168
      %v9559 = vunpack.c.0.s8 %v9558
      %v9560 = vlaneseq
      %v9561 = vshrl.u32 %v9560, 7
      %v9562 = vsub.s32 %v9559, %v9561
      %v9563 = vrot.slane %v9535, %v9562
      %v9564 = vcombine.low %v9542, %v9549
      %v9565 = vcombine.low %v9556, %v9563
      %v9567 = vunpack.c.l.s4 1966171168
      %v9568 = vunpack.c.0.s8 %v9567
      %v9569 = vlaneseq
      %v9570 = vshrl.u32 %v9569, 7
      %v9571 = vsub.s32 %v9568, %v9570
      %v9572 = vrot.slane %v9564, %v9571
      %v9574 = vunpack.c.l.s4 1966171168
      %v9575 = vunpack.c.0.s8 %v9574
      %v9576 = vlaneseq
      %v9577 = vshrl.u32 %v9576, 7
      %v9578 = vsub.s32 %v9575, %v9577
      %v9579 = vrot.slane %v9565, %v9578
      %v9580 = vcombine.low %v9572, %v9579
      %v9581 = vcombine.low %v7742, %v7756
      %v9582 = vcombine.low %v7764, %v7766
      %v9583 = vcombine.low %v7749, %v7763
      %v9584 = vcombine.low %v7765, %v7767
      %v9586 = vunpack.c.l.s4 1966171168
      %v9587 = vunpack.c.0.s8 %v9586
      %v9588 = vlaneseq
      %v9589 = vshrl.u32 %v9588, 7
      %v9590 = vsub.s32 %v9587, %v9589
      %v9591 = vrot.slane %v9581, %v9590
      %v9593 = vunpack.c.l.s4 1966171168
      %v9594 = vunpack.c.0.s8 %v9593
      %v9595 = vlaneseq
      %v9596 = vshrl.u32 %v9595, 7
      %v9597 = vsub.s32 %v9594, %v9596
      %v9598 = vrot.slane %v9582, %v9597
      %v9600 = vunpack.c.l.s4 1966171168
      %v9601 = vunpack.c.0.s8 %v9600
      %v9602 = vlaneseq
      %v9603 = vshrl.u32 %v9602, 7
      %v9604 = vsub.s32 %v9601, %v9603
      %v9605 = vrot.slane %v9583, %v9604
      %v9607 = vunpack.c.l.s4 1966171168
      %v9608 = vunpack.c.0.s8 %v9607
      %v9609 = vlaneseq
      %v9610 = vshrl.u32 %v9609, 7
      %v9611 = vsub.s32 %v9608, %v9610
      %v9612 = vrot.slane %v9584, %v9611
      %v9613 = vcombine.low %v9591, %v9598
      %v9614 = vcombine.low %v9605, %v9612
      %v9616 = vunpack.c.l.s4 1966171168
      %v9617 = vunpack.c.0.s8 %v9616
      %v9618 = vlaneseq
      %v9619 = vshrl.u32 %v9618, 7
      %v9620 = vsub.s32 %v9617, %v9619
      %v9621 = vrot.slane %v9613, %v9620
      %v9623 = vunpack.c.l.s4 1966171168
      %v9624 = vunpack.c.0.s8 %v9623
      %v9625 = vlaneseq
      %v9626 = vshrl.u32 %v9625, 7
      %v9627 = vsub.s32 %v9624, %v9626
      %v9628 = vrot.slane %v9614, %v9627
      %v9629 = vcombine.low %v9621, %v9628
      %v9630 = vcombine.low %v7791, %v7805
      %v9631 = vcombine.low %v7813, %v7815
      %v9632 = vcombine.low %v7798, %v7812
      %v9633 = vcombine.low %v7814, %v7816
      %v9635 = vunpack.c.l.s4 1966171168
      %v9636 = vunpack.c.0.s8 %v9635
      %v9637 = vlaneseq
      %v9638 = vshrl.u32 %v9637, 7
      %v9639 = vsub.s32 %v9636, %v9638
      %v9640 = vrot.slane %v9630, %v9639
      %v9642 = vunpack.c.l.s4 1966171168
      %v9643 = vunpack.c.0.s8 %v9642
      %v9644 = vlaneseq
      %v9645 = vshrl.u32 %v9644, 7
      %v9646 = vsub.s32 %v9643, %v9645
      %v9647 = vrot.slane %v9631, %v9646
      %v9649 = vunpack.c.l.s4 1966171168
      %v9650 = vunpack.c.0.s8 %v9649
      %v9651 = vlaneseq
      %v9652 = vshrl.u32 %v9651, 7
      %v9653 = vsub.s32 %v9650, %v9652
      %v9654 = vrot.slane %v9632, %v9653
      %v9656 = vunpack.c.l.s4 1966171168
      %v9657 = vunpack.c.0.s8 %v9656
      %v9658 = vlaneseq
      %v9659 = vshrl.u32 %v9658, 7
      %v9660 = vsub.s32 %v9657, %v9659
      %v9661 = vrot.slane %v9633, %v9660
      %v9662 = vcombine.low %v9640, %v9647
      %v9663 = vcombine.low %v9654, %v9661
      %v9665 = vunpack.c.l.s4 1966171168
      %v9666 = vunpack.c.0.s8 %v9665
      %v9667 = vlaneseq
      %v9668 = vshrl.u32 %v9667, 7
      %v9669 = vsub.s32 %v9666, %v9668
      %v9670 = vrot.slane %v9662, %v9669
      %v9672 = vunpack.c.l.s4 1966171168
      %v9673 = vunpack.c.0.s8 %v9672
      %v9674 = vlaneseq
      %v9675 = vshrl.u32 %v9674, 7
      %v9676 = vsub.s32 %v9673, %v9675
      %v9677 = vrot.slane %v9663, %v9676
      %v9678 = vcombine.low %v9670, %v9677
      %v9679 = vcombine.low %v7840, %v7854
      %v9680 = vcombine.low %v7862, %v7864
      %v9681 = vcombine.low %v7847, %v7861
      %v9682 = vcombine.low %v7863, %v7865
      %v9684 = vunpack.c.l.s4 1966171168
      %v9685 = vunpack.c.0.s8 %v9684
      %v9686 = vlaneseq
      %v9687 = vshrl.u32 %v9686, 7
      %v9688 = vsub.s32 %v9685, %v9687
      %v9689 = vrot.slane %v9679, %v9688
      %v9691 = vunpack.c.l.s4 1966171168
      %v9692 = vunpack.c.0.s8 %v9691
      %v9693 = vlaneseq
      %v9694 = vshrl.u32 %v9693, 7
      %v9695 = vsub.s32 %v9692, %v9694
      %v9696 = vrot.slane %v9680, %v9695
      %v9698 = vunpack.c.l.s4 1966171168
      %v9699 = vunpack.c.0.s8 %v9698
      %v9700 = vlaneseq
      %v9701 = vshrl.u32 %v9700, 7
      %v9702 = vsub.s32 %v9699, %v9701
      %v9703 = vrot.slane %v9681, %v9702
      %v9705 = vunpack.c.l.s4 1966171168
      %v9706 = vunpack.c.0.s8 %v9705
      %v9707 = vlaneseq
      %v9708 = vshrl.u32 %v9707, 7
      %v9709 = vsub.s32 %v9706, %v9708
      %v9710 = vrot.slane %v9682, %v9709
      %v9711 = vcombine.low %v9689, %v9696
      %v9712 = vcombine.low %v9703, %v9710
      %v9714 = vunpack.c.l.s4 1966171168
      %v9715 = vunpack.c.0.s8 %v9714
      %v9716 = vlaneseq
      %v9717 = vshrl.u32 %v9716, 7
      %v9718 = vsub.s32 %v9715, %v9717
      %v9719 = vrot.slane %v9711, %v9718
      %v9721 = vunpack.c.l.s4 1966171168
      %v9722 = vunpack.c.0.s8 %v9721
      %v9723 = vlaneseq
      %v9724 = vshrl.u32 %v9723, 7
      %v9725 = vsub.s32 %v9722, %v9724
      %v9726 = vrot.slane %v9712, %v9725
      %v9727 = vcombine.low %v9719, %v9726
      %v9728 = vcombine.low %v7889, %v7903
      %v9729 = vcombine.low %v7911, %v7913
      %v9730 = vcombine.low %v7896, %v7910
      %v9731 = vcombine.low %v7912, %v7914
      %v9733 = vunpack.c.l.s4 1966171168
      %v9734 = vunpack.c.0.s8 %v9733
      %v9735 = vlaneseq
      %v9736 = vshrl.u32 %v9735, 7
      %v9737 = vsub.s32 %v9734, %v9736
      %v9738 = vrot.slane %v9728, %v9737
      %v9740 = vunpack.c.l.s4 1966171168
      %v9741 = vunpack.c.0.s8 %v9740
      %v9742 = vlaneseq
      %v9743 = vshrl.u32 %v9742, 7
      %v9744 = vsub.s32 %v9741, %v9743
      %v9745 = vrot.slane %v9729, %v9744
      %v9747 = vunpack.c.l.s4 1966171168
      %v9748 = vunpack.c.0.s8 %v9747
      %v9749 = vlaneseq
      %v9750 = vshrl.u32 %v9749, 7
      %v9751 = vsub.s32 %v9748, %v9750
      %v9752 = vrot.slane %v9730, %v9751
      %v9754 = vunpack.c.l.s4 1966171168
      %v9755 = vunpack.c.0.s8 %v9754
      %v9756 = vlaneseq
      %v9757 = vshrl.u32 %v9756, 7
      %v9758 = vsub.s32 %v9755, %v9757
      %v9759 = vrot.slane %v9731, %v9758
      %v9760 = vcombine.low %v9738, %v9745
      %v9761 = vcombine.low %v9752, %v9759
      %v9763 = vunpack.c.l.s4 1966171168
      %v9764 = vunpack.c.0.s8 %v9763
      %v9765 = vlaneseq
      %v9766 = vshrl.u32 %v9765, 7
      %v9767 = vsub.s32 %v9764, %v9766
      %v9768 = vrot.slane %v9760, %v9767
      %v9770 = vunpack.c.l.s4 1966171168
      %v9771 = vunpack.c.0.s8 %v9770
      %v9772 = vlaneseq
      %v9773 = vshrl.u32 %v9772, 7
      %v9774 = vsub.s32 %v9771, %v9773
      %v9775 = vrot.slane %v9761, %v9774
      %v9776 = vcombine.low %v9768, %v9775
      %v9777 = vcombine.low %v7938, %v7952
      %v9778 = vcombine.low %v7960, %v7962
      %v9779 = vcombine.low %v7945, %v7959
      %v9780 = vcombine.low %v7961, %v7963
      %v9782 = vunpack.c.l.s4 1966171168
      %v9783 = vunpack.c.0.s8 %v9782
      %v9784 = vlaneseq
      %v9785 = vshrl.u32 %v9784, 7
      %v9786 = vsub.s32 %v9783, %v9785
      %v9787 = vrot.slane %v9777, %v9786
      %v9789 = vunpack.c.l.s4 1966171168
      %v9790 = vunpack.c.0.s8 %v9789
      %v9791 = vlaneseq
      %v9792 = vshrl.u32 %v9791, 7
      %v9793 = vsub.s32 %v9790, %v9792
      %v9794 = vrot.slane %v9778, %v9793
      %v9796 = vunpack.c.l.s4 1966171168
      %v9797 = vunpack.c.0.s8 %v9796
      %v9798 = vlaneseq
      %v9799 = vshrl.u32 %v9798, 7
      %v9800 = vsub.s32 %v9797, %v9799
      %v9801 = vrot.slane %v9779, %v9800
      %v9803 = vunpack.c.l.s4 1966171168
      %v9804 = vunpack.c.0.s8 %v9803
      %v9805 = vlaneseq
      %v9806 = vshrl.u32 %v9805, 7
      %v9807 = vsub.s32 %v9804, %v9806
      %v9808 = vrot.slane %v9780, %v9807
      %v9809 = vcombine.low %v9787, %v9794
      %v9810 = vcombine.low %v9801, %v9808
      %v9812 = vunpack.c.l.s4 1966171168
      %v9813 = vunpack.c.0.s8 %v9812
      %v9814 = vlaneseq
      %v9815 = vshrl.u32 %v9814, 7
      %v9816 = vsub.s32 %v9813, %v9815
      %v9817 = vrot.slane %v9809, %v9816
      %v9819 = vunpack.c.l.s4 1966171168
      %v9820 = vunpack.c.0.s8 %v9819
      %v9821 = vlaneseq
      %v9822 = vshrl.u32 %v9821, 7
      %v9823 = vsub.s32 %v9820, %v9822
      %v9824 = vrot.slane %v9810, %v9823
      %v9825 = vcombine.low %v9817, %v9824
      %v9826 = vcombine.low %v7987, %v8001
      %v9827 = vcombine.low %v8009, %v8011
      %v9828 = vcombine.low %v7994, %v8008
      %v9829 = vcombine.low %v8010, %v8012
      %v9831 = vunpack.c.l.s4 1966171168
      %v9832 = vunpack.c.0.s8 %v9831
      %v9833 = vlaneseq
      %v9834 = vshrl.u32 %v9833, 7
      %v9835 = vsub.s32 %v9832, %v9834
      %v9836 = vrot.slane %v9826, %v9835
      %v9838 = vunpack.c.l.s4 1966171168
      %v9839 = vunpack.c.0.s8 %v9838
      %v9840 = vlaneseq
      %v9841 = vshrl.u32 %v9840, 7
      %v9842 = vsub.s32 %v9839, %v9841
      %v9843 = vrot.slane %v9827, %v9842
      %v9845 = vunpack.c.l.s4 1966171168
      %v9846 = vunpack.c.0.s8 %v9845
      %v9847 = vlaneseq
      %v9848 = vshrl.u32 %v9847, 7
      %v9849 = vsub.s32 %v9846, %v9848
      %v9850 = vrot.slane %v9828, %v9849
      %v9852 = vunpack.c.l.s4 1966171168
      %v9853 = vunpack.c.0.s8 %v9852
      %v9854 = vlaneseq
      %v9855 = vshrl.u32 %v9854, 7
      %v9856 = vsub.s32 %v9853, %v9855
      %v9857 = vrot.slane %v9829, %v9856
      %v9858 = vcombine.low %v9836, %v9843
      %v9859 = vcombine.low %v9850, %v9857
      %v9861 = vunpack.c.l.s4 1966171168
      %v9862 = vunpack.c.0.s8 %v9861
      %v9863 = vlaneseq
      %v9864 = vshrl.u32 %v9863, 7
      %v9865 = vsub.s32 %v9862, %v9864
      %v9866 = vrot.slane %v9858, %v9865
      %v9868 = vunpack.c.l.s4 1966171168
      %v9869 = vunpack.c.0.s8 %v9868
      %v9870 = vlaneseq
      %v9871 = vshrl.u32 %v9870, 7
      %v9872 = vsub.s32 %v9869, %v9871
      %v9873 = vrot.slane %v9859, %v9872
      %v9874 = vcombine.low %v9866, %v9873
      %9875 = vset.pattern.permute.xlu0 0
      %9876 = vperm.xlu0 %9875, %v8061
      %v9877 = vpop.permute.xlu0 %9876
      %9878 = vset.pattern.permute.xlu0 0
      %9879 = vperm.xlu0 %9878, %v8110
      %v9880 = vpop.permute.xlu0 %9879
      %9881 = vset.pattern.permute.xlu0 0
      %9882 = vperm.xlu0 %9881, %v8159
      %v9883 = vpop.permute.xlu0 %9882
      %9884 = vset.pattern.permute.xlu0 0
      %9885 = vperm.xlu0 %9884, %v8208
      %v9886 = vpop.permute.xlu0 %9885
      %9887 = vset.pattern.permute.xlu0 0
      %9888 = vperm.xlu0 %9887, %v8257
      %v9889 = vpop.permute.xlu0 %9888
      %9890 = vset.pattern.permute.xlu0 0
      %9891 = vperm.xlu0 %9890, %v8306
      %v9892 = vpop.permute.xlu0 %9891
      %9893 = vset.pattern.permute.xlu0 0
      %9894 = vperm.xlu0 %9893, %v8355
      %v9895 = vpop.permute.xlu0 %9894
      %9896 = vset.pattern.permute.xlu0 0
      %9897 = vperm.xlu0 %9896, %v8404
      %v9898 = vpop.permute.xlu0 %9897
      %9899 = vset.pattern.permute.xlu0 0
      %9900 = vperm.xlu0 %9899, %v8453
      %v9901 = vpop.permute.xlu0 %9900
      %9902 = vset.pattern.permute.xlu0 0
      %9903 = vperm.xlu0 %9902, %v8502
      %v9904 = vpop.permute.xlu0 %9903
      %9905 = vset.pattern.permute.xlu0 0
      %9906 = vperm.xlu0 %9905, %v8551
      %v9907 = vpop.permute.xlu0 %9906
      %9908 = vset.pattern.permute.xlu0 0
      %9909 = vperm.xlu0 %9908, %v8600
      %v9910 = vpop.permute.xlu0 %9909
      %9911 = vset.pattern.permute.xlu0 0
      %9912 = vperm.xlu0 %9911, %v8649
      %v9913 = vpop.permute.xlu0 %9912
      %9914 = vset.pattern.permute.xlu0 0
      %9915 = vperm.xlu0 %9914, %v8698
      %v9916 = vpop.permute.xlu0 %9915
      %9917 = vset.pattern.permute.xlu0 0
      %9918 = vperm.xlu0 %9917, %v8747
      %v9919 = vpop.permute.xlu0 %9918
      %9920 = vset.pattern.permute.xlu0 0
      %9921 = vperm.xlu0 %9920, %v8796
      %v9922 = vpop.permute.xlu0 %9921
      %9923 = vset.pattern.permute.xlu0 0
      %9924 = vperm.xlu0 %9923, %v8845
      %v9925 = vpop.permute.xlu0 %9924
      %9926 = vset.pattern.permute.xlu0 0
      %9927 = vperm.xlu0 %9926, %v8894
      %v9928 = vpop.permute.xlu0 %9927
      %9929 = vset.pattern.permute.xlu0 0
      %9930 = vperm.xlu0 %9929, %v8943
      %v9931 = vpop.permute.xlu0 %9930
      %9932 = vset.pattern.permute.xlu0 0
      %9933 = vperm.xlu0 %9932, %v8992
      %v9934 = vpop.permute.xlu0 %9933
      %9935 = vset.pattern.permute.xlu0 0
      %9936 = vperm.xlu0 %9935, %v9041
      %v9937 = vpop.permute.xlu0 %9936
      %9938 = vset.pattern.permute.xlu0 0
      %9939 = vperm.xlu0 %9938, %v9090
      %v9940 = vpop.permute.xlu0 %9939
      %9941 = vset.pattern.permute.xlu0 0
      %9942 = vperm.xlu0 %9941, %v9139
      %v9943 = vpop.permute.xlu0 %9942
      %9944 = vset.pattern.permute.xlu0 0
      %9945 = vperm.xlu0 %9944, %v9188
      %v9946 = vpop.permute.xlu0 %9945
      %9947 = vset.pattern.permute.xlu0 0
      %9948 = vperm.xlu0 %9947, %v9237
      %v9949 = vpop.permute.xlu0 %9948
      %9950 = vset.pattern.permute.xlu0 0
      %9951 = vperm.xlu0 %9950, %v9286
      %v9952 = vpop.permute.xlu0 %9951
      %9953 = vset.pattern.permute.xlu0 0
      %9954 = vperm.xlu0 %9953, %v9335
      %v9955 = vpop.permute.xlu0 %9954
      %9956 = vset.pattern.permute.xlu0 0
      %9957 = vperm.xlu0 %9956, %v9384
      %v9958 = vpop.permute.xlu0 %9957
      %9959 = vset.pattern.permute.xlu0 0
      %9960 = vperm.xlu0 %9959, %v9433
      %v9961 = vpop.permute.xlu0 %9960
      %9962 = vset.pattern.permute.xlu0 0
      %9963 = vperm.xlu0 %9962, %v9482
      %v9964 = vpop.permute.xlu0 %9963
      %9965 = vset.pattern.permute.xlu0 0
      %9966 = vperm.xlu0 %9965, %v9531
      %v9967 = vpop.permute.xlu0 %9966
      %9968 = vset.pattern.permute.xlu0 0
      %9969 = vperm.xlu0 %9968, %v9580
      %v9970 = vpop.permute.xlu0 %9969
      %9971 = vset.pattern.permute.xlu0 0
      %9972 = vperm.xlu0 %9971, %v9629
      %v9973 = vpop.permute.xlu0 %9972
      %9974 = vset.pattern.permute.xlu0 0
      %9975 = vperm.xlu0 %9974, %v9678
      %v9976 = vpop.permute.xlu0 %9975
      %9977 = vset.pattern.permute.xlu0 0
      %9978 = vperm.xlu0 %9977, %v9727
      %v9979 = vpop.permute.xlu0 %9978
      %9980 = vset.pattern.permute.xlu0 0
      %9981 = vperm.xlu0 %9980, %v9776
      %v9982 = vpop.permute.xlu0 %9981
      %9983 = vset.pattern.permute.xlu0 0
      %9984 = vperm.xlu0 %9983, %v9825
      %v9985 = vpop.permute.xlu0 %9984
      %9986 = vset.pattern.permute.xlu0 0
      %9987 = vperm.xlu0 %9986, %v9874
      %v9988 = vpop.permute.xlu0 %9987
      %v9989 = vlaneseq
      %v9990 = vand.u32 %v9989, 127
      %v9991 = vlaneseq
      %v9992 = vshrl.u32 %v9991, 7
      %v9993 = vsub.s32 %v9990, %v9992
      %v9994 = vrot.slane %v9877, %v9993
      %v9995 = vadd.s32 %v9990, 4294967288
      %v9996 = vlaneseq
      %v9997 = vshrl.u32 %v9996, 7
      %v9998 = vsub.s32 %v9995, %v9997
      %v9999 = vrot.slane %v9880, %v9998
      %vm10000 = vcmask 130112
      %v10001 = vsel %vm10000, %v9999, %v9994
      %v10002 = vadd.s32 %v9990, 4294967280
      %v10003 = vlaneseq
      %v10004 = vshrl.u32 %v10003, 7
      %v10005 = vsub.s32 %v10002, %v10004
      %v10006 = vrot.slane %v9883, %v10005
      %vm10007 = vcmask 195712
      %v10008 = vsel %vm10007, %v10006, %v10001
      %v10009 = vadd.s32 %v9990, 4294967272
      %v10010 = vlaneseq
      %v10011 = vshrl.u32 %v10010, 7
      %v10012 = vsub.s32 %v10009, %v10011
      %v10013 = vrot.slane %v9886, %v10012
      %vm10014 = vcmask 261312
      %v10015 = vsel %vm10014, %v10013, %v10008
      %v10016 = vadd.s32 %v9990, 4294967264
      %v10017 = vlaneseq
      %v10018 = vshrl.u32 %v10017, 7
      %v10019 = vsub.s32 %v10016, %v10018
      %v10020 = vrot.slane %v9889, %v10019
      %vm10021 = vcmask 326912
      %v10022 = vsel %vm10021, %v10020, %v10015
      %v10023 = vadd.s32 %v9990, 4294967256
      %v10024 = vlaneseq
      %v10025 = vshrl.u32 %v10024, 7
      %v10026 = vsub.s32 %v10023, %v10025
      %v10027 = vrot.slane %v9892, %v10026
      %vm10028 = vcmask 392512
      %v10029 = vsel %vm10028, %v10027, %v10022
      %v10030 = vadd.s32 %v9990, 4294967248
      %v10031 = vlaneseq
      %v10032 = vshrl.u32 %v10031, 7
      %v10033 = vsub.s32 %v10030, %v10032
      %v10034 = vrot.slane %v9895, %v10033
      %vm10035 = vcmask 458112
      %v10036 = vsel %vm10035, %v10034, %v10029
      %v10037 = vadd.s32 %v9990, 4294967240
      %v10038 = vlaneseq
      %v10039 = vshrl.u32 %v10038, 7
      %v10040 = vsub.s32 %v10037, %v10039
      %v10041 = vrot.slane %v9898, %v10040
      %vm10042 = vcmask 523712
      %v10043 = vsel %vm10042, %v10041, %v10036
      %v10044 = vadd.s32 %v9990, 4294967232
      %v10045 = vlaneseq
      %v10046 = vshrl.u32 %v10045, 7
      %v10047 = vsub.s32 %v10044, %v10046
      %v10048 = vrot.slane %v9901, %v10047
      %vm10049 = vcmask 589312
      %v10050 = vsel %vm10049, %v10048, %v10043
      %v10051 = vadd.s32 %v9990, 4294967224
      %v10052 = vlaneseq
      %v10053 = vshrl.u32 %v10052, 7
      %v10054 = vsub.s32 %v10051, %v10053
      %v10055 = vrot.slane %v9904, %v10054
      %vm10056 = vcmask 654912
      %v10057 = vsel %vm10056, %v10055, %v10050
      %v10058 = vadd.s32 %v9990, 4294967216
      %v10059 = vlaneseq
      %v10060 = vshrl.u32 %v10059, 7
      %v10061 = vsub.s32 %v10058, %v10060
      %v10062 = vrot.slane %v9907, %v10061
      %vm10063 = vcmask 720512
      %v10064 = vsel %vm10063, %v10062, %v10057
      %v10065 = vadd.s32 %v9990, 4294967208
      %v10066 = vlaneseq
      %v10067 = vshrl.u32 %v10066, 7
      %v10068 = vsub.s32 %v10065, %v10067
      %v10069 = vrot.slane %v9910, %v10068
      %vm10070 = vcmask 786112
      %v10071 = vsel %vm10070, %v10069, %v10064
      %v10072 = vadd.s32 %v9990, 4294967200
      %v10073 = vlaneseq
      %v10074 = vshrl.u32 %v10073, 7
      %v10075 = vsub.s32 %v10072, %v10074
      %v10076 = vrot.slane %v9913, %v10075
      %vm10077 = vcmask 851712
      %v10078 = vsel %vm10077, %v10076, %v10071
      %v10079 = vadd.s32 %v9990, 4294967192
      %v10080 = vlaneseq
      %v10081 = vshrl.u32 %v10080, 7
      %v10082 = vsub.s32 %v10079, %v10081
      %v10083 = vrot.slane %v9916, %v10082
      %vm10084 = vcmask 917312
      %v10085 = vsel %vm10084, %v10083, %v10078
      %v10086 = vadd.s32 %v9990, 4294967184
      %v10087 = vlaneseq
      %v10088 = vshrl.u32 %v10087, 7
      %v10089 = vsub.s32 %v10086, %v10088
      %v10090 = vrot.slane %v9919, %v10089
      %vm10091 = vcmask 982912
      %v10092 = vsel %vm10091, %v10090, %v10085
      %v10093 = vadd.s32 %v9990, 4294967176
      %v10094 = vlaneseq
      %v10095 = vshrl.u32 %v10094, 7
      %v10096 = vsub.s32 %v10093, %v10095
      %v10097 = vrot.slane %v9922, %v10096
      %vm10098 = vcmask 1048512
      %v10099 = vsel %vm10098, %v10097, %v10092
      %v10100 = vlaneseq
      %v10101 = vshrl.u32 %v10100, 7
      %v10102 = vsub.s32 %v9990, %v10101
      %v10103 = vrot.slane %v9925, %v10102
      %v10104 = vlaneseq
      %v10105 = vshrl.u32 %v10104, 7
      %v10106 = vsub.s32 %v9995, %v10105
      %v10107 = vrot.slane %v9928, %v10106
      %v10108 = vsel %vm10000, %v10107, %v10103
      %v10109 = vlaneseq
      %v10110 = vshrl.u32 %v10109, 7
      %v10111 = vsub.s32 %v10002, %v10110
      %v10112 = vrot.slane %v9931, %v10111
      %v10113 = vsel %vm10007, %v10112, %v10108
      %v10114 = vlaneseq
      %v10115 = vshrl.u32 %v10114, 7
      %v10116 = vsub.s32 %v10009, %v10115
      %v10117 = vrot.slane %v9934, %v10116
      %v10118 = vsel %vm10014, %v10117, %v10113
      %v10119 = vlaneseq
      %v10120 = vshrl.u32 %v10119, 7
      %v10121 = vsub.s32 %v10016, %v10120
      %v10122 = vrot.slane %v9937, %v10121
      %v10123 = vsel %vm10021, %v10122, %v10118
      %v10124 = vlaneseq
      %v10125 = vshrl.u32 %v10124, 7
      %v10126 = vsub.s32 %v10023, %v10125
      %v10127 = vrot.slane %v9940, %v10126
      %v10128 = vsel %vm10028, %v10127, %v10123
      %v10129 = vlaneseq
      %v10130 = vshrl.u32 %v10129, 7
      %v10131 = vsub.s32 %v10030, %v10130
      %v10132 = vrot.slane %v9943, %v10131
      %v10133 = vsel %vm10035, %v10132, %v10128
      %v10134 = vlaneseq
      %v10135 = vshrl.u32 %v10134, 7
      %v10136 = vsub.s32 %v10037, %v10135
      %v10137 = vrot.slane %v9946, %v10136
      %v10138 = vsel %vm10042, %v10137, %v10133
      %v10139 = vlaneseq
      %v10140 = vshrl.u32 %v10139, 7
      %v10141 = vsub.s32 %v10044, %v10140
      %v10142 = vrot.slane %v9949, %v10141
      %v10143 = vsel %vm10049, %v10142, %v10138
      %v10144 = vlaneseq
      %v10145 = vshrl.u32 %v10144, 7
      %v10146 = vsub.s32 %v10051, %v10145
      %v10147 = vrot.slane %v9952, %v10146
      %v10148 = vsel %vm10056, %v10147, %v10143
      %v10149 = vlaneseq
      %v10150 = vshrl.u32 %v10149, 7
      %v10151 = vsub.s32 %v10058, %v10150
      %v10152 = vrot.slane %v9955, %v10151
      %v10153 = vsel %vm10063, %v10152, %v10148
      %v10154 = vlaneseq
      %v10155 = vshrl.u32 %v10154, 7
      %v10156 = vsub.s32 %v10065, %v10155
      %v10157 = vrot.slane %v9958, %v10156
      %v10158 = vsel %vm10070, %v10157, %v10153
      %v10159 = vlaneseq
      %v10160 = vshrl.u32 %v10159, 7
      %v10161 = vsub.s32 %v10072, %v10160
      %v10162 = vrot.slane %v9961, %v10161
      %v10163 = vsel %vm10077, %v10162, %v10158
      %v10164 = vlaneseq
      %v10165 = vshrl.u32 %v10164, 7
      %v10166 = vsub.s32 %v10079, %v10165
      %v10167 = vrot.slane %v9964, %v10166
      %v10168 = vsel %vm10084, %v10167, %v10163
      %v10169 = vlaneseq
      %v10170 = vshrl.u32 %v10169, 7
      %v10171 = vsub.s32 %v10086, %v10170
      %v10172 = vrot.slane %v9967, %v10171
      %v10173 = vsel %vm10091, %v10172, %v10168
      %v10174 = vlaneseq
      %v10175 = vshrl.u32 %v10174, 7
      %v10176 = vsub.s32 %v10093, %v10175
      %v10177 = vrot.slane %v9970, %v10176
      %v10178 = vsel %vm10098, %v10177, %v10173
      %v10179 = vlaneseq
      %v10180 = vshrl.u32 %v10179, 7
      %v10181 = vsub.s32 %v9990, %v10180
      %v10182 = vrot.slane %v9973, %v10181
      %v10183 = vlaneseq
      %v10184 = vshrl.u32 %v10183, 7
      %v10185 = vsub.s32 %v9995, %v10184
      %v10186 = vrot.slane %v9976, %v10185
      %v10187 = vsel %vm10000, %v10186, %v10182
      %v10188 = vlaneseq
      %v10189 = vshrl.u32 %v10188, 7
      %v10190 = vsub.s32 %v10002, %v10189
      %v10191 = vrot.slane %v9979, %v10190
      %v10192 = vsel %vm10007, %v10191, %v10187
      %v10193 = vlaneseq
      %v10194 = vshrl.u32 %v10193, 7
      %v10195 = vsub.s32 %v10009, %v10194
      %v10196 = vrot.slane %v9982, %v10195
      %v10197 = vsel %vm10014, %v10196, %v10192
      %v10198 = vlaneseq
      %v10199 = vshrl.u32 %v10198, 7
      %v10200 = vsub.s32 %v10016, %v10199
      %v10201 = vrot.slane %v9985, %v10200
      %v10202 = vsel %vm10021, %v10201, %v10197
      %v10203 = vlaneseq
      %v10204 = vshrl.u32 %v10203, 7
      %v10205 = vsub.s32 %v10023, %v10204
      %v10206 = vrot.slane %v9988, %v10205
      %v10207 = vsel %vm10028, %v10206, %v10202
      %v10208 = vcombine.low %v10099, %v10178
      %v10210 = vunpack.c.l.s4 1966171168
      %v10211 = vunpack.c.0.s8 %v10210
      %v10212 = vlaneseq
      %v10213 = vshrl.u32 %v10212, 7
      %v10214 = vsub.s32 %v10211, %v10213
      %v10215 = vrot.slane %v10208, %v10214
      %v10217 = vunpack.c.l.s4 1966171168
      %v10218 = vunpack.c.0.s8 %v10217
      %v10219 = vlaneseq
      %v10220 = vshrl.u32 %v10219, 7
      %v10221 = vsub.s32 %v10218, %v10220
      %v10222 = vrot.slane %v10207, %v10221
      %v10223 = vcombine.low %v10215, %v10222
      %v10225 = vunpack.c.l.s4 1966171168
      %v10226 = vunpack.c.0.s8 %v10225
      %v10227 = vlaneseq
      %v10228 = vshrl.u32 %v10227, 7
      %v10229 = vsub.s32 %v10226, %v10228
      %v10230 = vrot.slane %v10223, %v10229
      %v10232 = vlaneseq
      %vm10233 = vcmp.ge.s32.totalorder %v10232, 0
      %vm10234 = vcmp.lt.s32.totalorder %v10232, 304
      %vm10235 = vmand %vm10233, %vm10234
      %10236 = vst.msk [vmem:[%s224] sm:$0x7] %vm10235, %v10230
      %p10237 = scmp.lt.s32.totalorder %s16, 1
      %s10238 = scalar_select %p10237, %s16, 1
      %s10239 = smul.addr %s10238, 3
      %s10240 = scalar_lea.vmem %s5, %s10239
      // Predicated region
      $region41: #{iou_fit_fc3.1} parent=39 // pred_check
        %p10241 = pneg %p144
      $region42: #{iou_fit_fc3.1} parent=39 // pred_check_branch
        %10243 = sbr.rel (%p10241) target = $region44
      $region43: #{iou_fit_fc3.1} parent=39 // pred_region
        _
      $region44: #{iou_fit_fc3.1} parent=39 // pred_fallthru
        _
    $region40: #{iou_fit_fc3.1} parent=5 // pred_fallthru
      _
    %p10244 = scmp.le.s32.totalorder 2, %s11
    // Predicated region
    $region45: #{iou_fit_fc3.1} parent=5 // pred_check
      %p10245 = pneg %p10244
    $region46: #{iou_fit_fc3.1} parent=5 // pred_check_branch
      %10247 = sbr.rel (%p10245) target = $region48
    $region47: #{iou_fit_fc3.1} parent=5 // pred_region
      %s10248 = ssub.s32 %s11, 2
      // Predicated region
      $region49: #{iou_fit_fc3.1} parent=47 // pred_check
        %p10249 = pneg %p150
      $region50: #{iou_fit_fc3.1} parent=47 // pred_check_branch
        %10251 = sbr.rel (%p10249) target = $region52
      $region51: #{iou_fit_fc3.1} parent=47 // pred_region
        %p10252 = scmp.lt.s32.totalorder %s17, 1
        %s10253 = scalar_select %p10252, %s17, 1
        %s10254 = smul.addr %s10253, 3
        %s10255 = scalar_lea.vmem %s5, %s10254
      $region52: #{iou_fit_fc3.1} parent=47 // pred_fallthru
        _
    $region48: #{iou_fit_fc3.1} parent=5 // pred_fallthru
      _
  $region6: #{iou_fit_fc3.1} parent=0 // loop_footer
    %s15 = sadd.s32 1, %s11
  $region7: #{iou_fit_fc3.1} parent=0 // loop_footer_branch
    %10 = sbr.rel target = $region3
  $region8: #{iou_fit_fc3.1} parent=0 // loop_exit
    _

</llo_original>
